<compile_context>
chip_gen: v6e
topology: v6e:2x2x1
jax: 0.10.0
libtpu: 0.0.40
codegen_flags: <defaults>
</compile_context>

<pallas_src>
import functools

import jax
import jax.numpy as jnp
from jax.experimental import pallas as pl
from jax.experimental.pallas import tpu as pltpu


_VMEM_SPEC = pl.BlockSpec(memory_space=pltpu.MemorySpace.VMEM)


# ----------------------------------------------------------------------------
# Fused kernel
# ----------------------------------------------------------------------------

def _make_fused_kernel(T, N, B, H, V, n_layers):
    """Builds the fully fused Siamese-LSTM forward kernel.

    Positional ref layout:
      ids_ref                : (T*N, 1) int32, time-major, row = t*N + n
      emb_ref                : (V, E)
      per (layer, direction) : w_ih_t (In, 4H), w_hh_t (H, 4H), bias (1, 4H)
      fc_w_ref               : (2H, H)
      fc_b_ref               : (1, H)
      out_ref                : (B, 1)   normalized distance
    """

    def kernel(*args):
        idx = 0
        ids_ref = args[idx]; idx += 1
        emb_ref = args[idx]; idx += 1
        lstm_refs = []
        for _ in range(n_layers):
            dirs = []
            for _ in range(2):
                dirs.append((args[idx], args[idx + 1], args[idx + 2]))
                idx += 3
            lstm_refs.append(dirs)
        fc_w_ref = args[idx]
        fc_b_ref = args[idx + 1]
        out_ref = args[idx + 2]

        # ---- Embedding as one-hot matmul (fused gather, runs on the MXU) ----
        ids = ids_ref[...]                                              # (T*N, 1)
        iota = jax.lax.broadcasted_iota(jnp.int32, (T * N, V), 1)
        one_hot = (ids == iota).astype(jnp.float32)                     # (T*N, V)
        layer_in = jnp.dot(one_hot, emb_ref[...],
                           preferred_element_type=jnp.float32)          # (T*N, E)

        h_final = [None, None]   # last-layer (forward, backward) final hidden

        for layer in range(n_layers):
            last = layer == n_layers - 1
            outs = [[None] * T, [None] * T]   # per-direction, per-time hidden

            for direction in range(2):
                w_ih_ref, w_hh_ref, b_ref = lstm_refs[layer][direction]

                # Hoisted input projection (no serial dependence): (T*N, 4H).
                gates_x = (jnp.dot(layer_in, w_ih_ref[...],
                                   preferred_element_type=jnp.float32)
                           + b_ref[...])
                w_hh = w_hh_ref[...]

                h = jnp.zeros((N, H), jnp.float32)
                c = jnp.zeros((N, H), jnp.float32)
                t_order = range(T) if direction == 0 else range(T - 1, -1, -1)
                for t in t_order:            # fully unrolled, static indices
                    g = gates_x[t * N:(t + 1) * N, :] + jnp.dot(
                        h, w_hh, preferred_element_type=jnp.float32)
                    # Activations on the full 4H = 128-lane slab, then slice.
                    sig = jax.nn.sigmoid(g)
                    tg = jnp.tanh(g)
                    i_g = sig[:, 0 * H:1 * H]
                    f_g = sig[:, 1 * H:2 * H]
                    g_g = tg[:, 2 * H:3 * H]
                    o_g = sig[:, 3 * H:4 * H]
                    c = f_g * c + i_g * g_g
                    h = o_g * jnp.tanh(c)
                    if not last:
                        outs[direction][t] = h
                if last:
                    h_final[direction] = h

            if not last:
                # Assemble next layer input (T*N, 2H) as a value (no scratch).
                fwd_all = jnp.concatenate(outs[0], axis=0)              # (T*N, H)
                bwd_all = jnp.concatenate(outs[1], axis=0)              # (T*N, H)
                layer_in = jnp.concatenate([fwd_all, bwd_all], axis=-1)  # (T*N, 2H)

        # ---- Head: cat(final fwd, final bwd) -> fc -> normalized distance ----
        hcat = jnp.concatenate(h_final, axis=-1)                        # (N, 2H)
        proj = (jnp.dot(hcat, fc_w_ref[...],
                        preferred_element_type=jnp.float32)
                + fc_b_ref[...])                                        # (N, H)
        o1 = proj[:B, :]        # branch 1
        o2 = proj[B:, :]        # branch 2
        diff = o1 - o2
        dist = jnp.sqrt(jnp.sum(diff * diff, axis=1, keepdims=True))
        mag1 = jnp.sqrt(jnp.sum(o1 * o1, axis=1, keepdims=True))
        mag2 = jnp.sqrt(jnp.sum(o2 * o2, axis=1, keepdims=True))
        out_ref[...] = dist * pl.reciprocal(mag1 + mag2, approx=True)

    return kernel


# ----------------------------------------------------------------------------
# Parameter init (matches PyTorch init_weights: xavier for weights, zero bias)
# ----------------------------------------------------------------------------

def xavier_uniform(key, shape):
    fan_out, fan_in = shape
    a = jnp.sqrt(6.0 / (fan_in + fan_out))
    return jax.random.uniform(key, shape, jnp.float32, minval=-a, maxval=a)


def init_params(key, vocab_size, embedding_size, hidden_units, n_layers):
    keys = jax.random.split(key, 2 + 2 * n_layers * 2)
    params = {}
    params["embedding"] = xavier_uniform(keys[0], (vocab_size, embedding_size))
    lstm = []
    k_idx = 1
    for layer in range(n_layers):
        in_size = embedding_size if layer == 0 else 2 * hidden_units
        dirs = []
        for _d in range(2):
            w_ih = xavier_uniform(keys[k_idx], (4 * hidden_units, in_size))
            k_idx += 1
            w_hh = xavier_uniform(keys[k_idx], (4 * hidden_units, hidden_units))
            k_idx += 1
            bias = jnp.zeros((1, 4 * hidden_units), jnp.float32)  # b_ih + b_hh == 0
            dirs.append((w_ih.T, w_hh.T, bias))   # pre-transposed for x @ W
        lstm.append(dirs)
    params["lstm"] = lstm
    w_fc = xavier_uniform(keys[k_idx], (hidden_units, 2 * hidden_units))
    params["fc_w_t"] = w_fc.T                     # (2H, H)
    params["fc_b"] = jnp.zeros((1, hidden_units), jnp.float32)
    return params


# ----------------------------------------------------------------------------
# Forward wrapper (one pallas_call for everything)
# ----------------------------------------------------------------------------

@functools.partial(jax.jit, static_argnums=(3,))
def siamese_forward(ids1, ids2, params, n_layers):
    B, T = ids1.shape
    H = params["fc_b"].shape[-1]
    V, _E = params["embedding"].shape
    N = 2 * B

    # Batch both Siamese branches (shared weights):
    #   rows 0..B-1 -> branch 1, rows B..2B-1 -> branch 2.
    ids = jnp.concatenate([ids1, ids2], axis=0)                # (N, T)
    ids_tm = jnp.transpose(ids, (1, 0)).reshape(T * N, 1)      # (T*N, 1), row = t*N + n
    ids_tm = ids_tm.astype(jnp.int32)

    flat = [ids_tm, params["embedding"]]
    for layer in range(n_layers):
        for d in range(2):
            flat.extend(params["lstm"][layer][d])
    flat.extend([params["fc_w_t"], params["fc_b"]])

    kernel = _make_fused_kernel(T, N, B, H, V, n_layers)
    out = pl.pallas_call(
        kernel,
        out_shape=jax.ShapeDtypeStruct((B, 1), jnp.float32),
        in_specs=[_VMEM_SPEC] * len(flat),
        out_specs=_VMEM_SPEC,
    )(*flat)
    return out.reshape(-1)


# ----------------------------------------------------------------------------
# Main
# ----------------------------------------------------------------------------

if __name__ == "__main__":
    VOCAB = 32
    EMB = 32
    HIDDEN = 32        # 4*H = 128 -> lane aligned
    N_LAYERS = 3
    BATCH = 2
    SEQ = 8

    key = jax.random.PRNGKey(0)
    k_param, k_in1, k_in2 = jax.random.split(key, 3)

    params = init_params(k_param, VOCAB, EMB, HIDDEN, N_LAYERS)
    ids1 = jax.random.randint(k_in1, (BATCH, SEQ), 0, VOCAB, dtype=jnp.int32)
    ids2 = jax.random.randint(k_in2, (BATCH, SEQ), 0, VOCAB, dtype=jnp.int32)

    dist = siamese_forward(ids1, ids2, params, N_LAYERS)
    jax.block_until_ready(dist)
    assert dist.shape == (BATCH,)
    assert bool(jnp.all(jnp.isfinite(dist)))
    print("KERNEL_OK")
</pallas_src>

<mosaic_0001>
module attributes {stable_mosaic.version = 11 : i64} {
  func.func @kernel(%arg0: memref<32x1xi32, #tpu.memory_space<vmem>>, %arg1: memref<32x32xf32, #tpu.memory_space<vmem>>, %arg2: memref<32x128xf32, #tpu.memory_space<vmem>>, %arg3: memref<32x128xf32, #tpu.memory_space<vmem>>, %arg4: memref<1x128xf32, #tpu.memory_space<vmem>>, %arg5: memref<32x128xf32, #tpu.memory_space<vmem>>, %arg6: memref<32x128xf32, #tpu.memory_space<vmem>>, %arg7: memref<1x128xf32, #tpu.memory_space<vmem>>, %arg8: memref<64x128xf32, #tpu.memory_space<vmem>>, %arg9: memref<32x128xf32, #tpu.memory_space<vmem>>, %arg10: memref<1x128xf32, #tpu.memory_space<vmem>>, %arg11: memref<64x128xf32, #tpu.memory_space<vmem>>, %arg12: memref<32x128xf32, #tpu.memory_space<vmem>>, %arg13: memref<1x128xf32, #tpu.memory_space<vmem>>, %arg14: memref<64x128xf32, #tpu.memory_space<vmem>>, %arg15: memref<32x128xf32, #tpu.memory_space<vmem>>, %arg16: memref<1x128xf32, #tpu.memory_space<vmem>>, %arg17: memref<64x128xf32, #tpu.memory_space<vmem>>, %arg18: memref<32x128xf32, #tpu.memory_space<vmem>>, %arg19: memref<1x128xf32, #tpu.memory_space<vmem>>, %arg20: memref<64x32xf32, #tpu.memory_space<vmem>>, %arg21: memref<1x32xf32, #tpu.memory_space<vmem>>, %arg22: memref<2x1xf32, #tpu.memory_space<vmem>>) attributes {dimension_semantics = [], scalar_prefetch = 0 : i64, scratch_operands = 0 : i64, tpu.core_type = #tpu.core_type<tc>} {
    %c0 = arith.constant 0 : index
    %c0_0 = arith.constant 0 : index
    %0 = vector.load %arg0[%c0, %c0_0] : memref<32x1xi32, #tpu.memory_space<vmem>>, vector<32x1xi32>
    %1 = tpu.iota {dimensions = array<i32: 1>} : vector<32x32xi32>
    %2 = vector.broadcast %0 : vector<32x1xi32> to vector<32x32xi32>
    %3 = arith.cmpi eq, %2, %1 : vector<32x32xi32>
    %4 = arith.extui %3 : vector<32x32xi1> to vector<32x32xi32>
    %5 = arith.sitofp %4 : vector<32x32xi32> to vector<32x32xf32>
    %c0_1 = arith.constant 0 : index
    %c0_2 = arith.constant 0 : index
    %6 = vector.load %arg1[%c0_1, %c0_2] : memref<32x32xf32, #tpu.memory_space<vmem>>, vector<32x32xf32>
    %cst = arith.constant dense<0.000000e+00> : vector<32x32xf32>
    %7 = tpu.matmul %5, %6, %cst {dimension_numbers = #tpu.dot_dimension_numbers<[1], [0], [0], [1], [0, 0, 1, 1], [], []>} : vector<32x32xf32>, vector<32x32xf32>, vector<32x32xf32> -> vector<32x32xf32>
    %c0_3 = arith.constant 0 : index
    %c0_4 = arith.constant 0 : index
    %8 = vector.load %arg2[%c0_3, %c0_4] : memref<32x128xf32, #tpu.memory_space<vmem>>, vector<32x128xf32>
    %cst_5 = arith.constant dense<0.000000e+00> : vector<32x128xf32>
    %9 = tpu.matmul %7, %8, %cst_5 {dimension_numbers = #tpu.dot_dimension_numbers<[1], [0], [0], [1], [0, 0, 1, 1], [], []>} : vector<32x32xf32>, vector<32x128xf32>, vector<32x128xf32> -> vector<32x128xf32>
    %c0_6 = arith.constant 0 : index
    %c0_7 = arith.constant 0 : index
    %10 = vector.load %arg4[%c0_6, %c0_7] : memref<1x128xf32, #tpu.memory_space<vmem>>, vector<1x128xf32>
    %11 = vector.broadcast %10 : vector<1x128xf32> to vector<32x128xf32>
    %12 = arith.addf %9, %11 : vector<32x128xf32>
    %c0_8 = arith.constant 0 : index
    %c0_9 = arith.constant 0 : index
    %13 = vector.load %arg3[%c0_8, %c0_9] : memref<32x128xf32, #tpu.memory_space<vmem>>, vector<32x128xf32>
    %cst_10 = arith.constant 0.000000e+00 : f32
    %14 = vector.broadcast %cst_10 : f32 to vector<4x32xf32>
    %cst_11 = arith.constant 0.000000e+00 : f32
    %15 = vector.broadcast %cst_11 : f32 to vector<4x32xf32>
    %16 = vector.extract_strided_slice %12 {offsets = [0, 0], sizes = [4, 128], strides = [1, 1]} : vector<32x128xf32> to vector<4x128xf32>
    %cst_12 = arith.constant dense<0.000000e+00> : vector<4x128xf32>
    %17 = tpu.matmul %14, %13, %cst_12 {dimension_numbers = #tpu.dot_dimension_numbers<[1], [0], [0], [1], [0, 0, 1, 1], [], []>} : vector<4x32xf32>, vector<32x128xf32>, vector<4x128xf32> -> vector<4x128xf32>
    %18 = arith.addf %16, %17 : vector<4x128xf32>
    %19 = arith.negf %18 : vector<4x128xf32>
    %20 = math.exp %19 : vector<4x128xf32>
    %cst_13 = arith.constant 1.000000e+00 : f32
    %21 = vector.broadcast %cst_13 : f32 to vector<4x128xf32>
    %22 = arith.addf %21, %20 : vector<4x128xf32>
    %23 = arith.divf %21, %22 : vector<4x128xf32>
    %24 = math.tanh %18 : vector<4x128xf32>
    %25 = vector.extract_strided_slice %23 {offsets = [0, 0], sizes = [4, 32], strides = [1, 1]} : vector<4x128xf32> to vector<4x32xf32>
    %26 = vector.extract_strided_slice %23 {offsets = [0, 32], sizes = [4, 32], strides = [1, 1]} : vector<4x128xf32> to vector<4x32xf32>
    %27 = vector.extract_strided_slice %24 {offsets = [0, 64], sizes = [4, 32], strides = [1, 1]} : vector<4x128xf32> to vector<4x32xf32>
    %28 = vector.extract_strided_slice %23 {offsets = [0, 96], sizes = [4, 32], strides = [1, 1]} : vector<4x128xf32> to vector<4x32xf32>
    %29 = arith.mulf %26, %15 : vector<4x32xf32>
    %30 = arith.mulf %25, %27 : vector<4x32xf32>
    %31 = arith.addf %29, %30 : vector<4x32xf32>
    %32 = math.tanh %31 : vector<4x32xf32>
    %33 = arith.mulf %28, %32 : vector<4x32xf32>
    %34 = vector.extract_strided_slice %12 {offsets = [4, 0], sizes = [4, 128], strides = [1, 1]} : vector<32x128xf32> to vector<4x128xf32>
    %cst_14 = arith.constant dense<0.000000e+00> : vector<4x128xf32>
    %35 = tpu.matmul %33, %13, %cst_14 {dimension_numbers = #tpu.dot_dimension_numbers<[1], [0], [0], [1], [0, 0, 1, 1], [], []>} : vector<4x32xf32>, vector<32x128xf32>, vector<4x128xf32> -> vector<4x128xf32>
    %36 = arith.addf %34, %35 : vector<4x128xf32>
    %37 = arith.negf %36 : vector<4x128xf32>
    %38 = math.exp %37 : vector<4x128xf32>
    %cst_15 = arith.constant 1.000000e+00 : f32
    %39 = vector.broadcast %cst_15 : f32 to vector<4x128xf32>
    %40 = arith.addf %39, %38 : vector<4x128xf32>
    %41 = arith.divf %39, %40 : vector<4x128xf32>
    %42 = math.tanh %36 : vector<4x128xf32>
    %43 = vector.extract_strided_slice %41 {offsets = [0, 0], sizes = [4, 32], strides = [1, 1]} : vector<4x128xf32> to vector<4x32xf32>
    %44 = vector.extract_strided_slice %41 {offsets = [0, 32], sizes = [4, 32], strides = [1, 1]} : vector<4x128xf32> to vector<4x32xf32>
    %45 = vector.extract_strided_slice %42 {offsets = [0, 64], sizes = [4, 32], strides = [1, 1]} : vector<4x128xf32> to vector<4x32xf32>
    %46 = vector.extract_strided_slice %41 {offsets = [0, 96], sizes = [4, 32], strides = [1, 1]} : vector<4x128xf32> to vector<4x32xf32>
    %47 = arith.mulf %44, %31 : vector<4x32xf32>
    %48 = arith.mulf %43, %45 : vector<4x32xf32>
    %49 = arith.addf %47, %48 : vector<4x32xf32>
    %50 = math.tanh %49 : vector<4x32xf32>
    %51 = arith.mulf %46, %50 : vector<4x32xf32>
    %52 = vector.extract_strided_slice %12 {offsets = [8, 0], sizes = [4, 128], strides = [1, 1]} : vector<32x128xf32> to vector<4x128xf32>
    %cst_16 = arith.constant dense<0.000000e+00> : vector<4x128xf32>
    %53 = tpu.matmul %51, %13, %cst_16 {dimension_numbers = #tpu.dot_dimension_numbers<[1], [0], [0], [1], [0, 0, 1, 1], [], []>} : vector<4x32xf32>, vector<32x128xf32>, vector<4x128xf32> -> vector<4x128xf32>
    %54 = arith.addf %52, %53 : vector<4x128xf32>
    %55 = arith.negf %54 : vector<4x128xf32>
    %56 = math.exp %55 : vector<4x128xf32>
    %cst_17 = arith.constant 1.000000e+00 : f32
    %57 = vector.broadcast %cst_17 : f32 to vector<4x128xf32>
    %58 = arith.addf %57, %56 : vector<4x128xf32>
    %59 = arith.divf %57, %58 : vector<4x128xf32>
    %60 = math.tanh %54 : vector<4x128xf32>
    %61 = vector.extract_strided_slice %59 {offsets = [0, 0], sizes = [4, 32], strides = [1, 1]} : vector<4x128xf32> to vector<4x32xf32>
    %62 = vector.extract_strided_slice %59 {offsets = [0, 32], sizes = [4, 32], strides = [1, 1]} : vector<4x128xf32> to vector<4x32xf32>
    %63 = vector.extract_strided_slice %60 {offsets = [0, 64], sizes = [4, 32], strides = [1, 1]} : vector<4x128xf32> to vector<4x32xf32>
    %64 = vector.extract_strided_slice %59 {offsets = [0, 96], sizes = [4, 32], strides = [1, 1]} : vector<4x128xf32> to vector<4x32xf32>
    %65 = arith.mulf %62, %49 : vector<4x32xf32>
    %66 = arith.mulf %61, %63 : vector<4x32xf32>
    %67 = arith.addf %65, %66 : vector<4x32xf32>
    %68 = math.tanh %67 : vector<4x32xf32>
    %69 = arith.mulf %64, %68 : vector<4x32xf32>
    %70 = vector.extract_strided_slice %12 {offsets = [12, 0], sizes = [4, 128], strides = [1, 1]} : vector<32x128xf32> to vector<4x128xf32>
    %cst_18 = arith.constant dense<0.000000e+00> : vector<4x128xf32>
    %71 = tpu.matmul %69, %13, %cst_18 {dimension_numbers = #tpu.dot_dimension_numbers<[1], [0], [0], [1], [0, 0, 1, 1], [], []>} : vector<4x32xf32>, vector<32x128xf32>, vector<4x128xf32> -> vector<4x128xf32>
    %72 = arith.addf %70, %71 : vector<4x128xf32>
    %73 = arith.negf %72 : vector<4x128xf32>
    %74 = math.exp %73 : vector<4x128xf32>
    %cst_19 = arith.constant 1.000000e+00 : f32
    %75 = vector.broadcast %cst_19 : f32 to vector<4x128xf32>
    %76 = arith.addf %75, %74 : vector<4x128xf32>
    %77 = arith.divf %75, %76 : vector<4x128xf32>
    %78 = math.tanh %72 : vector<4x128xf32>
    %79 = vector.extract_strided_slice %77 {offsets = [0, 0], sizes = [4, 32], strides = [1, 1]} : vector<4x128xf32> to vector<4x32xf32>
    %80 = vector.extract_strided_slice %77 {offsets = [0, 32], sizes = [4, 32], strides = [1, 1]} : vector<4x128xf32> to vector<4x32xf32>
    %81 = vector.extract_strided_slice %78 {offsets = [0, 64], sizes = [4, 32], strides = [1, 1]} : vector<4x128xf32> to vector<4x32xf32>
    %82 = vector.extract_strided_slice %77 {offsets = [0, 96], sizes = [4, 32], strides = [1, 1]} : vector<4x128xf32> to vector<4x32xf32>
    %83 = arith.mulf %80, %67 : vector<4x32xf32>
    %84 = arith.mulf %79, %81 : vector<4x32xf32>
    %85 = arith.addf %83, %84 : vector<4x32xf32>
    %86 = math.tanh %85 : vector<4x32xf32>
    %87 = arith.mulf %82, %86 : vector<4x32xf32>
    %88 = vector.extract_strided_slice %12 {offsets = [16, 0], sizes = [4, 128], strides = [1, 1]} : vector<32x128xf32> to vector<4x128xf32>
    %cst_20 = arith.constant dense<0.000000e+00> : vector<4x128xf32>
    %89 = tpu.matmul %87, %13, %cst_20 {dimension_numbers = #tpu.dot_dimension_numbers<[1], [0], [0], [1], [0, 0, 1, 1], [], []>} : vector<4x32xf32>, vector<32x128xf32>, vector<4x128xf32> -> vector<4x128xf32>
    %90 = arith.addf %88, %89 : vector<4x128xf32>
    %91 = arith.negf %90 : vector<4x128xf32>
    %92 = math.exp %91 : vector<4x128xf32>
    %cst_21 = arith.constant 1.000000e+00 : f32
    %93 = vector.broadcast %cst_21 : f32 to vector<4x128xf32>
    %94 = arith.addf %93, %92 : vector<4x128xf32>
    %95 = arith.divf %93, %94 : vector<4x128xf32>
    %96 = math.tanh %90 : vector<4x128xf32>
    %97 = vector.extract_strided_slice %95 {offsets = [0, 0], sizes = [4, 32], strides = [1, 1]} : vector<4x128xf32> to vector<4x32xf32>
    %98 = vector.extract_strided_slice %95 {offsets = [0, 32], sizes = [4, 32], strides = [1, 1]} : vector<4x128xf32> to vector<4x32xf32>
    %99 = vector.extract_strided_slice %96 {offsets = [0, 64], sizes = [4, 32], strides = [1, 1]} : vector<4x128xf32> to vector<4x32xf32>
    %100 = vector.extract_strided_slice %95 {offsets = [0, 96], sizes = [4, 32], strides = [1, 1]} : vector<4x128xf32> to vector<4x32xf32>
    %101 = arith.mulf %98, %85 : vector<4x32xf32>
    %102 = arith.mulf %97, %99 : vector<4x32xf32>
    %103 = arith.addf %101, %102 : vector<4x32xf32>
    %104 = math.tanh %103 : vector<4x32xf32>
    %105 = arith.mulf %100, %104 : vector<4x32xf32>
    %106 = vector.extract_strided_slice %12 {offsets = [20, 0], sizes = [4, 128], strides = [1, 1]} : vector<32x128xf32> to vector<4x128xf32>
    %cst_22 = arith.constant dense<0.000000e+00> : vector<4x128xf32>
    %107 = tpu.matmul %105, %13, %cst_22 {dimension_numbers = #tpu.dot_dimension_numbers<[1], [0], [0], [1], [0, 0, 1, 1], [], []>} : vector<4x32xf32>, vector<32x128xf32>, vector<4x128xf32> -> vector<4x128xf32>
    %108 = arith.addf %106, %107 : vector<4x128xf32>
    %109 = arith.negf %108 : vector<4x128xf32>
    %110 = math.exp %109 : vector<4x128xf32>
    %cst_23 = arith.constant 1.000000e+00 : f32
    %111 = vector.broadcast %cst_23 : f32 to vector<4x128xf32>
    %112 = arith.addf %111, %110 : vector<4x128xf32>
    %113 = arith.divf %111, %112 : vector<4x128xf32>
    %114 = math.tanh %108 : vector<4x128xf32>
    %115 = vector.extract_strided_slice %113 {offsets = [0, 0], sizes = [4, 32], strides = [1, 1]} : vector<4x128xf32> to vector<4x32xf32>
    %116 = vector.extract_strided_slice %113 {offsets = [0, 32], sizes = [4, 32], strides = [1, 1]} : vector<4x128xf32> to vector<4x32xf32>
    %117 = vector.extract_strided_slice %114 {offsets = [0, 64], sizes = [4, 32], strides = [1, 1]} : vector<4x128xf32> to vector<4x32xf32>
    %118 = vector.extract_strided_slice %113 {offsets = [0, 96], sizes = [4, 32], strides = [1, 1]} : vector<4x128xf32> to vector<4x32xf32>
    %119 = arith.mulf %116, %103 : vector<4x32xf32>
    %120 = arith.mulf %115, %117 : vector<4x32xf32>
    %121 = arith.addf %119, %120 : vector<4x32xf32>
    %122 = math.tanh %121 : vector<4x32xf32>
    %123 = arith.mulf %118, %122 : vector<4x32xf32>
    %124 = vector.extract_strided_slice %12 {offsets = [24, 0], sizes = [4, 128], strides = [1, 1]} : vector<32x128xf32> to vector<4x128xf32>
    %cst_24 = arith.constant dense<0.000000e+00> : vector<4x128xf32>
    %125 = tpu.matmul %123, %13, %cst_24 {dimension_numbers = #tpu.dot_dimension_numbers<[1], [0], [0], [1], [0, 0, 1, 1], [], []>} : vector<4x32xf32>, vector<32x128xf32>, vector<4x128xf32> -> vector<4x128xf32>
    %126 = arith.addf %124, %125 : vector<4x128xf32>
    %127 = arith.negf %126 : vector<4x128xf32>
    %128 = math.exp %127 : vector<4x128xf32>
    %cst_25 = arith.constant 1.000000e+00 : f32
    %129 = vector.broadcast %cst_25 : f32 to vector<4x128xf32>
    %130 = arith.addf %129, %128 : vector<4x128xf32>
    %131 = arith.divf %129, %130 : vector<4x128xf32>
    %132 = math.tanh %126 : vector<4x128xf32>
    %133 = vector.extract_strided_slice %131 {offsets = [0, 0], sizes = [4, 32], strides = [1, 1]} : vector<4x128xf32> to vector<4x32xf32>
    %134 = vector.extract_strided_slice %131 {offsets = [0, 32], sizes = [4, 32], strides = [1, 1]} : vector<4x128xf32> to vector<4x32xf32>
    %135 = vector.extract_strided_slice %132 {offsets = [0, 64], sizes = [4, 32], strides = [1, 1]} : vector<4x128xf32> to vector<4x32xf32>
    %136 = vector.extract_strided_slice %131 {offsets = [0, 96], sizes = [4, 32], strides = [1, 1]} : vector<4x128xf32> to vector<4x32xf32>
    %137 = arith.mulf %134, %121 : vector<4x32xf32>
    %138 = arith.mulf %133, %135 : vector<4x32xf32>
    %139 = arith.addf %137, %138 : vector<4x32xf32>
    %140 = math.tanh %139 : vector<4x32xf32>
    %141 = arith.mulf %136, %140 : vector<4x32xf32>
    %142 = vector.extract_strided_slice %12 {offsets = [28, 0], sizes = [4, 128], strides = [1, 1]} : vector<32x128xf32> to vector<4x128xf32>
    %cst_26 = arith.constant dense<0.000000e+00> : vector<4x128xf32>
    %143 = tpu.matmul %141, %13, %cst_26 {dimension_numbers = #tpu.dot_dimension_numbers<[1], [0], [0], [1], [0, 0, 1, 1], [], []>} : vector<4x32xf32>, vector<32x128xf32>, vector<4x128xf32> -> vector<4x128xf32>
    %144 = arith.addf %142, %143 : vector<4x128xf32>
    %145 = arith.negf %144 : vector<4x128xf32>
    %146 = math.exp %145 : vector<4x128xf32>
    %cst_27 = arith.constant 1.000000e+00 : f32
    %147 = vector.broadcast %cst_27 : f32 to vector<4x128xf32>
    %148 = arith.addf %147, %146 : vector<4x128xf32>
    %149 = arith.divf %147, %148 : vector<4x128xf32>
    %150 = math.tanh %144 : vector<4x128xf32>
    %151 = vector.extract_strided_slice %149 {offsets = [0, 0], sizes = [4, 32], strides = [1, 1]} : vector<4x128xf32> to vector<4x32xf32>
    %152 = vector.extract_strided_slice %149 {offsets = [0, 32], sizes = [4, 32], strides = [1, 1]} : vector<4x128xf32> to vector<4x32xf32>
    %153 = vector.extract_strided_slice %150 {offsets = [0, 64], sizes = [4, 32], strides = [1, 1]} : vector<4x128xf32> to vector<4x32xf32>
    %154 = vector.extract_strided_slice %149 {offsets = [0, 96], sizes = [4, 32], strides = [1, 1]} : vector<4x128xf32> to vector<4x32xf32>
    %155 = arith.mulf %152, %139 : vector<4x32xf32>
    %156 = arith.mulf %151, %153 : vector<4x32xf32>
    %157 = arith.addf %155, %156 : vector<4x32xf32>
    %158 = math.tanh %157 : vector<4x32xf32>
    %159 = arith.mulf %154, %158 : vector<4x32xf32>
    %c0_28 = arith.constant 0 : index
    %c0_29 = arith.constant 0 : index
    %160 = vector.load %arg5[%c0_28, %c0_29] : memref<32x128xf32, #tpu.memory_space<vmem>>, vector<32x128xf32>
    %cst_30 = arith.constant dense<0.000000e+00> : vector<32x128xf32>
    %161 = tpu.matmul %7, %160, %cst_30 {dimension_numbers = #tpu.dot_dimension_numbers<[1], [0], [0], [1], [0, 0, 1, 1], [], []>} : vector<32x32xf32>, vector<32x128xf32>, vector<32x128xf32> -> vector<32x128xf32>
    %c0_31 = arith.constant 0 : index
    %c0_32 = arith.constant 0 : index
    %162 = vector.load %arg7[%c0_31, %c0_32] : memref<1x128xf32, #tpu.memory_space<vmem>>, vector<1x128xf32>
    %163 = vector.broadcast %162 : vector<1x128xf32> to vector<32x128xf32>
    %164 = arith.addf %161, %163 : vector<32x128xf32>
    %c0_33 = arith.constant 0 : index
    %c0_34 = arith.constant 0 : index
    %165 = vector.load %arg6[%c0_33, %c0_34] : memref<32x128xf32, #tpu.memory_space<vmem>>, vector<32x128xf32>
    %cst_35 = arith.constant 0.000000e+00 : f32
    %166 = vector.broadcast %cst_35 : f32 to vector<4x32xf32>
    %cst_36 = arith.constant 0.000000e+00 : f32
    %167 = vector.broadcast %cst_36 : f32 to vector<4x32xf32>
    %168 = vector.extract_strided_slice %164 {offsets = [28, 0], sizes = [4, 128], strides = [1, 1]} : vector<32x128xf32> to vector<4x128xf32>
    %cst_37 = arith.constant dense<0.000000e+00> : vector<4x128xf32>
    %169 = tpu.matmul %166, %165, %cst_37 {dimension_numbers = #tpu.dot_dimension_numbers<[1], [0], [0], [1], [0, 0, 1, 1], [], []>} : vector<4x32xf32>, vector<32x128xf32>, vector<4x128xf32> -> vector<4x128xf32>
    %170 = arith.addf %168, %169 : vector<4x128xf32>
    %171 = arith.negf %170 : vector<4x128xf32>
    %172 = math.exp %171 : vector<4x128xf32>
    %cst_38 = arith.constant 1.000000e+00 : f32
    %173 = vector.broadcast %cst_38 : f32 to vector<4x128xf32>
    %174 = arith.addf %173, %172 : vector<4x128xf32>
    %175 = arith.divf %173, %174 : vector<4x128xf32>
    %176 = math.tanh %170 : vector<4x128xf32>
    %177 = vector.extract_strided_slice %175 {offsets = [0, 0], sizes = [4, 32], strides = [1, 1]} : vector<4x128xf32> to vector<4x32xf32>
    %178 = vector.extract_strided_slice %175 {offsets = [0, 32], sizes = [4, 32], strides = [1, 1]} : vector<4x128xf32> to vector<4x32xf32>
    %179 = vector.extract_strided_slice %176 {offsets = [0, 64], sizes = [4, 32], strides = [1, 1]} : vector<4x128xf32> to vector<4x32xf32>
    %180 = vector.extract_strided_slice %175 {offsets = [0, 96], sizes = [4, 32], strides = [1, 1]} : vector<4x128xf32> to vector<4x32xf32>
    %181 = arith.mulf %178, %167 : vector<4x32xf32>
    %182 = arith.mulf %177, %179 : vector<4x32xf32>
    %183 = arith.addf %181, %182 : vector<4x32xf32>
    %184 = math.tanh %183 : vector<4x32xf32>
    %185 = arith.mulf %180, %184 : vector<4x32xf32>
    %186 = vector.extract_strided_slice %164 {offsets = [24, 0], sizes = [4, 128], strides = [1, 1]} : vector<32x128xf32> to vector<4x128xf32>
    %cst_39 = arith.constant dense<0.000000e+00> : vector<4x128xf32>
    %187 = tpu.matmul %185, %165, %cst_39 {dimension_numbers = #tpu.dot_dimension_numbers<[1], [0], [0], [1], [0, 0, 1, 1], [], []>} : vector<4x32xf32>, vector<32x128xf32>, vector<4x128xf32> -> vector<4x128xf32>
    %188 = arith.addf %186, %187 : vector<4x128xf32>
    %189 = arith.negf %188 : vector<4x128xf32>
    %190 = math.exp %189 : vector<4x128xf32>
    %cst_40 = arith.constant 1.000000e+00 : f32
    %191 = vector.broadcast %cst_40 : f32 to vector<4x128xf32>
    %192 = arith.addf %191, %190 : vector<4x128xf32>
    %193 = arith.divf %191, %192 : vector<4x128xf32>
    %194 = math.tanh %188 : vector<4x128xf32>
    %195 = vector.extract_strided_slice %193 {offsets = [0, 0], sizes = [4, 32], strides = [1, 1]} : vector<4x128xf32> to vector<4x32xf32>
    %196 = vector.extract_strided_slice %193 {offsets = [0, 32], sizes = [4, 32], strides = [1, 1]} : vector<4x128xf32> to vector<4x32xf32>
    %197 = vector.extract_strided_slice %194 {offsets = [0, 64], sizes = [4, 32], strides = [1, 1]} : vector<4x128xf32> to vector<4x32xf32>
    %198 = vector.extract_strided_slice %193 {offsets = [0, 96], sizes = [4, 32], strides = [1, 1]} : vector<4x128xf32> to vector<4x32xf32>
    %199 = arith.mulf %196, %183 : vector<4x32xf32>
    %200 = arith.mulf %195, %197 : vector<4x32xf32>
    %201 = arith.addf %199, %200 : vector<4x32xf32>
    %202 = math.tanh %201 : vector<4x32xf32>
    %203 = arith.mulf %198, %202 : vector<4x32xf32>
    %204 = vector.extract_strided_slice %164 {offsets = [20, 0], sizes = [4, 128], strides = [1, 1]} : vector<32x128xf32> to vector<4x128xf32>
    %cst_41 = arith.constant dense<0.000000e+00> : vector<4x128xf32>
    %205 = tpu.matmul %203, %165, %cst_41 {dimension_numbers = #tpu.dot_dimension_numbers<[1], [0], [0], [1], [0, 0, 1, 1], [], []>} : vector<4x32xf32>, vector<32x128xf32>, vector<4x128xf32> -> vector<4x128xf32>
    %206 = arith.addf %204, %205 : vector<4x128xf32>
    %207 = arith.negf %206 : vector<4x128xf32>
    %208 = math.exp %207 : vector<4x128xf32>
    %cst_42 = arith.constant 1.000000e+00 : f32
    %209 = vector.broadcast %cst_42 : f32 to vector<4x128xf32>
    %210 = arith.addf %209, %208 : vector<4x128xf32>
    %211 = arith.divf %209, %210 : vector<4x128xf32>
    %212 = math.tanh %206 : vector<4x128xf32>
    %213 = vector.extract_strided_slice %211 {offsets = [0, 0], sizes = [4, 32], strides = [1, 1]} : vector<4x128xf32> to vector<4x32xf32>
    %214 = vector.extract_strided_slice %211 {offsets = [0, 32], sizes = [4, 32], strides = [1, 1]} : vector<4x128xf32> to vector<4x32xf32>
    %215 = vector.extract_strided_slice %212 {offsets = [0, 64], sizes = [4, 32], strides = [1, 1]} : vector<4x128xf32> to vector<4x32xf32>
    %216 = vector.extract_strided_slice %211 {offsets = [0, 96], sizes = [4, 32], strides = [1, 1]} : vector<4x128xf32> to vector<4x32xf32>
    %217 = arith.mulf %214, %201 : vector<4x32xf32>
    %218 = arith.mulf %213, %215 : vector<4x32xf32>
    %219 = arith.addf %217, %218 : vector<4x32xf32>
    %220 = math.tanh %219 : vector<4x32xf32>
    %221 = arith.mulf %216, %220 : vector<4x32xf32>
    %222 = vector.extract_strided_slice %164 {offsets = [16, 0], sizes = [4, 128], strides = [1, 1]} : vector<32x128xf32> to vector<4x128xf32>
    %cst_43 = arith.constant dense<0.000000e+00> : vector<4x128xf32>
    %223 = tpu.matmul %221, %165, %cst_43 {dimension_numbers = #tpu.dot_dimension_numbers<[1], [0], [0], [1], [0, 0, 1, 1], [], []>} : vector<4x32xf32>, vector<32x128xf32>, vector<4x128xf32> -> vector<4x128xf32>
    %224 = arith.addf %222, %223 : vector<4x128xf32>
    %225 = arith.negf %224 : vector<4x128xf32>
    %226 = math.exp %225 : vector<4x128xf32>
    %cst_44 = arith.constant 1.000000e+00 : f32
    %227 = vector.broadcast %cst_44 : f32 to vector<4x128xf32>
    %228 = arith.addf %227, %226 : vector<4x128xf32>
    %229 = arith.divf %227, %228 : vector<4x128xf32>
    %230 = math.tanh %224 : vector<4x128xf32>
    %231 = vector.extract_strided_slice %229 {offsets = [0, 0], sizes = [4, 32], strides = [1, 1]} : vector<4x128xf32> to vector<4x32xf32>
    %232 = vector.extract_strided_slice %229 {offsets = [0, 32], sizes = [4, 32], strides = [1, 1]} : vector<4x128xf32> to vector<4x32xf32>
    %233 = vector.extract_strided_slice %230 {offsets = [0, 64], sizes = [4, 32], strides = [1, 1]} : vector<4x128xf32> to vector<4x32xf32>
    %234 = vector.extract_strided_slice %229 {offsets = [0, 96], sizes = [4, 32], strides = [1, 1]} : vector<4x128xf32> to vector<4x32xf32>
    %235 = arith.mulf %232, %219 : vector<4x32xf32>
    %236 = arith.mulf %231, %233 : vector<4x32xf32>
    %237 = arith.addf %235, %236 : vector<4x32xf32>
    %238 = math.tanh %237 : vector<4x32xf32>
    %239 = arith.mulf %234, %238 : vector<4x32xf32>
    %240 = vector.extract_strided_slice %164 {offsets = [12, 0], sizes = [4, 128], strides = [1, 1]} : vector<32x128xf32> to vector<4x128xf32>
    %cst_45 = arith.constant dense<0.000000e+00> : vector<4x128xf32>
    %241 = tpu.matmul %239, %165, %cst_45 {dimension_numbers = #tpu.dot_dimension_numbers<[1], [0], [0], [1], [0, 0, 1, 1], [], []>} : vector<4x32xf32>, vector<32x128xf32>, vector<4x128xf32> -> vector<4x128xf32>
    %242 = arith.addf %240, %241 : vector<4x128xf32>
    %243 = arith.negf %242 : vector<4x128xf32>
    %244 = math.exp %243 : vector<4x128xf32>
    %cst_46 = arith.constant 1.000000e+00 : f32
    %245 = vector.broadcast %cst_46 : f32 to vector<4x128xf32>
    %246 = arith.addf %245, %244 : vector<4x128xf32>
    %247 = arith.divf %245, %246 : vector<4x128xf32>
    %248 = math.tanh %242 : vector<4x128xf32>
    %249 = vector.extract_strided_slice %247 {offsets = [0, 0], sizes = [4, 32], strides = [1, 1]} : vector<4x128xf32> to vector<4x32xf32>
    %250 = vector.extract_strided_slice %247 {offsets = [0, 32], sizes = [4, 32], strides = [1, 1]} : vector<4x128xf32> to vector<4x32xf32>
    %251 = vector.extract_strided_slice %248 {offsets = [0, 64], sizes = [4, 32], strides = [1, 1]} : vector<4x128xf32> to vector<4x32xf32>
    %252 = vector.extract_strided_slice %247 {offsets = [0, 96], sizes = [4, 32], strides = [1, 1]} : vector<4x128xf32> to vector<4x32xf32>
    %253 = arith.mulf %250, %237 : vector<4x32xf32>
    %254 = arith.mulf %249, %251 : vector<4x32xf32>
    %255 = arith.addf %253, %254 : vector<4x32xf32>
    %256 = math.tanh %255 : vector<4x32xf32>
    %257 = arith.mulf %252, %256 : vector<4x32xf32>
    %258 = vector.extract_strided_slice %164 {offsets = [8, 0], sizes = [4, 128], strides = [1, 1]} : vector<32x128xf32> to vector<4x128xf32>
    %cst_47 = arith.constant dense<0.000000e+00> : vector<4x128xf32>
    %259 = tpu.matmul %257, %165, %cst_47 {dimension_numbers = #tpu.dot_dimension_numbers<[1], [0], [0], [1], [0, 0, 1, 1], [], []>} : vector<4x32xf32>, vector<32x128xf32>, vector<4x128xf32> -> vector<4x128xf32>
    %260 = arith.addf %258, %259 : vector<4x128xf32>
    %261 = arith.negf %260 : vector<4x128xf32>
    %262 = math.exp %261 : vector<4x128xf32>
    %cst_48 = arith.constant 1.000000e+00 : f32
    %263 = vector.broadcast %cst_48 : f32 to vector<4x128xf32>
    %264 = arith.addf %263, %262 : vector<4x128xf32>
    %265 = arith.divf %263, %264 : vector<4x128xf32>
    %266 = math.tanh %260 : vector<4x128xf32>
    %267 = vector.extract_strided_slice %265 {offsets = [0, 0], sizes = [4, 32], strides = [1, 1]} : vector<4x128xf32> to vector<4x32xf32>
    %268 = vector.extract_strided_slice %265 {offsets = [0, 32], sizes = [4, 32], strides = [1, 1]} : vector<4x128xf32> to vector<4x32xf32>
    %269 = vector.extract_strided_slice %266 {offsets = [0, 64], sizes = [4, 32], strides = [1, 1]} : vector<4x128xf32> to vector<4x32xf32>
    %270 = vector.extract_strided_slice %265 {offsets = [0, 96], sizes = [4, 32], strides = [1, 1]} : vector<4x128xf32> to vector<4x32xf32>
    %271 = arith.mulf %268, %255 : vector<4x32xf32>
    %272 = arith.mulf %267, %269 : vector<4x32xf32>
    %273 = arith.addf %271, %272 : vector<4x32xf32>
    %274 = math.tanh %273 : vector<4x32xf32>
    %275 = arith.mulf %270, %274 : vector<4x32xf32>
    %276 = vector.extract_strided_slice %164 {offsets = [4, 0], sizes = [4, 128], strides = [1, 1]} : vector<32x128xf32> to vector<4x128xf32>
    %cst_49 = arith.constant dense<0.000000e+00> : vector<4x128xf32>
    %277 = tpu.matmul %275, %165, %cst_49 {dimension_numbers = #tpu.dot_dimension_numbers<[1], [0], [0], [1], [0, 0, 1, 1], [], []>} : vector<4x32xf32>, vector<32x128xf32>, vector<4x128xf32> -> vector<4x128xf32>
    %278 = arith.addf %276, %277 : vector<4x128xf32>
    %279 = arith.negf %278 : vector<4x128xf32>
    %280 = math.exp %279 : vector<4x128xf32>
    %cst_50 = arith.constant 1.000000e+00 : f32
    %281 = vector.broadcast %cst_50 : f32 to vector<4x128xf32>
    %282 = arith.addf %281, %280 : vector<4x128xf32>
    %283 = arith.divf %281, %282 : vector<4x128xf32>
    %284 = math.tanh %278 : vector<4x128xf32>
    %285 = vector.extract_strided_slice %283 {offsets = [0, 0], sizes = [4, 32], strides = [1, 1]} : vector<4x128xf32> to vector<4x32xf32>
    %286 = vector.extract_strided_slice %283 {offsets = [0, 32], sizes = [4, 32], strides = [1, 1]} : vector<4x128xf32> to vector<4x32xf32>
    %287 = vector.extract_strided_slice %284 {offsets = [0, 64], sizes = [4, 32], strides = [1, 1]} : vector<4x128xf32> to vector<4x32xf32>
    %288 = vector.extract_strided_slice %283 {offsets = [0, 96], sizes = [4, 32], strides = [1, 1]} : vector<4x128xf32> to vector<4x32xf32>
    %289 = arith.mulf %286, %273 : vector<4x32xf32>
    %290 = arith.mulf %285, %287 : vector<4x32xf32>
    %291 = arith.addf %289, %290 : vector<4x32xf32>
    %292 = math.tanh %291 : vector<4x32xf32>
    %293 = arith.mulf %288, %292 : vector<4x32xf32>
    %294 = vector.extract_strided_slice %164 {offsets = [0, 0], sizes = [4, 128], strides = [1, 1]} : vector<32x128xf32> to vector<4x128xf32>
    %cst_51 = arith.constant dense<0.000000e+00> : vector<4x128xf32>
    %295 = tpu.matmul %293, %165, %cst_51 {dimension_numbers = #tpu.dot_dimension_numbers<[1], [0], [0], [1], [0, 0, 1, 1], [], []>} : vector<4x32xf32>, vector<32x128xf32>, vector<4x128xf32> -> vector<4x128xf32>
    %296 = arith.addf %294, %295 : vector<4x128xf32>
    %297 = arith.negf %296 : vector<4x128xf32>
    %298 = math.exp %297 : vector<4x128xf32>
    %cst_52 = arith.constant 1.000000e+00 : f32
    %299 = vector.broadcast %cst_52 : f32 to vector<4x128xf32>
    %300 = arith.addf %299, %298 : vector<4x128xf32>
    %301 = arith.divf %299, %300 : vector<4x128xf32>
    %302 = math.tanh %296 : vector<4x128xf32>
    %303 = vector.extract_strided_slice %301 {offsets = [0, 0], sizes = [4, 32], strides = [1, 1]} : vector<4x128xf32> to vector<4x32xf32>
    %304 = vector.extract_strided_slice %301 {offsets = [0, 32], sizes = [4, 32], strides = [1, 1]} : vector<4x128xf32> to vector<4x32xf32>
    %305 = vector.extract_strided_slice %302 {offsets = [0, 64], sizes = [4, 32], strides = [1, 1]} : vector<4x128xf32> to vector<4x32xf32>
    %306 = vector.extract_strided_slice %301 {offsets = [0, 96], sizes = [4, 32], strides = [1, 1]} : vector<4x128xf32> to vector<4x32xf32>
    %307 = arith.mulf %304, %291 : vector<4x32xf32>
    %308 = arith.mulf %303, %305 : vector<4x32xf32>
    %309 = arith.addf %307, %308 : vector<4x32xf32>
    %310 = math.tanh %309 : vector<4x32xf32>
    %311 = arith.mulf %306, %310 : vector<4x32xf32>
    %312 = tpu.concatenate %33, %51, %69, %87, %105, %123, %141, %159 in 0 : vector<4x32xf32>, vector<4x32xf32>, vector<4x32xf32>, vector<4x32xf32>, vector<4x32xf32>, vector<4x32xf32>, vector<4x32xf32>, vector<4x32xf32> -> vector<32x32xf32>
    %313 = tpu.concatenate %311, %293, %275, %257, %239, %221, %203, %185 in 0 : vector<4x32xf32>, vector<4x32xf32>, vector<4x32xf32>, vector<4x32xf32>, vector<4x32xf32>, vector<4x32xf32>, vector<4x32xf32>, vector<4x32xf32> -> vector<32x32xf32>
    %314 = tpu.concatenate %312, %313 in 1 : vector<32x32xf32>, vector<32x32xf32> -> vector<32x64xf32>
    %c0_53 = arith.constant 0 : index
    %c0_54 = arith.constant 0 : index
    %315 = vector.load %arg8[%c0_53, %c0_54] : memref<64x128xf32, #tpu.memory_space<vmem>>, vector<64x128xf32>
    %cst_55 = arith.constant dense<0.000000e+00> : vector<32x128xf32>
    %316 = tpu.matmul %314, %315, %cst_55 {dimension_numbers = #tpu.dot_dimension_numbers<[1], [0], [0], [1], [0, 0, 1, 1], [], []>} : vector<32x64xf32>, vector<64x128xf32>, vector<32x128xf32> -> vector<32x128xf32>
    %c0_56 = arith.constant 0 : index
    %c0_57 = arith.constant 0 : index
    %317 = vector.load %arg10[%c0_56, %c0_57] : memref<1x128xf32, #tpu.memory_space<vmem>>, vector<1x128xf32>
    %318 = vector.broadcast %317 : vector<1x128xf32> to vector<32x128xf32>
    %319 = arith.addf %316, %318 : vector<32x128xf32>
    %c0_58 = arith.constant 0 : index
    %c0_59 = arith.constant 0 : index
    %320 = vector.load %arg9[%c0_58, %c0_59] : memref<32x128xf32, #tpu.memory_space<vmem>>, vector<32x128xf32>
    %cst_60 = arith.constant 0.000000e+00 : f32
    %321 = vector.broadcast %cst_60 : f32 to vector<4x32xf32>
    %cst_61 = arith.constant 0.000000e+00 : f32
    %322 = vector.broadcast %cst_61 : f32 to vector<4x32xf32>
    %323 = vector.extract_strided_slice %319 {offsets = [0, 0], sizes = [4, 128], strides = [1, 1]} : vector<32x128xf32> to vector<4x128xf32>
    %cst_62 = arith.constant dense<0.000000e+00> : vector<4x128xf32>
    %324 = tpu.matmul %321, %320, %cst_62 {dimension_numbers = #tpu.dot_dimension_numbers<[1], [0], [0], [1], [0, 0, 1, 1], [], []>} : vector<4x32xf32>, vector<32x128xf32>, vector<4x128xf32> -> vector<4x128xf32>
    %325 = arith.addf %323, %324 : vector<4x128xf32>
    %326 = arith.negf %325 : vector<4x128xf32>
    %327 = math.exp %326 : vector<4x128xf32>
    %cst_63 = arith.constant 1.000000e+00 : f32
    %328 = vector.broadcast %cst_63 : f32 to vector<4x128xf32>
    %329 = arith.addf %328, %327 : vector<4x128xf32>
    %330 = arith.divf %328, %329 : vector<4x128xf32>
    %331 = math.tanh %325 : vector<4x128xf32>
    %332 = vector.extract_strided_slice %330 {offsets = [0, 0], sizes = [4, 32], strides = [1, 1]} : vector<4x128xf32> to vector<4x32xf32>
    %333 = vector.extract_strided_slice %330 {offsets = [0, 32], sizes = [4, 32], strides = [1, 1]} : vector<4x128xf32> to vector<4x32xf32>
    %334 = vector.extract_strided_slice %331 {offsets = [0, 64], sizes = [4, 32], strides = [1, 1]} : vector<4x128xf32> to vector<4x32xf32>
    %335 = vector.extract_strided_slice %330 {offsets = [0, 96], sizes = [4, 32], strides = [1, 1]} : vector<4x128xf32> to vector<4x32xf32>
    %336 = arith.mulf %333, %322 : vector<4x32xf32>
    %337 = arith.mulf %332, %334 : vector<4x32xf32>
    %338 = arith.addf %336, %337 : vector<4x32xf32>
    %339 = math.tanh %338 : vector<4x32xf32>
    %340 = arith.mulf %335, %339 : vector<4x32xf32>
    %341 = vector.extract_strided_slice %319 {offsets = [4, 0], sizes = [4, 128], strides = [1, 1]} : vector<32x128xf32> to vector<4x128xf32>
    %cst_64 = arith.constant dense<0.000000e+00> : vector<4x128xf32>
    %342 = tpu.matmul %340, %320, %cst_64 {dimension_numbers = #tpu.dot_dimension_numbers<[1], [0], [0], [1], [0, 0, 1, 1], [], []>} : vector<4x32xf32>, vector<32x128xf32>, vector<4x128xf32> -> vector<4x128xf32>
    %343 = arith.addf %341, %342 : vector<4x128xf32>
    %344 = arith.negf %343 : vector<4x128xf32>
    %345 = math.exp %344 : vector<4x128xf32>
    %cst_65 = arith.constant 1.000000e+00 : f32
    %346 = vector.broadcast %cst_65 : f32 to vector<4x128xf32>
    %347 = arith.addf %346, %345 : vector<4x128xf32>
    %348 = arith.divf %346, %347 : vector<4x128xf32>
    %349 = math.tanh %343 : vector<4x128xf32>
    %350 = vector.extract_strided_slice %348 {offsets = [0, 0], sizes = [4, 32], strides = [1, 1]} : vector<4x128xf32> to vector<4x32xf32>
    %351 = vector.extract_strided_slice %348 {offsets = [0, 32], sizes = [4, 32], strides = [1, 1]} : vector<4x128xf32> to vector<4x32xf32>
    %352 = vector.extract_strided_slice %349 {offsets = [0, 64], sizes = [4, 32], strides = [1, 1]} : vector<4x128xf32> to vector<4x32xf32>
    %353 = vector.extract_strided_slice %348 {offsets = [0, 96], sizes = [4, 32], strides = [1, 1]} : vector<4x128xf32> to vector<4x32xf32>
    %354 = arith.mulf %351, %338 : vector<4x32xf32>
    %355 = arith.mulf %350, %352 : vector<4x32xf32>
    %356 = arith.addf %354, %355 : vector<4x32xf32>
    %357 = math.tanh %356 : vector<4x32xf32>
    %358 = arith.mulf %353, %357 : vector<4x32xf32>
    %359 = vector.extract_strided_slice %319 {offsets = [8, 0], sizes = [4, 128], strides = [1, 1]} : vector<32x128xf32> to vector<4x128xf32>
    %cst_66 = arith.constant dense<0.000000e+00> : vector<4x128xf32>
    %360 = tpu.matmul %358, %320, %cst_66 {dimension_numbers = #tpu.dot_dimension_numbers<[1], [0], [0], [1], [0, 0, 1, 1], [], []>} : vector<4x32xf32>, vector<32x128xf32>, vector<4x128xf32> -> vector<4x128xf32>
    %361 = arith.addf %359, %360 : vector<4x128xf32>
    %362 = arith.negf %361 : vector<4x128xf32>
    %363 = math.exp %362 : vector<4x128xf32>
    %cst_67 = arith.constant 1.000000e+00 : f32
    %364 = vector.broadcast %cst_67 : f32 to vector<4x128xf32>
    %365 = arith.addf %364, %363 : vector<4x128xf32>
    %366 = arith.divf %364, %365 : vector<4x128xf32>
    %367 = math.tanh %361 : vector<4x128xf32>
    %368 = vector.extract_strided_slice %366 {offsets = [0, 0], sizes = [4, 32], strides = [1, 1]} : vector<4x128xf32> to vector<4x32xf32>
    %369 = vector.extract_strided_slice %366 {offsets = [0, 32], sizes = [4, 32], strides = [1, 1]} : vector<4x128xf32> to vector<4x32xf32>
    %370 = vector.extract_strided_slice %367 {offsets = [0, 64], sizes = [4, 32], strides = [1, 1]} : vector<4x128xf32> to vector<4x32xf32>
    %371 = vector.extract_strided_slice %366 {offsets = [0, 96], sizes = [4, 32], strides = [1, 1]} : vector<4x128xf32> to vector<4x32xf32>
    %372 = arith.mulf %369, %356 : vector<4x32xf32>
    %373 = arith.mulf %368, %370 : vector<4x32xf32>
    %374 = arith.addf %372, %373 : vector<4x32xf32>
    %375 = math.tanh %374 : vector<4x32xf32>
    %376 = arith.mulf %371, %375 : vector<4x32xf32>
    %377 = vector.extract_strided_slice %319 {offsets = [12, 0], sizes = [4, 128], strides = [1, 1]} : vector<32x128xf32> to vector<4x128xf32>
    %cst_68 = arith.constant dense<0.000000e+00> : vector<4x128xf32>
    %378 = tpu.matmul %376, %320, %cst_68 {dimension_numbers = #tpu.dot_dimension_numbers<[1], [0], [0], [1], [0, 0, 1, 1], [], []>} : vector<4x32xf32>, vector<32x128xf32>, vector<4x128xf32> -> vector<4x128xf32>
    %379 = arith.addf %377, %378 : vector<4x128xf32>
    %380 = arith.negf %379 : vector<4x128xf32>
    %381 = math.exp %380 : vector<4x128xf32>
    %cst_69 = arith.constant 1.000000e+00 : f32
    %382 = vector.broadcast %cst_69 : f32 to vector<4x128xf32>
    %383 = arith.addf %382, %381 : vector<4x128xf32>
    %384 = arith.divf %382, %383 : vector<4x128xf32>
    %385 = math.tanh %379 : vector<4x128xf32>
    %386 = vector.extract_strided_slice %384 {offsets = [0, 0], sizes = [4, 32], strides = [1, 1]} : vector<4x128xf32> to vector<4x32xf32>
    %387 = vector.extract_strided_slice %384 {offsets = [0, 32], sizes = [4, 32], strides = [1, 1]} : vector<4x128xf32> to vector<4x32xf32>
    %388 = vector.extract_strided_slice %385 {offsets = [0, 64], sizes = [4, 32], strides = [1, 1]} : vector<4x128xf32> to vector<4x32xf32>
    %389 = vector.extract_strided_slice %384 {offsets = [0, 96], sizes = [4, 32], strides = [1, 1]} : vector<4x128xf32> to vector<4x32xf32>
    %390 = arith.mulf %387, %374 : vector<4x32xf32>
    %391 = arith.mulf %386, %388 : vector<4x32xf32>
    %392 = arith.addf %390, %391 : vector<4x32xf32>
    %393 = math.tanh %392 : vector<4x32xf32>
    %394 = arith.mulf %389, %393 : vector<4x32xf32>
    %395 = vector.extract_strided_slice %319 {offsets = [16, 0], sizes = [4, 128], strides = [1, 1]} : vector<32x128xf32> to vector<4x128xf32>
    %cst_70 = arith.constant dense<0.000000e+00> : vector<4x128xf32>
    %396 = tpu.matmul %394, %320, %cst_70 {dimension_numbers = #tpu.dot_dimension_numbers<[1], [0], [0], [1], [0, 0, 1, 1], [], []>} : vector<4x32xf32>, vector<32x128xf32>, vector<4x128xf32> -> vector<4x128xf32>
    %397 = arith.addf %395, %396 : vector<4x128xf32>
    %398 = arith.negf %397 : vector<4x128xf32>
    %399 = math.exp %398 : vector<4x128xf32>
    %cst_71 = arith.constant 1.000000e+00 : f32
    %400 = vector.broadcast %cst_71 : f32 to vector<4x128xf32>
    %401 = arith.addf %400, %399 : vector<4x128xf32>
    %402 = arith.divf %400, %401 : vector<4x128xf32>
    %403 = math.tanh %397 : vector<4x128xf32>
    %404 = vector.extract_strided_slice %402 {offsets = [0, 0], sizes = [4, 32], strides = [1, 1]} : vector<4x128xf32> to vector<4x32xf32>
    %405 = vector.extract_strided_slice %402 {offsets = [0, 32], sizes = [4, 32], strides = [1, 1]} : vector<4x128xf32> to vector<4x32xf32>
    %406 = vector.extract_strided_slice %403 {offsets = [0, 64], sizes = [4, 32], strides = [1, 1]} : vector<4x128xf32> to vector<4x32xf32>
    %407 = vector.extract_strided_slice %402 {offsets = [0, 96], sizes = [4, 32], strides = [1, 1]} : vector<4x128xf32> to vector<4x32xf32>
    %408 = arith.mulf %405, %392 : vector<4x32xf32>
    %409 = arith.mulf %404, %406 : vector<4x32xf32>
    %410 = arith.addf %408, %409 : vector<4x32xf32>
    %411 = math.tanh %410 : vector<4x32xf32>
    %412 = arith.mulf %407, %411 : vector<4x32xf32>
    %413 = vector.extract_strided_slice %319 {offsets = [20, 0], sizes = [4, 128], strides = [1, 1]} : vector<32x128xf32> to vector<4x128xf32>
    %cst_72 = arith.constant dense<0.000000e+00> : vector<4x128xf32>
    %414 = tpu.matmul %412, %320, %cst_72 {dimension_numbers = #tpu.dot_dimension_numbers<[1], [0], [0], [1], [0, 0, 1, 1], [], []>} : vector<4x32xf32>, vector<32x128xf32>, vector<4x128xf32> -> vector<4x128xf32>
    %415 = arith.addf %413, %414 : vector<4x128xf32>
    %416 = arith.negf %415 : vector<4x128xf32>
    %417 = math.exp %416 : vector<4x128xf32>
    %cst_73 = arith.constant 1.000000e+00 : f32
    %418 = vector.broadcast %cst_73 : f32 to vector<4x128xf32>
    %419 = arith.addf %418, %417 : vector<4x128xf32>
    %420 = arith.divf %418, %419 : vector<4x128xf32>
    %421 = math.tanh %415 : vector<4x128xf32>
    %422 = vector.extract_strided_slice %420 {offsets = [0, 0], sizes = [4, 32], strides = [1, 1]} : vector<4x128xf32> to vector<4x32xf32>
    %423 = vector.extract_strided_slice %420 {offsets = [0, 32], sizes = [4, 32], strides = [1, 1]} : vector<4x128xf32> to vector<4x32xf32>
    %424 = vector.extract_strided_slice %421 {offsets = [0, 64], sizes = [4, 32], strides = [1, 1]} : vector<4x128xf32> to vector<4x32xf32>
    %425 = vector.extract_strided_slice %420 {offsets = [0, 96], sizes = [4, 32], strides = [1, 1]} : vector<4x128xf32> to vector<4x32xf32>
    %426 = arith.mulf %423, %410 : vector<4x32xf32>
    %427 = arith.mulf %422, %424 : vector<4x32xf32>
    %428 = arith.addf %426, %427 : vector<4x32xf32>
    %429 = math.tanh %428 : vector<4x32xf32>
    %430 = arith.mulf %425, %429 : vector<4x32xf32>
    %431 = vector.extract_strided_slice %319 {offsets = [24, 0], sizes = [4, 128], strides = [1, 1]} : vector<32x128xf32> to vector<4x128xf32>
    %cst_74 = arith.constant dense<0.000000e+00> : vector<4x128xf32>
    %432 = tpu.matmul %430, %320, %cst_74 {dimension_numbers = #tpu.dot_dimension_numbers<[1], [0], [0], [1], [0, 0, 1, 1], [], []>} : vector<4x32xf32>, vector<32x128xf32>, vector<4x128xf32> -> vector<4x128xf32>
    %433 = arith.addf %431, %432 : vector<4x128xf32>
    %434 = arith.negf %433 : vector<4x128xf32>
    %435 = math.exp %434 : vector<4x128xf32>
    %cst_75 = arith.constant 1.000000e+00 : f32
    %436 = vector.broadcast %cst_75 : f32 to vector<4x128xf32>
    %437 = arith.addf %436, %435 : vector<4x128xf32>
    %438 = arith.divf %436, %437 : vector<4x128xf32>
    %439 = math.tanh %433 : vector<4x128xf32>
    %440 = vector.extract_strided_slice %438 {offsets = [0, 0], sizes = [4, 32], strides = [1, 1]} : vector<4x128xf32> to vector<4x32xf32>
    %441 = vector.extract_strided_slice %438 {offsets = [0, 32], sizes = [4, 32], strides = [1, 1]} : vector<4x128xf32> to vector<4x32xf32>
    %442 = vector.extract_strided_slice %439 {offsets = [0, 64], sizes = [4, 32], strides = [1, 1]} : vector<4x128xf32> to vector<4x32xf32>
    %443 = vector.extract_strided_slice %438 {offsets = [0, 96], sizes = [4, 32], strides = [1, 1]} : vector<4x128xf32> to vector<4x32xf32>
    %444 = arith.mulf %441, %428 : vector<4x32xf32>
    %445 = arith.mulf %440, %442 : vector<4x32xf32>
    %446 = arith.addf %444, %445 : vector<4x32xf32>
    %447 = math.tanh %446 : vector<4x32xf32>
    %448 = arith.mulf %443, %447 : vector<4x32xf32>
    %449 = vector.extract_strided_slice %319 {offsets = [28, 0], sizes = [4, 128], strides = [1, 1]} : vector<32x128xf32> to vector<4x128xf32>
    %cst_76 = arith.constant dense<0.000000e+00> : vector<4x128xf32>
    %450 = tpu.matmul %448, %320, %cst_76 {dimension_numbers = #tpu.dot_dimension_numbers<[1], [0], [0], [1], [0, 0, 1, 1], [], []>} : vector<4x32xf32>, vector<32x128xf32>, vector<4x128xf32> -> vector<4x128xf32>
    %451 = arith.addf %449, %450 : vector<4x128xf32>
    %452 = arith.negf %451 : vector<4x128xf32>
    %453 = math.exp %452 : vector<4x128xf32>
    %cst_77 = arith.constant 1.000000e+00 : f32
    %454 = vector.broadcast %cst_77 : f32 to vector<4x128xf32>
    %455 = arith.addf %454, %453 : vector<4x128xf32>
    %456 = arith.divf %454, %455 : vector<4x128xf32>
    %457 = math.tanh %451 : vector<4x128xf32>
    %458 = vector.extract_strided_slice %456 {offsets = [0, 0], sizes = [4, 32], strides = [1, 1]} : vector<4x128xf32> to vector<4x32xf32>
    %459 = vector.extract_strided_slice %456 {offsets = [0, 32], sizes = [4, 32], strides = [1, 1]} : vector<4x128xf32> to vector<4x32xf32>
    %460 = vector.extract_strided_slice %457 {offsets = [0, 64], sizes = [4, 32], strides = [1, 1]} : vector<4x128xf32> to vector<4x32xf32>
    %461 = vector.extract_strided_slice %456 {offsets = [0, 96], sizes = [4, 32], strides = [1, 1]} : vector<4x128xf32> to vector<4x32xf32>
    %462 = arith.mulf %459, %446 : vector<4x32xf32>
    %463 = arith.mulf %458, %460 : vector<4x32xf32>
    %464 = arith.addf %462, %463 : vector<4x32xf32>
    %465 = math.tanh %464 : vector<4x32xf32>
    %466 = arith.mulf %461, %465 : vector<4x32xf32>
    %c0_78 = arith.constant 0 : index
    %c0_79 = arith.constant 0 : index
    %467 = vector.load %arg11[%c0_78, %c0_79] : memref<64x128xf32, #tpu.memory_space<vmem>>, vector<64x128xf32>
    %cst_80 = arith.constant dense<0.000000e+00> : vector<32x128xf32>
    %468 = tpu.matmul %314, %467, %cst_80 {dimension_numbers = #tpu.dot_dimension_numbers<[1], [0], [0], [1], [0, 0, 1, 1], [], []>} : vector<32x64xf32>, vector<64x128xf32>, vector<32x128xf32> -> vector<32x128xf32>
    %c0_81 = arith.constant 0 : index
    %c0_82 = arith.constant 0 : index
    %469 = vector.load %arg13[%c0_81, %c0_82] : memref<1x128xf32, #tpu.memory_space<vmem>>, vector<1x128xf32>
    %470 = vector.broadcast %469 : vector<1x128xf32> to vector<32x128xf32>
    %471 = arith.addf %468, %470 : vector<32x128xf32>
    %c0_83 = arith.constant 0 : index
    %c0_84 = arith.constant 0 : index
    %472 = vector.load %arg12[%c0_83, %c0_84] : memref<32x128xf32, #tpu.memory_space<vmem>>, vector<32x128xf32>
    %cst_85 = arith.constant 0.000000e+00 : f32
    %473 = vector.broadcast %cst_85 : f32 to vector<4x32xf32>
    %cst_86 = arith.constant 0.000000e+00 : f32
    %474 = vector.broadcast %cst_86 : f32 to vector<4x32xf32>
    %475 = vector.extract_strided_slice %471 {offsets = [28, 0], sizes = [4, 128], strides = [1, 1]} : vector<32x128xf32> to vector<4x128xf32>
    %cst_87 = arith.constant dense<0.000000e+00> : vector<4x128xf32>
    %476 = tpu.matmul %473, %472, %cst_87 {dimension_numbers = #tpu.dot_dimension_numbers<[1], [0], [0], [1], [0, 0, 1, 1], [], []>} : vector<4x32xf32>, vector<32x128xf32>, vector<4x128xf32> -> vector<4x128xf32>
    %477 = arith.addf %475, %476 : vector<4x128xf32>
    %478 = arith.negf %477 : vector<4x128xf32>
    %479 = math.exp %478 : vector<4x128xf32>
    %cst_88 = arith.constant 1.000000e+00 : f32
    %480 = vector.broadcast %cst_88 : f32 to vector<4x128xf32>
    %481 = arith.addf %480, %479 : vector<4x128xf32>
    %482 = arith.divf %480, %481 : vector<4x128xf32>
    %483 = math.tanh %477 : vector<4x128xf32>
    %484 = vector.extract_strided_slice %482 {offsets = [0, 0], sizes = [4, 32], strides = [1, 1]} : vector<4x128xf32> to vector<4x32xf32>
    %485 = vector.extract_strided_slice %482 {offsets = [0, 32], sizes = [4, 32], strides = [1, 1]} : vector<4x128xf32> to vector<4x32xf32>
    %486 = vector.extract_strided_slice %483 {offsets = [0, 64], sizes = [4, 32], strides = [1, 1]} : vector<4x128xf32> to vector<4x32xf32>
    %487 = vector.extract_strided_slice %482 {offsets = [0, 96], sizes = [4, 32], strides = [1, 1]} : vector<4x128xf32> to vector<4x32xf32>
    %488 = arith.mulf %485, %474 : vector<4x32xf32>
    %489 = arith.mulf %484, %486 : vector<4x32xf32>
    %490 = arith.addf %488, %489 : vector<4x32xf32>
    %491 = math.tanh %490 : vector<4x32xf32>
    %492 = arith.mulf %487, %491 : vector<4x32xf32>
    %493 = vector.extract_strided_slice %471 {offsets = [24, 0], sizes = [4, 128], strides = [1, 1]} : vector<32x128xf32> to vector<4x128xf32>
    %cst_89 = arith.constant dense<0.000000e+00> : vector<4x128xf32>
    %494 = tpu.matmul %492, %472, %cst_89 {dimension_numbers = #tpu.dot_dimension_numbers<[1], [0], [0], [1], [0, 0, 1, 1], [], []>} : vector<4x32xf32>, vector<32x128xf32>, vector<4x128xf32> -> vector<4x128xf32>
    %495 = arith.addf %493, %494 : vector<4x128xf32>
    %496 = arith.negf %495 : vector<4x128xf32>
    %497 = math.exp %496 : vector<4x128xf32>
    %cst_90 = arith.constant 1.000000e+00 : f32
    %498 = vector.broadcast %cst_90 : f32 to vector<4x128xf32>
    %499 = arith.addf %498, %497 : vector<4x128xf32>
    %500 = arith.divf %498, %499 : vector<4x128xf32>
    %501 = math.tanh %495 : vector<4x128xf32>
    %502 = vector.extract_strided_slice %500 {offsets = [0, 0], sizes = [4, 32], strides = [1, 1]} : vector<4x128xf32> to vector<4x32xf32>
    %503 = vector.extract_strided_slice %500 {offsets = [0, 32], sizes = [4, 32], strides = [1, 1]} : vector<4x128xf32> to vector<4x32xf32>
    %504 = vector.extract_strided_slice %501 {offsets = [0, 64], sizes = [4, 32], strides = [1, 1]} : vector<4x128xf32> to vector<4x32xf32>
    %505 = vector.extract_strided_slice %500 {offsets = [0, 96], sizes = [4, 32], strides = [1, 1]} : vector<4x128xf32> to vector<4x32xf32>
    %506 = arith.mulf %503, %490 : vector<4x32xf32>
    %507 = arith.mulf %502, %504 : vector<4x32xf32>
    %508 = arith.addf %506, %507 : vector<4x32xf32>
    %509 = math.tanh %508 : vector<4x32xf32>
    %510 = arith.mulf %505, %509 : vector<4x32xf32>
    %511 = vector.extract_strided_slice %471 {offsets = [20, 0], sizes = [4, 128], strides = [1, 1]} : vector<32x128xf32> to vector<4x128xf32>
    %cst_91 = arith.constant dense<0.000000e+00> : vector<4x128xf32>
    %512 = tpu.matmul %510, %472, %cst_91 {dimension_numbers = #tpu.dot_dimension_numbers<[1], [0], [0], [1], [0, 0, 1, 1], [], []>} : vector<4x32xf32>, vector<32x128xf32>, vector<4x128xf32> -> vector<4x128xf32>
    %513 = arith.addf %511, %512 : vector<4x128xf32>
    %514 = arith.negf %513 : vector<4x128xf32>
    %515 = math.exp %514 : vector<4x128xf32>
    %cst_92 = arith.constant 1.000000e+00 : f32
    %516 = vector.broadcast %cst_92 : f32 to vector<4x128xf32>
    %517 = arith.addf %516, %515 : vector<4x128xf32>
    %518 = arith.divf %516, %517 : vector<4x128xf32>
    %519 = math.tanh %513 : vector<4x128xf32>
    %520 = vector.extract_strided_slice %518 {offsets = [0, 0], sizes = [4, 32], strides = [1, 1]} : vector<4x128xf32> to vector<4x32xf32>
    %521 = vector.extract_strided_slice %518 {offsets = [0, 32], sizes = [4, 32], strides = [1, 1]} : vector<4x128xf32> to vector<4x32xf32>
    %522 = vector.extract_strided_slice %519 {offsets = [0, 64], sizes = [4, 32], strides = [1, 1]} : vector<4x128xf32> to vector<4x32xf32>
    %523 = vector.extract_strided_slice %518 {offsets = [0, 96], sizes = [4, 32], strides = [1, 1]} : vector<4x128xf32> to vector<4x32xf32>
    %524 = arith.mulf %521, %508 : vector<4x32xf32>
    %525 = arith.mulf %520, %522 : vector<4x32xf32>
    %526 = arith.addf %524, %525 : vector<4x32xf32>
    %527 = math.tanh %526 : vector<4x32xf32>
    %528 = arith.mulf %523, %527 : vector<4x32xf32>
    %529 = vector.extract_strided_slice %471 {offsets = [16, 0], sizes = [4, 128], strides = [1, 1]} : vector<32x128xf32> to vector<4x128xf32>
    %cst_93 = arith.constant dense<0.000000e+00> : vector<4x128xf32>
    %530 = tpu.matmul %528, %472, %cst_93 {dimension_numbers = #tpu.dot_dimension_numbers<[1], [0], [0], [1], [0, 0, 1, 1], [], []>} : vector<4x32xf32>, vector<32x128xf32>, vector<4x128xf32> -> vector<4x128xf32>
    %531 = arith.addf %529, %530 : vector<4x128xf32>
    %532 = arith.negf %531 : vector<4x128xf32>
    %533 = math.exp %532 : vector<4x128xf32>
    %cst_94 = arith.constant 1.000000e+00 : f32
    %534 = vector.broadcast %cst_94 : f32 to vector<4x128xf32>
    %535 = arith.addf %534, %533 : vector<4x128xf32>
    %536 = arith.divf %534, %535 : vector<4x128xf32>
    %537 = math.tanh %531 : vector<4x128xf32>
    %538 = vector.extract_strided_slice %536 {offsets = [0, 0], sizes = [4, 32], strides = [1, 1]} : vector<4x128xf32> to vector<4x32xf32>
    %539 = vector.extract_strided_slice %536 {offsets = [0, 32], sizes = [4, 32], strides = [1, 1]} : vector<4x128xf32> to vector<4x32xf32>
    %540 = vector.extract_strided_slice %537 {offsets = [0, 64], sizes = [4, 32], strides = [1, 1]} : vector<4x128xf32> to vector<4x32xf32>
    %541 = vector.extract_strided_slice %536 {offsets = [0, 96], sizes = [4, 32], strides = [1, 1]} : vector<4x128xf32> to vector<4x32xf32>
    %542 = arith.mulf %539, %526 : vector<4x32xf32>
    %543 = arith.mulf %538, %540 : vector<4x32xf32>
    %544 = arith.addf %542, %543 : vector<4x32xf32>
    %545 = math.tanh %544 : vector<4x32xf32>
    %546 = arith.mulf %541, %545 : vector<4x32xf32>
    %547 = vector.extract_strided_slice %471 {offsets = [12, 0], sizes = [4, 128], strides = [1, 1]} : vector<32x128xf32> to vector<4x128xf32>
    %cst_95 = arith.constant dense<0.000000e+00> : vector<4x128xf32>
    %548 = tpu.matmul %546, %472, %cst_95 {dimension_numbers = #tpu.dot_dimension_numbers<[1], [0], [0], [1], [0, 0, 1, 1], [], []>} : vector<4x32xf32>, vector<32x128xf32>, vector<4x128xf32> -> vector<4x128xf32>
    %549 = arith.addf %547, %548 : vector<4x128xf32>
    %550 = arith.negf %549 : vector<4x128xf32>
    %551 = math.exp %550 : vector<4x128xf32>
    %cst_96 = arith.constant 1.000000e+00 : f32
    %552 = vector.broadcast %cst_96 : f32 to vector<4x128xf32>
    %553 = arith.addf %552, %551 : vector<4x128xf32>
    %554 = arith.divf %552, %553 : vector<4x128xf32>
    %555 = math.tanh %549 : vector<4x128xf32>
    %556 = vector.extract_strided_slice %554 {offsets = [0, 0], sizes = [4, 32], strides = [1, 1]} : vector<4x128xf32> to vector<4x32xf32>
    %557 = vector.extract_strided_slice %554 {offsets = [0, 32], sizes = [4, 32], strides = [1, 1]} : vector<4x128xf32> to vector<4x32xf32>
    %558 = vector.extract_strided_slice %555 {offsets = [0, 64], sizes = [4, 32], strides = [1, 1]} : vector<4x128xf32> to vector<4x32xf32>
    %559 = vector.extract_strided_slice %554 {offsets = [0, 96], sizes = [4, 32], strides = [1, 1]} : vector<4x128xf32> to vector<4x32xf32>
    %560 = arith.mulf %557, %544 : vector<4x32xf32>
    %561 = arith.mulf %556, %558 : vector<4x32xf32>
    %562 = arith.addf %560, %561 : vector<4x32xf32>
    %563 = math.tanh %562 : vector<4x32xf32>
    %564 = arith.mulf %559, %563 : vector<4x32xf32>
    %565 = vector.extract_strided_slice %471 {offsets = [8, 0], sizes = [4, 128], strides = [1, 1]} : vector<32x128xf32> to vector<4x128xf32>
    %cst_97 = arith.constant dense<0.000000e+00> : vector<4x128xf32>
    %566 = tpu.matmul %564, %472, %cst_97 {dimension_numbers = #tpu.dot_dimension_numbers<[1], [0], [0], [1], [0, 0, 1, 1], [], []>} : vector<4x32xf32>, vector<32x128xf32>, vector<4x128xf32> -> vector<4x128xf32>
    %567 = arith.addf %565, %566 : vector<4x128xf32>
    %568 = arith.negf %567 : vector<4x128xf32>
    %569 = math.exp %568 : vector<4x128xf32>
    %cst_98 = arith.constant 1.000000e+00 : f32
    %570 = vector.broadcast %cst_98 : f32 to vector<4x128xf32>
    %571 = arith.addf %570, %569 : vector<4x128xf32>
    %572 = arith.divf %570, %571 : vector<4x128xf32>
    %573 = math.tanh %567 : vector<4x128xf32>
    %574 = vector.extract_strided_slice %572 {offsets = [0, 0], sizes = [4, 32], strides = [1, 1]} : vector<4x128xf32> to vector<4x32xf32>
    %575 = vector.extract_strided_slice %572 {offsets = [0, 32], sizes = [4, 32], strides = [1, 1]} : vector<4x128xf32> to vector<4x32xf32>
    %576 = vector.extract_strided_slice %573 {offsets = [0, 64], sizes = [4, 32], strides = [1, 1]} : vector<4x128xf32> to vector<4x32xf32>
    %577 = vector.extract_strided_slice %572 {offsets = [0, 96], sizes = [4, 32], strides = [1, 1]} : vector<4x128xf32> to vector<4x32xf32>
    %578 = arith.mulf %575, %562 : vector<4x32xf32>
    %579 = arith.mulf %574, %576 : vector<4x32xf32>
    %580 = arith.addf %578, %579 : vector<4x32xf32>
    %581 = math.tanh %580 : vector<4x32xf32>
    %582 = arith.mulf %577, %581 : vector<4x32xf32>
    %583 = vector.extract_strided_slice %471 {offsets = [4, 0], sizes = [4, 128], strides = [1, 1]} : vector<32x128xf32> to vector<4x128xf32>
    %cst_99 = arith.constant dense<0.000000e+00> : vector<4x128xf32>
    %584 = tpu.matmul %582, %472, %cst_99 {dimension_numbers = #tpu.dot_dimension_numbers<[1], [0], [0], [1], [0, 0, 1, 1], [], []>} : vector<4x32xf32>, vector<32x128xf32>, vector<4x128xf32> -> vector<4x128xf32>
    %585 = arith.addf %583, %584 : vector<4x128xf32>
    %586 = arith.negf %585 : vector<4x128xf32>
    %587 = math.exp %586 : vector<4x128xf32>
    %cst_100 = arith.constant 1.000000e+00 : f32
    %588 = vector.broadcast %cst_100 : f32 to vector<4x128xf32>
    %589 = arith.addf %588, %587 : vector<4x128xf32>
    %590 = arith.divf %588, %589 : vector<4x128xf32>
    %591 = math.tanh %585 : vector<4x128xf32>
    %592 = vector.extract_strided_slice %590 {offsets = [0, 0], sizes = [4, 32], strides = [1, 1]} : vector<4x128xf32> to vector<4x32xf32>
    %593 = vector.extract_strided_slice %590 {offsets = [0, 32], sizes = [4, 32], strides = [1, 1]} : vector<4x128xf32> to vector<4x32xf32>
    %594 = vector.extract_strided_slice %591 {offsets = [0, 64], sizes = [4, 32], strides = [1, 1]} : vector<4x128xf32> to vector<4x32xf32>
    %595 = vector.extract_strided_slice %590 {offsets = [0, 96], sizes = [4, 32], strides = [1, 1]} : vector<4x128xf32> to vector<4x32xf32>
    %596 = arith.mulf %593, %580 : vector<4x32xf32>
    %597 = arith.mulf %592, %594 : vector<4x32xf32>
    %598 = arith.addf %596, %597 : vector<4x32xf32>
    %599 = math.tanh %598 : vector<4x32xf32>
    %600 = arith.mulf %595, %599 : vector<4x32xf32>
    %601 = vector.extract_strided_slice %471 {offsets = [0, 0], sizes = [4, 128], strides = [1, 1]} : vector<32x128xf32> to vector<4x128xf32>
    %cst_101 = arith.constant dense<0.000000e+00> : vector<4x128xf32>
    %602 = tpu.matmul %600, %472, %cst_101 {dimension_numbers = #tpu.dot_dimension_numbers<[1], [0], [0], [1], [0, 0, 1, 1], [], []>} : vector<4x32xf32>, vector<32x128xf32>, vector<4x128xf32> -> vector<4x128xf32>
    %603 = arith.addf %601, %602 : vector<4x128xf32>
    %604 = arith.negf %603 : vector<4x128xf32>
    %605 = math.exp %604 : vector<4x128xf32>
    %cst_102 = arith.constant 1.000000e+00 : f32
    %606 = vector.broadcast %cst_102 : f32 to vector<4x128xf32>
    %607 = arith.addf %606, %605 : vector<4x128xf32>
    %608 = arith.divf %606, %607 : vector<4x128xf32>
    %609 = math.tanh %603 : vector<4x128xf32>
    %610 = vector.extract_strided_slice %608 {offsets = [0, 0], sizes = [4, 32], strides = [1, 1]} : vector<4x128xf32> to vector<4x32xf32>
    %611 = vector.extract_strided_slice %608 {offsets = [0, 32], sizes = [4, 32], strides = [1, 1]} : vector<4x128xf32> to vector<4x32xf32>
    %612 = vector.extract_strided_slice %609 {offsets = [0, 64], sizes = [4, 32], strides = [1, 1]} : vector<4x128xf32> to vector<4x32xf32>
    %613 = vector.extract_strided_slice %608 {offsets = [0, 96], sizes = [4, 32], strides = [1, 1]} : vector<4x128xf32> to vector<4x32xf32>
    %614 = arith.mulf %611, %598 : vector<4x32xf32>
    %615 = arith.mulf %610, %612 : vector<4x32xf32>
    %616 = arith.addf %614, %615 : vector<4x32xf32>
    %617 = math.tanh %616 : vector<4x32xf32>
    %618 = arith.mulf %613, %617 : vector<4x32xf32>
    %619 = tpu.concatenate %340, %358, %376, %394, %412, %430, %448, %466 in 0 : vector<4x32xf32>, vector<4x32xf32>, vector<4x32xf32>, vector<4x32xf32>, vector<4x32xf32>, vector<4x32xf32>, vector<4x32xf32>, vector<4x32xf32> -> vector<32x32xf32>
    %620 = tpu.concatenate %618, %600, %582, %564, %546, %528, %510, %492 in 0 : vector<4x32xf32>, vector<4x32xf32>, vector<4x32xf32>, vector<4x32xf32>, vector<4x32xf32>, vector<4x32xf32>, vector<4x32xf32>, vector<4x32xf32> -> vector<32x32xf32>
    %621 = tpu.concatenate %619, %620 in 1 : vector<32x32xf32>, vector<32x32xf32> -> vector<32x64xf32>
    %c0_103 = arith.constant 0 : index
    %c0_104 = arith.constant 0 : index
    %622 = vector.load %arg14[%c0_103, %c0_104] : memref<64x128xf32, #tpu.memory_space<vmem>>, vector<64x128xf32>
    %cst_105 = arith.constant dense<0.000000e+00> : vector<32x128xf32>
    %623 = tpu.matmul %621, %622, %cst_105 {dimension_numbers = #tpu.dot_dimension_numbers<[1], [0], [0], [1], [0, 0, 1, 1], [], []>} : vector<32x64xf32>, vector<64x128xf32>, vector<32x128xf32> -> vector<32x128xf32>
    %c0_106 = arith.constant 0 : index
    %c0_107 = arith.constant 0 : index
    %624 = vector.load %arg16[%c0_106, %c0_107] : memref<1x128xf32, #tpu.memory_space<vmem>>, vector<1x128xf32>
    %625 = vector.broadcast %624 : vector<1x128xf32> to vector<32x128xf32>
    %626 = arith.addf %623, %625 : vector<32x128xf32>
    %c0_108 = arith.constant 0 : index
    %c0_109 = arith.constant 0 : index
    %627 = vector.load %arg15[%c0_108, %c0_109] : memref<32x128xf32, #tpu.memory_space<vmem>>, vector<32x128xf32>
    %cst_110 = arith.constant 0.000000e+00 : f32
    %628 = vector.broadcast %cst_110 : f32 to vector<4x32xf32>
    %cst_111 = arith.constant 0.000000e+00 : f32
    %629 = vector.broadcast %cst_111 : f32 to vector<4x32xf32>
    %630 = vector.extract_strided_slice %626 {offsets = [0, 0], sizes = [4, 128], strides = [1, 1]} : vector<32x128xf32> to vector<4x128xf32>
    %cst_112 = arith.constant dense<0.000000e+00> : vector<4x128xf32>
    %631 = tpu.matmul %628, %627, %cst_112 {dimension_numbers = #tpu.dot_dimension_numbers<[1], [0], [0], [1], [0, 0, 1, 1], [], []>} : vector<4x32xf32>, vector<32x128xf32>, vector<4x128xf32> -> vector<4x128xf32>
    %632 = arith.addf %630, %631 : vector<4x128xf32>
    %633 = arith.negf %632 : vector<4x128xf32>
    %634 = math.exp %633 : vector<4x128xf32>
    %cst_113 = arith.constant 1.000000e+00 : f32
    %635 = vector.broadcast %cst_113 : f32 to vector<4x128xf32>
    %636 = arith.addf %635, %634 : vector<4x128xf32>
    %637 = arith.divf %635, %636 : vector<4x128xf32>
    %638 = math.tanh %632 : vector<4x128xf32>
    %639 = vector.extract_strided_slice %637 {offsets = [0, 0], sizes = [4, 32], strides = [1, 1]} : vector<4x128xf32> to vector<4x32xf32>
    %640 = vector.extract_strided_slice %637 {offsets = [0, 32], sizes = [4, 32], strides = [1, 1]} : vector<4x128xf32> to vector<4x32xf32>
    %641 = vector.extract_strided_slice %638 {offsets = [0, 64], sizes = [4, 32], strides = [1, 1]} : vector<4x128xf32> to vector<4x32xf32>
    %642 = vector.extract_strided_slice %637 {offsets = [0, 96], sizes = [4, 32], strides = [1, 1]} : vector<4x128xf32> to vector<4x32xf32>
    %643 = arith.mulf %640, %629 : vector<4x32xf32>
    %644 = arith.mulf %639, %641 : vector<4x32xf32>
    %645 = arith.addf %643, %644 : vector<4x32xf32>
    %646 = math.tanh %645 : vector<4x32xf32>
    %647 = arith.mulf %642, %646 : vector<4x32xf32>
    %648 = vector.extract_strided_slice %626 {offsets = [4, 0], sizes = [4, 128], strides = [1, 1]} : vector<32x128xf32> to vector<4x128xf32>
    %cst_114 = arith.constant dense<0.000000e+00> : vector<4x128xf32>
    %649 = tpu.matmul %647, %627, %cst_114 {dimension_numbers = #tpu.dot_dimension_numbers<[1], [0], [0], [1], [0, 0, 1, 1], [], []>} : vector<4x32xf32>, vector<32x128xf32>, vector<4x128xf32> -> vector<4x128xf32>
    %650 = arith.addf %648, %649 : vector<4x128xf32>
    %651 = arith.negf %650 : vector<4x128xf32>
    %652 = math.exp %651 : vector<4x128xf32>
    %cst_115 = arith.constant 1.000000e+00 : f32
    %653 = vector.broadcast %cst_115 : f32 to vector<4x128xf32>
    %654 = arith.addf %653, %652 : vector<4x128xf32>
    %655 = arith.divf %653, %654 : vector<4x128xf32>
    %656 = math.tanh %650 : vector<4x128xf32>
    %657 = vector.extract_strided_slice %655 {offsets = [0, 0], sizes = [4, 32], strides = [1, 1]} : vector<4x128xf32> to vector<4x32xf32>
    %658 = vector.extract_strided_slice %655 {offsets = [0, 32], sizes = [4, 32], strides = [1, 1]} : vector<4x128xf32> to vector<4x32xf32>
    %659 = vector.extract_strided_slice %656 {offsets = [0, 64], sizes = [4, 32], strides = [1, 1]} : vector<4x128xf32> to vector<4x32xf32>
    %660 = vector.extract_strided_slice %655 {offsets = [0, 96], sizes = [4, 32], strides = [1, 1]} : vector<4x128xf32> to vector<4x32xf32>
    %661 = arith.mulf %658, %645 : vector<4x32xf32>
    %662 = arith.mulf %657, %659 : vector<4x32xf32>
    %663 = arith.addf %661, %662 : vector<4x32xf32>
    %664 = math.tanh %663 : vector<4x32xf32>
    %665 = arith.mulf %660, %664 : vector<4x32xf32>
    %666 = vector.extract_strided_slice %626 {offsets = [8, 0], sizes = [4, 128], strides = [1, 1]} : vector<32x128xf32> to vector<4x128xf32>
    %cst_116 = arith.constant dense<0.000000e+00> : vector<4x128xf32>
    %667 = tpu.matmul %665, %627, %cst_116 {dimension_numbers = #tpu.dot_dimension_numbers<[1], [0], [0], [1], [0, 0, 1, 1], [], []>} : vector<4x32xf32>, vector<32x128xf32>, vector<4x128xf32> -> vector<4x128xf32>
    %668 = arith.addf %666, %667 : vector<4x128xf32>
    %669 = arith.negf %668 : vector<4x128xf32>
    %670 = math.exp %669 : vector<4x128xf32>
    %cst_117 = arith.constant 1.000000e+00 : f32
    %671 = vector.broadcast %cst_117 : f32 to vector<4x128xf32>
    %672 = arith.addf %671, %670 : vector<4x128xf32>
    %673 = arith.divf %671, %672 : vector<4x128xf32>
    %674 = math.tanh %668 : vector<4x128xf32>
    %675 = vector.extract_strided_slice %673 {offsets = [0, 0], sizes = [4, 32], strides = [1, 1]} : vector<4x128xf32> to vector<4x32xf32>
    %676 = vector.extract_strided_slice %673 {offsets = [0, 32], sizes = [4, 32], strides = [1, 1]} : vector<4x128xf32> to vector<4x32xf32>
    %677 = vector.extract_strided_slice %674 {offsets = [0, 64], sizes = [4, 32], strides = [1, 1]} : vector<4x128xf32> to vector<4x32xf32>
    %678 = vector.extract_strided_slice %673 {offsets = [0, 96], sizes = [4, 32], strides = [1, 1]} : vector<4x128xf32> to vector<4x32xf32>
    %679 = arith.mulf %676, %663 : vector<4x32xf32>
    %680 = arith.mulf %675, %677 : vector<4x32xf32>
    %681 = arith.addf %679, %680 : vector<4x32xf32>
    %682 = math.tanh %681 : vector<4x32xf32>
    %683 = arith.mulf %678, %682 : vector<4x32xf32>
    %684 = vector.extract_strided_slice %626 {offsets = [12, 0], sizes = [4, 128], strides = [1, 1]} : vector<32x128xf32> to vector<4x128xf32>
    %cst_118 = arith.constant dense<0.000000e+00> : vector<4x128xf32>
    %685 = tpu.matmul %683, %627, %cst_118 {dimension_numbers = #tpu.dot_dimension_numbers<[1], [0], [0], [1], [0, 0, 1, 1], [], []>} : vector<4x32xf32>, vector<32x128xf32>, vector<4x128xf32> -> vector<4x128xf32>
    %686 = arith.addf %684, %685 : vector<4x128xf32>
    %687 = arith.negf %686 : vector<4x128xf32>
    %688 = math.exp %687 : vector<4x128xf32>
    %cst_119 = arith.constant 1.000000e+00 : f32
    %689 = vector.broadcast %cst_119 : f32 to vector<4x128xf32>
    %690 = arith.addf %689, %688 : vector<4x128xf32>
    %691 = arith.divf %689, %690 : vector<4x128xf32>
    %692 = math.tanh %686 : vector<4x128xf32>
    %693 = vector.extract_strided_slice %691 {offsets = [0, 0], sizes = [4, 32], strides = [1, 1]} : vector<4x128xf32> to vector<4x32xf32>
    %694 = vector.extract_strided_slice %691 {offsets = [0, 32], sizes = [4, 32], strides = [1, 1]} : vector<4x128xf32> to vector<4x32xf32>
    %695 = vector.extract_strided_slice %692 {offsets = [0, 64], sizes = [4, 32], strides = [1, 1]} : vector<4x128xf32> to vector<4x32xf32>
    %696 = vector.extract_strided_slice %691 {offsets = [0, 96], sizes = [4, 32], strides = [1, 1]} : vector<4x128xf32> to vector<4x32xf32>
    %697 = arith.mulf %694, %681 : vector<4x32xf32>
    %698 = arith.mulf %693, %695 : vector<4x32xf32>
    %699 = arith.addf %697, %698 : vector<4x32xf32>
    %700 = math.tanh %699 : vector<4x32xf32>
    %701 = arith.mulf %696, %700 : vector<4x32xf32>
    %702 = vector.extract_strided_slice %626 {offsets = [16, 0], sizes = [4, 128], strides = [1, 1]} : vector<32x128xf32> to vector<4x128xf32>
    %cst_120 = arith.constant dense<0.000000e+00> : vector<4x128xf32>
    %703 = tpu.matmul %701, %627, %cst_120 {dimension_numbers = #tpu.dot_dimension_numbers<[1], [0], [0], [1], [0, 0, 1, 1], [], []>} : vector<4x32xf32>, vector<32x128xf32>, vector<4x128xf32> -> vector<4x128xf32>
    %704 = arith.addf %702, %703 : vector<4x128xf32>
    %705 = arith.negf %704 : vector<4x128xf32>
    %706 = math.exp %705 : vector<4x128xf32>
    %cst_121 = arith.constant 1.000000e+00 : f32
    %707 = vector.broadcast %cst_121 : f32 to vector<4x128xf32>
    %708 = arith.addf %707, %706 : vector<4x128xf32>
    %709 = arith.divf %707, %708 : vector<4x128xf32>
    %710 = math.tanh %704 : vector<4x128xf32>
    %711 = vector.extract_strided_slice %709 {offsets = [0, 0], sizes = [4, 32], strides = [1, 1]} : vector<4x128xf32> to vector<4x32xf32>
    %712 = vector.extract_strided_slice %709 {offsets = [0, 32], sizes = [4, 32], strides = [1, 1]} : vector<4x128xf32> to vector<4x32xf32>
    %713 = vector.extract_strided_slice %710 {offsets = [0, 64], sizes = [4, 32], strides = [1, 1]} : vector<4x128xf32> to vector<4x32xf32>
    %714 = vector.extract_strided_slice %709 {offsets = [0, 96], sizes = [4, 32], strides = [1, 1]} : vector<4x128xf32> to vector<4x32xf32>
    %715 = arith.mulf %712, %699 : vector<4x32xf32>
    %716 = arith.mulf %711, %713 : vector<4x32xf32>
    %717 = arith.addf %715, %716 : vector<4x32xf32>
    %718 = math.tanh %717 : vector<4x32xf32>
    %719 = arith.mulf %714, %718 : vector<4x32xf32>
    %720 = vector.extract_strided_slice %626 {offsets = [20, 0], sizes = [4, 128], strides = [1, 1]} : vector<32x128xf32> to vector<4x128xf32>
    %cst_122 = arith.constant dense<0.000000e+00> : vector<4x128xf32>
    %721 = tpu.matmul %719, %627, %cst_122 {dimension_numbers = #tpu.dot_dimension_numbers<[1], [0], [0], [1], [0, 0, 1, 1], [], []>} : vector<4x32xf32>, vector<32x128xf32>, vector<4x128xf32> -> vector<4x128xf32>
    %722 = arith.addf %720, %721 : vector<4x128xf32>
    %723 = arith.negf %722 : vector<4x128xf32>
    %724 = math.exp %723 : vector<4x128xf32>
    %cst_123 = arith.constant 1.000000e+00 : f32
    %725 = vector.broadcast %cst_123 : f32 to vector<4x128xf32>
    %726 = arith.addf %725, %724 : vector<4x128xf32>
    %727 = arith.divf %725, %726 : vector<4x128xf32>
    %728 = math.tanh %722 : vector<4x128xf32>
    %729 = vector.extract_strided_slice %727 {offsets = [0, 0], sizes = [4, 32], strides = [1, 1]} : vector<4x128xf32> to vector<4x32xf32>
    %730 = vector.extract_strided_slice %727 {offsets = [0, 32], sizes = [4, 32], strides = [1, 1]} : vector<4x128xf32> to vector<4x32xf32>
    %731 = vector.extract_strided_slice %728 {offsets = [0, 64], sizes = [4, 32], strides = [1, 1]} : vector<4x128xf32> to vector<4x32xf32>
    %732 = vector.extract_strided_slice %727 {offsets = [0, 96], sizes = [4, 32], strides = [1, 1]} : vector<4x128xf32> to vector<4x32xf32>
    %733 = arith.mulf %730, %717 : vector<4x32xf32>
    %734 = arith.mulf %729, %731 : vector<4x32xf32>
    %735 = arith.addf %733, %734 : vector<4x32xf32>
    %736 = math.tanh %735 : vector<4x32xf32>
    %737 = arith.mulf %732, %736 : vector<4x32xf32>
    %738 = vector.extract_strided_slice %626 {offsets = [24, 0], sizes = [4, 128], strides = [1, 1]} : vector<32x128xf32> to vector<4x128xf32>
    %cst_124 = arith.constant dense<0.000000e+00> : vector<4x128xf32>
    %739 = tpu.matmul %737, %627, %cst_124 {dimension_numbers = #tpu.dot_dimension_numbers<[1], [0], [0], [1], [0, 0, 1, 1], [], []>} : vector<4x32xf32>, vector<32x128xf32>, vector<4x128xf32> -> vector<4x128xf32>
    %740 = arith.addf %738, %739 : vector<4x128xf32>
    %741 = arith.negf %740 : vector<4x128xf32>
    %742 = math.exp %741 : vector<4x128xf32>
    %cst_125 = arith.constant 1.000000e+00 : f32
    %743 = vector.broadcast %cst_125 : f32 to vector<4x128xf32>
    %744 = arith.addf %743, %742 : vector<4x128xf32>
    %745 = arith.divf %743, %744 : vector<4x128xf32>
    %746 = math.tanh %740 : vector<4x128xf32>
    %747 = vector.extract_strided_slice %745 {offsets = [0, 0], sizes = [4, 32], strides = [1, 1]} : vector<4x128xf32> to vector<4x32xf32>
    %748 = vector.extract_strided_slice %745 {offsets = [0, 32], sizes = [4, 32], strides = [1, 1]} : vector<4x128xf32> to vector<4x32xf32>
    %749 = vector.extract_strided_slice %746 {offsets = [0, 64], sizes = [4, 32], strides = [1, 1]} : vector<4x128xf32> to vector<4x32xf32>
    %750 = vector.extract_strided_slice %745 {offsets = [0, 96], sizes = [4, 32], strides = [1, 1]} : vector<4x128xf32> to vector<4x32xf32>
    %751 = arith.mulf %748, %735 : vector<4x32xf32>
    %752 = arith.mulf %747, %749 : vector<4x32xf32>
    %753 = arith.addf %751, %752 : vector<4x32xf32>
    %754 = math.tanh %753 : vector<4x32xf32>
    %755 = arith.mulf %750, %754 : vector<4x32xf32>
    %756 = vector.extract_strided_slice %626 {offsets = [28, 0], sizes = [4, 128], strides = [1, 1]} : vector<32x128xf32> to vector<4x128xf32>
    %cst_126 = arith.constant dense<0.000000e+00> : vector<4x128xf32>
    %757 = tpu.matmul %755, %627, %cst_126 {dimension_numbers = #tpu.dot_dimension_numbers<[1], [0], [0], [1], [0, 0, 1, 1], [], []>} : vector<4x32xf32>, vector<32x128xf32>, vector<4x128xf32> -> vector<4x128xf32>
    %758 = arith.addf %756, %757 : vector<4x128xf32>
    %759 = arith.negf %758 : vector<4x128xf32>
    %760 = math.exp %759 : vector<4x128xf32>
    %cst_127 = arith.constant 1.000000e+00 : f32
    %761 = vector.broadcast %cst_127 : f32 to vector<4x128xf32>
    %762 = arith.addf %761, %760 : vector<4x128xf32>
    %763 = arith.divf %761, %762 : vector<4x128xf32>
    %764 = math.tanh %758 : vector<4x128xf32>
    %765 = vector.extract_strided_slice %763 {offsets = [0, 0], sizes = [4, 32], strides = [1, 1]} : vector<4x128xf32> to vector<4x32xf32>
    %766 = vector.extract_strided_slice %763 {offsets = [0, 32], sizes = [4, 32], strides = [1, 1]} : vector<4x128xf32> to vector<4x32xf32>
    %767 = vector.extract_strided_slice %764 {offsets = [0, 64], sizes = [4, 32], strides = [1, 1]} : vector<4x128xf32> to vector<4x32xf32>
    %768 = vector.extract_strided_slice %763 {offsets = [0, 96], sizes = [4, 32], strides = [1, 1]} : vector<4x128xf32> to vector<4x32xf32>
    %769 = arith.mulf %766, %753 : vector<4x32xf32>
    %770 = arith.mulf %765, %767 : vector<4x32xf32>
    %771 = arith.addf %769, %770 : vector<4x32xf32>
    %772 = math.tanh %771 : vector<4x32xf32>
    %773 = arith.mulf %768, %772 : vector<4x32xf32>
    %c0_128 = arith.constant 0 : index
    %c0_129 = arith.constant 0 : index
    %774 = vector.load %arg17[%c0_128, %c0_129] : memref<64x128xf32, #tpu.memory_space<vmem>>, vector<64x128xf32>
    %cst_130 = arith.constant dense<0.000000e+00> : vector<32x128xf32>
    %775 = tpu.matmul %621, %774, %cst_130 {dimension_numbers = #tpu.dot_dimension_numbers<[1], [0], [0], [1], [0, 0, 1, 1], [], []>} : vector<32x64xf32>, vector<64x128xf32>, vector<32x128xf32> -> vector<32x128xf32>
    %c0_131 = arith.constant 0 : index
    %c0_132 = arith.constant 0 : index
    %776 = vector.load %arg19[%c0_131, %c0_132] : memref<1x128xf32, #tpu.memory_space<vmem>>, vector<1x128xf32>
    %777 = vector.broadcast %776 : vector<1x128xf32> to vector<32x128xf32>
    %778 = arith.addf %775, %777 : vector<32x128xf32>
    %c0_133 = arith.constant 0 : index
    %c0_134 = arith.constant 0 : index
    %779 = vector.load %arg18[%c0_133, %c0_134] : memref<32x128xf32, #tpu.memory_space<vmem>>, vector<32x128xf32>
    %cst_135 = arith.constant 0.000000e+00 : f32
    %780 = vector.broadcast %cst_135 : f32 to vector<4x32xf32>
    %cst_136 = arith.constant 0.000000e+00 : f32
    %781 = vector.broadcast %cst_136 : f32 to vector<4x32xf32>
    %782 = vector.extract_strided_slice %778 {offsets = [28, 0], sizes = [4, 128], strides = [1, 1]} : vector<32x128xf32> to vector<4x128xf32>
    %cst_137 = arith.constant dense<0.000000e+00> : vector<4x128xf32>
    %783 = tpu.matmul %780, %779, %cst_137 {dimension_numbers = #tpu.dot_dimension_numbers<[1], [0], [0], [1], [0, 0, 1, 1], [], []>} : vector<4x32xf32>, vector<32x128xf32>, vector<4x128xf32> -> vector<4x128xf32>
    %784 = arith.addf %782, %783 : vector<4x128xf32>
    %785 = arith.negf %784 : vector<4x128xf32>
    %786 = math.exp %785 : vector<4x128xf32>
    %cst_138 = arith.constant 1.000000e+00 : f32
    %787 = vector.broadcast %cst_138 : f32 to vector<4x128xf32>
    %788 = arith.addf %787, %786 : vector<4x128xf32>
    %789 = arith.divf %787, %788 : vector<4x128xf32>
    %790 = math.tanh %784 : vector<4x128xf32>
    %791 = vector.extract_strided_slice %789 {offsets = [0, 0], sizes = [4, 32], strides = [1, 1]} : vector<4x128xf32> to vector<4x32xf32>
    %792 = vector.extract_strided_slice %789 {offsets = [0, 32], sizes = [4, 32], strides = [1, 1]} : vector<4x128xf32> to vector<4x32xf32>
    %793 = vector.extract_strided_slice %790 {offsets = [0, 64], sizes = [4, 32], strides = [1, 1]} : vector<4x128xf32> to vector<4x32xf32>
    %794 = vector.extract_strided_slice %789 {offsets = [0, 96], sizes = [4, 32], strides = [1, 1]} : vector<4x128xf32> to vector<4x32xf32>
    %795 = arith.mulf %792, %781 : vector<4x32xf32>
    %796 = arith.mulf %791, %793 : vector<4x32xf32>
    %797 = arith.addf %795, %796 : vector<4x32xf32>
    %798 = math.tanh %797 : vector<4x32xf32>
    %799 = arith.mulf %794, %798 : vector<4x32xf32>
    %800 = vector.extract_strided_slice %778 {offsets = [24, 0], sizes = [4, 128], strides = [1, 1]} : vector<32x128xf32> to vector<4x128xf32>
    %cst_139 = arith.constant dense<0.000000e+00> : vector<4x128xf32>
    %801 = tpu.matmul %799, %779, %cst_139 {dimension_numbers = #tpu.dot_dimension_numbers<[1], [0], [0], [1], [0, 0, 1, 1], [], []>} : vector<4x32xf32>, vector<32x128xf32>, vector<4x128xf32> -> vector<4x128xf32>
    %802 = arith.addf %800, %801 : vector<4x128xf32>
    %803 = arith.negf %802 : vector<4x128xf32>
    %804 = math.exp %803 : vector<4x128xf32>
    %cst_140 = arith.constant 1.000000e+00 : f32
    %805 = vector.broadcast %cst_140 : f32 to vector<4x128xf32>
    %806 = arith.addf %805, %804 : vector<4x128xf32>
    %807 = arith.divf %805, %806 : vector<4x128xf32>
    %808 = math.tanh %802 : vector<4x128xf32>
    %809 = vector.extract_strided_slice %807 {offsets = [0, 0], sizes = [4, 32], strides = [1, 1]} : vector<4x128xf32> to vector<4x32xf32>
    %810 = vector.extract_strided_slice %807 {offsets = [0, 32], sizes = [4, 32], strides = [1, 1]} : vector<4x128xf32> to vector<4x32xf32>
    %811 = vector.extract_strided_slice %808 {offsets = [0, 64], sizes = [4, 32], strides = [1, 1]} : vector<4x128xf32> to vector<4x32xf32>
    %812 = vector.extract_strided_slice %807 {offsets = [0, 96], sizes = [4, 32], strides = [1, 1]} : vector<4x128xf32> to vector<4x32xf32>
    %813 = arith.mulf %810, %797 : vector<4x32xf32>
    %814 = arith.mulf %809, %811 : vector<4x32xf32>
    %815 = arith.addf %813, %814 : vector<4x32xf32>
    %816 = math.tanh %815 : vector<4x32xf32>
    %817 = arith.mulf %812, %816 : vector<4x32xf32>
    %818 = vector.extract_strided_slice %778 {offsets = [20, 0], sizes = [4, 128], strides = [1, 1]} : vector<32x128xf32> to vector<4x128xf32>
    %cst_141 = arith.constant dense<0.000000e+00> : vector<4x128xf32>
    %819 = tpu.matmul %817, %779, %cst_141 {dimension_numbers = #tpu.dot_dimension_numbers<[1], [0], [0], [1], [0, 0, 1, 1], [], []>} : vector<4x32xf32>, vector<32x128xf32>, vector<4x128xf32> -> vector<4x128xf32>
    %820 = arith.addf %818, %819 : vector<4x128xf32>
    %821 = arith.negf %820 : vector<4x128xf32>
    %822 = math.exp %821 : vector<4x128xf32>
    %cst_142 = arith.constant 1.000000e+00 : f32
    %823 = vector.broadcast %cst_142 : f32 to vector<4x128xf32>
    %824 = arith.addf %823, %822 : vector<4x128xf32>
    %825 = arith.divf %823, %824 : vector<4x128xf32>
    %826 = math.tanh %820 : vector<4x128xf32>
    %827 = vector.extract_strided_slice %825 {offsets = [0, 0], sizes = [4, 32], strides = [1, 1]} : vector<4x128xf32> to vector<4x32xf32>
    %828 = vector.extract_strided_slice %825 {offsets = [0, 32], sizes = [4, 32], strides = [1, 1]} : vector<4x128xf32> to vector<4x32xf32>
    %829 = vector.extract_strided_slice %826 {offsets = [0, 64], sizes = [4, 32], strides = [1, 1]} : vector<4x128xf32> to vector<4x32xf32>
    %830 = vector.extract_strided_slice %825 {offsets = [0, 96], sizes = [4, 32], strides = [1, 1]} : vector<4x128xf32> to vector<4x32xf32>
    %831 = arith.mulf %828, %815 : vector<4x32xf32>
    %832 = arith.mulf %827, %829 : vector<4x32xf32>
    %833 = arith.addf %831, %832 : vector<4x32xf32>
    %834 = math.tanh %833 : vector<4x32xf32>
    %835 = arith.mulf %830, %834 : vector<4x32xf32>
    %836 = vector.extract_strided_slice %778 {offsets = [16, 0], sizes = [4, 128], strides = [1, 1]} : vector<32x128xf32> to vector<4x128xf32>
    %cst_143 = arith.constant dense<0.000000e+00> : vector<4x128xf32>
    %837 = tpu.matmul %835, %779, %cst_143 {dimension_numbers = #tpu.dot_dimension_numbers<[1], [0], [0], [1], [0, 0, 1, 1], [], []>} : vector<4x32xf32>, vector<32x128xf32>, vector<4x128xf32> -> vector<4x128xf32>
    %838 = arith.addf %836, %837 : vector<4x128xf32>
    %839 = arith.negf %838 : vector<4x128xf32>
    %840 = math.exp %839 : vector<4x128xf32>
    %cst_144 = arith.constant 1.000000e+00 : f32
    %841 = vector.broadcast %cst_144 : f32 to vector<4x128xf32>
    %842 = arith.addf %841, %840 : vector<4x128xf32>
    %843 = arith.divf %841, %842 : vector<4x128xf32>
    %844 = math.tanh %838 : vector<4x128xf32>
    %845 = vector.extract_strided_slice %843 {offsets = [0, 0], sizes = [4, 32], strides = [1, 1]} : vector<4x128xf32> to vector<4x32xf32>
    %846 = vector.extract_strided_slice %843 {offsets = [0, 32], sizes = [4, 32], strides = [1, 1]} : vector<4x128xf32> to vector<4x32xf32>
    %847 = vector.extract_strided_slice %844 {offsets = [0, 64], sizes = [4, 32], strides = [1, 1]} : vector<4x128xf32> to vector<4x32xf32>
    %848 = vector.extract_strided_slice %843 {offsets = [0, 96], sizes = [4, 32], strides = [1, 1]} : vector<4x128xf32> to vector<4x32xf32>
    %849 = arith.mulf %846, %833 : vector<4x32xf32>
    %850 = arith.mulf %845, %847 : vector<4x32xf32>
    %851 = arith.addf %849, %850 : vector<4x32xf32>
    %852 = math.tanh %851 : vector<4x32xf32>
    %853 = arith.mulf %848, %852 : vector<4x32xf32>
    %854 = vector.extract_strided_slice %778 {offsets = [12, 0], sizes = [4, 128], strides = [1, 1]} : vector<32x128xf32> to vector<4x128xf32>
    %cst_145 = arith.constant dense<0.000000e+00> : vector<4x128xf32>
    %855 = tpu.matmul %853, %779, %cst_145 {dimension_numbers = #tpu.dot_dimension_numbers<[1], [0], [0], [1], [0, 0, 1, 1], [], []>} : vector<4x32xf32>, vector<32x128xf32>, vector<4x128xf32> -> vector<4x128xf32>
    %856 = arith.addf %854, %855 : vector<4x128xf32>
    %857 = arith.negf %856 : vector<4x128xf32>
    %858 = math.exp %857 : vector<4x128xf32>
    %cst_146 = arith.constant 1.000000e+00 : f32
    %859 = vector.broadcast %cst_146 : f32 to vector<4x128xf32>
    %860 = arith.addf %859, %858 : vector<4x128xf32>
    %861 = arith.divf %859, %860 : vector<4x128xf32>
    %862 = math.tanh %856 : vector<4x128xf32>
    %863 = vector.extract_strided_slice %861 {offsets = [0, 0], sizes = [4, 32], strides = [1, 1]} : vector<4x128xf32> to vector<4x32xf32>
    %864 = vector.extract_strided_slice %861 {offsets = [0, 32], sizes = [4, 32], strides = [1, 1]} : vector<4x128xf32> to vector<4x32xf32>
    %865 = vector.extract_strided_slice %862 {offsets = [0, 64], sizes = [4, 32], strides = [1, 1]} : vector<4x128xf32> to vector<4x32xf32>
    %866 = vector.extract_strided_slice %861 {offsets = [0, 96], sizes = [4, 32], strides = [1, 1]} : vector<4x128xf32> to vector<4x32xf32>
    %867 = arith.mulf %864, %851 : vector<4x32xf32>
    %868 = arith.mulf %863, %865 : vector<4x32xf32>
    %869 = arith.addf %867, %868 : vector<4x32xf32>
    %870 = math.tanh %869 : vector<4x32xf32>
    %871 = arith.mulf %866, %870 : vector<4x32xf32>
    %872 = vector.extract_strided_slice %778 {offsets = [8, 0], sizes = [4, 128], strides = [1, 1]} : vector<32x128xf32> to vector<4x128xf32>
    %cst_147 = arith.constant dense<0.000000e+00> : vector<4x128xf32>
    %873 = tpu.matmul %871, %779, %cst_147 {dimension_numbers = #tpu.dot_dimension_numbers<[1], [0], [0], [1], [0, 0, 1, 1], [], []>} : vector<4x32xf32>, vector<32x128xf32>, vector<4x128xf32> -> vector<4x128xf32>
    %874 = arith.addf %872, %873 : vector<4x128xf32>
    %875 = arith.negf %874 : vector<4x128xf32>
    %876 = math.exp %875 : vector<4x128xf32>
    %cst_148 = arith.constant 1.000000e+00 : f32
    %877 = vector.broadcast %cst_148 : f32 to vector<4x128xf32>
    %878 = arith.addf %877, %876 : vector<4x128xf32>
    %879 = arith.divf %877, %878 : vector<4x128xf32>
    %880 = math.tanh %874 : vector<4x128xf32>
    %881 = vector.extract_strided_slice %879 {offsets = [0, 0], sizes = [4, 32], strides = [1, 1]} : vector<4x128xf32> to vector<4x32xf32>
    %882 = vector.extract_strided_slice %879 {offsets = [0, 32], sizes = [4, 32], strides = [1, 1]} : vector<4x128xf32> to vector<4x32xf32>
    %883 = vector.extract_strided_slice %880 {offsets = [0, 64], sizes = [4, 32], strides = [1, 1]} : vector<4x128xf32> to vector<4x32xf32>
    %884 = vector.extract_strided_slice %879 {offsets = [0, 96], sizes = [4, 32], strides = [1, 1]} : vector<4x128xf32> to vector<4x32xf32>
    %885 = arith.mulf %882, %869 : vector<4x32xf32>
    %886 = arith.mulf %881, %883 : vector<4x32xf32>
    %887 = arith.addf %885, %886 : vector<4x32xf32>
    %888 = math.tanh %887 : vector<4x32xf32>
    %889 = arith.mulf %884, %888 : vector<4x32xf32>
    %890 = vector.extract_strided_slice %778 {offsets = [4, 0], sizes = [4, 128], strides = [1, 1]} : vector<32x128xf32> to vector<4x128xf32>
    %cst_149 = arith.constant dense<0.000000e+00> : vector<4x128xf32>
    %891 = tpu.matmul %889, %779, %cst_149 {dimension_numbers = #tpu.dot_dimension_numbers<[1], [0], [0], [1], [0, 0, 1, 1], [], []>} : vector<4x32xf32>, vector<32x128xf32>, vector<4x128xf32> -> vector<4x128xf32>
    %892 = arith.addf %890, %891 : vector<4x128xf32>
    %893 = arith.negf %892 : vector<4x128xf32>
    %894 = math.exp %893 : vector<4x128xf32>
    %cst_150 = arith.constant 1.000000e+00 : f32
    %895 = vector.broadcast %cst_150 : f32 to vector<4x128xf32>
    %896 = arith.addf %895, %894 : vector<4x128xf32>
    %897 = arith.divf %895, %896 : vector<4x128xf32>
    %898 = math.tanh %892 : vector<4x128xf32>
    %899 = vector.extract_strided_slice %897 {offsets = [0, 0], sizes = [4, 32], strides = [1, 1]} : vector<4x128xf32> to vector<4x32xf32>
    %900 = vector.extract_strided_slice %897 {offsets = [0, 32], sizes = [4, 32], strides = [1, 1]} : vector<4x128xf32> to vector<4x32xf32>
    %901 = vector.extract_strided_slice %898 {offsets = [0, 64], sizes = [4, 32], strides = [1, 1]} : vector<4x128xf32> to vector<4x32xf32>
    %902 = vector.extract_strided_slice %897 {offsets = [0, 96], sizes = [4, 32], strides = [1, 1]} : vector<4x128xf32> to vector<4x32xf32>
    %903 = arith.mulf %900, %887 : vector<4x32xf32>
    %904 = arith.mulf %899, %901 : vector<4x32xf32>
    %905 = arith.addf %903, %904 : vector<4x32xf32>
    %906 = math.tanh %905 : vector<4x32xf32>
    %907 = arith.mulf %902, %906 : vector<4x32xf32>
    %908 = vector.extract_strided_slice %778 {offsets = [0, 0], sizes = [4, 128], strides = [1, 1]} : vector<32x128xf32> to vector<4x128xf32>
    %cst_151 = arith.constant dense<0.000000e+00> : vector<4x128xf32>
    %909 = tpu.matmul %907, %779, %cst_151 {dimension_numbers = #tpu.dot_dimension_numbers<[1], [0], [0], [1], [0, 0, 1, 1], [], []>} : vector<4x32xf32>, vector<32x128xf32>, vector<4x128xf32> -> vector<4x128xf32>
    %910 = arith.addf %908, %909 : vector<4x128xf32>
    %911 = arith.negf %910 : vector<4x128xf32>
    %912 = math.exp %911 : vector<4x128xf32>
    %cst_152 = arith.constant 1.000000e+00 : f32
    %913 = vector.broadcast %cst_152 : f32 to vector<4x128xf32>
    %914 = arith.addf %913, %912 : vector<4x128xf32>
    %915 = arith.divf %913, %914 : vector<4x128xf32>
    %916 = math.tanh %910 : vector<4x128xf32>
    %917 = vector.extract_strided_slice %915 {offsets = [0, 0], sizes = [4, 32], strides = [1, 1]} : vector<4x128xf32> to vector<4x32xf32>
    %918 = vector.extract_strided_slice %915 {offsets = [0, 32], sizes = [4, 32], strides = [1, 1]} : vector<4x128xf32> to vector<4x32xf32>
    %919 = vector.extract_strided_slice %916 {offsets = [0, 64], sizes = [4, 32], strides = [1, 1]} : vector<4x128xf32> to vector<4x32xf32>
    %920 = vector.extract_strided_slice %915 {offsets = [0, 96], sizes = [4, 32], strides = [1, 1]} : vector<4x128xf32> to vector<4x32xf32>
    %921 = arith.mulf %918, %905 : vector<4x32xf32>
    %922 = arith.mulf %917, %919 : vector<4x32xf32>
    %923 = arith.addf %921, %922 : vector<4x32xf32>
    %924 = math.tanh %923 : vector<4x32xf32>
    %925 = arith.mulf %920, %924 : vector<4x32xf32>
    %926 = tpu.concatenate %773, %925 in 1 : vector<4x32xf32>, vector<4x32xf32> -> vector<4x64xf32>
    %c0_153 = arith.constant 0 : index
    %c0_154 = arith.constant 0 : index
    %927 = vector.load %arg20[%c0_153, %c0_154] : memref<64x32xf32, #tpu.memory_space<vmem>>, vector<64x32xf32>
    %cst_155 = arith.constant dense<0.000000e+00> : vector<4x32xf32>
    %928 = tpu.matmul %926, %927, %cst_155 {dimension_numbers = #tpu.dot_dimension_numbers<[1], [0], [0], [1], [0, 0, 1, 1], [], []>} : vector<4x64xf32>, vector<64x32xf32>, vector<4x32xf32> -> vector<4x32xf32>
    %c0_156 = arith.constant 0 : index
    %c0_157 = arith.constant 0 : index
    %929 = vector.load %arg21[%c0_156, %c0_157] : memref<1x32xf32, #tpu.memory_space<vmem>>, vector<1x32xf32>
    %930 = vector.broadcast %929 : vector<1x32xf32> to vector<4x32xf32>
    %931 = arith.addf %928, %930 : vector<4x32xf32>
    %932 = vector.extract_strided_slice %931 {offsets = [0, 0], sizes = [2, 32], strides = [1, 1]} : vector<4x32xf32> to vector<2x32xf32>
    %933 = vector.extract_strided_slice %931 {offsets = [2, 0], sizes = [2, 32], strides = [1, 1]} : vector<4x32xf32> to vector<2x32xf32>
    %934 = arith.subf %932, %933 : vector<2x32xf32>
    %935 = arith.mulf %934, %934 : vector<2x32xf32>
    %cst_158 = arith.constant dense<0.000000e+00> : vector<2xf32>
    %936 = vector.multi_reduction <add>, %935, %cst_158 [1] : vector<2x32xf32> to vector<2xf32>
    %937 = vector.shape_cast %936 : vector<2xf32> to vector<2x1xf32>
    %938 = math.sqrt %937 : vector<2x1xf32>
    %939 = arith.mulf %932, %932 : vector<2x32xf32>
    %cst_159 = arith.constant dense<0.000000e+00> : vector<2xf32>
    %940 = vector.multi_reduction <add>, %939, %cst_159 [1] : vector<2x32xf32> to vector<2xf32>
    %941 = vector.shape_cast %940 : vector<2xf32> to vector<2x1xf32>
    %942 = math.sqrt %941 : vector<2x1xf32>
    %943 = arith.mulf %933, %933 : vector<2x32xf32>
    %cst_160 = arith.constant dense<0.000000e+00> : vector<2xf32>
    %944 = vector.multi_reduction <add>, %943, %cst_160 [1] : vector<2x32xf32> to vector<2xf32>
    %945 = vector.shape_cast %944 : vector<2xf32> to vector<2x1xf32>
    %946 = math.sqrt %945 : vector<2x1xf32>
    %947 = arith.addf %942, %946 : vector<2x1xf32>
    %948 = tpu.reciprocal %947 {approx = true} : vector<2x1xf32> -> vector<2x1xf32>
    %949 = arith.mulf %938, %948 : vector<2x1xf32>
    %c0_161 = arith.constant 0 : index
    %c0_162 = arith.constant 0 : index
    %950 = vector.load %arg22[%c0_161, %c0_162] : memref<2x1xf32, #tpu.memory_space<vmem>>, vector<2x1xf32>
    tpu.vector_store %arg22[%c0_161, %c0_162], %949 {strides = array<i32>} : memref<2x1xf32, #tpu.memory_space<vmem>>, vector<2x1xf32>,
    return
  }
}

</mosaic_0001>

<llo_original>
// kernel: siamese_forward.1
$region0: #{siamese_forward.1}
  #allocation0 [shape = 'u32[]', space=smem, size = 0x4, offset = 0x4, fixed_abs, tag = 'smem constant byte address 0x4 - core index']
  #allocation1 [shape = 'u32[144,128]{1,0:T(1,128)}', space=vmem, size = 0x12000, scoped, tag = 'internal scratch']
  %s0 = inlined_call_operand.vmem [shape: s32[32,1], index: 0, kind: input, shape index: {}]
  %s1 = inlined_call_operand.hbm [shape: f32[32,32], index: 1, kind: input, shape index: {}]
  %s2 = inlined_call_operand.hbm [shape: f32[32,128], index: 2, kind: input, shape index: {}]
  %s3 = inlined_call_operand.hbm [shape: f32[32,128], index: 3, kind: input, shape index: {}]
  %s4 = inlined_call_operand.hbm [shape: f32[1,128], index: 4, kind: input, shape index: {}]
  %s5 = inlined_call_operand.hbm [shape: f32[32,128], index: 5, kind: input, shape index: {}]
  %s6 = inlined_call_operand.hbm [shape: f32[32,128], index: 6, kind: input, shape index: {}]
  %s7 = inlined_call_operand.hbm [shape: f32[1,128], index: 7, kind: input, shape index: {}]
  %s8 = inlined_call_operand.vmem [shape: f32[64,128], index: 8, kind: input, shape index: {}]
  %s9 = inlined_call_operand.hbm [shape: f32[32,128], index: 9, kind: input, shape index: {}]
  %s10 = inlined_call_operand.hbm [shape: f32[1,128], index: 10, kind: input, shape index: {}]
  %s11 = inlined_call_operand.vmem [shape: f32[64,128], index: 11, kind: input, shape index: {}]
  %s12 = inlined_call_operand.hbm [shape: f32[32,128], index: 12, kind: input, shape index: {}]
  %s13 = inlined_call_operand.hbm [shape: f32[1,128], index: 13, kind: input, shape index: {}]
  %s14 = inlined_call_operand.hbm [shape: f32[64,128], index: 14, kind: input, shape index: {}]
  %s15 = inlined_call_operand.hbm [shape: f32[32,128], index: 15, kind: input, shape index: {}]
  %s16 = inlined_call_operand.hbm [shape: f32[1,128], index: 16, kind: input, shape index: {}]
  %s17 = inlined_call_operand.vmem [shape: f32[64,128], index: 17, kind: input, shape index: {}]
  %s18 = inlined_call_operand.hbm [shape: f32[32,128], index: 18, kind: input, shape index: {}]
  %s19 = inlined_call_operand.vmem [shape: f32[1,128], index: 19, kind: input, shape index: {}]
  %s20 = inlined_call_operand.vmem [shape: f32[64,32], index: 20, kind: input, shape index: {}]
  %s21 = inlined_call_operand.hbm [shape: f32[1,32], index: 21, kind: input, shape index: {}]
  %s22 = inlined_call_operand.vmem [shape: f32[2,1], index: 22, kind: output, shape index: {}]
  %s23 = sld [smem:[#allocation0]]
  $region162: #{siamese_forward.1} parent=0
    _
  %s25 = ssub.s32 1, %s23
  %s26 = scalar_select 0, %s25, %s23
  $region1: #{siamese_forward.1} parent=0
    #allocation2 [shape = 'u8[16384]{0}', space=vmem, size = 0x4000, scoped, tag = 'input window, operand 1, single buffered']
    #allocation3 [shape = 's32[1]{0}', space=sflag, size = 0x4, scoped, tag = 'scoped memory for siamese_forward.1']
    #allocation4 [shape = 'u8[16384]{0}', space=vmem, size = 0x4000, scoped, tag = 'input window, operand 2, single buffered']
    #allocation5 [shape = 's32[1]{0}', space=sflag, size = 0x4, scoped, tag = 'scoped memory for siamese_forward.1']
    #allocation6 [shape = 'u8[16384]{0}', space=vmem, size = 0x4000, scoped, tag = 'input window, operand 3, single buffered']
    #allocation7 [shape = 'u8[512]{0}', space=vmem, size = 0x400, scoped, tag = 'input window, operand 4, single buffered']
    #allocation8 [shape = 's32[1]{0}', space=sflag, size = 0x4, scoped, tag = 'scoped memory for siamese_forward.1']
    #allocation9 [shape = 'u8[16384]{0}', space=vmem, size = 0x4000, scoped, tag = 'input window, operand 5, single buffered']
    #allocation10 [shape = 'u8[16384]{0}', space=vmem, size = 0x4000, scoped, tag = 'input window, operand 6, single buffered']
    #allocation11 [shape = 's32[1]{0}', space=sflag, size = 0x4, scoped, tag = 'scoped memory for siamese_forward.1']
    #allocation12 [shape = 'u8[512]{0}', space=vmem, size = 0x400, scoped, tag = 'input window, operand 7, single buffered']
    #allocation13 [shape = 'u8[16384]{0}', space=vmem, size = 0x4000, scoped, tag = 'input window, operand 9, single buffered']
    #allocation14 [shape = 's32[1]{0}', space=sflag, size = 0x4, scoped, tag = 'scoped memory for siamese_forward.1']
    #allocation15 [shape = 'u8[512]{0}', space=vmem, size = 0x400, scoped, tag = 'input window, operand 10, single buffered']
    #allocation16 [shape = 'u8[16384]{0}', space=vmem, size = 0x4000, scoped, tag = 'input window, operand 12, single buffered']
    #allocation17 [shape = 's32[1]{0}', space=sflag, size = 0x4, scoped, tag = 'scoped memory for siamese_forward.1']
    #allocation18 [shape = 'u8[512]{0}', space=vmem, size = 0x400, scoped, tag = 'input window, operand 13, single buffered']
    #allocation19 [shape = 'u8[32768]{0}', space=vmem, size = 0x8000, scoped, tag = 'input window, operand 14, single buffered']
    #allocation20 [shape = 's32[1]{0}', space=sflag, size = 0x4, scoped, tag = 'scoped memory for siamese_forward.1']
    #allocation21 [shape = 'u8[16384]{0}', space=vmem, size = 0x4000, scoped, tag = 'input window, operand 15, single buffered']
    #allocation22 [shape = 'u8[512]{0}', space=vmem, size = 0x400, scoped, tag = 'input window, operand 16, single buffered']
    #allocation23 [shape = 's32[1]{0}', space=sflag, size = 0x4, scoped, tag = 'scoped memory for siamese_forward.1']
    #allocation24 [shape = 'u8[16384]{0}', space=vmem, size = 0x4000, scoped, tag = 'input window, operand 18, single buffered']
    #allocation25 [shape = 'u8[512]{0}', space=vmem, size = 0x400, scoped, tag = 'input window, operand 21, single buffered']
    #allocation26 [shape = 's32[1]{0}', space=sflag, size = 0x4, scoped, tag = 'scoped memory for siamese_forward.1']
    %27 = vsyncpa [#allocation3], 0
    %28 = vsyncpa [#allocation5], 0
    %29 = vsyncpa [#allocation8], 0
    %30 = vsyncpa [#allocation11], 0
    %31 = vsyncpa [#allocation14], 0
    %32 = vsyncpa [#allocation17], 0
    %33 = vsyncpa [#allocation20], 0
    %34 = vsyncpa [#allocation23], 0
    %35 = vsyncpa [#allocation26], 0
    // Predicated region
    $region2: #{siamese_forward.1} parent=1 // pred_check
      _
    $region3: #{siamese_forward.1} parent=1 // pred_check_branch
      %37 = sbr.rel (0) target = $region5
    $region4: #{siamese_forward.1} parent=1 // pred_region
      _
    $region5: #{siamese_forward.1} parent=1 // pred_fallthru
      _
    // Predicated region
    $region6: #{siamese_forward.1} parent=1 // pred_check
      _
    $region7: #{siamese_forward.1} parent=1 // pred_check_branch
      %39 = sbr.rel (0) target = $region9
    $region8: #{siamese_forward.1} parent=1 // pred_region
      %s41 = ssub.s32 512, 512
      %42 = vsyncadd [#allocation3], %s41
      %s43 = sshll.u32 [#allocation2], 4
      %s44 = int_to_ptr.vmem [resolvable:$true] %s43
      %49 = dma.hbm_to_vmem [thread:$0]  %s1, 512, %s44, [#allocation3], 128, 128, 8
    $region9: #{siamese_forward.1} parent=1 // pred_fallthru
      _
    // Predicated region
    $region10: #{siamese_forward.1} parent=1 // pred_check
      _
    $region11: #{siamese_forward.1} parent=1 // pred_check_branch
      %51 = sbr.rel (0) target = $region13
    $region12: #{siamese_forward.1} parent=1 // pred_region
      %s53 = ssub.s32 512, 512
      %54 = vsyncadd [#allocation5], %s53
      %s55 = sshll.u32 [#allocation4], 4
      %s56 = int_to_ptr.vmem [resolvable:$true] %s55
      %61 = dma.hbm_to_vmem [thread:$0]  %s2, 512, %s56, [#allocation5], 128, 128, 8
    $region13: #{siamese_forward.1} parent=1 // pred_fallthru
      _
    // Predicated region
    $region14: #{siamese_forward.1} parent=1 // pred_check
      _
    $region15: #{siamese_forward.1} parent=1 // pred_check_branch
      %63 = sbr.rel (0) target = $region17
    $region16: #{siamese_forward.1} parent=1 // pred_region
      %s65 = ssub.s32 512, 512
      %66 = vsyncadd [#allocation5], %s65
      %s67 = sshll.u32 [#allocation6], 4
      %s68 = int_to_ptr.vmem [resolvable:$true] %s67
      %73 = dma.hbm_to_vmem [thread:$0]  %s3, 512, %s68, [#allocation5], 128, 128, 8
    $region17: #{siamese_forward.1} parent=1 // pred_fallthru
      _
    // Predicated region
    $region18: #{siamese_forward.1} parent=1 // pred_check
      _
    $region19: #{siamese_forward.1} parent=1 // pred_check_branch
      %75 = sbr.rel (0) target = $region21
    $region20: #{siamese_forward.1} parent=1 // pred_region
      %s77 = ssub.s32 16, 16
      %78 = vsyncadd [#allocation8], %s77
      %s80 = sshll.u32 [#allocation7], 4
      %s81 = int_to_ptr.vmem [resolvable:$true] %s80
      %83 = dma.hbm_to_vmem [thread:$0]  %s4, 16, %s81, [#allocation8]
    $region21: #{siamese_forward.1} parent=1 // pred_fallthru
      _
    // Predicated region
    $region22: #{siamese_forward.1} parent=1 // pred_check
      _
    $region23: #{siamese_forward.1} parent=1 // pred_check_branch
      %85 = sbr.rel (0) target = $region25
    $region24: #{siamese_forward.1} parent=1 // pred_region
      %s87 = ssub.s32 512, 512
      %88 = vsyncadd [#allocation8], %s87
      %s89 = sshll.u32 [#allocation9], 4
      %s90 = int_to_ptr.vmem [resolvable:$true] %s89
      %95 = dma.hbm_to_vmem [thread:$0]  %s5, 512, %s90, [#allocation8], 128, 128, 8
    $region25: #{siamese_forward.1} parent=1 // pred_fallthru
      _
    // Predicated region
    $region26: #{siamese_forward.1} parent=1 // pred_check
      _
    $region27: #{siamese_forward.1} parent=1 // pred_check_branch
      %97 = sbr.rel (0) target = $region29
    $region28: #{siamese_forward.1} parent=1 // pred_region
      %s99 = ssub.s32 512, 512
      %100 = vsyncadd [#allocation11], %s99
      %s101 = sshll.u32 [#allocation10], 4
      %s102 = int_to_ptr.vmem [resolvable:$true] %s101
      %107 = dma.hbm_to_vmem [thread:$0]  %s6, 512, %s102, [#allocation11], 128, 128, 8
    $region29: #{siamese_forward.1} parent=1 // pred_fallthru
      _
    // Predicated region
    $region30: #{siamese_forward.1} parent=1 // pred_check
      _
    $region31: #{siamese_forward.1} parent=1 // pred_check_branch
      %109 = sbr.rel (0) target = $region33
    $region32: #{siamese_forward.1} parent=1 // pred_region
      %s111 = ssub.s32 16, 16
      %112 = vsyncadd [#allocation11], %s111
      %s114 = sshll.u32 [#allocation12], 4
      %s115 = int_to_ptr.vmem [resolvable:$true] %s114
      %117 = dma.hbm_to_vmem [thread:$0]  %s7, 16, %s115, [#allocation11]
    $region33: #{siamese_forward.1} parent=1 // pred_fallthru
      _
    // Predicated region
    $region34: #{siamese_forward.1} parent=1 // pred_check
      _
    $region35: #{siamese_forward.1} parent=1 // pred_check_branch
      %119 = sbr.rel (0) target = $region37
    $region36: #{siamese_forward.1} parent=1 // pred_region
      _
    $region37: #{siamese_forward.1} parent=1 // pred_fallthru
      _
    // Predicated region
    $region38: #{siamese_forward.1} parent=1 // pred_check
      _
    $region39: #{siamese_forward.1} parent=1 // pred_check_branch
      %121 = sbr.rel (0) target = $region41
    $region40: #{siamese_forward.1} parent=1 // pred_region
      %s123 = ssub.s32 512, 512
      %124 = vsyncadd [#allocation14], %s123
      %s125 = sshll.u32 [#allocation13], 4
      %s126 = int_to_ptr.vmem [resolvable:$true] %s125
      %131 = dma.hbm_to_vmem [thread:$0]  %s9, 512, %s126, [#allocation14], 128, 128, 8
    $region41: #{siamese_forward.1} parent=1 // pred_fallthru
      _
    // Predicated region
    $region42: #{siamese_forward.1} parent=1 // pred_check
      _
    $region43: #{siamese_forward.1} parent=1 // pred_check_branch
      %133 = sbr.rel (0) target = $region45
    $region44: #{siamese_forward.1} parent=1 // pred_region
      %s135 = ssub.s32 16, 16
      %136 = vsyncadd [#allocation14], %s135
      %s138 = sshll.u32 [#allocation15], 4
      %s139 = int_to_ptr.vmem [resolvable:$true] %s138
      %141 = dma.hbm_to_vmem [thread:$0]  %s10, 16, %s139, [#allocation14]
    $region45: #{siamese_forward.1} parent=1 // pred_fallthru
      _
    // Predicated region
    $region46: #{siamese_forward.1} parent=1 // pred_check
      _
    $region47: #{siamese_forward.1} parent=1 // pred_check_branch
      %143 = sbr.rel (0) target = $region49
    $region48: #{siamese_forward.1} parent=1 // pred_region
      _
    $region49: #{siamese_forward.1} parent=1 // pred_fallthru
      _
    // Predicated region
    $region50: #{siamese_forward.1} parent=1 // pred_check
      _
    $region51: #{siamese_forward.1} parent=1 // pred_check_branch
      %145 = sbr.rel (0) target = $region53
    $region52: #{siamese_forward.1} parent=1 // pred_region
      %s147 = ssub.s32 512, 512
      %148 = vsyncadd [#allocation17], %s147
      %s149 = sshll.u32 [#allocation16], 4
      %s150 = int_to_ptr.vmem [resolvable:$true] %s149
      %155 = dma.hbm_to_vmem [thread:$0]  %s12, 512, %s150, [#allocation17], 128, 128, 8
    $region53: #{siamese_forward.1} parent=1 // pred_fallthru
      _
    // Predicated region
    $region54: #{siamese_forward.1} parent=1 // pred_check
      _
    $region55: #{siamese_forward.1} parent=1 // pred_check_branch
      %157 = sbr.rel (0) target = $region57
    $region56: #{siamese_forward.1} parent=1 // pred_region
      %s159 = ssub.s32 16, 16
      %160 = vsyncadd [#allocation17], %s159
      %s162 = sshll.u32 [#allocation18], 4
      %s163 = int_to_ptr.vmem [resolvable:$true] %s162
      %165 = dma.hbm_to_vmem [thread:$0]  %s13, 16, %s163, [#allocation17]
    $region57: #{siamese_forward.1} parent=1 // pred_fallthru
      _
    // Predicated region
    $region58: #{siamese_forward.1} parent=1 // pred_check
      _
    $region59: #{siamese_forward.1} parent=1 // pred_check_branch
      %167 = sbr.rel (0) target = $region61
    $region60: #{siamese_forward.1} parent=1 // pred_region
      %s169 = ssub.s32 1024, 1024
      %170 = vsyncadd [#allocation20], %s169
      %s171 = sshll.u32 [#allocation19], 4
      %s172 = int_to_ptr.vmem [resolvable:$true] %s171
      %177 = dma.hbm_to_vmem [thread:$0]  %s14, 1024, %s172, [#allocation20], 128, 128, 8
    $region61: #{siamese_forward.1} parent=1 // pred_fallthru
      _
    // Predicated region
    $region62: #{siamese_forward.1} parent=1 // pred_check
      _
    $region63: #{siamese_forward.1} parent=1 // pred_check_branch
      %179 = sbr.rel (0) target = $region65
    $region64: #{siamese_forward.1} parent=1 // pred_region
      %s181 = ssub.s32 512, 512
      %182 = vsyncadd [#allocation20], %s181
      %s183 = sshll.u32 [#allocation21], 4
      %s184 = int_to_ptr.vmem [resolvable:$true] %s183
      %189 = dma.hbm_to_vmem [thread:$0]  %s15, 512, %s184, [#allocation20], 128, 128, 8
    $region65: #{siamese_forward.1} parent=1 // pred_fallthru
      _
    // Predicated region
    $region66: #{siamese_forward.1} parent=1 // pred_check
      _
    $region67: #{siamese_forward.1} parent=1 // pred_check_branch
      %191 = sbr.rel (0) target = $region69
    $region68: #{siamese_forward.1} parent=1 // pred_region
      %s193 = ssub.s32 16, 16
      %194 = vsyncadd [#allocation23], %s193
      %s196 = sshll.u32 [#allocation22], 4
      %s197 = int_to_ptr.vmem [resolvable:$true] %s196
      %199 = dma.hbm_to_vmem [thread:$0]  %s16, 16, %s197, [#allocation23]
    $region69: #{siamese_forward.1} parent=1 // pred_fallthru
      _
    // Predicated region
    $region70: #{siamese_forward.1} parent=1 // pred_check
      _
    $region71: #{siamese_forward.1} parent=1 // pred_check_branch
      %201 = sbr.rel (0) target = $region73
    $region72: #{siamese_forward.1} parent=1 // pred_region
      _
    $region73: #{siamese_forward.1} parent=1 // pred_fallthru
      _
    // Predicated region
    $region74: #{siamese_forward.1} parent=1 // pred_check
      _
    $region75: #{siamese_forward.1} parent=1 // pred_check_branch
      %203 = sbr.rel (0) target = $region77
    $region76: #{siamese_forward.1} parent=1 // pred_region
      %s205 = ssub.s32 512, 512
      %206 = vsyncadd [#allocation23], %s205
      %s207 = sshll.u32 [#allocation24], 4
      %s208 = int_to_ptr.vmem [resolvable:$true] %s207
      %213 = dma.hbm_to_vmem [thread:$0]  %s18, 512, %s208, [#allocation23], 128, 128, 8
    $region77: #{siamese_forward.1} parent=1 // pred_fallthru
      _
    // Predicated region
    $region78: #{siamese_forward.1} parent=1 // pred_check
      _
    $region79: #{siamese_forward.1} parent=1 // pred_check_branch
      %215 = sbr.rel (0) target = $region81
    $region80: #{siamese_forward.1} parent=1 // pred_region
      _
    $region81: #{siamese_forward.1} parent=1 // pred_fallthru
      _
    // Predicated region
    $region82: #{siamese_forward.1} parent=1 // pred_check
      _
    $region83: #{siamese_forward.1} parent=1 // pred_check_branch
      %217 = sbr.rel (0) target = $region85
    $region84: #{siamese_forward.1} parent=1 // pred_region
      _
    $region85: #{siamese_forward.1} parent=1 // pred_fallthru
      _
    // Predicated region
    $region86: #{siamese_forward.1} parent=1 // pred_check
      _
    $region87: #{siamese_forward.1} parent=1 // pred_check_branch
      %219 = sbr.rel (0) target = $region89
    $region88: #{siamese_forward.1} parent=1 // pred_region
      %s221 = ssub.s32 16, 16
      %222 = vsyncadd [#allocation26], %s221
      %s224 = sshll.u32 [#allocation25], 4
      %s225 = int_to_ptr.vmem [resolvable:$true] %s224
      %227 = dma.hbm_to_vmem [thread:$0]  %s21, 16, %s225, [#allocation26]
    $region89: #{siamese_forward.1} parent=1 // pred_fallthru
      _
    // Predicated region
    $region90: #{siamese_forward.1} parent=1 // pred_check
      _
    $region91: #{siamese_forward.1} parent=1 // pred_check_branch
      %229 = sbr.rel (0) target = $region93
    $region92: #{siamese_forward.1} parent=1 // pred_region
      %230 = dma.done [#allocation3], 512
    $region93: #{siamese_forward.1} parent=1 // pred_fallthru
      _
    // Predicated region
    $region94: #{siamese_forward.1} parent=1 // pred_check
      _
    $region95: #{siamese_forward.1} parent=1 // pred_check_branch
      %232 = sbr.rel (0) target = $region97
    $region96: #{siamese_forward.1} parent=1 // pred_region
      %233 = dma.done [#allocation5], 512
    $region97: #{siamese_forward.1} parent=1 // pred_fallthru
      _
    // Predicated region
    $region98: #{siamese_forward.1} parent=1 // pred_check
      _
    $region99: #{siamese_forward.1} parent=1 // pred_check_branch
      %235 = sbr.rel (0) target = $region101
    $region100: #{siamese_forward.1} parent=1 // pred_region
      %236 = dma.done [#allocation5], 512
    $region101: #{siamese_forward.1} parent=1 // pred_fallthru
      _
    // Predicated region
    $region102: #{siamese_forward.1} parent=1 // pred_check
      _
    $region103: #{siamese_forward.1} parent=1 // pred_check_branch
      %238 = sbr.rel (0) target = $region105
    $region104: #{siamese_forward.1} parent=1 // pred_region
      %239 = dma.done [#allocation8], 16
    $region105: #{siamese_forward.1} parent=1 // pred_fallthru
      _
    // Predicated region
    $region106: #{siamese_forward.1} parent=1 // pred_check
      _
    $region107: #{siamese_forward.1} parent=1 // pred_check_branch
      %241 = sbr.rel (0) target = $region109
    $region108: #{siamese_forward.1} parent=1 // pred_region
      %242 = dma.done [#allocation8], 512
    $region109: #{siamese_forward.1} parent=1 // pred_fallthru
      _
    // Predicated region
    $region110: #{siamese_forward.1} parent=1 // pred_check
      _
    $region111: #{siamese_forward.1} parent=1 // pred_check_branch
      %244 = sbr.rel (0) target = $region113
    $region112: #{siamese_forward.1} parent=1 // pred_region
      %245 = dma.done [#allocation11], 512
    $region113: #{siamese_forward.1} parent=1 // pred_fallthru
      _
    // Predicated region
    $region114: #{siamese_forward.1} parent=1 // pred_check
      _
    $region115: #{siamese_forward.1} parent=1 // pred_check_branch
      %247 = sbr.rel (0) target = $region117
    $region116: #{siamese_forward.1} parent=1 // pred_region
      %248 = dma.done [#allocation11], 16
    $region117: #{siamese_forward.1} parent=1 // pred_fallthru
      _
    // Predicated region
    $region118: #{siamese_forward.1} parent=1 // pred_check
      _
    $region119: #{siamese_forward.1} parent=1 // pred_check_branch
      %250 = sbr.rel (0) target = $region121
    $region120: #{siamese_forward.1} parent=1 // pred_region
      %251 = dma.done [#allocation14], 512
    $region121: #{siamese_forward.1} parent=1 // pred_fallthru
      _
    // Predicated region
    $region122: #{siamese_forward.1} parent=1 // pred_check
      _
    $region123: #{siamese_forward.1} parent=1 // pred_check_branch
      %253 = sbr.rel (0) target = $region125
    $region124: #{siamese_forward.1} parent=1 // pred_region
      %254 = dma.done [#allocation14], 16
    $region125: #{siamese_forward.1} parent=1 // pred_fallthru
      _
    // Predicated region
    $region126: #{siamese_forward.1} parent=1 // pred_check
      _
    $region127: #{siamese_forward.1} parent=1 // pred_check_branch
      %256 = sbr.rel (0) target = $region129
    $region128: #{siamese_forward.1} parent=1 // pred_region
      %257 = dma.done [#allocation17], 512
    $region129: #{siamese_forward.1} parent=1 // pred_fallthru
      _
    // Predicated region
    $region130: #{siamese_forward.1} parent=1 // pred_check
      _
    $region131: #{siamese_forward.1} parent=1 // pred_check_branch
      %259 = sbr.rel (0) target = $region133
    $region132: #{siamese_forward.1} parent=1 // pred_region
      %260 = dma.done [#allocation17], 16
    $region133: #{siamese_forward.1} parent=1 // pred_fallthru
      _
    // Predicated region
    $region134: #{siamese_forward.1} parent=1 // pred_check
      _
    $region135: #{siamese_forward.1} parent=1 // pred_check_branch
      %262 = sbr.rel (0) target = $region137
    $region136: #{siamese_forward.1} parent=1 // pred_region
      %263 = dma.done [#allocation20], 1024
    $region137: #{siamese_forward.1} parent=1 // pred_fallthru
      _
    // Predicated region
    $region138: #{siamese_forward.1} parent=1 // pred_check
      _
    $region139: #{siamese_forward.1} parent=1 // pred_check_branch
      %265 = sbr.rel (0) target = $region141
    $region140: #{siamese_forward.1} parent=1 // pred_region
      %266 = dma.done [#allocation20], 512
    $region141: #{siamese_forward.1} parent=1 // pred_fallthru
      _
    // Predicated region
    $region142: #{siamese_forward.1} parent=1 // pred_check
      _
    $region143: #{siamese_forward.1} parent=1 // pred_check_branch
      %268 = sbr.rel (0) target = $region145
    $region144: #{siamese_forward.1} parent=1 // pred_region
      %269 = dma.done [#allocation23], 16
    $region145: #{siamese_forward.1} parent=1 // pred_fallthru
      _
    // Predicated region
    $region146: #{siamese_forward.1} parent=1 // pred_check
      _
    $region147: #{siamese_forward.1} parent=1 // pred_check_branch
      %271 = sbr.rel (0) target = $region149
    $region148: #{siamese_forward.1} parent=1 // pred_region
      %272 = dma.done [#allocation23], 512
    $region149: #{siamese_forward.1} parent=1 // pred_fallthru
      _
    // Predicated region
    $region150: #{siamese_forward.1} parent=1 // pred_check
      _
    $region151: #{siamese_forward.1} parent=1 // pred_check_branch
      %274 = sbr.rel (0) target = $region153
    $region152: #{siamese_forward.1} parent=1 // pred_region
      %275 = dma.done [#allocation26], 16
    $region153: #{siamese_forward.1} parent=1 // pred_fallthru
      _
    %v276 = vld [vmem:[%s0] sm:$0xff]
    %v277 = vld [vmem:[%s0 + $0x8] sm:$0xff]
    %v278 = vld [vmem:[%s0 + $0x10] sm:$0xff]
    %v279 = vld [vmem:[%s0 + $0x18] sm:$0xff]
    %v280 = vlaneseq
    %v281 = vand.u32 %v280, 127
    %282 = vset.pattern.permute.xlu0 0
    %283 = vperm.xlu0 %282, %v276
    %v284 = vpop.permute.xlu0 %283
    %285 = vset.pattern.permute.xlu0 0
    %286 = vperm.xlu0 %285, %v277
    %v287 = vpop.permute.xlu0 %286
    %288 = vset.pattern.permute.xlu0 0
    %289 = vperm.xlu0 %288, %v278
    %v290 = vpop.permute.xlu0 %289
    %291 = vset.pattern.permute.xlu0 0
    %292 = vperm.xlu0 %291, %v279
    %v293 = vpop.permute.xlu0 %292
    %vm294 = vcmp.eq.s32.totalorder %v284, %v281
    %vm295 = vcmp.eq.s32.totalorder %v287, %v281
    %vm296 = vcmp.eq.s32.totalorder %v290, %v281
    %vm297 = vcmp.eq.s32.totalorder %v293, %v281
    %v298 = vsel %vm294, 1, 0
    %v299 = vsel %vm295, 1, 0
    %v300 = vsel %vm296, 1, 0
    %v301 = vsel %vm297, 1, 0
    %v302 = vcvt.s32.f32 %v298
    %v303 = vcvt.s32.f32 %v299
    %v304 = vcvt.s32.f32 %v300
    %v305 = vcvt.s32.f32 %v301
    %v306 = vld [vmem:[#allocation2] sm:$0xff]
    %v307 = vld [vmem:[#allocation2 + $0x8] sm:$0xff]
    %v308 = vld [vmem:[#allocation2 + $0x10] sm:$0xff]
    %v309 = vld [vmem:[#allocation2 + $0x18] sm:$0xff]
    %vm310 = vcmask 261120
    %v312 = vsel %vm310, %v302, 0
    %v315 = vsel %vm310, %v303, 0
    %v318 = vsel %vm310, %v304, 0
    %v321 = vsel %vm310, %v305, 0
    %323 = vmatprep.subr.mxu0 0.0
    %324 = vmatpush1.msra.mxu0 0.0
    %325 = vmatprep.subr.mxu0 0.0
    %326 = vmatpush1.msra.mxu0 0.0
    %327 = vmatprep.subr.mxu0 0.0
    %328 = vmatpush1.msra.mxu0 0.0
    %329 = vmatprep.subr.mxu0 0.0
    %330 = vmatpush1.msra.mxu0 0.0
    %331 = vmatprep.subr.mxu0 0.0
    %332 = vmatpush1.msra.mxu0 0.0
    %333 = vmatprep.subr.mxu0 0.0
    %334 = vmatpush1.msra.mxu0 0.0
    %335 = vmatprep.subr.mxu0 0.0
    %336 = vmatpush1.msra.mxu0 0.0
    %337 = vmatprep.subr.mxu0 0.0
    %338 = vmatpush1.msra.mxu0 0.0
    %339 = vmatprep.subr.mxu0 0.0
    %340 = vmatpush1.msra.mxu0 0.0
    %341 = vmatprep.subr.mxu0 0.0
    %342 = vmatpush1.msra.mxu0 0.0
    %343 = vmatprep.subr.mxu0 0.0
    %344 = vmatpush1.msra.mxu0 0.0
    %345 = vmatprep.subr.mxu0 0.0
    %346 = vmatpush1.msra.mxu0 0.0
    %347 = vmatprep.subr.mxu0 0.0
    %348 = vmatpush1.msra.mxu0 %v309
    %349 = vmatprep.subr.mxu0 0.0
    %350 = vmatpush1.msra.mxu0 %v308
    %351 = vmatprep.subr.mxu0 0.0
    %352 = vmatpush1.msra.mxu0 %v307
    %353 = vmatprep.subr.mxu0 0.0
    %354 = vmatpush1.msra.mxu0 %v306
    %355 = vmatprep.subr.mxu0 0.0
    %356 = vmatpush2.msra.mxu0 0.0
    %357 = vmatprep.subr.mxu0 0.0
    %358 = vmatpush2.msra.mxu0 0.0
    %359 = vmatprep.subr.mxu0 0.0
    %360 = vmatpush2.msra.mxu0 0.0
    %361 = vmatprep.subr.mxu0 0.0
    %362 = vmatpush2.msra.mxu0 0.0
    %363 = vmatprep.subr.mxu0 0.0
    %364 = vmatpush2.msra.mxu0 0.0
    %365 = vmatprep.subr.mxu0 0.0
    %366 = vmatpush2.msra.mxu0 0.0
    %367 = vmatprep.subr.mxu0 0.0
    %368 = vmatpush2.msra.mxu0 0.0
    %369 = vmatprep.subr.mxu0 0.0
    %370 = vmatpush2.msra.mxu0 0.0
    %371 = vmatprep.subr.mxu0 0.0
    %372 = vmatpush2.msra.mxu0 0.0
    %373 = vmatprep.subr.mxu0 0.0
    %374 = vmatpush2.msra.mxu0 0.0
    %375 = vmatprep.subr.mxu0 0.0
    %376 = vmatpush2.msra.mxu0 0.0
    %377 = vmatprep.subr.mxu0 0.0
    %378 = vmatpush2.msra.mxu0 0.0
    %379 = vmatprep.subr.mxu0 0.0
    %380 = vmatpush2.msra.mxu0 0.0
    %381 = vmatprep.subr.mxu0 0.0
    %382 = vmatpush2.msra.mxu0 0.0
    %383 = vmatprep.subr.mxu0 0.0
    %384 = vmatpush2.msra.mxu0 0.0
    %385 = vmatprep.subr.mxu0 0.0
    %386 = vmatpush2.msra.mxu0 0.0
    %387 = vmatprep.mubr.f32.mxu0 0.0
    %388 = vmatmul.mubr.f32.gmra.mxu0 %v312
    %v389 = vpop.f32.mrf.mxu0
    %v390 = vadd.f32 0.0, %v389
    %v391 = vpop.f32.mrf.mxu0
    %392 = vmatprep.mubr.f32.mxu0 0.0
    %393 = vmatmul.mubr.f32.gmra.mxu0 %v315
    %v394 = vpop.f32.mrf.mxu0
    %v395 = vadd.f32 0.0, %v394
    %v396 = vpop.f32.mrf.mxu0
    %397 = vmatprep.mubr.f32.mxu0 0.0
    %398 = vmatmul.mubr.f32.gmra.mxu0 %v318
    %v399 = vpop.f32.mrf.mxu0
    %v400 = vadd.f32 0.0, %v399
    %v401 = vpop.f32.mrf.mxu0
    %402 = vmatprep.mubr.f32.mxu0 0.0
    %403 = vmatmul.mubr.f32.gmra.mxu0 %v321
    %v404 = vpop.f32.mrf.mxu0
    %v405 = vadd.f32 0.0, %v404
    %v406 = vpop.f32.mrf.mxu0
    %407 = vdwg.mxu0
    %v408 = vld [vmem:[#allocation4] sm:$0xff]
    %v409 = vld [vmem:[#allocation4 + $0x8] sm:$0xff]
    %v410 = vld [vmem:[#allocation4 + $0x10] sm:$0xff]
    %v411 = vld [vmem:[#allocation4 + $0x18] sm:$0xff]
    %v412 = vld [vmem:[#allocation7] sm:$0x1]
    %v414 = vlaneseq
    %v415 = vshrl.u32 %v414, 7
    %v416 = vsub.s32 0, %v415
    %v417 = vrot.slane %v412, %v416
    %v420 = vsel %vm310, %v390, 0
    %v423 = vsel %vm310, %v395, 0
    %v426 = vsel %vm310, %v400, 0
    %v429 = vsel %vm310, %v405, 0
    %431 = vmatprep.subr.mxu0 0.0
    %432 = vmatpush1.msra.mxu0 0.0
    %433 = vmatprep.subr.mxu0 0.0
    %434 = vmatpush1.msra.mxu0 0.0
    %435 = vmatprep.subr.mxu0 0.0
    %436 = vmatpush1.msra.mxu0 0.0
    %437 = vmatprep.subr.mxu0 0.0
    %438 = vmatpush1.msra.mxu0 0.0
    %439 = vmatprep.subr.mxu0 0.0
    %440 = vmatpush1.msra.mxu0 0.0
    %441 = vmatprep.subr.mxu0 0.0
    %442 = vmatpush1.msra.mxu0 0.0
    %443 = vmatprep.subr.mxu0 0.0
    %444 = vmatpush1.msra.mxu0 0.0
    %445 = vmatprep.subr.mxu0 0.0
    %446 = vmatpush1.msra.mxu0 0.0
    %447 = vmatprep.subr.mxu0 0.0
    %448 = vmatpush1.msra.mxu0 0.0
    %449 = vmatprep.subr.mxu0 0.0
    %450 = vmatpush1.msra.mxu0 0.0
    %451 = vmatprep.subr.mxu0 0.0
    %452 = vmatpush1.msra.mxu0 0.0
    %453 = vmatprep.subr.mxu0 0.0
    %454 = vmatpush1.msra.mxu0 0.0
    %455 = vmatprep.subr.mxu0 0.0
    %456 = vmatpush1.msra.mxu0 %v411
    %457 = vmatprep.subr.mxu0 0.0
    %458 = vmatpush1.msra.mxu0 %v410
    %459 = vmatprep.subr.mxu0 0.0
    %460 = vmatpush1.msra.mxu0 %v409
    %461 = vmatprep.subr.mxu0 0.0
    %462 = vmatpush1.msra.mxu0 %v408
    %463 = vmatprep.subr.mxu0 0.0
    %464 = vmatpush2.msra.mxu0 0.0
    %465 = vmatprep.subr.mxu0 0.0
    %466 = vmatpush2.msra.mxu0 0.0
    %467 = vmatprep.subr.mxu0 0.0
    %468 = vmatpush2.msra.mxu0 0.0
    %469 = vmatprep.subr.mxu0 0.0
    %470 = vmatpush2.msra.mxu0 0.0
    %471 = vmatprep.subr.mxu0 0.0
    %472 = vmatpush2.msra.mxu0 0.0
    %473 = vmatprep.subr.mxu0 0.0
    %474 = vmatpush2.msra.mxu0 0.0
    %475 = vmatprep.subr.mxu0 0.0
    %476 = vmatpush2.msra.mxu0 0.0
    %477 = vmatprep.subr.mxu0 0.0
    %478 = vmatpush2.msra.mxu0 0.0
    %479 = vmatprep.subr.mxu0 0.0
    %480 = vmatpush2.msra.mxu0 0.0
    %481 = vmatprep.subr.mxu0 0.0
    %482 = vmatpush2.msra.mxu0 0.0
    %483 = vmatprep.subr.mxu0 0.0
    %484 = vmatpush2.msra.mxu0 0.0
    %485 = vmatprep.subr.mxu0 0.0
    %486 = vmatpush2.msra.mxu0 0.0
    %487 = vmatprep.subr.mxu0 0.0
    %488 = vmatpush2.msra.mxu0 0.0
    %489 = vmatprep.subr.mxu0 0.0
    %490 = vmatpush2.msra.mxu0 0.0
    %491 = vmatprep.subr.mxu0 0.0
    %492 = vmatpush2.msra.mxu0 0.0
    %493 = vmatprep.subr.mxu0 0.0
    %494 = vmatpush2.msra.mxu0 0.0
    %495 = vmatprep.mubr.f32.mxu0 0.0
    %496 = vmatmul.mubr.f32.gmra.mxu0 %v420
    %v497 = vpop.f32.mrf.mxu0
    %v498 = vadd.f32 %v417, %v497
    %v499 = vpop.f32.mrf.mxu0
    %500 = vmatprep.mubr.f32.mxu0 0.0
    %501 = vmatmul.mubr.f32.gmra.mxu0 %v423
    %v502 = vpop.f32.mrf.mxu0
    %v503 = vadd.f32 %v417, %v502
    %v504 = vpop.f32.mrf.mxu0
    %505 = vmatprep.mubr.f32.mxu0 0.0
    %506 = vmatmul.mubr.f32.gmra.mxu0 %v426
    %v507 = vpop.f32.mrf.mxu0
    %v508 = vadd.f32 %v417, %v507
    %v509 = vpop.f32.mrf.mxu0
    %510 = vmatprep.mubr.f32.mxu0 0.0
    %511 = vmatmul.mubr.f32.gmra.mxu0 %v429
    %v512 = vpop.f32.mrf.mxu0
    %v513 = vadd.f32 %v417, %v512
    %v514 = vpop.f32.mrf.mxu0
    %515 = vdwg.mxu0
    %v516 = vld [vmem:[#allocation6] sm:$0xff]
    %v517 = vld [vmem:[#allocation6 + $0x8] sm:$0xff]
    %v518 = vld [vmem:[#allocation6 + $0x10] sm:$0xff]
    %v519 = vld [vmem:[#allocation6 + $0x18] sm:$0xff]
    %v521 = vsel %vm310, 0.0, 0
    %523 = vmatprep.subr.mxu0 0.0
    %524 = vmatpush1.msra.mxu0 0.0
    %525 = vmatprep.subr.mxu0 0.0
    %526 = vmatpush1.msra.mxu0 0.0
    %527 = vmatprep.subr.mxu0 0.0
    %528 = vmatpush1.msra.mxu0 0.0
    %529 = vmatprep.subr.mxu0 0.0
    %530 = vmatpush1.msra.mxu0 0.0
    %531 = vmatprep.subr.mxu0 0.0
    %532 = vmatpush1.msra.mxu0 0.0
    %533 = vmatprep.subr.mxu0 0.0
    %534 = vmatpush1.msra.mxu0 0.0
    %535 = vmatprep.subr.mxu0 0.0
    %536 = vmatpush1.msra.mxu0 0.0
    %537 = vmatprep.subr.mxu0 0.0
    %538 = vmatpush1.msra.mxu0 0.0
    %539 = vmatprep.subr.mxu0 0.0
    %540 = vmatpush1.msra.mxu0 0.0
    %541 = vmatprep.subr.mxu0 0.0
    %542 = vmatpush1.msra.mxu0 0.0
    %543 = vmatprep.subr.mxu0 0.0
    %544 = vmatpush1.msra.mxu0 0.0
    %545 = vmatprep.subr.mxu0 0.0
    %546 = vmatpush1.msra.mxu0 0.0
    %547 = vmatprep.subr.mxu0 0.0
    %548 = vmatpush1.msra.mxu0 %v519
    %549 = vmatprep.subr.mxu0 0.0
    %550 = vmatpush1.msra.mxu0 %v518
    %551 = vmatprep.subr.mxu0 0.0
    %552 = vmatpush1.msra.mxu0 %v517
    %553 = vmatprep.subr.mxu0 0.0
    %554 = vmatpush1.msra.mxu0 %v516
    %555 = vmatprep.subr.mxu0 0.0
    %556 = vmatpush2.msra.mxu0 0.0
    %557 = vmatprep.subr.mxu0 0.0
    %558 = vmatpush2.msra.mxu0 0.0
    %559 = vmatprep.subr.mxu0 0.0
    %560 = vmatpush2.msra.mxu0 0.0
    %561 = vmatprep.subr.mxu0 0.0
    %562 = vmatpush2.msra.mxu0 0.0
    %563 = vmatprep.subr.mxu0 0.0
    %564 = vmatpush2.msra.mxu0 0.0
    %565 = vmatprep.subr.mxu0 0.0
    %566 = vmatpush2.msra.mxu0 0.0
    %567 = vmatprep.subr.mxu0 0.0
    %568 = vmatpush2.msra.mxu0 0.0
    %569 = vmatprep.subr.mxu0 0.0
    %570 = vmatpush2.msra.mxu0 0.0
    %571 = vmatprep.subr.mxu0 0.0
    %572 = vmatpush2.msra.mxu0 0.0
    %573 = vmatprep.subr.mxu0 0.0
    %574 = vmatpush2.msra.mxu0 0.0
    %575 = vmatprep.subr.mxu0 0.0
    %576 = vmatpush2.msra.mxu0 0.0
    %577 = vmatprep.subr.mxu0 0.0
    %578 = vmatpush2.msra.mxu0 0.0
    %579 = vmatprep.subr.mxu0 0.0
    %580 = vmatpush2.msra.mxu0 0.0
    %581 = vmatprep.subr.mxu0 0.0
    %582 = vmatpush2.msra.mxu0 0.0
    %583 = vmatprep.subr.mxu0 0.0
    %584 = vmatpush2.msra.mxu0 0.0
    %585 = vmatprep.subr.mxu0 0.0
    %586 = vmatpush2.msra.mxu0 0.0
    %587 = vmatprep.mubr.f32.mxu0 0.0
    %588 = vmatmul.mubr.f32.gmra.mxu0 %v521
    %v589 = vpop.f32.mrf.mxu0
    %v590 = vadd.f32 0.0, %v589
    %v591 = vpop.f32.mrf.mxu0
    %592 = vdwg.mxu0
    %v593 = vadd.f32 %v498, %v590
    %v594 = vxor.u32 %v593, 2147483648
    %v595 = vmul.f32 %v594, 1.442695
    %v596 = vpow.pop %v595
    %v597 = vadd.f32 %v596, 1.0
    %v598 = vrcp.pop %v597
    %v599 = vmul.f32 1.0, %v598
    %v600 = vtanh.pop %v593
    %v601 = vmul.f32 %v599, 0.0
    %603 = vrot.lane.b32.xlu0 %v600, 64
    %v604 = vpop.permute.xlu0 %603
    %v606 = vmul.f32 %v599, %v604
    %608 = vrot.lane.b32.xlu0 %v606, 32
    %v609 = vpop.permute.xlu0 %608
    %v611 = vadd.f32 %v601, %v609
    %v612 = vtanh.pop %v611
    %614 = vrot.lane.b32.xlu0 %v612, 64
    %v615 = vpop.permute.xlu0 %614
    %v617 = vmul.f32 %v599, %v615
    %619 = vrot.lane.b32.xlu0 %v617, 32
    %v620 = vpop.permute.xlu0 %619
    %v621 = vsel %vm310, %v620, 0
    %623 = vmatprep.subr.mxu0 0.0
    %624 = vmatpush1.msra.mxu0 0.0
    %625 = vmatprep.subr.mxu0 0.0
    %626 = vmatpush1.msra.mxu0 0.0
    %627 = vmatprep.subr.mxu0 0.0
    %628 = vmatpush1.msra.mxu0 0.0
    %629 = vmatprep.subr.mxu0 0.0
    %630 = vmatpush1.msra.mxu0 0.0
    %631 = vmatprep.subr.mxu0 0.0
    %632 = vmatpush1.msra.mxu0 0.0
    %633 = vmatprep.subr.mxu0 0.0
    %634 = vmatpush1.msra.mxu0 0.0
    %635 = vmatprep.subr.mxu0 0.0
    %636 = vmatpush1.msra.mxu0 0.0
    %637 = vmatprep.subr.mxu0 0.0
    %638 = vmatpush1.msra.mxu0 0.0
    %639 = vmatprep.subr.mxu0 0.0
    %640 = vmatpush1.msra.mxu0 0.0
    %641 = vmatprep.subr.mxu0 0.0
    %642 = vmatpush1.msra.mxu0 0.0
    %643 = vmatprep.subr.mxu0 0.0
    %644 = vmatpush1.msra.mxu0 0.0
    %645 = vmatprep.subr.mxu0 0.0
    %646 = vmatpush1.msra.mxu0 0.0
    %647 = vmatprep.subr.mxu0 0.0
    %648 = vmatpush1.msra.mxu0 %v519
    %649 = vmatprep.subr.mxu0 0.0
    %650 = vmatpush1.msra.mxu0 %v518
    %651 = vmatprep.subr.mxu0 0.0
    %652 = vmatpush1.msra.mxu0 %v517
    %653 = vmatprep.subr.mxu0 0.0
    %654 = vmatpush1.msra.mxu0 %v516
    %655 = vmatprep.subr.mxu0 0.0
    %656 = vmatpush2.msra.mxu0 0.0
    %657 = vmatprep.subr.mxu0 0.0
    %658 = vmatpush2.msra.mxu0 0.0
    %659 = vmatprep.subr.mxu0 0.0
    %660 = vmatpush2.msra.mxu0 0.0
    %661 = vmatprep.subr.mxu0 0.0
    %662 = vmatpush2.msra.mxu0 0.0
    %663 = vmatprep.subr.mxu0 0.0
    %664 = vmatpush2.msra.mxu0 0.0
    %665 = vmatprep.subr.mxu0 0.0
    %666 = vmatpush2.msra.mxu0 0.0
    %667 = vmatprep.subr.mxu0 0.0
    %668 = vmatpush2.msra.mxu0 0.0
    %669 = vmatprep.subr.mxu0 0.0
    %670 = vmatpush2.msra.mxu0 0.0
    %671 = vmatprep.subr.mxu0 0.0
    %672 = vmatpush2.msra.mxu0 0.0
    %673 = vmatprep.subr.mxu0 0.0
    %674 = vmatpush2.msra.mxu0 0.0
    %675 = vmatprep.subr.mxu0 0.0
    %676 = vmatpush2.msra.mxu0 0.0
    %677 = vmatprep.subr.mxu0 0.0
    %678 = vmatpush2.msra.mxu0 0.0
    %679 = vmatprep.subr.mxu0 0.0
    %680 = vmatpush2.msra.mxu0 0.0
    %681 = vmatprep.subr.mxu0 0.0
    %682 = vmatpush2.msra.mxu0 0.0
    %683 = vmatprep.subr.mxu0 0.0
    %684 = vmatpush2.msra.mxu0 0.0
    %685 = vmatprep.subr.mxu0 0.0
    %686 = vmatpush2.msra.mxu0 0.0
    %687 = vmatprep.mubr.f32.mxu0 0.0
    %688 = vmatmul.mubr.f32.gmra.mxu0 %v621
    %v689 = vpop.f32.mrf.mxu0
    %v690 = vadd.f32 0.0, %v689
    %v691 = vpop.f32.mrf.mxu0
    %692 = vdwg.mxu0
    %v694 = vrot.slane %v690, 4
    %v696 = vadd.f32 %v498, %v694
    %v697 = vxor.u32 %v696, 2147483648
    %v698 = vmul.f32 %v697, 1.442695
    %v699 = vpow.pop %v698
    %v700 = vadd.f32 %v699, 1.0
    %v701 = vrcp.pop %v700
    %v702 = vmul.f32 1.0, %v701
    %v703 = vtanh.pop %v696
    %v705 = vrot.slane %v611, 4
    %v707 = vmul.f32 %v702, %v705
    %709 = vrot.lane.b32.xlu0 %v703, 64
    %v710 = vpop.permute.xlu0 %709
    %v712 = vmul.f32 %v702, %v710
    %714 = vrot.lane.b32.xlu0 %v712, 32
    %v715 = vpop.permute.xlu0 %714
    %v717 = vadd.f32 %v707, %v715
    %v718 = vtanh.pop %v717
    %720 = vrot.lane.b32.xlu0 %v718, 64
    %v721 = vpop.permute.xlu0 %720
    %v723 = vmul.f32 %v702, %v721
    %v725 = vrot.slane %v723, 4
    %726 = vrot.lane.b32.xlu0 %v725, 32
    %v727 = vpop.permute.xlu0 %726
    %v728 = vsel %vm310, %v727, 0
    %730 = vmatprep.subr.mxu0 0.0
    %731 = vmatpush1.msra.mxu0 0.0
    %732 = vmatprep.subr.mxu0 0.0
    %733 = vmatpush1.msra.mxu0 0.0
    %734 = vmatprep.subr.mxu0 0.0
    %735 = vmatpush1.msra.mxu0 0.0
    %736 = vmatprep.subr.mxu0 0.0
    %737 = vmatpush1.msra.mxu0 0.0
    %738 = vmatprep.subr.mxu0 0.0
    %739 = vmatpush1.msra.mxu0 0.0
    %740 = vmatprep.subr.mxu0 0.0
    %741 = vmatpush1.msra.mxu0 0.0
    %742 = vmatprep.subr.mxu0 0.0
    %743 = vmatpush1.msra.mxu0 0.0
    %744 = vmatprep.subr.mxu0 0.0
    %745 = vmatpush1.msra.mxu0 0.0
    %746 = vmatprep.subr.mxu0 0.0
    %747 = vmatpush1.msra.mxu0 0.0
    %748 = vmatprep.subr.mxu0 0.0
    %749 = vmatpush1.msra.mxu0 0.0
    %750 = vmatprep.subr.mxu0 0.0
    %751 = vmatpush1.msra.mxu0 0.0
    %752 = vmatprep.subr.mxu0 0.0
    %753 = vmatpush1.msra.mxu0 0.0
    %754 = vmatprep.subr.mxu0 0.0
    %755 = vmatpush1.msra.mxu0 %v519
    %756 = vmatprep.subr.mxu0 0.0
    %757 = vmatpush1.msra.mxu0 %v518
    %758 = vmatprep.subr.mxu0 0.0
    %759 = vmatpush1.msra.mxu0 %v517
    %760 = vmatprep.subr.mxu0 0.0
    %761 = vmatpush1.msra.mxu0 %v516
    %762 = vmatprep.subr.mxu0 0.0
    %763 = vmatpush2.msra.mxu0 0.0
    %764 = vmatprep.subr.mxu0 0.0
    %765 = vmatpush2.msra.mxu0 0.0
    %766 = vmatprep.subr.mxu0 0.0
    %767 = vmatpush2.msra.mxu0 0.0
    %768 = vmatprep.subr.mxu0 0.0
    %769 = vmatpush2.msra.mxu0 0.0
    %770 = vmatprep.subr.mxu0 0.0
    %771 = vmatpush2.msra.mxu0 0.0
    %772 = vmatprep.subr.mxu0 0.0
    %773 = vmatpush2.msra.mxu0 0.0
    %774 = vmatprep.subr.mxu0 0.0
    %775 = vmatpush2.msra.mxu0 0.0
    %776 = vmatprep.subr.mxu0 0.0
    %777 = vmatpush2.msra.mxu0 0.0
    %778 = vmatprep.subr.mxu0 0.0
    %779 = vmatpush2.msra.mxu0 0.0
    %780 = vmatprep.subr.mxu0 0.0
    %781 = vmatpush2.msra.mxu0 0.0
    %782 = vmatprep.subr.mxu0 0.0
    %783 = vmatpush2.msra.mxu0 0.0
    %784 = vmatprep.subr.mxu0 0.0
    %785 = vmatpush2.msra.mxu0 0.0
    %786 = vmatprep.subr.mxu0 0.0
    %787 = vmatpush2.msra.mxu0 0.0
    %788 = vmatprep.subr.mxu0 0.0
    %789 = vmatpush2.msra.mxu0 0.0
    %790 = vmatprep.subr.mxu0 0.0
    %791 = vmatpush2.msra.mxu0 0.0
    %792 = vmatprep.subr.mxu0 0.0
    %793 = vmatpush2.msra.mxu0 0.0
    %794 = vmatprep.mubr.f32.mxu0 0.0
    %795 = vmatmul.mubr.f32.gmra.mxu0 %v728
    %v796 = vpop.f32.mrf.mxu0
    %v797 = vadd.f32 0.0, %v796
    %v798 = vpop.f32.mrf.mxu0
    %799 = vdwg.mxu0
    %v800 = vadd.f32 %v503, %v797
    %v801 = vxor.u32 %v800, 2147483648
    %v802 = vmul.f32 %v801, 1.442695
    %v803 = vpow.pop %v802
    %v804 = vadd.f32 %v803, 1.0
    %v805 = vrcp.pop %v804
    %v806 = vmul.f32 1.0, %v805
    %v807 = vtanh.pop %v800
    %v809 = vrot.slane %v717, 4
    %v811 = vmul.f32 %v806, %v809
    %813 = vrot.lane.b32.xlu0 %v807, 64
    %v814 = vpop.permute.xlu0 %813
    %v816 = vmul.f32 %v806, %v814
    %818 = vrot.lane.b32.xlu0 %v816, 32
    %v819 = vpop.permute.xlu0 %818
    %v821 = vadd.f32 %v811, %v819
    %v822 = vtanh.pop %v821
    %824 = vrot.lane.b32.xlu0 %v822, 64
    %v825 = vpop.permute.xlu0 %824
    %v827 = vmul.f32 %v806, %v825
    %829 = vrot.lane.b32.xlu0 %v827, 32
    %v830 = vpop.permute.xlu0 %829
    %v831 = vsel %vm310, %v830, 0
    %833 = vmatprep.subr.mxu0 0.0
    %834 = vmatpush1.msra.mxu0 0.0
    %835 = vmatprep.subr.mxu0 0.0
    %836 = vmatpush1.msra.mxu0 0.0
    %837 = vmatprep.subr.mxu0 0.0
    %838 = vmatpush1.msra.mxu0 0.0
    %839 = vmatprep.subr.mxu0 0.0
    %840 = vmatpush1.msra.mxu0 0.0
    %841 = vmatprep.subr.mxu0 0.0
    %842 = vmatpush1.msra.mxu0 0.0
    %843 = vmatprep.subr.mxu0 0.0
    %844 = vmatpush1.msra.mxu0 0.0
    %845 = vmatprep.subr.mxu0 0.0
    %846 = vmatpush1.msra.mxu0 0.0
    %847 = vmatprep.subr.mxu0 0.0
    %848 = vmatpush1.msra.mxu0 0.0
    %849 = vmatprep.subr.mxu0 0.0
    %850 = vmatpush1.msra.mxu0 0.0
    %851 = vmatprep.subr.mxu0 0.0
    %852 = vmatpush1.msra.mxu0 0.0
    %853 = vmatprep.subr.mxu0 0.0
    %854 = vmatpush1.msra.mxu0 0.0
    %855 = vmatprep.subr.mxu0 0.0
    %856 = vmatpush1.msra.mxu0 0.0
    %857 = vmatprep.subr.mxu0 0.0
    %858 = vmatpush1.msra.mxu0 %v519
    %859 = vmatprep.subr.mxu0 0.0
    %860 = vmatpush1.msra.mxu0 %v518
    %861 = vmatprep.subr.mxu0 0.0
    %862 = vmatpush1.msra.mxu0 %v517
    %863 = vmatprep.subr.mxu0 0.0
    %864 = vmatpush1.msra.mxu0 %v516
    %865 = vmatprep.subr.mxu0 0.0
    %866 = vmatpush2.msra.mxu0 0.0
    %867 = vmatprep.subr.mxu0 0.0
    %868 = vmatpush2.msra.mxu0 0.0
    %869 = vmatprep.subr.mxu0 0.0
    %870 = vmatpush2.msra.mxu0 0.0
    %871 = vmatprep.subr.mxu0 0.0
    %872 = vmatpush2.msra.mxu0 0.0
    %873 = vmatprep.subr.mxu0 0.0
    %874 = vmatpush2.msra.mxu0 0.0
    %875 = vmatprep.subr.mxu0 0.0
    %876 = vmatpush2.msra.mxu0 0.0
    %877 = vmatprep.subr.mxu0 0.0
    %878 = vmatpush2.msra.mxu0 0.0
    %879 = vmatprep.subr.mxu0 0.0
    %880 = vmatpush2.msra.mxu0 0.0
    %881 = vmatprep.subr.mxu0 0.0
    %882 = vmatpush2.msra.mxu0 0.0
    %883 = vmatprep.subr.mxu0 0.0
    %884 = vmatpush2.msra.mxu0 0.0
    %885 = vmatprep.subr.mxu0 0.0
    %886 = vmatpush2.msra.mxu0 0.0
    %887 = vmatprep.subr.mxu0 0.0
    %888 = vmatpush2.msra.mxu0 0.0
    %889 = vmatprep.subr.mxu0 0.0
    %890 = vmatpush2.msra.mxu0 0.0
    %891 = vmatprep.subr.mxu0 0.0
    %892 = vmatpush2.msra.mxu0 0.0
    %893 = vmatprep.subr.mxu0 0.0
    %894 = vmatpush2.msra.mxu0 0.0
    %895 = vmatprep.subr.mxu0 0.0
    %896 = vmatpush2.msra.mxu0 0.0
    %897 = vmatprep.mubr.f32.mxu0 0.0
    %898 = vmatmul.mubr.f32.gmra.mxu0 %v831
    %v899 = vpop.f32.mrf.mxu0
    %v900 = vadd.f32 0.0, %v899
    %v901 = vpop.f32.mrf.mxu0
    %902 = vdwg.mxu0
    %v904 = vrot.slane %v900, 4
    %v906 = vadd.f32 %v503, %v904
    %v907 = vxor.u32 %v906, 2147483648
    %v908 = vmul.f32 %v907, 1.442695
    %v909 = vpow.pop %v908
    %v910 = vadd.f32 %v909, 1.0
    %v911 = vrcp.pop %v910
    %v912 = vmul.f32 1.0, %v911
    %v913 = vtanh.pop %v906
    %v915 = vrot.slane %v821, 4
    %v917 = vmul.f32 %v912, %v915
    %919 = vrot.lane.b32.xlu0 %v913, 64
    %v920 = vpop.permute.xlu0 %919
    %v922 = vmul.f32 %v912, %v920
    %924 = vrot.lane.b32.xlu0 %v922, 32
    %v925 = vpop.permute.xlu0 %924
    %v927 = vadd.f32 %v917, %v925
    %v928 = vtanh.pop %v927
    %930 = vrot.lane.b32.xlu0 %v928, 64
    %v931 = vpop.permute.xlu0 %930
    %v933 = vmul.f32 %v912, %v931
    %v935 = vrot.slane %v933, 4
    %936 = vrot.lane.b32.xlu0 %v935, 32
    %v937 = vpop.permute.xlu0 %936
    %v938 = vsel %vm310, %v937, 0
    %940 = vmatprep.subr.mxu0 0.0
    %941 = vmatpush1.msra.mxu0 0.0
    %942 = vmatprep.subr.mxu0 0.0
    %943 = vmatpush1.msra.mxu0 0.0
    %944 = vmatprep.subr.mxu0 0.0
    %945 = vmatpush1.msra.mxu0 0.0
    %946 = vmatprep.subr.mxu0 0.0
    %947 = vmatpush1.msra.mxu0 0.0
    %948 = vmatprep.subr.mxu0 0.0
    %949 = vmatpush1.msra.mxu0 0.0
    %950 = vmatprep.subr.mxu0 0.0
    %951 = vmatpush1.msra.mxu0 0.0
    %952 = vmatprep.subr.mxu0 0.0
    %953 = vmatpush1.msra.mxu0 0.0
    %954 = vmatprep.subr.mxu0 0.0
    %955 = vmatpush1.msra.mxu0 0.0
    %956 = vmatprep.subr.mxu0 0.0
    %957 = vmatpush1.msra.mxu0 0.0
    %958 = vmatprep.subr.mxu0 0.0
    %959 = vmatpush1.msra.mxu0 0.0
    %960 = vmatprep.subr.mxu0 0.0
    %961 = vmatpush1.msra.mxu0 0.0
    %962 = vmatprep.subr.mxu0 0.0
    %963 = vmatpush1.msra.mxu0 0.0
    %964 = vmatprep.subr.mxu0 0.0
    %965 = vmatpush1.msra.mxu0 %v519
    %966 = vmatprep.subr.mxu0 0.0
    %967 = vmatpush1.msra.mxu0 %v518
    %968 = vmatprep.subr.mxu0 0.0
    %969 = vmatpush1.msra.mxu0 %v517
    %970 = vmatprep.subr.mxu0 0.0
    %971 = vmatpush1.msra.mxu0 %v516
    %972 = vmatprep.subr.mxu0 0.0
    %973 = vmatpush2.msra.mxu0 0.0
    %974 = vmatprep.subr.mxu0 0.0
    %975 = vmatpush2.msra.mxu0 0.0
    %976 = vmatprep.subr.mxu0 0.0
    %977 = vmatpush2.msra.mxu0 0.0
    %978 = vmatprep.subr.mxu0 0.0
    %979 = vmatpush2.msra.mxu0 0.0
    %980 = vmatprep.subr.mxu0 0.0
    %981 = vmatpush2.msra.mxu0 0.0
    %982 = vmatprep.subr.mxu0 0.0
    %983 = vmatpush2.msra.mxu0 0.0
    %984 = vmatprep.subr.mxu0 0.0
    %985 = vmatpush2.msra.mxu0 0.0
    %986 = vmatprep.subr.mxu0 0.0
    %987 = vmatpush2.msra.mxu0 0.0
    %988 = vmatprep.subr.mxu0 0.0
    %989 = vmatpush2.msra.mxu0 0.0
    %990 = vmatprep.subr.mxu0 0.0
    %991 = vmatpush2.msra.mxu0 0.0
    %992 = vmatprep.subr.mxu0 0.0
    %993 = vmatpush2.msra.mxu0 0.0
    %994 = vmatprep.subr.mxu0 0.0
    %995 = vmatpush2.msra.mxu0 0.0
    %996 = vmatprep.subr.mxu0 0.0
    %997 = vmatpush2.msra.mxu0 0.0
    %998 = vmatprep.subr.mxu0 0.0
    %999 = vmatpush2.msra.mxu0 0.0
    %1000 = vmatprep.subr.mxu0 0.0
    %1001 = vmatpush2.msra.mxu0 0.0
    %1002 = vmatprep.subr.mxu0 0.0
    %1003 = vmatpush2.msra.mxu0 0.0
    %1004 = vmatprep.mubr.f32.mxu0 0.0
    %1005 = vmatmul.mubr.f32.gmra.mxu0 %v938
    %v1006 = vpop.f32.mrf.mxu0
    %v1007 = vadd.f32 0.0, %v1006
    %v1008 = vpop.f32.mrf.mxu0
    %1009 = vdwg.mxu0
    %v1010 = vadd.f32 %v508, %v1007
    %v1011 = vxor.u32 %v1010, 2147483648
    %v1012 = vmul.f32 %v1011, 1.442695
    %v1013 = vpow.pop %v1012
    %v1014 = vadd.f32 %v1013, 1.0
    %v1015 = vrcp.pop %v1014
    %v1016 = vmul.f32 1.0, %v1015
    %v1017 = vtanh.pop %v1010
    %v1019 = vrot.slane %v927, 4
    %v1021 = vmul.f32 %v1016, %v1019
    %1023 = vrot.lane.b32.xlu0 %v1017, 64
    %v1024 = vpop.permute.xlu0 %1023
    %v1026 = vmul.f32 %v1016, %v1024
    %1028 = vrot.lane.b32.xlu0 %v1026, 32
    %v1029 = vpop.permute.xlu0 %1028
    %v1031 = vadd.f32 %v1021, %v1029
    %v1032 = vtanh.pop %v1031
    %1034 = vrot.lane.b32.xlu0 %v1032, 64
    %v1035 = vpop.permute.xlu0 %1034
    %v1037 = vmul.f32 %v1016, %v1035
    %1039 = vrot.lane.b32.xlu0 %v1037, 32
    %v1040 = vpop.permute.xlu0 %1039
    %v1041 = vsel %vm310, %v1040, 0
    %1043 = vmatprep.subr.mxu0 0.0
    %1044 = vmatpush1.msra.mxu0 0.0
    %1045 = vmatprep.subr.mxu0 0.0
    %1046 = vmatpush1.msra.mxu0 0.0
    %1047 = vmatprep.subr.mxu0 0.0
    %1048 = vmatpush1.msra.mxu0 0.0
    %1049 = vmatprep.subr.mxu0 0.0
    %1050 = vmatpush1.msra.mxu0 0.0
    %1051 = vmatprep.subr.mxu0 0.0
    %1052 = vmatpush1.msra.mxu0 0.0
    %1053 = vmatprep.subr.mxu0 0.0
    %1054 = vmatpush1.msra.mxu0 0.0
    %1055 = vmatprep.subr.mxu0 0.0
    %1056 = vmatpush1.msra.mxu0 0.0
    %1057 = vmatprep.subr.mxu0 0.0
    %1058 = vmatpush1.msra.mxu0 0.0
    %1059 = vmatprep.subr.mxu0 0.0
    %1060 = vmatpush1.msra.mxu0 0.0
    %1061 = vmatprep.subr.mxu0 0.0
    %1062 = vmatpush1.msra.mxu0 0.0
    %1063 = vmatprep.subr.mxu0 0.0
    %1064 = vmatpush1.msra.mxu0 0.0
    %1065 = vmatprep.subr.mxu0 0.0
    %1066 = vmatpush1.msra.mxu0 0.0
    %1067 = vmatprep.subr.mxu0 0.0
    %1068 = vmatpush1.msra.mxu0 %v519
    %1069 = vmatprep.subr.mxu0 0.0
    %1070 = vmatpush1.msra.mxu0 %v518
    %1071 = vmatprep.subr.mxu0 0.0
    %1072 = vmatpush1.msra.mxu0 %v517
    %1073 = vmatprep.subr.mxu0 0.0
    %1074 = vmatpush1.msra.mxu0 %v516
    %1075 = vmatprep.subr.mxu0 0.0
    %1076 = vmatpush2.msra.mxu0 0.0
    %1077 = vmatprep.subr.mxu0 0.0
    %1078 = vmatpush2.msra.mxu0 0.0
    %1079 = vmatprep.subr.mxu0 0.0
    %1080 = vmatpush2.msra.mxu0 0.0
    %1081 = vmatprep.subr.mxu0 0.0
    %1082 = vmatpush2.msra.mxu0 0.0
    %1083 = vmatprep.subr.mxu0 0.0
    %1084 = vmatpush2.msra.mxu0 0.0
    %1085 = vmatprep.subr.mxu0 0.0
    %1086 = vmatpush2.msra.mxu0 0.0
    %1087 = vmatprep.subr.mxu0 0.0
    %1088 = vmatpush2.msra.mxu0 0.0
    %1089 = vmatprep.subr.mxu0 0.0
    %1090 = vmatpush2.msra.mxu0 0.0
    %1091 = vmatprep.subr.mxu0 0.0
    %1092 = vmatpush2.msra.mxu0 0.0
    %1093 = vmatprep.subr.mxu0 0.0
    %1094 = vmatpush2.msra.mxu0 0.0
    %1095 = vmatprep.subr.mxu0 0.0
    %1096 = vmatpush2.msra.mxu0 0.0
    %1097 = vmatprep.subr.mxu0 0.0
    %1098 = vmatpush2.msra.mxu0 0.0
    %1099 = vmatprep.subr.mxu0 0.0
    %1100 = vmatpush2.msra.mxu0 0.0
    %1101 = vmatprep.subr.mxu0 0.0
    %1102 = vmatpush2.msra.mxu0 0.0
    %1103 = vmatprep.subr.mxu0 0.0
    %1104 = vmatpush2.msra.mxu0 0.0
    %1105 = vmatprep.subr.mxu0 0.0
    %1106 = vmatpush2.msra.mxu0 0.0
    %1107 = vmatprep.mubr.f32.mxu0 0.0
    %1108 = vmatmul.mubr.f32.gmra.mxu0 %v1041
    %v1109 = vpop.f32.mrf.mxu0
    %v1110 = vadd.f32 0.0, %v1109
    %v1111 = vpop.f32.mrf.mxu0
    %1112 = vdwg.mxu0
    %v1114 = vrot.slane %v1110, 4
    %v1116 = vadd.f32 %v508, %v1114
    %v1117 = vxor.u32 %v1116, 2147483648
    %v1118 = vmul.f32 %v1117, 1.442695
    %v1119 = vpow.pop %v1118
    %v1120 = vadd.f32 %v1119, 1.0
    %v1121 = vrcp.pop %v1120
    %v1122 = vmul.f32 1.0, %v1121
    %v1123 = vtanh.pop %v1116
    %v1125 = vrot.slane %v1031, 4
    %v1127 = vmul.f32 %v1122, %v1125
    %1129 = vrot.lane.b32.xlu0 %v1123, 64
    %v1130 = vpop.permute.xlu0 %1129
    %v1132 = vmul.f32 %v1122, %v1130
    %1134 = vrot.lane.b32.xlu0 %v1132, 32
    %v1135 = vpop.permute.xlu0 %1134
    %v1137 = vadd.f32 %v1127, %v1135
    %v1138 = vtanh.pop %v1137
    %1140 = vrot.lane.b32.xlu0 %v1138, 64
    %v1141 = vpop.permute.xlu0 %1140
    %v1143 = vmul.f32 %v1122, %v1141
    %v1145 = vrot.slane %v1143, 4
    %1146 = vrot.lane.b32.xlu0 %v1145, 32
    %v1147 = vpop.permute.xlu0 %1146
    %v1148 = vsel %vm310, %v1147, 0
    %1150 = vmatprep.subr.mxu0 0.0
    %1151 = vmatpush1.msra.mxu0 0.0
    %1152 = vmatprep.subr.mxu0 0.0
    %1153 = vmatpush1.msra.mxu0 0.0
    %1154 = vmatprep.subr.mxu0 0.0
    %1155 = vmatpush1.msra.mxu0 0.0
    %1156 = vmatprep.subr.mxu0 0.0
    %1157 = vmatpush1.msra.mxu0 0.0
    %1158 = vmatprep.subr.mxu0 0.0
    %1159 = vmatpush1.msra.mxu0 0.0
    %1160 = vmatprep.subr.mxu0 0.0
    %1161 = vmatpush1.msra.mxu0 0.0
    %1162 = vmatprep.subr.mxu0 0.0
    %1163 = vmatpush1.msra.mxu0 0.0
    %1164 = vmatprep.subr.mxu0 0.0
    %1165 = vmatpush1.msra.mxu0 0.0
    %1166 = vmatprep.subr.mxu0 0.0
    %1167 = vmatpush1.msra.mxu0 0.0
    %1168 = vmatprep.subr.mxu0 0.0
    %1169 = vmatpush1.msra.mxu0 0.0
    %1170 = vmatprep.subr.mxu0 0.0
    %1171 = vmatpush1.msra.mxu0 0.0
    %1172 = vmatprep.subr.mxu0 0.0
    %1173 = vmatpush1.msra.mxu0 0.0
    %1174 = vmatprep.subr.mxu0 0.0
    %1175 = vmatpush1.msra.mxu0 %v519
    %1176 = vmatprep.subr.mxu0 0.0
    %1177 = vmatpush1.msra.mxu0 %v518
    %1178 = vmatprep.subr.mxu0 0.0
    %1179 = vmatpush1.msra.mxu0 %v517
    %1180 = vmatprep.subr.mxu0 0.0
    %1181 = vmatpush1.msra.mxu0 %v516
    %1182 = vmatprep.subr.mxu0 0.0
    %1183 = vmatpush2.msra.mxu0 0.0
    %1184 = vmatprep.subr.mxu0 0.0
    %1185 = vmatpush2.msra.mxu0 0.0
    %1186 = vmatprep.subr.mxu0 0.0
    %1187 = vmatpush2.msra.mxu0 0.0
    %1188 = vmatprep.subr.mxu0 0.0
    %1189 = vmatpush2.msra.mxu0 0.0
    %1190 = vmatprep.subr.mxu0 0.0
    %1191 = vmatpush2.msra.mxu0 0.0
    %1192 = vmatprep.subr.mxu0 0.0
    %1193 = vmatpush2.msra.mxu0 0.0
    %1194 = vmatprep.subr.mxu0 0.0
    %1195 = vmatpush2.msra.mxu0 0.0
    %1196 = vmatprep.subr.mxu0 0.0
    %1197 = vmatpush2.msra.mxu0 0.0
    %1198 = vmatprep.subr.mxu0 0.0
    %1199 = vmatpush2.msra.mxu0 0.0
    %1200 = vmatprep.subr.mxu0 0.0
    %1201 = vmatpush2.msra.mxu0 0.0
    %1202 = vmatprep.subr.mxu0 0.0
    %1203 = vmatpush2.msra.mxu0 0.0
    %1204 = vmatprep.subr.mxu0 0.0
    %1205 = vmatpush2.msra.mxu0 0.0
    %1206 = vmatprep.subr.mxu0 0.0
    %1207 = vmatpush2.msra.mxu0 0.0
    %1208 = vmatprep.subr.mxu0 0.0
    %1209 = vmatpush2.msra.mxu0 0.0
    %1210 = vmatprep.subr.mxu0 0.0
    %1211 = vmatpush2.msra.mxu0 0.0
    %1212 = vmatprep.subr.mxu0 0.0
    %1213 = vmatpush2.msra.mxu0 0.0
    %1214 = vmatprep.mubr.f32.mxu0 0.0
    %1215 = vmatmul.mubr.f32.gmra.mxu0 %v1148
    %v1216 = vpop.f32.mrf.mxu0
    %v1217 = vadd.f32 0.0, %v1216
    %v1218 = vpop.f32.mrf.mxu0
    %1219 = vdwg.mxu0
    %v1220 = vadd.f32 %v513, %v1217
    %v1221 = vxor.u32 %v1220, 2147483648
    %v1222 = vmul.f32 %v1221, 1.442695
    %v1223 = vpow.pop %v1222
    %v1224 = vadd.f32 %v1223, 1.0
    %v1225 = vrcp.pop %v1224
    %v1226 = vmul.f32 1.0, %v1225
    %v1227 = vtanh.pop %v1220
    %v1229 = vrot.slane %v1137, 4
    %v1231 = vmul.f32 %v1226, %v1229
    %1233 = vrot.lane.b32.xlu0 %v1227, 64
    %v1234 = vpop.permute.xlu0 %1233
    %v1236 = vmul.f32 %v1226, %v1234
    %1238 = vrot.lane.b32.xlu0 %v1236, 32
    %v1239 = vpop.permute.xlu0 %1238
    %v1241 = vadd.f32 %v1231, %v1239
    %v1242 = vtanh.pop %v1241
    %1244 = vrot.lane.b32.xlu0 %v1242, 64
    %v1245 = vpop.permute.xlu0 %1244
    %v1247 = vmul.f32 %v1226, %v1245
    %1249 = vrot.lane.b32.xlu0 %v1247, 32
    %v1250 = vpop.permute.xlu0 %1249
    %v1251 = vsel %vm310, %v1250, 0
    %1253 = vmatprep.subr.mxu0 0.0
    %1254 = vmatpush1.msra.mxu0 0.0
    %1255 = vmatprep.subr.mxu0 0.0
    %1256 = vmatpush1.msra.mxu0 0.0
    %1257 = vmatprep.subr.mxu0 0.0
    %1258 = vmatpush1.msra.mxu0 0.0
    %1259 = vmatprep.subr.mxu0 0.0
    %1260 = vmatpush1.msra.mxu0 0.0
    %1261 = vmatprep.subr.mxu0 0.0
    %1262 = vmatpush1.msra.mxu0 0.0
    %1263 = vmatprep.subr.mxu0 0.0
    %1264 = vmatpush1.msra.mxu0 0.0
    %1265 = vmatprep.subr.mxu0 0.0
    %1266 = vmatpush1.msra.mxu0 0.0
    %1267 = vmatprep.subr.mxu0 0.0
    %1268 = vmatpush1.msra.mxu0 0.0
    %1269 = vmatprep.subr.mxu0 0.0
    %1270 = vmatpush1.msra.mxu0 0.0
    %1271 = vmatprep.subr.mxu0 0.0
    %1272 = vmatpush1.msra.mxu0 0.0
    %1273 = vmatprep.subr.mxu0 0.0
    %1274 = vmatpush1.msra.mxu0 0.0
    %1275 = vmatprep.subr.mxu0 0.0
    %1276 = vmatpush1.msra.mxu0 0.0
    %1277 = vmatprep.subr.mxu0 0.0
    %1278 = vmatpush1.msra.mxu0 %v519
    %1279 = vmatprep.subr.mxu0 0.0
    %1280 = vmatpush1.msra.mxu0 %v518
    %1281 = vmatprep.subr.mxu0 0.0
    %1282 = vmatpush1.msra.mxu0 %v517
    %1283 = vmatprep.subr.mxu0 0.0
    %1284 = vmatpush1.msra.mxu0 %v516
    %1285 = vmatprep.subr.mxu0 0.0
    %1286 = vmatpush2.msra.mxu0 0.0
    %1287 = vmatprep.subr.mxu0 0.0
    %1288 = vmatpush2.msra.mxu0 0.0
    %1289 = vmatprep.subr.mxu0 0.0
    %1290 = vmatpush2.msra.mxu0 0.0
    %1291 = vmatprep.subr.mxu0 0.0
    %1292 = vmatpush2.msra.mxu0 0.0
    %1293 = vmatprep.subr.mxu0 0.0
    %1294 = vmatpush2.msra.mxu0 0.0
    %1295 = vmatprep.subr.mxu0 0.0
    %1296 = vmatpush2.msra.mxu0 0.0
    %1297 = vmatprep.subr.mxu0 0.0
    %1298 = vmatpush2.msra.mxu0 0.0
    %1299 = vmatprep.subr.mxu0 0.0
    %1300 = vmatpush2.msra.mxu0 0.0
    %1301 = vmatprep.subr.mxu0 0.0
    %1302 = vmatpush2.msra.mxu0 0.0
    %1303 = vmatprep.subr.mxu0 0.0
    %1304 = vmatpush2.msra.mxu0 0.0
    %1305 = vmatprep.subr.mxu0 0.0
    %1306 = vmatpush2.msra.mxu0 0.0
    %1307 = vmatprep.subr.mxu0 0.0
    %1308 = vmatpush2.msra.mxu0 0.0
    %1309 = vmatprep.subr.mxu0 0.0
    %1310 = vmatpush2.msra.mxu0 0.0
    %1311 = vmatprep.subr.mxu0 0.0
    %1312 = vmatpush2.msra.mxu0 0.0
    %1313 = vmatprep.subr.mxu0 0.0
    %1314 = vmatpush2.msra.mxu0 0.0
    %1315 = vmatprep.subr.mxu0 0.0
    %1316 = vmatpush2.msra.mxu0 0.0
    %1317 = vmatprep.mubr.f32.mxu0 0.0
    %1318 = vmatmul.mubr.f32.gmra.mxu0 %v1251
    %v1319 = vpop.f32.mrf.mxu0
    %v1320 = vadd.f32 0.0, %v1319
    %v1321 = vpop.f32.mrf.mxu0
    %1322 = vdwg.mxu0
    %v1324 = vrot.slane %v1320, 4
    %v1326 = vadd.f32 %v513, %v1324
    %v1327 = vxor.u32 %v1326, 2147483648
    %v1328 = vmul.f32 %v1327, 1.442695
    %v1329 = vpow.pop %v1328
    %v1330 = vadd.f32 %v1329, 1.0
    %v1331 = vrcp.pop %v1330
    %v1332 = vmul.f32 1.0, %v1331
    %v1333 = vtanh.pop %v1326
    %v1335 = vrot.slane %v1241, 4
    %v1337 = vmul.f32 %v1332, %v1335
    %1339 = vrot.lane.b32.xlu0 %v1333, 64
    %v1340 = vpop.permute.xlu0 %1339
    %v1342 = vmul.f32 %v1332, %v1340
    %1344 = vrot.lane.b32.xlu0 %v1342, 32
    %v1345 = vpop.permute.xlu0 %1344
    %v1347 = vadd.f32 %v1337, %v1345
    %v1348 = vtanh.pop %v1347
    %1350 = vrot.lane.b32.xlu0 %v1348, 64
    %v1351 = vpop.permute.xlu0 %1350
    %v1353 = vmul.f32 %v1332, %v1351
    %v1354 = vld [vmem:[#allocation9] sm:$0xff]
    %v1355 = vld [vmem:[#allocation9 + $0x8] sm:$0xff]
    %v1356 = vld [vmem:[#allocation9 + $0x10] sm:$0xff]
    %v1357 = vld [vmem:[#allocation9 + $0x18] sm:$0xff]
    %v1358 = vld [vmem:[#allocation12] sm:$0x1]
    %v1360 = vlaneseq
    %v1361 = vshrl.u32 %v1360, 7
    %v1362 = vsub.s32 0, %v1361
    %v1363 = vrot.slane %v1358, %v1362
    %1365 = vmatprep.subr.mxu0 0.0
    %1366 = vmatpush1.msra.mxu0 0.0
    %1367 = vmatprep.subr.mxu0 0.0
    %1368 = vmatpush1.msra.mxu0 0.0
    %1369 = vmatprep.subr.mxu0 0.0
    %1370 = vmatpush1.msra.mxu0 0.0
    %1371 = vmatprep.subr.mxu0 0.0
    %1372 = vmatpush1.msra.mxu0 0.0
    %1373 = vmatprep.subr.mxu0 0.0
    %1374 = vmatpush1.msra.mxu0 0.0
    %1375 = vmatprep.subr.mxu0 0.0
    %1376 = vmatpush1.msra.mxu0 0.0
    %1377 = vmatprep.subr.mxu0 0.0
    %1378 = vmatpush1.msra.mxu0 0.0
    %1379 = vmatprep.subr.mxu0 0.0
    %1380 = vmatpush1.msra.mxu0 0.0
    %1381 = vmatprep.subr.mxu0 0.0
    %1382 = vmatpush1.msra.mxu0 0.0
    %1383 = vmatprep.subr.mxu0 0.0
    %1384 = vmatpush1.msra.mxu0 0.0
    %1385 = vmatprep.subr.mxu0 0.0
    %1386 = vmatpush1.msra.mxu0 0.0
    %1387 = vmatprep.subr.mxu0 0.0
    %1388 = vmatpush1.msra.mxu0 0.0
    %1389 = vmatprep.subr.mxu0 0.0
    %1390 = vmatpush1.msra.mxu0 %v1357
    %1391 = vmatprep.subr.mxu0 0.0
    %1392 = vmatpush1.msra.mxu0 %v1356
    %1393 = vmatprep.subr.mxu0 0.0
    %1394 = vmatpush1.msra.mxu0 %v1355
    %1395 = vmatprep.subr.mxu0 0.0
    %1396 = vmatpush1.msra.mxu0 %v1354
    %1397 = vmatprep.subr.mxu0 0.0
    %1398 = vmatpush2.msra.mxu0 0.0
    %1399 = vmatprep.subr.mxu0 0.0
    %1400 = vmatpush2.msra.mxu0 0.0
    %1401 = vmatprep.subr.mxu0 0.0
    %1402 = vmatpush2.msra.mxu0 0.0
    %1403 = vmatprep.subr.mxu0 0.0
    %1404 = vmatpush2.msra.mxu0 0.0
    %1405 = vmatprep.subr.mxu0 0.0
    %1406 = vmatpush2.msra.mxu0 0.0
    %1407 = vmatprep.subr.mxu0 0.0
    %1408 = vmatpush2.msra.mxu0 0.0
    %1409 = vmatprep.subr.mxu0 0.0
    %1410 = vmatpush2.msra.mxu0 0.0
    %1411 = vmatprep.subr.mxu0 0.0
    %1412 = vmatpush2.msra.mxu0 0.0
    %1413 = vmatprep.subr.mxu0 0.0
    %1414 = vmatpush2.msra.mxu0 0.0
    %1415 = vmatprep.subr.mxu0 0.0
    %1416 = vmatpush2.msra.mxu0 0.0
    %1417 = vmatprep.subr.mxu0 0.0
    %1418 = vmatpush2.msra.mxu0 0.0
    %1419 = vmatprep.subr.mxu0 0.0
    %1420 = vmatpush2.msra.mxu0 0.0
    %1421 = vmatprep.subr.mxu0 0.0
    %1422 = vmatpush2.msra.mxu0 0.0
    %1423 = vmatprep.subr.mxu0 0.0
    %1424 = vmatpush2.msra.mxu0 0.0
    %1425 = vmatprep.subr.mxu0 0.0
    %1426 = vmatpush2.msra.mxu0 0.0
    %1427 = vmatprep.subr.mxu0 0.0
    %1428 = vmatpush2.msra.mxu0 0.0
    %1429 = vmatprep.mubr.f32.mxu0 0.0
    %1430 = vmatmul.mubr.f32.gmra.mxu0 %v420
    %v1431 = vpop.f32.mrf.mxu0
    %v1432 = vadd.f32 %v1363, %v1431
    %v1433 = vpop.f32.mrf.mxu0
    %1434 = vmatprep.mubr.f32.mxu0 0.0
    %1435 = vmatmul.mubr.f32.gmra.mxu0 %v423
    %v1436 = vpop.f32.mrf.mxu0
    %v1437 = vadd.f32 %v1363, %v1436
    %v1438 = vpop.f32.mrf.mxu0
    %1439 = vmatprep.mubr.f32.mxu0 0.0
    %1440 = vmatmul.mubr.f32.gmra.mxu0 %v426
    %v1441 = vpop.f32.mrf.mxu0
    %v1442 = vadd.f32 %v1363, %v1441
    %v1443 = vpop.f32.mrf.mxu0
    %1444 = vmatprep.mubr.f32.mxu0 0.0
    %1445 = vmatmul.mubr.f32.gmra.mxu0 %v429
    %v1446 = vpop.f32.mrf.mxu0
    %v1447 = vadd.f32 %v1363, %v1446
    %v1448 = vpop.f32.mrf.mxu0
    %1449 = vdwg.mxu0
    %v1450 = vld [vmem:[#allocation10] sm:$0xff]
    %v1451 = vld [vmem:[#allocation10 + $0x8] sm:$0xff]
    %v1452 = vld [vmem:[#allocation10 + $0x10] sm:$0xff]
    %v1453 = vld [vmem:[#allocation10 + $0x18] sm:$0xff]
    %1454 = vmatprep.subr.mxu0 0.0
    %1455 = vmatpush1.msra.mxu0 0.0
    %1456 = vmatprep.subr.mxu0 0.0
    %1457 = vmatpush1.msra.mxu0 0.0
    %1458 = vmatprep.subr.mxu0 0.0
    %1459 = vmatpush1.msra.mxu0 0.0
    %1460 = vmatprep.subr.mxu0 0.0
    %1461 = vmatpush1.msra.mxu0 0.0
    %1462 = vmatprep.subr.mxu0 0.0
    %1463 = vmatpush1.msra.mxu0 0.0
    %1464 = vmatprep.subr.mxu0 0.0
    %1465 = vmatpush1.msra.mxu0 0.0
    %1466 = vmatprep.subr.mxu0 0.0
    %1467 = vmatpush1.msra.mxu0 0.0
    %1468 = vmatprep.subr.mxu0 0.0
    %1469 = vmatpush1.msra.mxu0 0.0
    %1470 = vmatprep.subr.mxu0 0.0
    %1471 = vmatpush1.msra.mxu0 0.0
    %1472 = vmatprep.subr.mxu0 0.0
    %1473 = vmatpush1.msra.mxu0 0.0
    %1474 = vmatprep.subr.mxu0 0.0
    %1475 = vmatpush1.msra.mxu0 0.0
    %1476 = vmatprep.subr.mxu0 0.0
    %1477 = vmatpush1.msra.mxu0 0.0
    %1478 = vmatprep.subr.mxu0 0.0
    %1479 = vmatpush1.msra.mxu0 %v1453
    %1480 = vmatprep.subr.mxu0 0.0
    %1481 = vmatpush1.msra.mxu0 %v1452
    %1482 = vmatprep.subr.mxu0 0.0
    %1483 = vmatpush1.msra.mxu0 %v1451
    %1484 = vmatprep.subr.mxu0 0.0
    %1485 = vmatpush1.msra.mxu0 %v1450
    %1486 = vmatprep.subr.mxu0 0.0
    %1487 = vmatpush2.msra.mxu0 0.0
    %1488 = vmatprep.subr.mxu0 0.0
    %1489 = vmatpush2.msra.mxu0 0.0
    %1490 = vmatprep.subr.mxu0 0.0
    %1491 = vmatpush2.msra.mxu0 0.0
    %1492 = vmatprep.subr.mxu0 0.0
    %1493 = vmatpush2.msra.mxu0 0.0
    %1494 = vmatprep.subr.mxu0 0.0
    %1495 = vmatpush2.msra.mxu0 0.0
    %1496 = vmatprep.subr.mxu0 0.0
    %1497 = vmatpush2.msra.mxu0 0.0
    %1498 = vmatprep.subr.mxu0 0.0
    %1499 = vmatpush2.msra.mxu0 0.0
    %1500 = vmatprep.subr.mxu0 0.0
    %1501 = vmatpush2.msra.mxu0 0.0
    %1502 = vmatprep.subr.mxu0 0.0
    %1503 = vmatpush2.msra.mxu0 0.0
    %1504 = vmatprep.subr.mxu0 0.0
    %1505 = vmatpush2.msra.mxu0 0.0
    %1506 = vmatprep.subr.mxu0 0.0
    %1507 = vmatpush2.msra.mxu0 0.0
    %1508 = vmatprep.subr.mxu0 0.0
    %1509 = vmatpush2.msra.mxu0 0.0
    %1510 = vmatprep.subr.mxu0 0.0
    %1511 = vmatpush2.msra.mxu0 0.0
    %1512 = vmatprep.subr.mxu0 0.0
    %1513 = vmatpush2.msra.mxu0 0.0
    %1514 = vmatprep.subr.mxu0 0.0
    %1515 = vmatpush2.msra.mxu0 0.0
    %1516 = vmatprep.subr.mxu0 0.0
    %1517 = vmatpush2.msra.mxu0 0.0
    %1518 = vmatprep.mubr.f32.mxu0 0.0
    %1519 = vmatmul.mubr.f32.gmra.mxu0 %v521
    %v1520 = vpop.f32.mrf.mxu0
    %v1521 = vadd.f32 0.0, %v1520
    %v1522 = vpop.f32.mrf.mxu0
    %1523 = vdwg.mxu0
    %v1525 = vrot.slane %v1521, 4
    %v1527 = vadd.f32 %v1447, %v1525
    %v1528 = vxor.u32 %v1527, 2147483648
    %v1529 = vmul.f32 %v1528, 1.442695
    %v1530 = vpow.pop %v1529
    %v1531 = vadd.f32 %v1530, 1.0
    %v1532 = vrcp.pop %v1531
    %v1533 = vmul.f32 1.0, %v1532
    %v1534 = vtanh.pop %v1527
    %v1535 = vmul.f32 %v1533, 0.0
    %1537 = vrot.lane.b32.xlu0 %v1534, 64
    %v1538 = vpop.permute.xlu0 %1537
    %v1540 = vmul.f32 %v1533, %v1538
    %1542 = vrot.lane.b32.xlu0 %v1540, 32
    %v1543 = vpop.permute.xlu0 %1542
    %v1545 = vadd.f32 %v1535, %v1543
    %v1546 = vtanh.pop %v1545
    %1548 = vrot.lane.b32.xlu0 %v1546, 64
    %v1549 = vpop.permute.xlu0 %1548
    %v1551 = vmul.f32 %v1533, %v1549
    %v1553 = vrot.slane %v1551, 4
    %1554 = vrot.lane.b32.xlu0 %v1553, 32
    %v1555 = vpop.permute.xlu0 %1554
    %v1556 = vsel %vm310, %v1555, 0
    %1558 = vmatprep.subr.mxu0 0.0
    %1559 = vmatpush1.msra.mxu0 0.0
    %1560 = vmatprep.subr.mxu0 0.0
    %1561 = vmatpush1.msra.mxu0 0.0
    %1562 = vmatprep.subr.mxu0 0.0
    %1563 = vmatpush1.msra.mxu0 0.0
    %1564 = vmatprep.subr.mxu0 0.0
    %1565 = vmatpush1.msra.mxu0 0.0
    %1566 = vmatprep.subr.mxu0 0.0
    %1567 = vmatpush1.msra.mxu0 0.0
    %1568 = vmatprep.subr.mxu0 0.0
    %1569 = vmatpush1.msra.mxu0 0.0
    %1570 = vmatprep.subr.mxu0 0.0
    %1571 = vmatpush1.msra.mxu0 0.0
    %1572 = vmatprep.subr.mxu0 0.0
    %1573 = vmatpush1.msra.mxu0 0.0
    %1574 = vmatprep.subr.mxu0 0.0
    %1575 = vmatpush1.msra.mxu0 0.0
    %1576 = vmatprep.subr.mxu0 0.0
    %1577 = vmatpush1.msra.mxu0 0.0
    %1578 = vmatprep.subr.mxu0 0.0
    %1579 = vmatpush1.msra.mxu0 0.0
    %1580 = vmatprep.subr.mxu0 0.0
    %1581 = vmatpush1.msra.mxu0 0.0
    %1582 = vmatprep.subr.mxu0 0.0
    %1583 = vmatpush1.msra.mxu0 %v1453
    %1584 = vmatprep.subr.mxu0 0.0
    %1585 = vmatpush1.msra.mxu0 %v1452
    %1586 = vmatprep.subr.mxu0 0.0
    %1587 = vmatpush1.msra.mxu0 %v1451
    %1588 = vmatprep.subr.mxu0 0.0
    %1589 = vmatpush1.msra.mxu0 %v1450
    %1590 = vmatprep.subr.mxu0 0.0
    %1591 = vmatpush2.msra.mxu0 0.0
    %1592 = vmatprep.subr.mxu0 0.0
    %1593 = vmatpush2.msra.mxu0 0.0
    %1594 = vmatprep.subr.mxu0 0.0
    %1595 = vmatpush2.msra.mxu0 0.0
    %1596 = vmatprep.subr.mxu0 0.0
    %1597 = vmatpush2.msra.mxu0 0.0
    %1598 = vmatprep.subr.mxu0 0.0
    %1599 = vmatpush2.msra.mxu0 0.0
    %1600 = vmatprep.subr.mxu0 0.0
    %1601 = vmatpush2.msra.mxu0 0.0
    %1602 = vmatprep.subr.mxu0 0.0
    %1603 = vmatpush2.msra.mxu0 0.0
    %1604 = vmatprep.subr.mxu0 0.0
    %1605 = vmatpush2.msra.mxu0 0.0
    %1606 = vmatprep.subr.mxu0 0.0
    %1607 = vmatpush2.msra.mxu0 0.0
    %1608 = vmatprep.subr.mxu0 0.0
    %1609 = vmatpush2.msra.mxu0 0.0
    %1610 = vmatprep.subr.mxu0 0.0
    %1611 = vmatpush2.msra.mxu0 0.0
    %1612 = vmatprep.subr.mxu0 0.0
    %1613 = vmatpush2.msra.mxu0 0.0
    %1614 = vmatprep.subr.mxu0 0.0
    %1615 = vmatpush2.msra.mxu0 0.0
    %1616 = vmatprep.subr.mxu0 0.0
    %1617 = vmatpush2.msra.mxu0 0.0
    %1618 = vmatprep.subr.mxu0 0.0
    %1619 = vmatpush2.msra.mxu0 0.0
    %1620 = vmatprep.subr.mxu0 0.0
    %1621 = vmatpush2.msra.mxu0 0.0
    %1622 = vmatprep.mubr.f32.mxu0 0.0
    %1623 = vmatmul.mubr.f32.gmra.mxu0 %v1556
    %v1624 = vpop.f32.mrf.mxu0
    %v1625 = vadd.f32 0.0, %v1624
    %v1626 = vpop.f32.mrf.mxu0
    %1627 = vdwg.mxu0
    %v1628 = vadd.f32 %v1447, %v1625
    %v1629 = vxor.u32 %v1628, 2147483648
    %v1630 = vmul.f32 %v1629, 1.442695
    %v1631 = vpow.pop %v1630
    %v1632 = vadd.f32 %v1631, 1.0
    %v1633 = vrcp.pop %v1632
    %v1634 = vmul.f32 1.0, %v1633
    %v1635 = vtanh.pop %v1628
    %v1637 = vrot.slane %v1545, 4
    %v1639 = vmul.f32 %v1634, %v1637
    %1641 = vrot.lane.b32.xlu0 %v1635, 64
    %v1642 = vpop.permute.xlu0 %1641
    %v1644 = vmul.f32 %v1634, %v1642
    %1646 = vrot.lane.b32.xlu0 %v1644, 32
    %v1647 = vpop.permute.xlu0 %1646
    %v1649 = vadd.f32 %v1639, %v1647
    %v1650 = vtanh.pop %v1649
    %1652 = vrot.lane.b32.xlu0 %v1650, 64
    %v1653 = vpop.permute.xlu0 %1652
    %v1655 = vmul.f32 %v1634, %v1653
    %1657 = vrot.lane.b32.xlu0 %v1655, 32
    %v1658 = vpop.permute.xlu0 %1657
    %v1659 = vsel %vm310, %v1658, 0
    %1661 = vmatprep.subr.mxu0 0.0
    %1662 = vmatpush1.msra.mxu0 0.0
    %1663 = vmatprep.subr.mxu0 0.0
    %1664 = vmatpush1.msra.mxu0 0.0
    %1665 = vmatprep.subr.mxu0 0.0
    %1666 = vmatpush1.msra.mxu0 0.0
    %1667 = vmatprep.subr.mxu0 0.0
    %1668 = vmatpush1.msra.mxu0 0.0
    %1669 = vmatprep.subr.mxu0 0.0
    %1670 = vmatpush1.msra.mxu0 0.0
    %1671 = vmatprep.subr.mxu0 0.0
    %1672 = vmatpush1.msra.mxu0 0.0
    %1673 = vmatprep.subr.mxu0 0.0
    %1674 = vmatpush1.msra.mxu0 0.0
    %1675 = vmatprep.subr.mxu0 0.0
    %1676 = vmatpush1.msra.mxu0 0.0
    %1677 = vmatprep.subr.mxu0 0.0
    %1678 = vmatpush1.msra.mxu0 0.0
    %1679 = vmatprep.subr.mxu0 0.0
    %1680 = vmatpush1.msra.mxu0 0.0
    %1681 = vmatprep.subr.mxu0 0.0
    %1682 = vmatpush1.msra.mxu0 0.0
    %1683 = vmatprep.subr.mxu0 0.0
    %1684 = vmatpush1.msra.mxu0 0.0
    %1685 = vmatprep.subr.mxu0 0.0
    %1686 = vmatpush1.msra.mxu0 %v1453
    %1687 = vmatprep.subr.mxu0 0.0
    %1688 = vmatpush1.msra.mxu0 %v1452
    %1689 = vmatprep.subr.mxu0 0.0
    %1690 = vmatpush1.msra.mxu0 %v1451
    %1691 = vmatprep.subr.mxu0 0.0
    %1692 = vmatpush1.msra.mxu0 %v1450
    %1693 = vmatprep.subr.mxu0 0.0
    %1694 = vmatpush2.msra.mxu0 0.0
    %1695 = vmatprep.subr.mxu0 0.0
    %1696 = vmatpush2.msra.mxu0 0.0
    %1697 = vmatprep.subr.mxu0 0.0
    %1698 = vmatpush2.msra.mxu0 0.0
    %1699 = vmatprep.subr.mxu0 0.0
    %1700 = vmatpush2.msra.mxu0 0.0
    %1701 = vmatprep.subr.mxu0 0.0
    %1702 = vmatpush2.msra.mxu0 0.0
    %1703 = vmatprep.subr.mxu0 0.0
    %1704 = vmatpush2.msra.mxu0 0.0
    %1705 = vmatprep.subr.mxu0 0.0
    %1706 = vmatpush2.msra.mxu0 0.0
    %1707 = vmatprep.subr.mxu0 0.0
    %1708 = vmatpush2.msra.mxu0 0.0
    %1709 = vmatprep.subr.mxu0 0.0
    %1710 = vmatpush2.msra.mxu0 0.0
    %1711 = vmatprep.subr.mxu0 0.0
    %1712 = vmatpush2.msra.mxu0 0.0
    %1713 = vmatprep.subr.mxu0 0.0
    %1714 = vmatpush2.msra.mxu0 0.0
    %1715 = vmatprep.subr.mxu0 0.0
    %1716 = vmatpush2.msra.mxu0 0.0
    %1717 = vmatprep.subr.mxu0 0.0
    %1718 = vmatpush2.msra.mxu0 0.0
    %1719 = vmatprep.subr.mxu0 0.0
    %1720 = vmatpush2.msra.mxu0 0.0
    %1721 = vmatprep.subr.mxu0 0.0
    %1722 = vmatpush2.msra.mxu0 0.0
    %1723 = vmatprep.subr.mxu0 0.0
    %1724 = vmatpush2.msra.mxu0 0.0
    %1725 = vmatprep.mubr.f32.mxu0 0.0
    %1726 = vmatmul.mubr.f32.gmra.mxu0 %v1659
    %v1727 = vpop.f32.mrf.mxu0
    %v1728 = vadd.f32 0.0, %v1727
    %v1729 = vpop.f32.mrf.mxu0
    %1730 = vdwg.mxu0
    %v1732 = vrot.slane %v1728, 4
    %v1734 = vadd.f32 %v1442, %v1732
    %v1735 = vxor.u32 %v1734, 2147483648
    %v1736 = vmul.f32 %v1735, 1.442695
    %v1737 = vpow.pop %v1736
    %v1738 = vadd.f32 %v1737, 1.0
    %v1739 = vrcp.pop %v1738
    %v1740 = vmul.f32 1.0, %v1739
    %v1741 = vtanh.pop %v1734
    %v1743 = vrot.slane %v1649, 4
    %v1745 = vmul.f32 %v1740, %v1743
    %1747 = vrot.lane.b32.xlu0 %v1741, 64
    %v1748 = vpop.permute.xlu0 %1747
    %v1750 = vmul.f32 %v1740, %v1748
    %1752 = vrot.lane.b32.xlu0 %v1750, 32
    %v1753 = vpop.permute.xlu0 %1752
    %v1755 = vadd.f32 %v1745, %v1753
    %v1756 = vtanh.pop %v1755
    %1758 = vrot.lane.b32.xlu0 %v1756, 64
    %v1759 = vpop.permute.xlu0 %1758
    %v1761 = vmul.f32 %v1740, %v1759
    %v1763 = vrot.slane %v1761, 4
    %1764 = vrot.lane.b32.xlu0 %v1763, 32
    %v1765 = vpop.permute.xlu0 %1764
    %v1766 = vsel %vm310, %v1765, 0
    %1768 = vmatprep.subr.mxu0 0.0
    %1769 = vmatpush1.msra.mxu0 0.0
    %1770 = vmatprep.subr.mxu0 0.0
    %1771 = vmatpush1.msra.mxu0 0.0
    %1772 = vmatprep.subr.mxu0 0.0
    %1773 = vmatpush1.msra.mxu0 0.0
    %1774 = vmatprep.subr.mxu0 0.0
    %1775 = vmatpush1.msra.mxu0 0.0
    %1776 = vmatprep.subr.mxu0 0.0
    %1777 = vmatpush1.msra.mxu0 0.0
    %1778 = vmatprep.subr.mxu0 0.0
    %1779 = vmatpush1.msra.mxu0 0.0
    %1780 = vmatprep.subr.mxu0 0.0
    %1781 = vmatpush1.msra.mxu0 0.0
    %1782 = vmatprep.subr.mxu0 0.0
    %1783 = vmatpush1.msra.mxu0 0.0
    %1784 = vmatprep.subr.mxu0 0.0
    %1785 = vmatpush1.msra.mxu0 0.0
    %1786 = vmatprep.subr.mxu0 0.0
    %1787 = vmatpush1.msra.mxu0 0.0
    %1788 = vmatprep.subr.mxu0 0.0
    %1789 = vmatpush1.msra.mxu0 0.0
    %1790 = vmatprep.subr.mxu0 0.0
    %1791 = vmatpush1.msra.mxu0 0.0
    %1792 = vmatprep.subr.mxu0 0.0
    %1793 = vmatpush1.msra.mxu0 %v1453
    %1794 = vmatprep.subr.mxu0 0.0
    %1795 = vmatpush1.msra.mxu0 %v1452
    %1796 = vmatprep.subr.mxu0 0.0
    %1797 = vmatpush1.msra.mxu0 %v1451
    %1798 = vmatprep.subr.mxu0 0.0
    %1799 = vmatpush1.msra.mxu0 %v1450
    %1800 = vmatprep.subr.mxu0 0.0
    %1801 = vmatpush2.msra.mxu0 0.0
    %1802 = vmatprep.subr.mxu0 0.0
    %1803 = vmatpush2.msra.mxu0 0.0
    %1804 = vmatprep.subr.mxu0 0.0
    %1805 = vmatpush2.msra.mxu0 0.0
    %1806 = vmatprep.subr.mxu0 0.0
    %1807 = vmatpush2.msra.mxu0 0.0
    %1808 = vmatprep.subr.mxu0 0.0
    %1809 = vmatpush2.msra.mxu0 0.0
    %1810 = vmatprep.subr.mxu0 0.0
    %1811 = vmatpush2.msra.mxu0 0.0
    %1812 = vmatprep.subr.mxu0 0.0
    %1813 = vmatpush2.msra.mxu0 0.0
    %1814 = vmatprep.subr.mxu0 0.0
    %1815 = vmatpush2.msra.mxu0 0.0
    %1816 = vmatprep.subr.mxu0 0.0
    %1817 = vmatpush2.msra.mxu0 0.0
    %1818 = vmatprep.subr.mxu0 0.0
    %1819 = vmatpush2.msra.mxu0 0.0
    %1820 = vmatprep.subr.mxu0 0.0
    %1821 = vmatpush2.msra.mxu0 0.0
    %1822 = vmatprep.subr.mxu0 0.0
    %1823 = vmatpush2.msra.mxu0 0.0
    %1824 = vmatprep.subr.mxu0 0.0
    %1825 = vmatpush2.msra.mxu0 0.0
    %1826 = vmatprep.subr.mxu0 0.0
    %1827 = vmatpush2.msra.mxu0 0.0
    %1828 = vmatprep.subr.mxu0 0.0
    %1829 = vmatpush2.msra.mxu0 0.0
    %1830 = vmatprep.subr.mxu0 0.0
    %1831 = vmatpush2.msra.mxu0 0.0
    %1832 = vmatprep.mubr.f32.mxu0 0.0
    %1833 = vmatmul.mubr.f32.gmra.mxu0 %v1766
    %v1834 = vpop.f32.mrf.mxu0
    %v1835 = vadd.f32 0.0, %v1834
    %v1836 = vpop.f32.mrf.mxu0
    %1837 = vdwg.mxu0
    %v1838 = vadd.f32 %v1442, %v1835
    %v1839 = vxor.u32 %v1838, 2147483648
    %v1840 = vmul.f32 %v1839, 1.442695
    %v1841 = vpow.pop %v1840
    %v1842 = vadd.f32 %v1841, 1.0
    %v1843 = vrcp.pop %v1842
    %v1844 = vmul.f32 1.0, %v1843
    %v1845 = vtanh.pop %v1838
    %v1847 = vrot.slane %v1755, 4
    %v1849 = vmul.f32 %v1844, %v1847
    %1851 = vrot.lane.b32.xlu0 %v1845, 64
    %v1852 = vpop.permute.xlu0 %1851
    %v1854 = vmul.f32 %v1844, %v1852
    %1856 = vrot.lane.b32.xlu0 %v1854, 32
    %v1857 = vpop.permute.xlu0 %1856
    %v1859 = vadd.f32 %v1849, %v1857
    %v1860 = vtanh.pop %v1859
    %1862 = vrot.lane.b32.xlu0 %v1860, 64
    %v1863 = vpop.permute.xlu0 %1862
    %v1865 = vmul.f32 %v1844, %v1863
    %1867 = vrot.lane.b32.xlu0 %v1865, 32
    %v1868 = vpop.permute.xlu0 %1867
    %v1869 = vsel %vm310, %v1868, 0
    %1871 = vmatprep.subr.mxu0 0.0
    %1872 = vmatpush1.msra.mxu0 0.0
    %1873 = vmatprep.subr.mxu0 0.0
    %1874 = vmatpush1.msra.mxu0 0.0
    %1875 = vmatprep.subr.mxu0 0.0
    %1876 = vmatpush1.msra.mxu0 0.0
    %1877 = vmatprep.subr.mxu0 0.0
    %1878 = vmatpush1.msra.mxu0 0.0
    %1879 = vmatprep.subr.mxu0 0.0
    %1880 = vmatpush1.msra.mxu0 0.0
    %1881 = vmatprep.subr.mxu0 0.0
    %1882 = vmatpush1.msra.mxu0 0.0
    %1883 = vmatprep.subr.mxu0 0.0
    %1884 = vmatpush1.msra.mxu0 0.0
    %1885 = vmatprep.subr.mxu0 0.0
    %1886 = vmatpush1.msra.mxu0 0.0
    %1887 = vmatprep.subr.mxu0 0.0
    %1888 = vmatpush1.msra.mxu0 0.0
    %1889 = vmatprep.subr.mxu0 0.0
    %1890 = vmatpush1.msra.mxu0 0.0
    %1891 = vmatprep.subr.mxu0 0.0
    %1892 = vmatpush1.msra.mxu0 0.0
    %1893 = vmatprep.subr.mxu0 0.0
    %1894 = vmatpush1.msra.mxu0 0.0
    %1895 = vmatprep.subr.mxu0 0.0
    %1896 = vmatpush1.msra.mxu0 %v1453
    %1897 = vmatprep.subr.mxu0 0.0
    %1898 = vmatpush1.msra.mxu0 %v1452
    %1899 = vmatprep.subr.mxu0 0.0
    %1900 = vmatpush1.msra.mxu0 %v1451
    %1901 = vmatprep.subr.mxu0 0.0
    %1902 = vmatpush1.msra.mxu0 %v1450
    %1903 = vmatprep.subr.mxu0 0.0
    %1904 = vmatpush2.msra.mxu0 0.0
    %1905 = vmatprep.subr.mxu0 0.0
    %1906 = vmatpush2.msra.mxu0 0.0
    %1907 = vmatprep.subr.mxu0 0.0
    %1908 = vmatpush2.msra.mxu0 0.0
    %1909 = vmatprep.subr.mxu0 0.0
    %1910 = vmatpush2.msra.mxu0 0.0
    %1911 = vmatprep.subr.mxu0 0.0
    %1912 = vmatpush2.msra.mxu0 0.0
    %1913 = vmatprep.subr.mxu0 0.0
    %1914 = vmatpush2.msra.mxu0 0.0
    %1915 = vmatprep.subr.mxu0 0.0
    %1916 = vmatpush2.msra.mxu0 0.0
    %1917 = vmatprep.subr.mxu0 0.0
    %1918 = vmatpush2.msra.mxu0 0.0
    %1919 = vmatprep.subr.mxu0 0.0
    %1920 = vmatpush2.msra.mxu0 0.0
    %1921 = vmatprep.subr.mxu0 0.0
    %1922 = vmatpush2.msra.mxu0 0.0
    %1923 = vmatprep.subr.mxu0 0.0
    %1924 = vmatpush2.msra.mxu0 0.0
    %1925 = vmatprep.subr.mxu0 0.0
    %1926 = vmatpush2.msra.mxu0 0.0
    %1927 = vmatprep.subr.mxu0 0.0
    %1928 = vmatpush2.msra.mxu0 0.0
    %1929 = vmatprep.subr.mxu0 0.0
    %1930 = vmatpush2.msra.mxu0 0.0
    %1931 = vmatprep.subr.mxu0 0.0
    %1932 = vmatpush2.msra.mxu0 0.0
    %1933 = vmatprep.subr.mxu0 0.0
    %1934 = vmatpush2.msra.mxu0 0.0
    %1935 = vmatprep.mubr.f32.mxu0 0.0
    %1936 = vmatmul.mubr.f32.gmra.mxu0 %v1869
    %v1937 = vpop.f32.mrf.mxu0
    %v1938 = vadd.f32 0.0, %v1937
    %v1939 = vpop.f32.mrf.mxu0
    %1940 = vdwg.mxu0
    %v1942 = vrot.slane %v1938, 4
    %v1944 = vadd.f32 %v1437, %v1942
    %v1945 = vxor.u32 %v1944, 2147483648
    %v1946 = vmul.f32 %v1945, 1.442695
    %v1947 = vpow.pop %v1946
    %v1948 = vadd.f32 %v1947, 1.0
    %v1949 = vrcp.pop %v1948
    %v1950 = vmul.f32 1.0, %v1949
    %v1951 = vtanh.pop %v1944
    %v1953 = vrot.slane %v1859, 4
    %v1955 = vmul.f32 %v1950, %v1953
    %1957 = vrot.lane.b32.xlu0 %v1951, 64
    %v1958 = vpop.permute.xlu0 %1957
    %v1960 = vmul.f32 %v1950, %v1958
    %1962 = vrot.lane.b32.xlu0 %v1960, 32
    %v1963 = vpop.permute.xlu0 %1962
    %v1965 = vadd.f32 %v1955, %v1963
    %v1966 = vtanh.pop %v1965
    %1968 = vrot.lane.b32.xlu0 %v1966, 64
    %v1969 = vpop.permute.xlu0 %1968
    %v1971 = vmul.f32 %v1950, %v1969
    %v1973 = vrot.slane %v1971, 4
    %1974 = vrot.lane.b32.xlu0 %v1973, 32
    %v1975 = vpop.permute.xlu0 %1974
    %v1976 = vsel %vm310, %v1975, 0
    %1978 = vmatprep.subr.mxu0 0.0
    %1979 = vmatpush1.msra.mxu0 0.0
    %1980 = vmatprep.subr.mxu0 0.0
    %1981 = vmatpush1.msra.mxu0 0.0
    %1982 = vmatprep.subr.mxu0 0.0
    %1983 = vmatpush1.msra.mxu0 0.0
    %1984 = vmatprep.subr.mxu0 0.0
    %1985 = vmatpush1.msra.mxu0 0.0
    %1986 = vmatprep.subr.mxu0 0.0
    %1987 = vmatpush1.msra.mxu0 0.0
    %1988 = vmatprep.subr.mxu0 0.0
    %1989 = vmatpush1.msra.mxu0 0.0
    %1990 = vmatprep.subr.mxu0 0.0
    %1991 = vmatpush1.msra.mxu0 0.0
    %1992 = vmatprep.subr.mxu0 0.0
    %1993 = vmatpush1.msra.mxu0 0.0
    %1994 = vmatprep.subr.mxu0 0.0
    %1995 = vmatpush1.msra.mxu0 0.0
    %1996 = vmatprep.subr.mxu0 0.0
    %1997 = vmatpush1.msra.mxu0 0.0
    %1998 = vmatprep.subr.mxu0 0.0
    %1999 = vmatpush1.msra.mxu0 0.0
    %2000 = vmatprep.subr.mxu0 0.0
    %2001 = vmatpush1.msra.mxu0 0.0
    %2002 = vmatprep.subr.mxu0 0.0
    %2003 = vmatpush1.msra.mxu0 %v1453
    %2004 = vmatprep.subr.mxu0 0.0
    %2005 = vmatpush1.msra.mxu0 %v1452
    %2006 = vmatprep.subr.mxu0 0.0
    %2007 = vmatpush1.msra.mxu0 %v1451
    %2008 = vmatprep.subr.mxu0 0.0
    %2009 = vmatpush1.msra.mxu0 %v1450
    %2010 = vmatprep.subr.mxu0 0.0
    %2011 = vmatpush2.msra.mxu0 0.0
    %2012 = vmatprep.subr.mxu0 0.0
    %2013 = vmatpush2.msra.mxu0 0.0
    %2014 = vmatprep.subr.mxu0 0.0
    %2015 = vmatpush2.msra.mxu0 0.0
    %2016 = vmatprep.subr.mxu0 0.0
    %2017 = vmatpush2.msra.mxu0 0.0
    %2018 = vmatprep.subr.mxu0 0.0
    %2019 = vmatpush2.msra.mxu0 0.0
    %2020 = vmatprep.subr.mxu0 0.0
    %2021 = vmatpush2.msra.mxu0 0.0
    %2022 = vmatprep.subr.mxu0 0.0
    %2023 = vmatpush2.msra.mxu0 0.0
    %2024 = vmatprep.subr.mxu0 0.0
    %2025 = vmatpush2.msra.mxu0 0.0
    %2026 = vmatprep.subr.mxu0 0.0
    %2027 = vmatpush2.msra.mxu0 0.0
    %2028 = vmatprep.subr.mxu0 0.0
    %2029 = vmatpush2.msra.mxu0 0.0
    %2030 = vmatprep.subr.mxu0 0.0
    %2031 = vmatpush2.msra.mxu0 0.0
    %2032 = vmatprep.subr.mxu0 0.0
    %2033 = vmatpush2.msra.mxu0 0.0
    %2034 = vmatprep.subr.mxu0 0.0
    %2035 = vmatpush2.msra.mxu0 0.0
    %2036 = vmatprep.subr.mxu0 0.0
    %2037 = vmatpush2.msra.mxu0 0.0
    %2038 = vmatprep.subr.mxu0 0.0
    %2039 = vmatpush2.msra.mxu0 0.0
    %2040 = vmatprep.subr.mxu0 0.0
    %2041 = vmatpush2.msra.mxu0 0.0
    %2042 = vmatprep.mubr.f32.mxu0 0.0
    %2043 = vmatmul.mubr.f32.gmra.mxu0 %v1976
    %v2044 = vpop.f32.mrf.mxu0
    %v2045 = vadd.f32 0.0, %v2044
    %v2046 = vpop.f32.mrf.mxu0
    %2047 = vdwg.mxu0
    %v2048 = vadd.f32 %v1437, %v2045
    %v2049 = vxor.u32 %v2048, 2147483648
    %v2050 = vmul.f32 %v2049, 1.442695
    %v2051 = vpow.pop %v2050
    %v2052 = vadd.f32 %v2051, 1.0
    %v2053 = vrcp.pop %v2052
    %v2054 = vmul.f32 1.0, %v2053
    %v2055 = vtanh.pop %v2048
    %v2057 = vrot.slane %v1965, 4
    %v2059 = vmul.f32 %v2054, %v2057
    %2061 = vrot.lane.b32.xlu0 %v2055, 64
    %v2062 = vpop.permute.xlu0 %2061
    %v2064 = vmul.f32 %v2054, %v2062
    %2066 = vrot.lane.b32.xlu0 %v2064, 32
    %v2067 = vpop.permute.xlu0 %2066
    %v2069 = vadd.f32 %v2059, %v2067
    %v2070 = vtanh.pop %v2069
    %2072 = vrot.lane.b32.xlu0 %v2070, 64
    %v2073 = vpop.permute.xlu0 %2072
    %v2075 = vmul.f32 %v2054, %v2073
    %2077 = vrot.lane.b32.xlu0 %v2075, 32
    %v2078 = vpop.permute.xlu0 %2077
    %v2079 = vsel %vm310, %v2078, 0
    %2081 = vmatprep.subr.mxu0 0.0
    %2082 = vmatpush1.msra.mxu0 0.0
    %2083 = vmatprep.subr.mxu0 0.0
    %2084 = vmatpush1.msra.mxu0 0.0
    %2085 = vmatprep.subr.mxu0 0.0
    %2086 = vmatpush1.msra.mxu0 0.0
    %2087 = vmatprep.subr.mxu0 0.0
    %2088 = vmatpush1.msra.mxu0 0.0
    %2089 = vmatprep.subr.mxu0 0.0
    %2090 = vmatpush1.msra.mxu0 0.0
    %2091 = vmatprep.subr.mxu0 0.0
    %2092 = vmatpush1.msra.mxu0 0.0
    %2093 = vmatprep.subr.mxu0 0.0
    %2094 = vmatpush1.msra.mxu0 0.0
    %2095 = vmatprep.subr.mxu0 0.0
    %2096 = vmatpush1.msra.mxu0 0.0
    %2097 = vmatprep.subr.mxu0 0.0
    %2098 = vmatpush1.msra.mxu0 0.0
    %2099 = vmatprep.subr.mxu0 0.0
    %2100 = vmatpush1.msra.mxu0 0.0
    %2101 = vmatprep.subr.mxu0 0.0
    %2102 = vmatpush1.msra.mxu0 0.0
    %2103 = vmatprep.subr.mxu0 0.0
    %2104 = vmatpush1.msra.mxu0 0.0
    %2105 = vmatprep.subr.mxu0 0.0
    %2106 = vmatpush1.msra.mxu0 %v1453
    %2107 = vmatprep.subr.mxu0 0.0
    %2108 = vmatpush1.msra.mxu0 %v1452
    %2109 = vmatprep.subr.mxu0 0.0
    %2110 = vmatpush1.msra.mxu0 %v1451
    %2111 = vmatprep.subr.mxu0 0.0
    %2112 = vmatpush1.msra.mxu0 %v1450
    %2113 = vmatprep.subr.mxu0 0.0
    %2114 = vmatpush2.msra.mxu0 0.0
    %2115 = vmatprep.subr.mxu0 0.0
    %2116 = vmatpush2.msra.mxu0 0.0
    %2117 = vmatprep.subr.mxu0 0.0
    %2118 = vmatpush2.msra.mxu0 0.0
    %2119 = vmatprep.subr.mxu0 0.0
    %2120 = vmatpush2.msra.mxu0 0.0
    %2121 = vmatprep.subr.mxu0 0.0
    %2122 = vmatpush2.msra.mxu0 0.0
    %2123 = vmatprep.subr.mxu0 0.0
    %2124 = vmatpush2.msra.mxu0 0.0
    %2125 = vmatprep.subr.mxu0 0.0
    %2126 = vmatpush2.msra.mxu0 0.0
    %2127 = vmatprep.subr.mxu0 0.0
    %2128 = vmatpush2.msra.mxu0 0.0
    %2129 = vmatprep.subr.mxu0 0.0
    %2130 = vmatpush2.msra.mxu0 0.0
    %2131 = vmatprep.subr.mxu0 0.0
    %2132 = vmatpush2.msra.mxu0 0.0
    %2133 = vmatprep.subr.mxu0 0.0
    %2134 = vmatpush2.msra.mxu0 0.0
    %2135 = vmatprep.subr.mxu0 0.0
    %2136 = vmatpush2.msra.mxu0 0.0
    %2137 = vmatprep.subr.mxu0 0.0
    %2138 = vmatpush2.msra.mxu0 0.0
    %2139 = vmatprep.subr.mxu0 0.0
    %2140 = vmatpush2.msra.mxu0 0.0
    %2141 = vmatprep.subr.mxu0 0.0
    %2142 = vmatpush2.msra.mxu0 0.0
    %2143 = vmatprep.subr.mxu0 0.0
    %2144 = vmatpush2.msra.mxu0 0.0
    %2145 = vmatprep.mubr.f32.mxu0 0.0
    %2146 = vmatmul.mubr.f32.gmra.mxu0 %v2079
    %v2147 = vpop.f32.mrf.mxu0
    %v2148 = vadd.f32 0.0, %v2147
    %v2149 = vpop.f32.mrf.mxu0
    %2150 = vdwg.mxu0
    %v2152 = vrot.slane %v2148, 4
    %v2154 = vadd.f32 %v1432, %v2152
    %v2155 = vxor.u32 %v2154, 2147483648
    %v2156 = vmul.f32 %v2155, 1.442695
    %v2157 = vpow.pop %v2156
    %v2158 = vadd.f32 %v2157, 1.0
    %v2159 = vrcp.pop %v2158
    %v2160 = vmul.f32 1.0, %v2159
    %v2161 = vtanh.pop %v2154
    %v2163 = vrot.slane %v2069, 4
    %v2165 = vmul.f32 %v2160, %v2163
    %2167 = vrot.lane.b32.xlu0 %v2161, 64
    %v2168 = vpop.permute.xlu0 %2167
    %v2170 = vmul.f32 %v2160, %v2168
    %2172 = vrot.lane.b32.xlu0 %v2170, 32
    %v2173 = vpop.permute.xlu0 %2172
    %v2175 = vadd.f32 %v2165, %v2173
    %v2176 = vtanh.pop %v2175
    %2178 = vrot.lane.b32.xlu0 %v2176, 64
    %v2179 = vpop.permute.xlu0 %2178
    %v2181 = vmul.f32 %v2160, %v2179
    %v2183 = vrot.slane %v2181, 4
    %2184 = vrot.lane.b32.xlu0 %v2183, 32
    %v2185 = vpop.permute.xlu0 %2184
    %v2186 = vsel %vm310, %v2185, 0
    %2188 = vmatprep.subr.mxu0 0.0
    %2189 = vmatpush1.msra.mxu0 0.0
    %2190 = vmatprep.subr.mxu0 0.0
    %2191 = vmatpush1.msra.mxu0 0.0
    %2192 = vmatprep.subr.mxu0 0.0
    %2193 = vmatpush1.msra.mxu0 0.0
    %2194 = vmatprep.subr.mxu0 0.0
    %2195 = vmatpush1.msra.mxu0 0.0
    %2196 = vmatprep.subr.mxu0 0.0
    %2197 = vmatpush1.msra.mxu0 0.0
    %2198 = vmatprep.subr.mxu0 0.0
    %2199 = vmatpush1.msra.mxu0 0.0
    %2200 = vmatprep.subr.mxu0 0.0
    %2201 = vmatpush1.msra.mxu0 0.0
    %2202 = vmatprep.subr.mxu0 0.0
    %2203 = vmatpush1.msra.mxu0 0.0
    %2204 = vmatprep.subr.mxu0 0.0
    %2205 = vmatpush1.msra.mxu0 0.0
    %2206 = vmatprep.subr.mxu0 0.0
    %2207 = vmatpush1.msra.mxu0 0.0
    %2208 = vmatprep.subr.mxu0 0.0
    %2209 = vmatpush1.msra.mxu0 0.0
    %2210 = vmatprep.subr.mxu0 0.0
    %2211 = vmatpush1.msra.mxu0 0.0
    %2212 = vmatprep.subr.mxu0 0.0
    %2213 = vmatpush1.msra.mxu0 %v1453
    %2214 = vmatprep.subr.mxu0 0.0
    %2215 = vmatpush1.msra.mxu0 %v1452
    %2216 = vmatprep.subr.mxu0 0.0
    %2217 = vmatpush1.msra.mxu0 %v1451
    %2218 = vmatprep.subr.mxu0 0.0
    %2219 = vmatpush1.msra.mxu0 %v1450
    %2220 = vmatprep.subr.mxu0 0.0
    %2221 = vmatpush2.msra.mxu0 0.0
    %2222 = vmatprep.subr.mxu0 0.0
    %2223 = vmatpush2.msra.mxu0 0.0
    %2224 = vmatprep.subr.mxu0 0.0
    %2225 = vmatpush2.msra.mxu0 0.0
    %2226 = vmatprep.subr.mxu0 0.0
    %2227 = vmatpush2.msra.mxu0 0.0
    %2228 = vmatprep.subr.mxu0 0.0
    %2229 = vmatpush2.msra.mxu0 0.0
    %2230 = vmatprep.subr.mxu0 0.0
    %2231 = vmatpush2.msra.mxu0 0.0
    %2232 = vmatprep.subr.mxu0 0.0
    %2233 = vmatpush2.msra.mxu0 0.0
    %2234 = vmatprep.subr.mxu0 0.0
    %2235 = vmatpush2.msra.mxu0 0.0
    %2236 = vmatprep.subr.mxu0 0.0
    %2237 = vmatpush2.msra.mxu0 0.0
    %2238 = vmatprep.subr.mxu0 0.0
    %2239 = vmatpush2.msra.mxu0 0.0
    %2240 = vmatprep.subr.mxu0 0.0
    %2241 = vmatpush2.msra.mxu0 0.0
    %2242 = vmatprep.subr.mxu0 0.0
    %2243 = vmatpush2.msra.mxu0 0.0
    %2244 = vmatprep.subr.mxu0 0.0
    %2245 = vmatpush2.msra.mxu0 0.0
    %2246 = vmatprep.subr.mxu0 0.0
    %2247 = vmatpush2.msra.mxu0 0.0
    %2248 = vmatprep.subr.mxu0 0.0
    %2249 = vmatpush2.msra.mxu0 0.0
    %2250 = vmatprep.subr.mxu0 0.0
    %2251 = vmatpush2.msra.mxu0 0.0
    %2252 = vmatprep.mubr.f32.mxu0 0.0
    %2253 = vmatmul.mubr.f32.gmra.mxu0 %v2186
    %v2254 = vpop.f32.mrf.mxu0
    %v2255 = vadd.f32 0.0, %v2254
    %v2256 = vpop.f32.mrf.mxu0
    %2257 = vdwg.mxu0
    %v2258 = vadd.f32 %v1432, %v2255
    %v2259 = vxor.u32 %v2258, 2147483648
    %v2260 = vmul.f32 %v2259, 1.442695
    %v2261 = vpow.pop %v2260
    %v2262 = vadd.f32 %v2261, 1.0
    %v2263 = vrcp.pop %v2262
    %v2264 = vmul.f32 1.0, %v2263
    %v2265 = vtanh.pop %v2258
    %v2267 = vrot.slane %v2175, 4
    %v2269 = vmul.f32 %v2264, %v2267
    %2271 = vrot.lane.b32.xlu0 %v2265, 64
    %v2272 = vpop.permute.xlu0 %2271
    %v2274 = vmul.f32 %v2264, %v2272
    %2276 = vrot.lane.b32.xlu0 %v2274, 32
    %v2277 = vpop.permute.xlu0 %2276
    %v2279 = vadd.f32 %v2269, %v2277
    %v2280 = vtanh.pop %v2279
    %2282 = vrot.lane.b32.xlu0 %v2280, 64
    %v2283 = vpop.permute.xlu0 %2282
    %v2285 = vmul.f32 %v2264, %v2283
    %vm2286 = vcmask 1043456
    %v2287 = vsel %vm2286, %v617, %v723
    %v2288 = vsel %vm2286, %v827, %v933
    %v2289 = vsel %vm2286, %v1037, %v1143
    %v2290 = vsel %vm2286, %v1247, %v1353
    %v2291 = vsel %vm2286, %v2285, %v2181
    %v2292 = vsel %vm2286, %v2075, %v1971
    %v2293 = vsel %vm2286, %v1865, %v1761
    %v2294 = vsel %vm2286, %v1655, %v1551
    %2299 = vrot.lane.b32.xlu0 %v2287, 32
    %v2300 = vpop.permute.xlu0 %2299
    %2301 = vrot.lane.b32.xlu0 %v2288, 32
    %v2302 = vpop.permute.xlu0 %2301
    %2303 = vrot.lane.b32.xlu0 %v2289, 32
    %v2304 = vpop.permute.xlu0 %2303
    %2305 = vrot.lane.b32.xlu0 %v2290, 32
    %v2306 = vpop.permute.xlu0 %2305
    %2315 = vrot.lane.b32.xlu0 %v2291, 64
    %v2316 = vpop.permute.xlu0 %2315
    %2317 = vrot.lane.b32.xlu0 %v2292, 64
    %v2318 = vpop.permute.xlu0 %2317
    %2319 = vrot.lane.b32.xlu0 %v2293, 64
    %v2320 = vpop.permute.xlu0 %2319
    %2321 = vrot.lane.b32.xlu0 %v2294, 64
    %v2322 = vpop.permute.xlu0 %2321
    %v2327 = vsel %vm310, %v2300, %v2316
    %v2328 = vsel %vm310, %v2302, %v2318
    %v2329 = vsel %vm310, %v2304, %v2320
    %v2330 = vsel %vm310, %v2306, %v2322
    %v2331 = vld [vmem:[%s8] sm:$0xff]
    %v2332 = vld [vmem:[%s8 + $0x8] sm:$0xff]
    %v2333 = vld [vmem:[%s8 + $0x10] sm:$0xff]
    %v2334 = vld [vmem:[%s8 + $0x18] sm:$0xff]
    %v2335 = vld [vmem:[%s8 + $0x20] sm:$0xff]
    %v2336 = vld [vmem:[%s8 + $0x28] sm:$0xff]
    %v2337 = vld [vmem:[%s8 + $0x30] sm:$0xff]
    %v2338 = vld [vmem:[%s8 + $0x38] sm:$0xff]
    %v2339 = vld [vmem:[#allocation15] sm:$0x1]
    %v2341 = vlaneseq
    %v2342 = vshrl.u32 %v2341, 7
    %v2343 = vsub.s32 0, %v2342
    %v2344 = vrot.slane %v2339, %v2343
    %vm2346 = vcmask 523264
    %v2348 = vsel %vm2346, %v2327, 0
    %v2351 = vsel %vm2346, %v2328, 0
    %v2354 = vsel %vm2346, %v2329, 0
    %v2357 = vsel %vm2346, %v2330, 0
    %2359 = vmatprep.subr.mxu0 0.0
    %2360 = vmatpush1.msra.mxu0 0.0
    %2361 = vmatprep.subr.mxu0 0.0
    %2362 = vmatpush1.msra.mxu0 0.0
    %2363 = vmatprep.subr.mxu0 0.0
    %2364 = vmatpush1.msra.mxu0 0.0
    %2365 = vmatprep.subr.mxu0 0.0
    %2366 = vmatpush1.msra.mxu0 0.0
    %2367 = vmatprep.subr.mxu0 0.0
    %2368 = vmatpush1.msra.mxu0 0.0
    %2369 = vmatprep.subr.mxu0 0.0
    %2370 = vmatpush1.msra.mxu0 0.0
    %2371 = vmatprep.subr.mxu0 0.0
    %2372 = vmatpush1.msra.mxu0 0.0
    %2373 = vmatprep.subr.mxu0 0.0
    %2374 = vmatpush1.msra.mxu0 0.0
    %2375 = vmatprep.subr.mxu0 0.0
    %2376 = vmatpush1.msra.mxu0 %v2338
    %2377 = vmatprep.subr.mxu0 0.0
    %2378 = vmatpush1.msra.mxu0 %v2337
    %2379 = vmatprep.subr.mxu0 0.0
    %2380 = vmatpush1.msra.mxu0 %v2336
    %2381 = vmatprep.subr.mxu0 0.0
    %2382 = vmatpush1.msra.mxu0 %v2335
    %2383 = vmatprep.subr.mxu0 0.0
    %2384 = vmatpush1.msra.mxu0 %v2334
    %2385 = vmatprep.subr.mxu0 0.0
    %2386 = vmatpush1.msra.mxu0 %v2333
    %2387 = vmatprep.subr.mxu0 0.0
    %2388 = vmatpush1.msra.mxu0 %v2332
    %2389 = vmatprep.subr.mxu0 0.0
    %2390 = vmatpush1.msra.mxu0 %v2331
    %2391 = vmatprep.subr.mxu0 0.0
    %2392 = vmatpush2.msra.mxu0 0.0
    %2393 = vmatprep.subr.mxu0 0.0
    %2394 = vmatpush2.msra.mxu0 0.0
    %2395 = vmatprep.subr.mxu0 0.0
    %2396 = vmatpush2.msra.mxu0 0.0
    %2397 = vmatprep.subr.mxu0 0.0
    %2398 = vmatpush2.msra.mxu0 0.0
    %2399 = vmatprep.subr.mxu0 0.0
    %2400 = vmatpush2.msra.mxu0 0.0
    %2401 = vmatprep.subr.mxu0 0.0
    %2402 = vmatpush2.msra.mxu0 0.0
    %2403 = vmatprep.subr.mxu0 0.0
    %2404 = vmatpush2.msra.mxu0 0.0
    %2405 = vmatprep.subr.mxu0 0.0
    %2406 = vmatpush2.msra.mxu0 0.0
    %2407 = vmatprep.subr.mxu0 0.0
    %2408 = vmatpush2.msra.mxu0 0.0
    %2409 = vmatprep.subr.mxu0 0.0
    %2410 = vmatpush2.msra.mxu0 0.0
    %2411 = vmatprep.subr.mxu0 0.0
    %2412 = vmatpush2.msra.mxu0 0.0
    %2413 = vmatprep.subr.mxu0 0.0
    %2414 = vmatpush2.msra.mxu0 0.0
    %2415 = vmatprep.subr.mxu0 0.0
    %2416 = vmatpush2.msra.mxu0 0.0
    %2417 = vmatprep.subr.mxu0 0.0
    %2418 = vmatpush2.msra.mxu0 0.0
    %2419 = vmatprep.subr.mxu0 0.0
    %2420 = vmatpush2.msra.mxu0 0.0
    %2421 = vmatprep.subr.mxu0 0.0
    %2422 = vmatpush2.msra.mxu0 0.0
    %2423 = vmatprep.mubr.f32.mxu0 0.0
    %2424 = vmatmul.mubr.f32.gmra.mxu0 %v2348
    %v2425 = vpop.f32.mrf.mxu0
    %v2426 = vadd.f32 %v2344, %v2425
    %v2427 = vpop.f32.mrf.mxu0
    %2428 = vmatprep.mubr.f32.mxu0 0.0
    %2429 = vmatmul.mubr.f32.gmra.mxu0 %v2351
    %v2430 = vpop.f32.mrf.mxu0
    %v2431 = vadd.f32 %v2344, %v2430
    %v2432 = vpop.f32.mrf.mxu0
    %2433 = vmatprep.mubr.f32.mxu0 0.0
    %2434 = vmatmul.mubr.f32.gmra.mxu0 %v2354
    %v2435 = vpop.f32.mrf.mxu0
    %v2436 = vadd.f32 %v2344, %v2435
    %v2437 = vpop.f32.mrf.mxu0
    %2438 = vmatprep.mubr.f32.mxu0 0.0
    %2439 = vmatmul.mubr.f32.gmra.mxu0 %v2357
    %v2440 = vpop.f32.mrf.mxu0
    %v2441 = vadd.f32 %v2344, %v2440
    %v2442 = vpop.f32.mrf.mxu0
    %2443 = vdwg.mxu0
    %v2444 = vld [vmem:[#allocation13] sm:$0xff]
    %v2445 = vld [vmem:[#allocation13 + $0x8] sm:$0xff]
    %v2446 = vld [vmem:[#allocation13 + $0x10] sm:$0xff]
    %v2447 = vld [vmem:[#allocation13 + $0x18] sm:$0xff]
    %2448 = vmatprep.subr.mxu0 0.0
    %2449 = vmatpush1.msra.mxu0 0.0
    %2450 = vmatprep.subr.mxu0 0.0
    %2451 = vmatpush1.msra.mxu0 0.0
    %2452 = vmatprep.subr.mxu0 0.0
    %2453 = vmatpush1.msra.mxu0 0.0
    %2454 = vmatprep.subr.mxu0 0.0
    %2455 = vmatpush1.msra.mxu0 0.0
    %2456 = vmatprep.subr.mxu0 0.0
    %2457 = vmatpush1.msra.mxu0 0.0
    %2458 = vmatprep.subr.mxu0 0.0
    %2459 = vmatpush1.msra.mxu0 0.0
    %2460 = vmatprep.subr.mxu0 0.0
    %2461 = vmatpush1.msra.mxu0 0.0
    %2462 = vmatprep.subr.mxu0 0.0
    %2463 = vmatpush1.msra.mxu0 0.0
    %2464 = vmatprep.subr.mxu0 0.0
    %2465 = vmatpush1.msra.mxu0 0.0
    %2466 = vmatprep.subr.mxu0 0.0
    %2467 = vmatpush1.msra.mxu0 0.0
    %2468 = vmatprep.subr.mxu0 0.0
    %2469 = vmatpush1.msra.mxu0 0.0
    %2470 = vmatprep.subr.mxu0 0.0
    %2471 = vmatpush1.msra.mxu0 0.0
    %2472 = vmatprep.subr.mxu0 0.0
    %2473 = vmatpush1.msra.mxu0 %v2447
    %2474 = vmatprep.subr.mxu0 0.0
    %2475 = vmatpush1.msra.mxu0 %v2446
    %2476 = vmatprep.subr.mxu0 0.0
    %2477 = vmatpush1.msra.mxu0 %v2445
    %2478 = vmatprep.subr.mxu0 0.0
    %2479 = vmatpush1.msra.mxu0 %v2444
    %2480 = vmatprep.subr.mxu0 0.0
    %2481 = vmatpush2.msra.mxu0 0.0
    %2482 = vmatprep.subr.mxu0 0.0
    %2483 = vmatpush2.msra.mxu0 0.0
    %2484 = vmatprep.subr.mxu0 0.0
    %2485 = vmatpush2.msra.mxu0 0.0
    %2486 = vmatprep.subr.mxu0 0.0
    %2487 = vmatpush2.msra.mxu0 0.0
    %2488 = vmatprep.subr.mxu0 0.0
    %2489 = vmatpush2.msra.mxu0 0.0
    %2490 = vmatprep.subr.mxu0 0.0
    %2491 = vmatpush2.msra.mxu0 0.0
    %2492 = vmatprep.subr.mxu0 0.0
    %2493 = vmatpush2.msra.mxu0 0.0
    %2494 = vmatprep.subr.mxu0 0.0
    %2495 = vmatpush2.msra.mxu0 0.0
    %2496 = vmatprep.subr.mxu0 0.0
    %2497 = vmatpush2.msra.mxu0 0.0
    %2498 = vmatprep.subr.mxu0 0.0
    %2499 = vmatpush2.msra.mxu0 0.0
    %2500 = vmatprep.subr.mxu0 0.0
    %2501 = vmatpush2.msra.mxu0 0.0
    %2502 = vmatprep.subr.mxu0 0.0
    %2503 = vmatpush2.msra.mxu0 0.0
    %2504 = vmatprep.subr.mxu0 0.0
    %2505 = vmatpush2.msra.mxu0 0.0
    %2506 = vmatprep.subr.mxu0 0.0
    %2507 = vmatpush2.msra.mxu0 0.0
    %2508 = vmatprep.subr.mxu0 0.0
    %2509 = vmatpush2.msra.mxu0 0.0
    %2510 = vmatprep.subr.mxu0 0.0
    %2511 = vmatpush2.msra.mxu0 0.0
    %2512 = vmatprep.mubr.f32.mxu0 0.0
    %2513 = vmatmul.mubr.f32.gmra.mxu0 %v521
    %v2514 = vpop.f32.mrf.mxu0
    %v2515 = vadd.f32 0.0, %v2514
    %v2516 = vpop.f32.mrf.mxu0
    %2517 = vdwg.mxu0
    %v2518 = vadd.f32 %v2426, %v2515
    %v2519 = vxor.u32 %v2518, 2147483648
    %v2520 = vmul.f32 %v2519, 1.442695
    %v2521 = vpow.pop %v2520
    %v2522 = vadd.f32 %v2521, 1.0
    %v2523 = vrcp.pop %v2522
    %v2524 = vmul.f32 1.0, %v2523
    %v2525 = vtanh.pop %v2518
    %v2526 = vmul.f32 %v2524, 0.0
    %2528 = vrot.lane.b32.xlu0 %v2525, 64
    %v2529 = vpop.permute.xlu0 %2528
    %v2531 = vmul.f32 %v2524, %v2529
    %2533 = vrot.lane.b32.xlu0 %v2531, 32
    %v2534 = vpop.permute.xlu0 %2533
    %v2536 = vadd.f32 %v2526, %v2534
    %v2537 = vtanh.pop %v2536
    %2539 = vrot.lane.b32.xlu0 %v2537, 64
    %v2540 = vpop.permute.xlu0 %2539
    %v2542 = vmul.f32 %v2524, %v2540
    %2544 = vrot.lane.b32.xlu0 %v2542, 32
    %v2545 = vpop.permute.xlu0 %2544
    %v2546 = vsel %vm310, %v2545, 0
    %2548 = vmatprep.subr.mxu0 0.0
    %2549 = vmatpush1.msra.mxu0 0.0
    %2550 = vmatprep.subr.mxu0 0.0
    %2551 = vmatpush1.msra.mxu0 0.0
    %2552 = vmatprep.subr.mxu0 0.0
    %2553 = vmatpush1.msra.mxu0 0.0
    %2554 = vmatprep.subr.mxu0 0.0
    %2555 = vmatpush1.msra.mxu0 0.0
    %2556 = vmatprep.subr.mxu0 0.0
    %2557 = vmatpush1.msra.mxu0 0.0
    %2558 = vmatprep.subr.mxu0 0.0
    %2559 = vmatpush1.msra.mxu0 0.0
    %2560 = vmatprep.subr.mxu0 0.0
    %2561 = vmatpush1.msra.mxu0 0.0
    %2562 = vmatprep.subr.mxu0 0.0
    %2563 = vmatpush1.msra.mxu0 0.0
    %2564 = vmatprep.subr.mxu0 0.0
    %2565 = vmatpush1.msra.mxu0 0.0
    %2566 = vmatprep.subr.mxu0 0.0
    %2567 = vmatpush1.msra.mxu0 0.0
    %2568 = vmatprep.subr.mxu0 0.0
    %2569 = vmatpush1.msra.mxu0 0.0
    %2570 = vmatprep.subr.mxu0 0.0
    %2571 = vmatpush1.msra.mxu0 0.0
    %2572 = vmatprep.subr.mxu0 0.0
    %2573 = vmatpush1.msra.mxu0 %v2447
    %2574 = vmatprep.subr.mxu0 0.0
    %2575 = vmatpush1.msra.mxu0 %v2446
    %2576 = vmatprep.subr.mxu0 0.0
    %2577 = vmatpush1.msra.mxu0 %v2445
    %2578 = vmatprep.subr.mxu0 0.0
    %2579 = vmatpush1.msra.mxu0 %v2444
    %2580 = vmatprep.subr.mxu0 0.0
    %2581 = vmatpush2.msra.mxu0 0.0
    %2582 = vmatprep.subr.mxu0 0.0
    %2583 = vmatpush2.msra.mxu0 0.0
    %2584 = vmatprep.subr.mxu0 0.0
    %2585 = vmatpush2.msra.mxu0 0.0
    %2586 = vmatprep.subr.mxu0 0.0
    %2587 = vmatpush2.msra.mxu0 0.0
    %2588 = vmatprep.subr.mxu0 0.0
    %2589 = vmatpush2.msra.mxu0 0.0
    %2590 = vmatprep.subr.mxu0 0.0
    %2591 = vmatpush2.msra.mxu0 0.0
    %2592 = vmatprep.subr.mxu0 0.0
    %2593 = vmatpush2.msra.mxu0 0.0
    %2594 = vmatprep.subr.mxu0 0.0
    %2595 = vmatpush2.msra.mxu0 0.0
    %2596 = vmatprep.subr.mxu0 0.0
    %2597 = vmatpush2.msra.mxu0 0.0
    %2598 = vmatprep.subr.mxu0 0.0
    %2599 = vmatpush2.msra.mxu0 0.0
    %2600 = vmatprep.subr.mxu0 0.0
    %2601 = vmatpush2.msra.mxu0 0.0
    %2602 = vmatprep.subr.mxu0 0.0
    %2603 = vmatpush2.msra.mxu0 0.0
    %2604 = vmatprep.subr.mxu0 0.0
    %2605 = vmatpush2.msra.mxu0 0.0
    %2606 = vmatprep.subr.mxu0 0.0
    %2607 = vmatpush2.msra.mxu0 0.0
    %2608 = vmatprep.subr.mxu0 0.0
    %2609 = vmatpush2.msra.mxu0 0.0
    %2610 = vmatprep.subr.mxu0 0.0
    %2611 = vmatpush2.msra.mxu0 0.0
    %2612 = vmatprep.mubr.f32.mxu0 0.0
    %2613 = vmatmul.mubr.f32.gmra.mxu0 %v2546
    %v2614 = vpop.f32.mrf.mxu0
    %v2615 = vadd.f32 0.0, %v2614
    %v2616 = vpop.f32.mrf.mxu0
    %2617 = vdwg.mxu0
    %v2619 = vrot.slane %v2615, 4
    %v2621 = vadd.f32 %v2426, %v2619
    %v2622 = vxor.u32 %v2621, 2147483648
    %v2623 = vmul.f32 %v2622, 1.442695
    %v2624 = vpow.pop %v2623
    %v2625 = vadd.f32 %v2624, 1.0
    %v2626 = vrcp.pop %v2625
    %v2627 = vmul.f32 1.0, %v2626
    %v2628 = vtanh.pop %v2621
    %v2630 = vrot.slane %v2536, 4
    %v2632 = vmul.f32 %v2627, %v2630
    %2634 = vrot.lane.b32.xlu0 %v2628, 64
    %v2635 = vpop.permute.xlu0 %2634
    %v2637 = vmul.f32 %v2627, %v2635
    %2639 = vrot.lane.b32.xlu0 %v2637, 32
    %v2640 = vpop.permute.xlu0 %2639
    %v2642 = vadd.f32 %v2632, %v2640
    %v2643 = vtanh.pop %v2642
    %2645 = vrot.lane.b32.xlu0 %v2643, 64
    %v2646 = vpop.permute.xlu0 %2645
    %v2648 = vmul.f32 %v2627, %v2646
    %v2650 = vrot.slane %v2648, 4
    %2651 = vrot.lane.b32.xlu0 %v2650, 32
    %v2652 = vpop.permute.xlu0 %2651
    %v2653 = vsel %vm310, %v2652, 0
    %2655 = vmatprep.subr.mxu0 0.0
    %2656 = vmatpush1.msra.mxu0 0.0
    %2657 = vmatprep.subr.mxu0 0.0
    %2658 = vmatpush1.msra.mxu0 0.0
    %2659 = vmatprep.subr.mxu0 0.0
    %2660 = vmatpush1.msra.mxu0 0.0
    %2661 = vmatprep.subr.mxu0 0.0
    %2662 = vmatpush1.msra.mxu0 0.0
    %2663 = vmatprep.subr.mxu0 0.0
    %2664 = vmatpush1.msra.mxu0 0.0
    %2665 = vmatprep.subr.mxu0 0.0
    %2666 = vmatpush1.msra.mxu0 0.0
    %2667 = vmatprep.subr.mxu0 0.0
    %2668 = vmatpush1.msra.mxu0 0.0
    %2669 = vmatprep.subr.mxu0 0.0
    %2670 = vmatpush1.msra.mxu0 0.0
    %2671 = vmatprep.subr.mxu0 0.0
    %2672 = vmatpush1.msra.mxu0 0.0
    %2673 = vmatprep.subr.mxu0 0.0
    %2674 = vmatpush1.msra.mxu0 0.0
    %2675 = vmatprep.subr.mxu0 0.0
    %2676 = vmatpush1.msra.mxu0 0.0
    %2677 = vmatprep.subr.mxu0 0.0
    %2678 = vmatpush1.msra.mxu0 0.0
    %2679 = vmatprep.subr.mxu0 0.0
    %2680 = vmatpush1.msra.mxu0 %v2447
    %2681 = vmatprep.subr.mxu0 0.0
    %2682 = vmatpush1.msra.mxu0 %v2446
    %2683 = vmatprep.subr.mxu0 0.0
    %2684 = vmatpush1.msra.mxu0 %v2445
    %2685 = vmatprep.subr.mxu0 0.0
    %2686 = vmatpush1.msra.mxu0 %v2444
    %2687 = vmatprep.subr.mxu0 0.0
    %2688 = vmatpush2.msra.mxu0 0.0
    %2689 = vmatprep.subr.mxu0 0.0
    %2690 = vmatpush2.msra.mxu0 0.0
    %2691 = vmatprep.subr.mxu0 0.0
    %2692 = vmatpush2.msra.mxu0 0.0
    %2693 = vmatprep.subr.mxu0 0.0
    %2694 = vmatpush2.msra.mxu0 0.0
    %2695 = vmatprep.subr.mxu0 0.0
    %2696 = vmatpush2.msra.mxu0 0.0
    %2697 = vmatprep.subr.mxu0 0.0
    %2698 = vmatpush2.msra.mxu0 0.0
    %2699 = vmatprep.subr.mxu0 0.0
    %2700 = vmatpush2.msra.mxu0 0.0
    %2701 = vmatprep.subr.mxu0 0.0
    %2702 = vmatpush2.msra.mxu0 0.0
    %2703 = vmatprep.subr.mxu0 0.0
    %2704 = vmatpush2.msra.mxu0 0.0
    %2705 = vmatprep.subr.mxu0 0.0
    %2706 = vmatpush2.msra.mxu0 0.0
    %2707 = vmatprep.subr.mxu0 0.0
    %2708 = vmatpush2.msra.mxu0 0.0
    %2709 = vmatprep.subr.mxu0 0.0
    %2710 = vmatpush2.msra.mxu0 0.0
    %2711 = vmatprep.subr.mxu0 0.0
    %2712 = vmatpush2.msra.mxu0 0.0
    %2713 = vmatprep.subr.mxu0 0.0
    %2714 = vmatpush2.msra.mxu0 0.0
    %2715 = vmatprep.subr.mxu0 0.0
    %2716 = vmatpush2.msra.mxu0 0.0
    %2717 = vmatprep.subr.mxu0 0.0
    %2718 = vmatpush2.msra.mxu0 0.0
    %2719 = vmatprep.mubr.f32.mxu0 0.0
    %2720 = vmatmul.mubr.f32.gmra.mxu0 %v2653
    %v2721 = vpop.f32.mrf.mxu0
    %v2722 = vadd.f32 0.0, %v2721
    %v2723 = vpop.f32.mrf.mxu0
    %2724 = vdwg.mxu0
    %v2725 = vadd.f32 %v2431, %v2722
    %v2726 = vxor.u32 %v2725, 2147483648
    %v2727 = vmul.f32 %v2726, 1.442695
    %v2728 = vpow.pop %v2727
    %v2729 = vadd.f32 %v2728, 1.0
    %v2730 = vrcp.pop %v2729
    %v2731 = vmul.f32 1.0, %v2730
    %v2732 = vtanh.pop %v2725
    %v2734 = vrot.slane %v2642, 4
    %v2736 = vmul.f32 %v2731, %v2734
    %2738 = vrot.lane.b32.xlu0 %v2732, 64
    %v2739 = vpop.permute.xlu0 %2738
    %v2741 = vmul.f32 %v2731, %v2739
    %2743 = vrot.lane.b32.xlu0 %v2741, 32
    %v2744 = vpop.permute.xlu0 %2743
    %v2746 = vadd.f32 %v2736, %v2744
    %v2747 = vtanh.pop %v2746
    %2749 = vrot.lane.b32.xlu0 %v2747, 64
    %v2750 = vpop.permute.xlu0 %2749
    %v2752 = vmul.f32 %v2731, %v2750
    %2754 = vrot.lane.b32.xlu0 %v2752, 32
    %v2755 = vpop.permute.xlu0 %2754
    %v2756 = vsel %vm310, %v2755, 0
    %2758 = vmatprep.subr.mxu0 0.0
    %2759 = vmatpush1.msra.mxu0 0.0
    %2760 = vmatprep.subr.mxu0 0.0
    %2761 = vmatpush1.msra.mxu0 0.0
    %2762 = vmatprep.subr.mxu0 0.0
    %2763 = vmatpush1.msra.mxu0 0.0
    %2764 = vmatprep.subr.mxu0 0.0
    %2765 = vmatpush1.msra.mxu0 0.0
    %2766 = vmatprep.subr.mxu0 0.0
    %2767 = vmatpush1.msra.mxu0 0.0
    %2768 = vmatprep.subr.mxu0 0.0
    %2769 = vmatpush1.msra.mxu0 0.0
    %2770 = vmatprep.subr.mxu0 0.0
    %2771 = vmatpush1.msra.mxu0 0.0
    %2772 = vmatprep.subr.mxu0 0.0
    %2773 = vmatpush1.msra.mxu0 0.0
    %2774 = vmatprep.subr.mxu0 0.0
    %2775 = vmatpush1.msra.mxu0 0.0
    %2776 = vmatprep.subr.mxu0 0.0
    %2777 = vmatpush1.msra.mxu0 0.0
    %2778 = vmatprep.subr.mxu0 0.0
    %2779 = vmatpush1.msra.mxu0 0.0
    %2780 = vmatprep.subr.mxu0 0.0
    %2781 = vmatpush1.msra.mxu0 0.0
    %2782 = vmatprep.subr.mxu0 0.0
    %2783 = vmatpush1.msra.mxu0 %v2447
    %2784 = vmatprep.subr.mxu0 0.0
    %2785 = vmatpush1.msra.mxu0 %v2446
    %2786 = vmatprep.subr.mxu0 0.0
    %2787 = vmatpush1.msra.mxu0 %v2445
    %2788 = vmatprep.subr.mxu0 0.0
    %2789 = vmatpush1.msra.mxu0 %v2444
    %2790 = vmatprep.subr.mxu0 0.0
    %2791 = vmatpush2.msra.mxu0 0.0
    %2792 = vmatprep.subr.mxu0 0.0
    %2793 = vmatpush2.msra.mxu0 0.0
    %2794 = vmatprep.subr.mxu0 0.0
    %2795 = vmatpush2.msra.mxu0 0.0
    %2796 = vmatprep.subr.mxu0 0.0
    %2797 = vmatpush2.msra.mxu0 0.0
    %2798 = vmatprep.subr.mxu0 0.0
    %2799 = vmatpush2.msra.mxu0 0.0
    %2800 = vmatprep.subr.mxu0 0.0
    %2801 = vmatpush2.msra.mxu0 0.0
    %2802 = vmatprep.subr.mxu0 0.0
    %2803 = vmatpush2.msra.mxu0 0.0
    %2804 = vmatprep.subr.mxu0 0.0
    %2805 = vmatpush2.msra.mxu0 0.0
    %2806 = vmatprep.subr.mxu0 0.0
    %2807 = vmatpush2.msra.mxu0 0.0
    %2808 = vmatprep.subr.mxu0 0.0
    %2809 = vmatpush2.msra.mxu0 0.0
    %2810 = vmatprep.subr.mxu0 0.0
    %2811 = vmatpush2.msra.mxu0 0.0
    %2812 = vmatprep.subr.mxu0 0.0
    %2813 = vmatpush2.msra.mxu0 0.0
    %2814 = vmatprep.subr.mxu0 0.0
    %2815 = vmatpush2.msra.mxu0 0.0
    %2816 = vmatprep.subr.mxu0 0.0
    %2817 = vmatpush2.msra.mxu0 0.0
    %2818 = vmatprep.subr.mxu0 0.0
    %2819 = vmatpush2.msra.mxu0 0.0
    %2820 = vmatprep.subr.mxu0 0.0
    %2821 = vmatpush2.msra.mxu0 0.0
    %2822 = vmatprep.mubr.f32.mxu0 0.0
    %2823 = vmatmul.mubr.f32.gmra.mxu0 %v2756
    %v2824 = vpop.f32.mrf.mxu0
    %v2825 = vadd.f32 0.0, %v2824
    %v2826 = vpop.f32.mrf.mxu0
    %2827 = vdwg.mxu0
    %v2829 = vrot.slane %v2825, 4
    %v2831 = vadd.f32 %v2431, %v2829
    %v2832 = vxor.u32 %v2831, 2147483648
    %v2833 = vmul.f32 %v2832, 1.442695
    %v2834 = vpow.pop %v2833
    %v2835 = vadd.f32 %v2834, 1.0
    %v2836 = vrcp.pop %v2835
    %v2837 = vmul.f32 1.0, %v2836
    %v2838 = vtanh.pop %v2831
    %v2840 = vrot.slane %v2746, 4
    %v2842 = vmul.f32 %v2837, %v2840
    %2844 = vrot.lane.b32.xlu0 %v2838, 64
    %v2845 = vpop.permute.xlu0 %2844
    %v2847 = vmul.f32 %v2837, %v2845
    %2849 = vrot.lane.b32.xlu0 %v2847, 32
    %v2850 = vpop.permute.xlu0 %2849
    %v2852 = vadd.f32 %v2842, %v2850
    %v2853 = vtanh.pop %v2852
    %2855 = vrot.lane.b32.xlu0 %v2853, 64
    %v2856 = vpop.permute.xlu0 %2855
    %v2858 = vmul.f32 %v2837, %v2856
    %v2860 = vrot.slane %v2858, 4
    %2861 = vrot.lane.b32.xlu0 %v2860, 32
    %v2862 = vpop.permute.xlu0 %2861
    %v2863 = vsel %vm310, %v2862, 0
    %2865 = vmatprep.subr.mxu0 0.0
    %2866 = vmatpush1.msra.mxu0 0.0
    %2867 = vmatprep.subr.mxu0 0.0
    %2868 = vmatpush1.msra.mxu0 0.0
    %2869 = vmatprep.subr.mxu0 0.0
    %2870 = vmatpush1.msra.mxu0 0.0
    %2871 = vmatprep.subr.mxu0 0.0
    %2872 = vmatpush1.msra.mxu0 0.0
    %2873 = vmatprep.subr.mxu0 0.0
    %2874 = vmatpush1.msra.mxu0 0.0
    %2875 = vmatprep.subr.mxu0 0.0
    %2876 = vmatpush1.msra.mxu0 0.0
    %2877 = vmatprep.subr.mxu0 0.0
    %2878 = vmatpush1.msra.mxu0 0.0
    %2879 = vmatprep.subr.mxu0 0.0
    %2880 = vmatpush1.msra.mxu0 0.0
    %2881 = vmatprep.subr.mxu0 0.0
    %2882 = vmatpush1.msra.mxu0 0.0
    %2883 = vmatprep.subr.mxu0 0.0
    %2884 = vmatpush1.msra.mxu0 0.0
    %2885 = vmatprep.subr.mxu0 0.0
    %2886 = vmatpush1.msra.mxu0 0.0
    %2887 = vmatprep.subr.mxu0 0.0
    %2888 = vmatpush1.msra.mxu0 0.0
    %2889 = vmatprep.subr.mxu0 0.0
    %2890 = vmatpush1.msra.mxu0 %v2447
    %2891 = vmatprep.subr.mxu0 0.0
    %2892 = vmatpush1.msra.mxu0 %v2446
    %2893 = vmatprep.subr.mxu0 0.0
    %2894 = vmatpush1.msra.mxu0 %v2445
    %2895 = vmatprep.subr.mxu0 0.0
    %2896 = vmatpush1.msra.mxu0 %v2444
    %2897 = vmatprep.subr.mxu0 0.0
    %2898 = vmatpush2.msra.mxu0 0.0
    %2899 = vmatprep.subr.mxu0 0.0
    %2900 = vmatpush2.msra.mxu0 0.0
    %2901 = vmatprep.subr.mxu0 0.0
    %2902 = vmatpush2.msra.mxu0 0.0
    %2903 = vmatprep.subr.mxu0 0.0
    %2904 = vmatpush2.msra.mxu0 0.0
    %2905 = vmatprep.subr.mxu0 0.0
    %2906 = vmatpush2.msra.mxu0 0.0
    %2907 = vmatprep.subr.mxu0 0.0
    %2908 = vmatpush2.msra.mxu0 0.0
    %2909 = vmatprep.subr.mxu0 0.0
    %2910 = vmatpush2.msra.mxu0 0.0
    %2911 = vmatprep.subr.mxu0 0.0
    %2912 = vmatpush2.msra.mxu0 0.0
    %2913 = vmatprep.subr.mxu0 0.0
    %2914 = vmatpush2.msra.mxu0 0.0
    %2915 = vmatprep.subr.mxu0 0.0
    %2916 = vmatpush2.msra.mxu0 0.0
    %2917 = vmatprep.subr.mxu0 0.0
    %2918 = vmatpush2.msra.mxu0 0.0
    %2919 = vmatprep.subr.mxu0 0.0
    %2920 = vmatpush2.msra.mxu0 0.0
    %2921 = vmatprep.subr.mxu0 0.0
    %2922 = vmatpush2.msra.mxu0 0.0
    %2923 = vmatprep.subr.mxu0 0.0
    %2924 = vmatpush2.msra.mxu0 0.0
    %2925 = vmatprep.subr.mxu0 0.0
    %2926 = vmatpush2.msra.mxu0 0.0
    %2927 = vmatprep.subr.mxu0 0.0
    %2928 = vmatpush2.msra.mxu0 0.0
    %2929 = vmatprep.mubr.f32.mxu0 0.0
    %2930 = vmatmul.mubr.f32.gmra.mxu0 %v2863
    %v2931 = vpop.f32.mrf.mxu0
    %v2932 = vadd.f32 0.0, %v2931
    %v2933 = vpop.f32.mrf.mxu0
    %2934 = vdwg.mxu0
    %v2935 = vadd.f32 %v2436, %v2932
    %v2936 = vxor.u32 %v2935, 2147483648
    %v2937 = vmul.f32 %v2936, 1.442695
    %v2938 = vpow.pop %v2937
    %v2939 = vadd.f32 %v2938, 1.0
    %v2940 = vrcp.pop %v2939
    %v2941 = vmul.f32 1.0, %v2940
    %v2942 = vtanh.pop %v2935
    %v2944 = vrot.slane %v2852, 4
    %v2946 = vmul.f32 %v2941, %v2944
    %2948 = vrot.lane.b32.xlu0 %v2942, 64
    %v2949 = vpop.permute.xlu0 %2948
    %v2951 = vmul.f32 %v2941, %v2949
    %2953 = vrot.lane.b32.xlu0 %v2951, 32
    %v2954 = vpop.permute.xlu0 %2953
    %v2956 = vadd.f32 %v2946, %v2954
    %v2957 = vtanh.pop %v2956
    %2959 = vrot.lane.b32.xlu0 %v2957, 64
    %v2960 = vpop.permute.xlu0 %2959
    %v2962 = vmul.f32 %v2941, %v2960
    %2964 = vrot.lane.b32.xlu0 %v2962, 32
    %v2965 = vpop.permute.xlu0 %2964
    %v2966 = vsel %vm310, %v2965, 0
    %2968 = vmatprep.subr.mxu0 0.0
    %2969 = vmatpush1.msra.mxu0 0.0
    %2970 = vmatprep.subr.mxu0 0.0
    %2971 = vmatpush1.msra.mxu0 0.0
    %2972 = vmatprep.subr.mxu0 0.0
    %2973 = vmatpush1.msra.mxu0 0.0
    %2974 = vmatprep.subr.mxu0 0.0
    %2975 = vmatpush1.msra.mxu0 0.0
    %2976 = vmatprep.subr.mxu0 0.0
    %2977 = vmatpush1.msra.mxu0 0.0
    %2978 = vmatprep.subr.mxu0 0.0
    %2979 = vmatpush1.msra.mxu0 0.0
    %2980 = vmatprep.subr.mxu0 0.0
    %2981 = vmatpush1.msra.mxu0 0.0
    %2982 = vmatprep.subr.mxu0 0.0
    %2983 = vmatpush1.msra.mxu0 0.0
    %2984 = vmatprep.subr.mxu0 0.0
    %2985 = vmatpush1.msra.mxu0 0.0
    %2986 = vmatprep.subr.mxu0 0.0
    %2987 = vmatpush1.msra.mxu0 0.0
    %2988 = vmatprep.subr.mxu0 0.0
    %2989 = vmatpush1.msra.mxu0 0.0
    %2990 = vmatprep.subr.mxu0 0.0
    %2991 = vmatpush1.msra.mxu0 0.0
    %2992 = vmatprep.subr.mxu0 0.0
    %2993 = vmatpush1.msra.mxu0 %v2447
    %2994 = vmatprep.subr.mxu0 0.0
    %2995 = vmatpush1.msra.mxu0 %v2446
    %2996 = vmatprep.subr.mxu0 0.0
    %2997 = vmatpush1.msra.mxu0 %v2445
    %2998 = vmatprep.subr.mxu0 0.0
    %2999 = vmatpush1.msra.mxu0 %v2444
    %3000 = vmatprep.subr.mxu0 0.0
    %3001 = vmatpush2.msra.mxu0 0.0
    %3002 = vmatprep.subr.mxu0 0.0
    %3003 = vmatpush2.msra.mxu0 0.0
    %3004 = vmatprep.subr.mxu0 0.0
    %3005 = vmatpush2.msra.mxu0 0.0
    %3006 = vmatprep.subr.mxu0 0.0
    %3007 = vmatpush2.msra.mxu0 0.0
    %3008 = vmatprep.subr.mxu0 0.0
    %3009 = vmatpush2.msra.mxu0 0.0
    %3010 = vmatprep.subr.mxu0 0.0
    %3011 = vmatpush2.msra.mxu0 0.0
    %3012 = vmatprep.subr.mxu0 0.0
    %3013 = vmatpush2.msra.mxu0 0.0
    %3014 = vmatprep.subr.mxu0 0.0
    %3015 = vmatpush2.msra.mxu0 0.0
    %3016 = vmatprep.subr.mxu0 0.0
    %3017 = vmatpush2.msra.mxu0 0.0
    %3018 = vmatprep.subr.mxu0 0.0
    %3019 = vmatpush2.msra.mxu0 0.0
    %3020 = vmatprep.subr.mxu0 0.0
    %3021 = vmatpush2.msra.mxu0 0.0
    %3022 = vmatprep.subr.mxu0 0.0
    %3023 = vmatpush2.msra.mxu0 0.0
    %3024 = vmatprep.subr.mxu0 0.0
    %3025 = vmatpush2.msra.mxu0 0.0
    %3026 = vmatprep.subr.mxu0 0.0
    %3027 = vmatpush2.msra.mxu0 0.0
    %3028 = vmatprep.subr.mxu0 0.0
    %3029 = vmatpush2.msra.mxu0 0.0
    %3030 = vmatprep.subr.mxu0 0.0
    %3031 = vmatpush2.msra.mxu0 0.0
    %3032 = vmatprep.mubr.f32.mxu0 0.0
    %3033 = vmatmul.mubr.f32.gmra.mxu0 %v2966
    %v3034 = vpop.f32.mrf.mxu0
    %v3035 = vadd.f32 0.0, %v3034
    %v3036 = vpop.f32.mrf.mxu0
    %3037 = vdwg.mxu0
    %v3039 = vrot.slane %v3035, 4
    %v3041 = vadd.f32 %v2436, %v3039
    %v3042 = vxor.u32 %v3041, 2147483648
    %v3043 = vmul.f32 %v3042, 1.442695
    %v3044 = vpow.pop %v3043
    %v3045 = vadd.f32 %v3044, 1.0
    %v3046 = vrcp.pop %v3045
    %v3047 = vmul.f32 1.0, %v3046
    %v3048 = vtanh.pop %v3041
    %v3050 = vrot.slane %v2956, 4
    %v3052 = vmul.f32 %v3047, %v3050
    %3054 = vrot.lane.b32.xlu0 %v3048, 64
    %v3055 = vpop.permute.xlu0 %3054
    %v3057 = vmul.f32 %v3047, %v3055
    %3059 = vrot.lane.b32.xlu0 %v3057, 32
    %v3060 = vpop.permute.xlu0 %3059
    %v3062 = vadd.f32 %v3052, %v3060
    %v3063 = vtanh.pop %v3062
    %3065 = vrot.lane.b32.xlu0 %v3063, 64
    %v3066 = vpop.permute.xlu0 %3065
    %v3068 = vmul.f32 %v3047, %v3066
    %v3070 = vrot.slane %v3068, 4
    %3071 = vrot.lane.b32.xlu0 %v3070, 32
    %v3072 = vpop.permute.xlu0 %3071
    %v3073 = vsel %vm310, %v3072, 0
    %3075 = vmatprep.subr.mxu0 0.0
    %3076 = vmatpush1.msra.mxu0 0.0
    %3077 = vmatprep.subr.mxu0 0.0
    %3078 = vmatpush1.msra.mxu0 0.0
    %3079 = vmatprep.subr.mxu0 0.0
    %3080 = vmatpush1.msra.mxu0 0.0
    %3081 = vmatprep.subr.mxu0 0.0
    %3082 = vmatpush1.msra.mxu0 0.0
    %3083 = vmatprep.subr.mxu0 0.0
    %3084 = vmatpush1.msra.mxu0 0.0
    %3085 = vmatprep.subr.mxu0 0.0
    %3086 = vmatpush1.msra.mxu0 0.0
    %3087 = vmatprep.subr.mxu0 0.0
    %3088 = vmatpush1.msra.mxu0 0.0
    %3089 = vmatprep.subr.mxu0 0.0
    %3090 = vmatpush1.msra.mxu0 0.0
    %3091 = vmatprep.subr.mxu0 0.0
    %3092 = vmatpush1.msra.mxu0 0.0
    %3093 = vmatprep.subr.mxu0 0.0
    %3094 = vmatpush1.msra.mxu0 0.0
    %3095 = vmatprep.subr.mxu0 0.0
    %3096 = vmatpush1.msra.mxu0 0.0
    %3097 = vmatprep.subr.mxu0 0.0
    %3098 = vmatpush1.msra.mxu0 0.0
    %3099 = vmatprep.subr.mxu0 0.0
    %3100 = vmatpush1.msra.mxu0 %v2447
    %3101 = vmatprep.subr.mxu0 0.0
    %3102 = vmatpush1.msra.mxu0 %v2446
    %3103 = vmatprep.subr.mxu0 0.0
    %3104 = vmatpush1.msra.mxu0 %v2445
    %3105 = vmatprep.subr.mxu0 0.0
    %3106 = vmatpush1.msra.mxu0 %v2444
    %3107 = vmatprep.subr.mxu0 0.0
    %3108 = vmatpush2.msra.mxu0 0.0
    %3109 = vmatprep.subr.mxu0 0.0
    %3110 = vmatpush2.msra.mxu0 0.0
    %3111 = vmatprep.subr.mxu0 0.0
    %3112 = vmatpush2.msra.mxu0 0.0
    %3113 = vmatprep.subr.mxu0 0.0
    %3114 = vmatpush2.msra.mxu0 0.0
    %3115 = vmatprep.subr.mxu0 0.0
    %3116 = vmatpush2.msra.mxu0 0.0
    %3117 = vmatprep.subr.mxu0 0.0
    %3118 = vmatpush2.msra.mxu0 0.0
    %3119 = vmatprep.subr.mxu0 0.0
    %3120 = vmatpush2.msra.mxu0 0.0
    %3121 = vmatprep.subr.mxu0 0.0
    %3122 = vmatpush2.msra.mxu0 0.0
    %3123 = vmatprep.subr.mxu0 0.0
    %3124 = vmatpush2.msra.mxu0 0.0
    %3125 = vmatprep.subr.mxu0 0.0
    %3126 = vmatpush2.msra.mxu0 0.0
    %3127 = vmatprep.subr.mxu0 0.0
    %3128 = vmatpush2.msra.mxu0 0.0
    %3129 = vmatprep.subr.mxu0 0.0
    %3130 = vmatpush2.msra.mxu0 0.0
    %3131 = vmatprep.subr.mxu0 0.0
    %3132 = vmatpush2.msra.mxu0 0.0
    %3133 = vmatprep.subr.mxu0 0.0
    %3134 = vmatpush2.msra.mxu0 0.0
    %3135 = vmatprep.subr.mxu0 0.0
    %3136 = vmatpush2.msra.mxu0 0.0
    %3137 = vmatprep.subr.mxu0 0.0
    %3138 = vmatpush2.msra.mxu0 0.0
    %3139 = vmatprep.mubr.f32.mxu0 0.0
    %3140 = vmatmul.mubr.f32.gmra.mxu0 %v3073
    %v3141 = vpop.f32.mrf.mxu0
    %v3142 = vadd.f32 0.0, %v3141
    %v3143 = vpop.f32.mrf.mxu0
    %3144 = vdwg.mxu0
    %v3145 = vadd.f32 %v2441, %v3142
    %v3146 = vxor.u32 %v3145, 2147483648
    %v3147 = vmul.f32 %v3146, 1.442695
    %v3148 = vpow.pop %v3147
    %v3149 = vadd.f32 %v3148, 1.0
    %v3150 = vrcp.pop %v3149
    %v3151 = vmul.f32 1.0, %v3150
    %v3152 = vtanh.pop %v3145
    %v3154 = vrot.slane %v3062, 4
    %v3156 = vmul.f32 %v3151, %v3154
    %3158 = vrot.lane.b32.xlu0 %v3152, 64
    %v3159 = vpop.permute.xlu0 %3158
    %v3161 = vmul.f32 %v3151, %v3159
    %3163 = vrot.lane.b32.xlu0 %v3161, 32
    %v3164 = vpop.permute.xlu0 %3163
    %v3166 = vadd.f32 %v3156, %v3164
    %v3167 = vtanh.pop %v3166
    %3169 = vrot.lane.b32.xlu0 %v3167, 64
    %v3170 = vpop.permute.xlu0 %3169
    %v3172 = vmul.f32 %v3151, %v3170
    %3174 = vrot.lane.b32.xlu0 %v3172, 32
    %v3175 = vpop.permute.xlu0 %3174
    %v3176 = vsel %vm310, %v3175, 0
    %3178 = vmatprep.subr.mxu0 0.0
    %3179 = vmatpush1.msra.mxu0 0.0
    %3180 = vmatprep.subr.mxu0 0.0
    %3181 = vmatpush1.msra.mxu0 0.0
    %3182 = vmatprep.subr.mxu0 0.0
    %3183 = vmatpush1.msra.mxu0 0.0
    %3184 = vmatprep.subr.mxu0 0.0
    %3185 = vmatpush1.msra.mxu0 0.0
    %3186 = vmatprep.subr.mxu0 0.0
    %3187 = vmatpush1.msra.mxu0 0.0
    %3188 = vmatprep.subr.mxu0 0.0
    %3189 = vmatpush1.msra.mxu0 0.0
    %3190 = vmatprep.subr.mxu0 0.0
    %3191 = vmatpush1.msra.mxu0 0.0
    %3192 = vmatprep.subr.mxu0 0.0
    %3193 = vmatpush1.msra.mxu0 0.0
    %3194 = vmatprep.subr.mxu0 0.0
    %3195 = vmatpush1.msra.mxu0 0.0
    %3196 = vmatprep.subr.mxu0 0.0
    %3197 = vmatpush1.msra.mxu0 0.0
    %3198 = vmatprep.subr.mxu0 0.0
    %3199 = vmatpush1.msra.mxu0 0.0
    %3200 = vmatprep.subr.mxu0 0.0
    %3201 = vmatpush1.msra.mxu0 0.0
    %3202 = vmatprep.subr.mxu0 0.0
    %3203 = vmatpush1.msra.mxu0 %v2447
    %3204 = vmatprep.subr.mxu0 0.0
    %3205 = vmatpush1.msra.mxu0 %v2446
    %3206 = vmatprep.subr.mxu0 0.0
    %3207 = vmatpush1.msra.mxu0 %v2445
    %3208 = vmatprep.subr.mxu0 0.0
    %3209 = vmatpush1.msra.mxu0 %v2444
    %3210 = vmatprep.subr.mxu0 0.0
    %3211 = vmatpush2.msra.mxu0 0.0
    %3212 = vmatprep.subr.mxu0 0.0
    %3213 = vmatpush2.msra.mxu0 0.0
    %3214 = vmatprep.subr.mxu0 0.0
    %3215 = vmatpush2.msra.mxu0 0.0
    %3216 = vmatprep.subr.mxu0 0.0
    %3217 = vmatpush2.msra.mxu0 0.0
    %3218 = vmatprep.subr.mxu0 0.0
    %3219 = vmatpush2.msra.mxu0 0.0
    %3220 = vmatprep.subr.mxu0 0.0
    %3221 = vmatpush2.msra.mxu0 0.0
    %3222 = vmatprep.subr.mxu0 0.0
    %3223 = vmatpush2.msra.mxu0 0.0
    %3224 = vmatprep.subr.mxu0 0.0
    %3225 = vmatpush2.msra.mxu0 0.0
    %3226 = vmatprep.subr.mxu0 0.0
    %3227 = vmatpush2.msra.mxu0 0.0
    %3228 = vmatprep.subr.mxu0 0.0
    %3229 = vmatpush2.msra.mxu0 0.0
    %3230 = vmatprep.subr.mxu0 0.0
    %3231 = vmatpush2.msra.mxu0 0.0
    %3232 = vmatprep.subr.mxu0 0.0
    %3233 = vmatpush2.msra.mxu0 0.0
    %3234 = vmatprep.subr.mxu0 0.0
    %3235 = vmatpush2.msra.mxu0 0.0
    %3236 = vmatprep.subr.mxu0 0.0
    %3237 = vmatpush2.msra.mxu0 0.0
    %3238 = vmatprep.subr.mxu0 0.0
    %3239 = vmatpush2.msra.mxu0 0.0
    %3240 = vmatprep.subr.mxu0 0.0
    %3241 = vmatpush2.msra.mxu0 0.0
    %3242 = vmatprep.mubr.f32.mxu0 0.0
    %3243 = vmatmul.mubr.f32.gmra.mxu0 %v3176
    %v3244 = vpop.f32.mrf.mxu0
    %v3245 = vadd.f32 0.0, %v3244
    %v3246 = vpop.f32.mrf.mxu0
    %3247 = vdwg.mxu0
    %v3249 = vrot.slane %v3245, 4
    %v3251 = vadd.f32 %v2441, %v3249
    %v3252 = vxor.u32 %v3251, 2147483648
    %v3253 = vmul.f32 %v3252, 1.442695
    %v3254 = vpow.pop %v3253
    %v3255 = vadd.f32 %v3254, 1.0
    %v3256 = vrcp.pop %v3255
    %v3257 = vmul.f32 1.0, %v3256
    %v3258 = vtanh.pop %v3251
    %v3260 = vrot.slane %v3166, 4
    %v3262 = vmul.f32 %v3257, %v3260
    %3264 = vrot.lane.b32.xlu0 %v3258, 64
    %v3265 = vpop.permute.xlu0 %3264
    %v3267 = vmul.f32 %v3257, %v3265
    %3269 = vrot.lane.b32.xlu0 %v3267, 32
    %v3270 = vpop.permute.xlu0 %3269
    %v3272 = vadd.f32 %v3262, %v3270
    %v3273 = vtanh.pop %v3272
    %3275 = vrot.lane.b32.xlu0 %v3273, 64
    %v3276 = vpop.permute.xlu0 %3275
    %v3278 = vmul.f32 %v3257, %v3276
    %v3279 = vld [vmem:[%s11] sm:$0xff]
    %v3280 = vld [vmem:[%s11 + $0x8] sm:$0xff]
    %v3281 = vld [vmem:[%s11 + $0x10] sm:$0xff]
    %v3282 = vld [vmem:[%s11 + $0x18] sm:$0xff]
    %v3283 = vld [vmem:[%s11 + $0x20] sm:$0xff]
    %v3284 = vld [vmem:[%s11 + $0x28] sm:$0xff]
    %v3285 = vld [vmem:[%s11 + $0x30] sm:$0xff]
    %v3286 = vld [vmem:[%s11 + $0x38] sm:$0xff]
    %v3287 = vld [vmem:[#allocation18] sm:$0x1]
    %v3289 = vlaneseq
    %v3290 = vshrl.u32 %v3289, 7
    %v3291 = vsub.s32 0, %v3290
    %v3292 = vrot.slane %v3287, %v3291
    %3294 = vmatprep.subr.mxu0 0.0
    %3295 = vmatpush1.msra.mxu0 0.0
    %3296 = vmatprep.subr.mxu0 0.0
    %3297 = vmatpush1.msra.mxu0 0.0
    %3298 = vmatprep.subr.mxu0 0.0
    %3299 = vmatpush1.msra.mxu0 0.0
    %3300 = vmatprep.subr.mxu0 0.0
    %3301 = vmatpush1.msra.mxu0 0.0
    %3302 = vmatprep.subr.mxu0 0.0
    %3303 = vmatpush1.msra.mxu0 0.0
    %3304 = vmatprep.subr.mxu0 0.0
    %3305 = vmatpush1.msra.mxu0 0.0
    %3306 = vmatprep.subr.mxu0 0.0
    %3307 = vmatpush1.msra.mxu0 0.0
    %3308 = vmatprep.subr.mxu0 0.0
    %3309 = vmatpush1.msra.mxu0 0.0
    %3310 = vmatprep.subr.mxu0 0.0
    %3311 = vmatpush1.msra.mxu0 %v3286
    %3312 = vmatprep.subr.mxu0 0.0
    %3313 = vmatpush1.msra.mxu0 %v3285
    %3314 = vmatprep.subr.mxu0 0.0
    %3315 = vmatpush1.msra.mxu0 %v3284
    %3316 = vmatprep.subr.mxu0 0.0
    %3317 = vmatpush1.msra.mxu0 %v3283
    %3318 = vmatprep.subr.mxu0 0.0
    %3319 = vmatpush1.msra.mxu0 %v3282
    %3320 = vmatprep.subr.mxu0 0.0
    %3321 = vmatpush1.msra.mxu0 %v3281
    %3322 = vmatprep.subr.mxu0 0.0
    %3323 = vmatpush1.msra.mxu0 %v3280
    %3324 = vmatprep.subr.mxu0 0.0
    %3325 = vmatpush1.msra.mxu0 %v3279
    %3326 = vmatprep.subr.mxu0 0.0
    %3327 = vmatpush2.msra.mxu0 0.0
    %3328 = vmatprep.subr.mxu0 0.0
    %3329 = vmatpush2.msra.mxu0 0.0
    %3330 = vmatprep.subr.mxu0 0.0
    %3331 = vmatpush2.msra.mxu0 0.0
    %3332 = vmatprep.subr.mxu0 0.0
    %3333 = vmatpush2.msra.mxu0 0.0
    %3334 = vmatprep.subr.mxu0 0.0
    %3335 = vmatpush2.msra.mxu0 0.0
    %3336 = vmatprep.subr.mxu0 0.0
    %3337 = vmatpush2.msra.mxu0 0.0
    %3338 = vmatprep.subr.mxu0 0.0
    %3339 = vmatpush2.msra.mxu0 0.0
    %3340 = vmatprep.subr.mxu0 0.0
    %3341 = vmatpush2.msra.mxu0 0.0
    %3342 = vmatprep.subr.mxu0 0.0
    %3343 = vmatpush2.msra.mxu0 0.0
    %3344 = vmatprep.subr.mxu0 0.0
    %3345 = vmatpush2.msra.mxu0 0.0
    %3346 = vmatprep.subr.mxu0 0.0
    %3347 = vmatpush2.msra.mxu0 0.0
    %3348 = vmatprep.subr.mxu0 0.0
    %3349 = vmatpush2.msra.mxu0 0.0
    %3350 = vmatprep.subr.mxu0 0.0
    %3351 = vmatpush2.msra.mxu0 0.0
    %3352 = vmatprep.subr.mxu0 0.0
    %3353 = vmatpush2.msra.mxu0 0.0
    %3354 = vmatprep.subr.mxu0 0.0
    %3355 = vmatpush2.msra.mxu0 0.0
    %3356 = vmatprep.subr.mxu0 0.0
    %3357 = vmatpush2.msra.mxu0 0.0
    %3358 = vmatprep.mubr.f32.mxu0 0.0
    %3359 = vmatmul.mubr.f32.gmra.mxu0 %v2348
    %v3360 = vpop.f32.mrf.mxu0
    %v3361 = vadd.f32 %v3292, %v3360
    %v3362 = vpop.f32.mrf.mxu0
    %3363 = vmatprep.mubr.f32.mxu0 0.0
    %3364 = vmatmul.mubr.f32.gmra.mxu0 %v2351
    %v3365 = vpop.f32.mrf.mxu0
    %v3366 = vadd.f32 %v3292, %v3365
    %v3367 = vpop.f32.mrf.mxu0
    %3368 = vmatprep.mubr.f32.mxu0 0.0
    %3369 = vmatmul.mubr.f32.gmra.mxu0 %v2354
    %v3370 = vpop.f32.mrf.mxu0
    %v3371 = vadd.f32 %v3292, %v3370
    %v3372 = vpop.f32.mrf.mxu0
    %3373 = vmatprep.mubr.f32.mxu0 0.0
    %3374 = vmatmul.mubr.f32.gmra.mxu0 %v2357
    %v3375 = vpop.f32.mrf.mxu0
    %v3376 = vadd.f32 %v3292, %v3375
    %v3377 = vpop.f32.mrf.mxu0
    %3378 = vdwg.mxu0
    %v3379 = vld [vmem:[#allocation16] sm:$0xff]
    %v3380 = vld [vmem:[#allocation16 + $0x8] sm:$0xff]
    %v3381 = vld [vmem:[#allocation16 + $0x10] sm:$0xff]
    %v3382 = vld [vmem:[#allocation16 + $0x18] sm:$0xff]
    %3383 = vmatprep.subr.mxu0 0.0
    %3384 = vmatpush1.msra.mxu0 0.0
    %3385 = vmatprep.subr.mxu0 0.0
    %3386 = vmatpush1.msra.mxu0 0.0
    %3387 = vmatprep.subr.mxu0 0.0
    %3388 = vmatpush1.msra.mxu0 0.0
    %3389 = vmatprep.subr.mxu0 0.0
    %3390 = vmatpush1.msra.mxu0 0.0
    %3391 = vmatprep.subr.mxu0 0.0
    %3392 = vmatpush1.msra.mxu0 0.0
    %3393 = vmatprep.subr.mxu0 0.0
    %3394 = vmatpush1.msra.mxu0 0.0
    %3395 = vmatprep.subr.mxu0 0.0
    %3396 = vmatpush1.msra.mxu0 0.0
    %3397 = vmatprep.subr.mxu0 0.0
    %3398 = vmatpush1.msra.mxu0 0.0
    %3399 = vmatprep.subr.mxu0 0.0
    %3400 = vmatpush1.msra.mxu0 0.0
    %3401 = vmatprep.subr.mxu0 0.0
    %3402 = vmatpush1.msra.mxu0 0.0
    %3403 = vmatprep.subr.mxu0 0.0
    %3404 = vmatpush1.msra.mxu0 0.0
    %3405 = vmatprep.subr.mxu0 0.0
    %3406 = vmatpush1.msra.mxu0 0.0
    %3407 = vmatprep.subr.mxu0 0.0
    %3408 = vmatpush1.msra.mxu0 %v3382
    %3409 = vmatprep.subr.mxu0 0.0
    %3410 = vmatpush1.msra.mxu0 %v3381
    %3411 = vmatprep.subr.mxu0 0.0
    %3412 = vmatpush1.msra.mxu0 %v3380
    %3413 = vmatprep.subr.mxu0 0.0
    %3414 = vmatpush1.msra.mxu0 %v3379
    %3415 = vmatprep.subr.mxu0 0.0
    %3416 = vmatpush2.msra.mxu0 0.0
    %3417 = vmatprep.subr.mxu0 0.0
    %3418 = vmatpush2.msra.mxu0 0.0
    %3419 = vmatprep.subr.mxu0 0.0
    %3420 = vmatpush2.msra.mxu0 0.0
    %3421 = vmatprep.subr.mxu0 0.0
    %3422 = vmatpush2.msra.mxu0 0.0
    %3423 = vmatprep.subr.mxu0 0.0
    %3424 = vmatpush2.msra.mxu0 0.0
    %3425 = vmatprep.subr.mxu0 0.0
    %3426 = vmatpush2.msra.mxu0 0.0
    %3427 = vmatprep.subr.mxu0 0.0
    %3428 = vmatpush2.msra.mxu0 0.0
    %3429 = vmatprep.subr.mxu0 0.0
    %3430 = vmatpush2.msra.mxu0 0.0
    %3431 = vmatprep.subr.mxu0 0.0
    %3432 = vmatpush2.msra.mxu0 0.0
    %3433 = vmatprep.subr.mxu0 0.0
    %3434 = vmatpush2.msra.mxu0 0.0
    %3435 = vmatprep.subr.mxu0 0.0
    %3436 = vmatpush2.msra.mxu0 0.0
    %3437 = vmatprep.subr.mxu0 0.0
    %3438 = vmatpush2.msra.mxu0 0.0
    %3439 = vmatprep.subr.mxu0 0.0
    %3440 = vmatpush2.msra.mxu0 0.0
    %3441 = vmatprep.subr.mxu0 0.0
    %3442 = vmatpush2.msra.mxu0 0.0
    %3443 = vmatprep.subr.mxu0 0.0
    %3444 = vmatpush2.msra.mxu0 0.0
    %3445 = vmatprep.subr.mxu0 0.0
    %3446 = vmatpush2.msra.mxu0 0.0
    %3447 = vmatprep.mubr.f32.mxu0 0.0
    %3448 = vmatmul.mubr.f32.gmra.mxu0 %v521
    %v3449 = vpop.f32.mrf.mxu0
    %v3450 = vadd.f32 0.0, %v3449
    %v3451 = vpop.f32.mrf.mxu0
    %3452 = vdwg.mxu0
    %v3454 = vrot.slane %v3450, 4
    %v3456 = vadd.f32 %v3376, %v3454
    %v3457 = vxor.u32 %v3456, 2147483648
    %v3458 = vmul.f32 %v3457, 1.442695
    %v3459 = vpow.pop %v3458
    %v3460 = vadd.f32 %v3459, 1.0
    %v3461 = vrcp.pop %v3460
    %v3462 = vmul.f32 1.0, %v3461
    %v3463 = vtanh.pop %v3456
    %v3464 = vmul.f32 %v3462, 0.0
    %3466 = vrot.lane.b32.xlu0 %v3463, 64
    %v3467 = vpop.permute.xlu0 %3466
    %v3469 = vmul.f32 %v3462, %v3467
    %3471 = vrot.lane.b32.xlu0 %v3469, 32
    %v3472 = vpop.permute.xlu0 %3471
    %v3474 = vadd.f32 %v3464, %v3472
    %v3475 = vtanh.pop %v3474
    %3477 = vrot.lane.b32.xlu0 %v3475, 64
    %v3478 = vpop.permute.xlu0 %3477
    %v3480 = vmul.f32 %v3462, %v3478
    %v3482 = vrot.slane %v3480, 4
    %3483 = vrot.lane.b32.xlu0 %v3482, 32
    %v3484 = vpop.permute.xlu0 %3483
    %v3485 = vsel %vm310, %v3484, 0
    %3487 = vmatprep.subr.mxu0 0.0
    %3488 = vmatpush1.msra.mxu0 0.0
    %3489 = vmatprep.subr.mxu0 0.0
    %3490 = vmatpush1.msra.mxu0 0.0
    %3491 = vmatprep.subr.mxu0 0.0
    %3492 = vmatpush1.msra.mxu0 0.0
    %3493 = vmatprep.subr.mxu0 0.0
    %3494 = vmatpush1.msra.mxu0 0.0
    %3495 = vmatprep.subr.mxu0 0.0
    %3496 = vmatpush1.msra.mxu0 0.0
    %3497 = vmatprep.subr.mxu0 0.0
    %3498 = vmatpush1.msra.mxu0 0.0
    %3499 = vmatprep.subr.mxu0 0.0
    %3500 = vmatpush1.msra.mxu0 0.0
    %3501 = vmatprep.subr.mxu0 0.0
    %3502 = vmatpush1.msra.mxu0 0.0
    %3503 = vmatprep.subr.mxu0 0.0
    %3504 = vmatpush1.msra.mxu0 0.0
    %3505 = vmatprep.subr.mxu0 0.0
    %3506 = vmatpush1.msra.mxu0 0.0
    %3507 = vmatprep.subr.mxu0 0.0
    %3508 = vmatpush1.msra.mxu0 0.0
    %3509 = vmatprep.subr.mxu0 0.0
    %3510 = vmatpush1.msra.mxu0 0.0
    %3511 = vmatprep.subr.mxu0 0.0
    %3512 = vmatpush1.msra.mxu0 %v3382
    %3513 = vmatprep.subr.mxu0 0.0
    %3514 = vmatpush1.msra.mxu0 %v3381
    %3515 = vmatprep.subr.mxu0 0.0
    %3516 = vmatpush1.msra.mxu0 %v3380
    %3517 = vmatprep.subr.mxu0 0.0
    %3518 = vmatpush1.msra.mxu0 %v3379
    %3519 = vmatprep.subr.mxu0 0.0
    %3520 = vmatpush2.msra.mxu0 0.0
    %3521 = vmatprep.subr.mxu0 0.0
    %3522 = vmatpush2.msra.mxu0 0.0
    %3523 = vmatprep.subr.mxu0 0.0
    %3524 = vmatpush2.msra.mxu0 0.0
    %3525 = vmatprep.subr.mxu0 0.0
    %3526 = vmatpush2.msra.mxu0 0.0
    %3527 = vmatprep.subr.mxu0 0.0
    %3528 = vmatpush2.msra.mxu0 0.0
    %3529 = vmatprep.subr.mxu0 0.0
    %3530 = vmatpush2.msra.mxu0 0.0
    %3531 = vmatprep.subr.mxu0 0.0
    %3532 = vmatpush2.msra.mxu0 0.0
    %3533 = vmatprep.subr.mxu0 0.0
    %3534 = vmatpush2.msra.mxu0 0.0
    %3535 = vmatprep.subr.mxu0 0.0
    %3536 = vmatpush2.msra.mxu0 0.0
    %3537 = vmatprep.subr.mxu0 0.0
    %3538 = vmatpush2.msra.mxu0 0.0
    %3539 = vmatprep.subr.mxu0 0.0
    %3540 = vmatpush2.msra.mxu0 0.0
    %3541 = vmatprep.subr.mxu0 0.0
    %3542 = vmatpush2.msra.mxu0 0.0
    %3543 = vmatprep.subr.mxu0 0.0
    %3544 = vmatpush2.msra.mxu0 0.0
    %3545 = vmatprep.subr.mxu0 0.0
    %3546 = vmatpush2.msra.mxu0 0.0
    %3547 = vmatprep.subr.mxu0 0.0
    %3548 = vmatpush2.msra.mxu0 0.0
    %3549 = vmatprep.subr.mxu0 0.0
    %3550 = vmatpush2.msra.mxu0 0.0
    %3551 = vmatprep.mubr.f32.mxu0 0.0
    %3552 = vmatmul.mubr.f32.gmra.mxu0 %v3485
    %v3553 = vpop.f32.mrf.mxu0
    %v3554 = vadd.f32 0.0, %v3553
    %v3555 = vpop.f32.mrf.mxu0
    %3556 = vdwg.mxu0
    %v3557 = vadd.f32 %v3376, %v3554
    %v3558 = vxor.u32 %v3557, 2147483648
    %v3559 = vmul.f32 %v3558, 1.442695
    %v3560 = vpow.pop %v3559
    %v3561 = vadd.f32 %v3560, 1.0
    %v3562 = vrcp.pop %v3561
    %v3563 = vmul.f32 1.0, %v3562
    %v3564 = vtanh.pop %v3557
    %v3566 = vrot.slane %v3474, 4
    %v3568 = vmul.f32 %v3563, %v3566
    %3570 = vrot.lane.b32.xlu0 %v3564, 64
    %v3571 = vpop.permute.xlu0 %3570
    %v3573 = vmul.f32 %v3563, %v3571
    %3575 = vrot.lane.b32.xlu0 %v3573, 32
    %v3576 = vpop.permute.xlu0 %3575
    %v3578 = vadd.f32 %v3568, %v3576
    %v3579 = vtanh.pop %v3578
    %3581 = vrot.lane.b32.xlu0 %v3579, 64
    %v3582 = vpop.permute.xlu0 %3581
    %v3584 = vmul.f32 %v3563, %v3582
    %3586 = vrot.lane.b32.xlu0 %v3584, 32
    %v3587 = vpop.permute.xlu0 %3586
    %v3588 = vsel %vm310, %v3587, 0
    %3590 = vmatprep.subr.mxu0 0.0
    %3591 = vmatpush1.msra.mxu0 0.0
    %3592 = vmatprep.subr.mxu0 0.0
    %3593 = vmatpush1.msra.mxu0 0.0
    %3594 = vmatprep.subr.mxu0 0.0
    %3595 = vmatpush1.msra.mxu0 0.0
    %3596 = vmatprep.subr.mxu0 0.0
    %3597 = vmatpush1.msra.mxu0 0.0
    %3598 = vmatprep.subr.mxu0 0.0
    %3599 = vmatpush1.msra.mxu0 0.0
    %3600 = vmatprep.subr.mxu0 0.0
    %3601 = vmatpush1.msra.mxu0 0.0
    %3602 = vmatprep.subr.mxu0 0.0
    %3603 = vmatpush1.msra.mxu0 0.0
    %3604 = vmatprep.subr.mxu0 0.0
    %3605 = vmatpush1.msra.mxu0 0.0
    %3606 = vmatprep.subr.mxu0 0.0
    %3607 = vmatpush1.msra.mxu0 0.0
    %3608 = vmatprep.subr.mxu0 0.0
    %3609 = vmatpush1.msra.mxu0 0.0
    %3610 = vmatprep.subr.mxu0 0.0
    %3611 = vmatpush1.msra.mxu0 0.0
    %3612 = vmatprep.subr.mxu0 0.0
    %3613 = vmatpush1.msra.mxu0 0.0
    %3614 = vmatprep.subr.mxu0 0.0
    %3615 = vmatpush1.msra.mxu0 %v3382
    %3616 = vmatprep.subr.mxu0 0.0
    %3617 = vmatpush1.msra.mxu0 %v3381
    %3618 = vmatprep.subr.mxu0 0.0
    %3619 = vmatpush1.msra.mxu0 %v3380
    %3620 = vmatprep.subr.mxu0 0.0
    %3621 = vmatpush1.msra.mxu0 %v3379
    %3622 = vmatprep.subr.mxu0 0.0
    %3623 = vmatpush2.msra.mxu0 0.0
    %3624 = vmatprep.subr.mxu0 0.0
    %3625 = vmatpush2.msra.mxu0 0.0
    %3626 = vmatprep.subr.mxu0 0.0
    %3627 = vmatpush2.msra.mxu0 0.0
    %3628 = vmatprep.subr.mxu0 0.0
    %3629 = vmatpush2.msra.mxu0 0.0
    %3630 = vmatprep.subr.mxu0 0.0
    %3631 = vmatpush2.msra.mxu0 0.0
    %3632 = vmatprep.subr.mxu0 0.0
    %3633 = vmatpush2.msra.mxu0 0.0
    %3634 = vmatprep.subr.mxu0 0.0
    %3635 = vmatpush2.msra.mxu0 0.0
    %3636 = vmatprep.subr.mxu0 0.0
    %3637 = vmatpush2.msra.mxu0 0.0
    %3638 = vmatprep.subr.mxu0 0.0
    %3639 = vmatpush2.msra.mxu0 0.0
    %3640 = vmatprep.subr.mxu0 0.0
    %3641 = vmatpush2.msra.mxu0 0.0
    %3642 = vmatprep.subr.mxu0 0.0
    %3643 = vmatpush2.msra.mxu0 0.0
    %3644 = vmatprep.subr.mxu0 0.0
    %3645 = vmatpush2.msra.mxu0 0.0
    %3646 = vmatprep.subr.mxu0 0.0
    %3647 = vmatpush2.msra.mxu0 0.0
    %3648 = vmatprep.subr.mxu0 0.0
    %3649 = vmatpush2.msra.mxu0 0.0
    %3650 = vmatprep.subr.mxu0 0.0
    %3651 = vmatpush2.msra.mxu0 0.0
    %3652 = vmatprep.subr.mxu0 0.0
    %3653 = vmatpush2.msra.mxu0 0.0
    %3654 = vmatprep.mubr.f32.mxu0 0.0
    %3655 = vmatmul.mubr.f32.gmra.mxu0 %v3588
    %v3656 = vpop.f32.mrf.mxu0
    %v3657 = vadd.f32 0.0, %v3656
    %v3658 = vpop.f32.mrf.mxu0
    %3659 = vdwg.mxu0
    %v3661 = vrot.slane %v3657, 4
    %v3663 = vadd.f32 %v3371, %v3661
    %v3664 = vxor.u32 %v3663, 2147483648
    %v3665 = vmul.f32 %v3664, 1.442695
    %v3666 = vpow.pop %v3665
    %v3667 = vadd.f32 %v3666, 1.0
    %v3668 = vrcp.pop %v3667
    %v3669 = vmul.f32 1.0, %v3668
    %v3670 = vtanh.pop %v3663
    %v3672 = vrot.slane %v3578, 4
    %v3674 = vmul.f32 %v3669, %v3672
    %3676 = vrot.lane.b32.xlu0 %v3670, 64
    %v3677 = vpop.permute.xlu0 %3676
    %v3679 = vmul.f32 %v3669, %v3677
    %3681 = vrot.lane.b32.xlu0 %v3679, 32
    %v3682 = vpop.permute.xlu0 %3681
    %v3684 = vadd.f32 %v3674, %v3682
    %v3685 = vtanh.pop %v3684
    %3687 = vrot.lane.b32.xlu0 %v3685, 64
    %v3688 = vpop.permute.xlu0 %3687
    %v3690 = vmul.f32 %v3669, %v3688
    %v3692 = vrot.slane %v3690, 4
    %3693 = vrot.lane.b32.xlu0 %v3692, 32
    %v3694 = vpop.permute.xlu0 %3693
    %v3695 = vsel %vm310, %v3694, 0
    %3697 = vmatprep.subr.mxu0 0.0
    %3698 = vmatpush1.msra.mxu0 0.0
    %3699 = vmatprep.subr.mxu0 0.0
    %3700 = vmatpush1.msra.mxu0 0.0
    %3701 = vmatprep.subr.mxu0 0.0
    %3702 = vmatpush1.msra.mxu0 0.0
    %3703 = vmatprep.subr.mxu0 0.0
    %3704 = vmatpush1.msra.mxu0 0.0
    %3705 = vmatprep.subr.mxu0 0.0
    %3706 = vmatpush1.msra.mxu0 0.0
    %3707 = vmatprep.subr.mxu0 0.0
    %3708 = vmatpush1.msra.mxu0 0.0
    %3709 = vmatprep.subr.mxu0 0.0
    %3710 = vmatpush1.msra.mxu0 0.0
    %3711 = vmatprep.subr.mxu0 0.0
    %3712 = vmatpush1.msra.mxu0 0.0
    %3713 = vmatprep.subr.mxu0 0.0
    %3714 = vmatpush1.msra.mxu0 0.0
    %3715 = vmatprep.subr.mxu0 0.0
    %3716 = vmatpush1.msra.mxu0 0.0
    %3717 = vmatprep.subr.mxu0 0.0
    %3718 = vmatpush1.msra.mxu0 0.0
    %3719 = vmatprep.subr.mxu0 0.0
    %3720 = vmatpush1.msra.mxu0 0.0
    %3721 = vmatprep.subr.mxu0 0.0
    %3722 = vmatpush1.msra.mxu0 %v3382
    %3723 = vmatprep.subr.mxu0 0.0
    %3724 = vmatpush1.msra.mxu0 %v3381
    %3725 = vmatprep.subr.mxu0 0.0
    %3726 = vmatpush1.msra.mxu0 %v3380
    %3727 = vmatprep.subr.mxu0 0.0
    %3728 = vmatpush1.msra.mxu0 %v3379
    %3729 = vmatprep.subr.mxu0 0.0
    %3730 = vmatpush2.msra.mxu0 0.0
    %3731 = vmatprep.subr.mxu0 0.0
    %3732 = vmatpush2.msra.mxu0 0.0
    %3733 = vmatprep.subr.mxu0 0.0
    %3734 = vmatpush2.msra.mxu0 0.0
    %3735 = vmatprep.subr.mxu0 0.0
    %3736 = vmatpush2.msra.mxu0 0.0
    %3737 = vmatprep.subr.mxu0 0.0
    %3738 = vmatpush2.msra.mxu0 0.0
    %3739 = vmatprep.subr.mxu0 0.0
    %3740 = vmatpush2.msra.mxu0 0.0
    %3741 = vmatprep.subr.mxu0 0.0
    %3742 = vmatpush2.msra.mxu0 0.0
    %3743 = vmatprep.subr.mxu0 0.0
    %3744 = vmatpush2.msra.mxu0 0.0
    %3745 = vmatprep.subr.mxu0 0.0
    %3746 = vmatpush2.msra.mxu0 0.0
    %3747 = vmatprep.subr.mxu0 0.0
    %3748 = vmatpush2.msra.mxu0 0.0
    %3749 = vmatprep.subr.mxu0 0.0
    %3750 = vmatpush2.msra.mxu0 0.0
    %3751 = vmatprep.subr.mxu0 0.0
    %3752 = vmatpush2.msra.mxu0 0.0
    %3753 = vmatprep.subr.mxu0 0.0
    %3754 = vmatpush2.msra.mxu0 0.0
    %3755 = vmatprep.subr.mxu0 0.0
    %3756 = vmatpush2.msra.mxu0 0.0
    %3757 = vmatprep.subr.mxu0 0.0
    %3758 = vmatpush2.msra.mxu0 0.0
    %3759 = vmatprep.subr.mxu0 0.0
    %3760 = vmatpush2.msra.mxu0 0.0
    %3761 = vmatprep.mubr.f32.mxu0 0.0
    %3762 = vmatmul.mubr.f32.gmra.mxu0 %v3695
    %v3763 = vpop.f32.mrf.mxu0
    %v3764 = vadd.f32 0.0, %v3763
    %v3765 = vpop.f32.mrf.mxu0
    %3766 = vdwg.mxu0
    %v3767 = vadd.f32 %v3371, %v3764
    %v3768 = vxor.u32 %v3767, 2147483648
    %v3769 = vmul.f32 %v3768, 1.442695
    %v3770 = vpow.pop %v3769
    %v3771 = vadd.f32 %v3770, 1.0
    %v3772 = vrcp.pop %v3771
    %v3773 = vmul.f32 1.0, %v3772
    %v3774 = vtanh.pop %v3767
    %v3776 = vrot.slane %v3684, 4
    %v3778 = vmul.f32 %v3773, %v3776
    %3780 = vrot.lane.b32.xlu0 %v3774, 64
    %v3781 = vpop.permute.xlu0 %3780
    %v3783 = vmul.f32 %v3773, %v3781
    %3785 = vrot.lane.b32.xlu0 %v3783, 32
    %v3786 = vpop.permute.xlu0 %3785
    %v3788 = vadd.f32 %v3778, %v3786
    %v3789 = vtanh.pop %v3788
    %3791 = vrot.lane.b32.xlu0 %v3789, 64
    %v3792 = vpop.permute.xlu0 %3791
    %v3794 = vmul.f32 %v3773, %v3792
    %3796 = vrot.lane.b32.xlu0 %v3794, 32
    %v3797 = vpop.permute.xlu0 %3796
    %v3798 = vsel %vm310, %v3797, 0
    %3800 = vmatprep.subr.mxu0 0.0
    %3801 = vmatpush1.msra.mxu0 0.0
    %3802 = vmatprep.subr.mxu0 0.0
    %3803 = vmatpush1.msra.mxu0 0.0
    %3804 = vmatprep.subr.mxu0 0.0
    %3805 = vmatpush1.msra.mxu0 0.0
    %3806 = vmatprep.subr.mxu0 0.0
    %3807 = vmatpush1.msra.mxu0 0.0
    %3808 = vmatprep.subr.mxu0 0.0
    %3809 = vmatpush1.msra.mxu0 0.0
    %3810 = vmatprep.subr.mxu0 0.0
    %3811 = vmatpush1.msra.mxu0 0.0
    %3812 = vmatprep.subr.mxu0 0.0
    %3813 = vmatpush1.msra.mxu0 0.0
    %3814 = vmatprep.subr.mxu0 0.0
    %3815 = vmatpush1.msra.mxu0 0.0
    %3816 = vmatprep.subr.mxu0 0.0
    %3817 = vmatpush1.msra.mxu0 0.0
    %3818 = vmatprep.subr.mxu0 0.0
    %3819 = vmatpush1.msra.mxu0 0.0
    %3820 = vmatprep.subr.mxu0 0.0
    %3821 = vmatpush1.msra.mxu0 0.0
    %3822 = vmatprep.subr.mxu0 0.0
    %3823 = vmatpush1.msra.mxu0 0.0
    %3824 = vmatprep.subr.mxu0 0.0
    %3825 = vmatpush1.msra.mxu0 %v3382
    %3826 = vmatprep.subr.mxu0 0.0
    %3827 = vmatpush1.msra.mxu0 %v3381
    %3828 = vmatprep.subr.mxu0 0.0
    %3829 = vmatpush1.msra.mxu0 %v3380
    %3830 = vmatprep.subr.mxu0 0.0
    %3831 = vmatpush1.msra.mxu0 %v3379
    %3832 = vmatprep.subr.mxu0 0.0
    %3833 = vmatpush2.msra.mxu0 0.0
    %3834 = vmatprep.subr.mxu0 0.0
    %3835 = vmatpush2.msra.mxu0 0.0
    %3836 = vmatprep.subr.mxu0 0.0
    %3837 = vmatpush2.msra.mxu0 0.0
    %3838 = vmatprep.subr.mxu0 0.0
    %3839 = vmatpush2.msra.mxu0 0.0
    %3840 = vmatprep.subr.mxu0 0.0
    %3841 = vmatpush2.msra.mxu0 0.0
    %3842 = vmatprep.subr.mxu0 0.0
    %3843 = vmatpush2.msra.mxu0 0.0
    %3844 = vmatprep.subr.mxu0 0.0
    %3845 = vmatpush2.msra.mxu0 0.0
    %3846 = vmatprep.subr.mxu0 0.0
    %3847 = vmatpush2.msra.mxu0 0.0
    %3848 = vmatprep.subr.mxu0 0.0
    %3849 = vmatpush2.msra.mxu0 0.0
    %3850 = vmatprep.subr.mxu0 0.0
    %3851 = vmatpush2.msra.mxu0 0.0
    %3852 = vmatprep.subr.mxu0 0.0
    %3853 = vmatpush2.msra.mxu0 0.0
    %3854 = vmatprep.subr.mxu0 0.0
    %3855 = vmatpush2.msra.mxu0 0.0
    %3856 = vmatprep.subr.mxu0 0.0
    %3857 = vmatpush2.msra.mxu0 0.0
    %3858 = vmatprep.subr.mxu0 0.0
    %3859 = vmatpush2.msra.mxu0 0.0
    %3860 = vmatprep.subr.mxu0 0.0
    %3861 = vmatpush2.msra.mxu0 0.0
    %3862 = vmatprep.subr.mxu0 0.0
    %3863 = vmatpush2.msra.mxu0 0.0
    %3864 = vmatprep.mubr.f32.mxu0 0.0
    %3865 = vmatmul.mubr.f32.gmra.mxu0 %v3798
    %v3866 = vpop.f32.mrf.mxu0
    %v3867 = vadd.f32 0.0, %v3866
    %v3868 = vpop.f32.mrf.mxu0
    %3869 = vdwg.mxu0
    %v3871 = vrot.slane %v3867, 4
    %v3873 = vadd.f32 %v3366, %v3871
    %v3874 = vxor.u32 %v3873, 2147483648
    %v3875 = vmul.f32 %v3874, 1.442695
    %v3876 = vpow.pop %v3875
    %v3877 = vadd.f32 %v3876, 1.0
    %v3878 = vrcp.pop %v3877
    %v3879 = vmul.f32 1.0, %v3878
    %v3880 = vtanh.pop %v3873
    %v3882 = vrot.slane %v3788, 4
    %v3884 = vmul.f32 %v3879, %v3882
    %3886 = vrot.lane.b32.xlu0 %v3880, 64
    %v3887 = vpop.permute.xlu0 %3886
    %v3889 = vmul.f32 %v3879, %v3887
    %3891 = vrot.lane.b32.xlu0 %v3889, 32
    %v3892 = vpop.permute.xlu0 %3891
    %v3894 = vadd.f32 %v3884, %v3892
    %v3895 = vtanh.pop %v3894
    %3897 = vrot.lane.b32.xlu0 %v3895, 64
    %v3898 = vpop.permute.xlu0 %3897
    %v3900 = vmul.f32 %v3879, %v3898
    %v3902 = vrot.slane %v3900, 4
    %3903 = vrot.lane.b32.xlu0 %v3902, 32
    %v3904 = vpop.permute.xlu0 %3903
    %v3905 = vsel %vm310, %v3904, 0
    %3907 = vmatprep.subr.mxu0 0.0
    %3908 = vmatpush1.msra.mxu0 0.0
    %3909 = vmatprep.subr.mxu0 0.0
    %3910 = vmatpush1.msra.mxu0 0.0
    %3911 = vmatprep.subr.mxu0 0.0
    %3912 = vmatpush1.msra.mxu0 0.0
    %3913 = vmatprep.subr.mxu0 0.0
    %3914 = vmatpush1.msra.mxu0 0.0
    %3915 = vmatprep.subr.mxu0 0.0
    %3916 = vmatpush1.msra.mxu0 0.0
    %3917 = vmatprep.subr.mxu0 0.0
    %3918 = vmatpush1.msra.mxu0 0.0
    %3919 = vmatprep.subr.mxu0 0.0
    %3920 = vmatpush1.msra.mxu0 0.0
    %3921 = vmatprep.subr.mxu0 0.0
    %3922 = vmatpush1.msra.mxu0 0.0
    %3923 = vmatprep.subr.mxu0 0.0
    %3924 = vmatpush1.msra.mxu0 0.0
    %3925 = vmatprep.subr.mxu0 0.0
    %3926 = vmatpush1.msra.mxu0 0.0
    %3927 = vmatprep.subr.mxu0 0.0
    %3928 = vmatpush1.msra.mxu0 0.0
    %3929 = vmatprep.subr.mxu0 0.0
    %3930 = vmatpush1.msra.mxu0 0.0
    %3931 = vmatprep.subr.mxu0 0.0
    %3932 = vmatpush1.msra.mxu0 %v3382
    %3933 = vmatprep.subr.mxu0 0.0
    %3934 = vmatpush1.msra.mxu0 %v3381
    %3935 = vmatprep.subr.mxu0 0.0
    %3936 = vmatpush1.msra.mxu0 %v3380
    %3937 = vmatprep.subr.mxu0 0.0
    %3938 = vmatpush1.msra.mxu0 %v3379
    %3939 = vmatprep.subr.mxu0 0.0
    %3940 = vmatpush2.msra.mxu0 0.0
    %3941 = vmatprep.subr.mxu0 0.0
    %3942 = vmatpush2.msra.mxu0 0.0
    %3943 = vmatprep.subr.mxu0 0.0
    %3944 = vmatpush2.msra.mxu0 0.0
    %3945 = vmatprep.subr.mxu0 0.0
    %3946 = vmatpush2.msra.mxu0 0.0
    %3947 = vmatprep.subr.mxu0 0.0
    %3948 = vmatpush2.msra.mxu0 0.0
    %3949 = vmatprep.subr.mxu0 0.0
    %3950 = vmatpush2.msra.mxu0 0.0
    %3951 = vmatprep.subr.mxu0 0.0
    %3952 = vmatpush2.msra.mxu0 0.0
    %3953 = vmatprep.subr.mxu0 0.0
    %3954 = vmatpush2.msra.mxu0 0.0
    %3955 = vmatprep.subr.mxu0 0.0
    %3956 = vmatpush2.msra.mxu0 0.0
    %3957 = vmatprep.subr.mxu0 0.0
    %3958 = vmatpush2.msra.mxu0 0.0
    %3959 = vmatprep.subr.mxu0 0.0
    %3960 = vmatpush2.msra.mxu0 0.0
    %3961 = vmatprep.subr.mxu0 0.0
    %3962 = vmatpush2.msra.mxu0 0.0
    %3963 = vmatprep.subr.mxu0 0.0
    %3964 = vmatpush2.msra.mxu0 0.0
    %3965 = vmatprep.subr.mxu0 0.0
    %3966 = vmatpush2.msra.mxu0 0.0
    %3967 = vmatprep.subr.mxu0 0.0
    %3968 = vmatpush2.msra.mxu0 0.0
    %3969 = vmatprep.subr.mxu0 0.0
    %3970 = vmatpush2.msra.mxu0 0.0
    %3971 = vmatprep.mubr.f32.mxu0 0.0
    %3972 = vmatmul.mubr.f32.gmra.mxu0 %v3905
    %v3973 = vpop.f32.mrf.mxu0
    %v3974 = vadd.f32 0.0, %v3973
    %v3975 = vpop.f32.mrf.mxu0
    %3976 = vdwg.mxu0
    %v3977 = vadd.f32 %v3366, %v3974
    %v3978 = vxor.u32 %v3977, 2147483648
    %v3979 = vmul.f32 %v3978, 1.442695
    %v3980 = vpow.pop %v3979
    %v3981 = vadd.f32 %v3980, 1.0
    %v3982 = vrcp.pop %v3981
    %v3983 = vmul.f32 1.0, %v3982
    %v3984 = vtanh.pop %v3977
    %v3986 = vrot.slane %v3894, 4
    %v3988 = vmul.f32 %v3983, %v3986
    %3990 = vrot.lane.b32.xlu0 %v3984, 64
    %v3991 = vpop.permute.xlu0 %3990
    %v3993 = vmul.f32 %v3983, %v3991
    %3995 = vrot.lane.b32.xlu0 %v3993, 32
    %v3996 = vpop.permute.xlu0 %3995
    %v3998 = vadd.f32 %v3988, %v3996
    %v3999 = vtanh.pop %v3998
    %4001 = vrot.lane.b32.xlu0 %v3999, 64
    %v4002 = vpop.permute.xlu0 %4001
    %v4004 = vmul.f32 %v3983, %v4002
    %4006 = vrot.lane.b32.xlu0 %v4004, 32
    %v4007 = vpop.permute.xlu0 %4006
    %v4008 = vsel %vm310, %v4007, 0
    %4010 = vmatprep.subr.mxu0 0.0
    %4011 = vmatpush1.msra.mxu0 0.0
    %4012 = vmatprep.subr.mxu0 0.0
    %4013 = vmatpush1.msra.mxu0 0.0
    %4014 = vmatprep.subr.mxu0 0.0
    %4015 = vmatpush1.msra.mxu0 0.0
    %4016 = vmatprep.subr.mxu0 0.0
    %4017 = vmatpush1.msra.mxu0 0.0
    %4018 = vmatprep.subr.mxu0 0.0
    %4019 = vmatpush1.msra.mxu0 0.0
    %4020 = vmatprep.subr.mxu0 0.0
    %4021 = vmatpush1.msra.mxu0 0.0
    %4022 = vmatprep.subr.mxu0 0.0
    %4023 = vmatpush1.msra.mxu0 0.0
    %4024 = vmatprep.subr.mxu0 0.0
    %4025 = vmatpush1.msra.mxu0 0.0
    %4026 = vmatprep.subr.mxu0 0.0
    %4027 = vmatpush1.msra.mxu0 0.0
    %4028 = vmatprep.subr.mxu0 0.0
    %4029 = vmatpush1.msra.mxu0 0.0
    %4030 = vmatprep.subr.mxu0 0.0
    %4031 = vmatpush1.msra.mxu0 0.0
    %4032 = vmatprep.subr.mxu0 0.0
    %4033 = vmatpush1.msra.mxu0 0.0
    %4034 = vmatprep.subr.mxu0 0.0
    %4035 = vmatpush1.msra.mxu0 %v3382
    %4036 = vmatprep.subr.mxu0 0.0
    %4037 = vmatpush1.msra.mxu0 %v3381
    %4038 = vmatprep.subr.mxu0 0.0
    %4039 = vmatpush1.msra.mxu0 %v3380
    %4040 = vmatprep.subr.mxu0 0.0
    %4041 = vmatpush1.msra.mxu0 %v3379
    %4042 = vmatprep.subr.mxu0 0.0
    %4043 = vmatpush2.msra.mxu0 0.0
    %4044 = vmatprep.subr.mxu0 0.0
    %4045 = vmatpush2.msra.mxu0 0.0
    %4046 = vmatprep.subr.mxu0 0.0
    %4047 = vmatpush2.msra.mxu0 0.0
    %4048 = vmatprep.subr.mxu0 0.0
    %4049 = vmatpush2.msra.mxu0 0.0
    %4050 = vmatprep.subr.mxu0 0.0
    %4051 = vmatpush2.msra.mxu0 0.0
    %4052 = vmatprep.subr.mxu0 0.0
    %4053 = vmatpush2.msra.mxu0 0.0
    %4054 = vmatprep.subr.mxu0 0.0
    %4055 = vmatpush2.msra.mxu0 0.0
    %4056 = vmatprep.subr.mxu0 0.0
    %4057 = vmatpush2.msra.mxu0 0.0
    %4058 = vmatprep.subr.mxu0 0.0
    %4059 = vmatpush2.msra.mxu0 0.0
    %4060 = vmatprep.subr.mxu0 0.0
    %4061 = vmatpush2.msra.mxu0 0.0
    %4062 = vmatprep.subr.mxu0 0.0
    %4063 = vmatpush2.msra.mxu0 0.0
    %4064 = vmatprep.subr.mxu0 0.0
    %4065 = vmatpush2.msra.mxu0 0.0
    %4066 = vmatprep.subr.mxu0 0.0
    %4067 = vmatpush2.msra.mxu0 0.0
    %4068 = vmatprep.subr.mxu0 0.0
    %4069 = vmatpush2.msra.mxu0 0.0
    %4070 = vmatprep.subr.mxu0 0.0
    %4071 = vmatpush2.msra.mxu0 0.0
    %4072 = vmatprep.subr.mxu0 0.0
    %4073 = vmatpush2.msra.mxu0 0.0
    %4074 = vmatprep.mubr.f32.mxu0 0.0
    %4075 = vmatmul.mubr.f32.gmra.mxu0 %v4008
    %v4076 = vpop.f32.mrf.mxu0
    %v4077 = vadd.f32 0.0, %v4076
    %v4078 = vpop.f32.mrf.mxu0
    %4079 = vdwg.mxu0
    %v4081 = vrot.slane %v4077, 4
    %v4083 = vadd.f32 %v3361, %v4081
    %v4084 = vxor.u32 %v4083, 2147483648
    %v4085 = vmul.f32 %v4084, 1.442695
    %v4086 = vpow.pop %v4085
    %v4087 = vadd.f32 %v4086, 1.0
    %v4088 = vrcp.pop %v4087
    %v4089 = vmul.f32 1.0, %v4088
    %v4090 = vtanh.pop %v4083
    %v4092 = vrot.slane %v3998, 4
    %v4094 = vmul.f32 %v4089, %v4092
    %4096 = vrot.lane.b32.xlu0 %v4090, 64
    %v4097 = vpop.permute.xlu0 %4096
    %v4099 = vmul.f32 %v4089, %v4097
    %4101 = vrot.lane.b32.xlu0 %v4099, 32
    %v4102 = vpop.permute.xlu0 %4101
    %v4104 = vadd.f32 %v4094, %v4102
    %v4105 = vtanh.pop %v4104
    %4107 = vrot.lane.b32.xlu0 %v4105, 64
    %v4108 = vpop.permute.xlu0 %4107
    %v4110 = vmul.f32 %v4089, %v4108
    %v4112 = vrot.slane %v4110, 4
    %4113 = vrot.lane.b32.xlu0 %v4112, 32
    %v4114 = vpop.permute.xlu0 %4113
    %v4115 = vsel %vm310, %v4114, 0
    %4117 = vmatprep.subr.mxu0 0.0
    %4118 = vmatpush1.msra.mxu0 0.0
    %4119 = vmatprep.subr.mxu0 0.0
    %4120 = vmatpush1.msra.mxu0 0.0
    %4121 = vmatprep.subr.mxu0 0.0
    %4122 = vmatpush1.msra.mxu0 0.0
    %4123 = vmatprep.subr.mxu0 0.0
    %4124 = vmatpush1.msra.mxu0 0.0
    %4125 = vmatprep.subr.mxu0 0.0
    %4126 = vmatpush1.msra.mxu0 0.0
    %4127 = vmatprep.subr.mxu0 0.0
    %4128 = vmatpush1.msra.mxu0 0.0
    %4129 = vmatprep.subr.mxu0 0.0
    %4130 = vmatpush1.msra.mxu0 0.0
    %4131 = vmatprep.subr.mxu0 0.0
    %4132 = vmatpush1.msra.mxu0 0.0
    %4133 = vmatprep.subr.mxu0 0.0
    %4134 = vmatpush1.msra.mxu0 0.0
    %4135 = vmatprep.subr.mxu0 0.0
    %4136 = vmatpush1.msra.mxu0 0.0
    %4137 = vmatprep.subr.mxu0 0.0
    %4138 = vmatpush1.msra.mxu0 0.0
    %4139 = vmatprep.subr.mxu0 0.0
    %4140 = vmatpush1.msra.mxu0 0.0
    %4141 = vmatprep.subr.mxu0 0.0
    %4142 = vmatpush1.msra.mxu0 %v3382
    %4143 = vmatprep.subr.mxu0 0.0
    %4144 = vmatpush1.msra.mxu0 %v3381
    %4145 = vmatprep.subr.mxu0 0.0
    %4146 = vmatpush1.msra.mxu0 %v3380
    %4147 = vmatprep.subr.mxu0 0.0
    %4148 = vmatpush1.msra.mxu0 %v3379
    %4149 = vmatprep.subr.mxu0 0.0
    %4150 = vmatpush2.msra.mxu0 0.0
    %4151 = vmatprep.subr.mxu0 0.0
    %4152 = vmatpush2.msra.mxu0 0.0
    %4153 = vmatprep.subr.mxu0 0.0
    %4154 = vmatpush2.msra.mxu0 0.0
    %4155 = vmatprep.subr.mxu0 0.0
    %4156 = vmatpush2.msra.mxu0 0.0
    %4157 = vmatprep.subr.mxu0 0.0
    %4158 = vmatpush2.msra.mxu0 0.0
    %4159 = vmatprep.subr.mxu0 0.0
    %4160 = vmatpush2.msra.mxu0 0.0
    %4161 = vmatprep.subr.mxu0 0.0
    %4162 = vmatpush2.msra.mxu0 0.0
    %4163 = vmatprep.subr.mxu0 0.0
    %4164 = vmatpush2.msra.mxu0 0.0
    %4165 = vmatprep.subr.mxu0 0.0
    %4166 = vmatpush2.msra.mxu0 0.0
    %4167 = vmatprep.subr.mxu0 0.0
    %4168 = vmatpush2.msra.mxu0 0.0
    %4169 = vmatprep.subr.mxu0 0.0
    %4170 = vmatpush2.msra.mxu0 0.0
    %4171 = vmatprep.subr.mxu0 0.0
    %4172 = vmatpush2.msra.mxu0 0.0
    %4173 = vmatprep.subr.mxu0 0.0
    %4174 = vmatpush2.msra.mxu0 0.0
    %4175 = vmatprep.subr.mxu0 0.0
    %4176 = vmatpush2.msra.mxu0 0.0
    %4177 = vmatprep.subr.mxu0 0.0
    %4178 = vmatpush2.msra.mxu0 0.0
    %4179 = vmatprep.subr.mxu0 0.0
    %4180 = vmatpush2.msra.mxu0 0.0
    %4181 = vmatprep.mubr.f32.mxu0 0.0
    %4182 = vmatmul.mubr.f32.gmra.mxu0 %v4115
    %v4183 = vpop.f32.mrf.mxu0
    %v4184 = vadd.f32 0.0, %v4183
    %v4185 = vpop.f32.mrf.mxu0
    %4186 = vdwg.mxu0
    %v4187 = vadd.f32 %v3361, %v4184
    %v4188 = vxor.u32 %v4187, 2147483648
    %v4189 = vmul.f32 %v4188, 1.442695
    %v4190 = vpow.pop %v4189
    %v4191 = vadd.f32 %v4190, 1.0
    %v4192 = vrcp.pop %v4191
    %v4193 = vmul.f32 1.0, %v4192
    %v4194 = vtanh.pop %v4187
    %v4196 = vrot.slane %v4104, 4
    %v4198 = vmul.f32 %v4193, %v4196
    %4200 = vrot.lane.b32.xlu0 %v4194, 64
    %v4201 = vpop.permute.xlu0 %4200
    %v4203 = vmul.f32 %v4193, %v4201
    %4205 = vrot.lane.b32.xlu0 %v4203, 32
    %v4206 = vpop.permute.xlu0 %4205
    %v4208 = vadd.f32 %v4198, %v4206
    %v4209 = vtanh.pop %v4208
    %4211 = vrot.lane.b32.xlu0 %v4209, 64
    %v4212 = vpop.permute.xlu0 %4211
    %v4214 = vmul.f32 %v4193, %v4212
    %v4215 = vsel %vm2286, %v2542, %v2648
    %v4216 = vsel %vm2286, %v2752, %v2858
    %v4217 = vsel %vm2286, %v2962, %v3068
    %v4218 = vsel %vm2286, %v3172, %v3278
    %v4219 = vsel %vm2286, %v4214, %v4110
    %v4220 = vsel %vm2286, %v4004, %v3900
    %v4221 = vsel %vm2286, %v3794, %v3690
    %v4222 = vsel %vm2286, %v3584, %v3480
    %4227 = vrot.lane.b32.xlu0 %v4215, 32
    %v4228 = vpop.permute.xlu0 %4227
    %4229 = vrot.lane.b32.xlu0 %v4216, 32
    %v4230 = vpop.permute.xlu0 %4229
    %4231 = vrot.lane.b32.xlu0 %v4217, 32
    %v4232 = vpop.permute.xlu0 %4231
    %4233 = vrot.lane.b32.xlu0 %v4218, 32
    %v4234 = vpop.permute.xlu0 %4233
    %4243 = vrot.lane.b32.xlu0 %v4219, 64
    %v4244 = vpop.permute.xlu0 %4243
    %4245 = vrot.lane.b32.xlu0 %v4220, 64
    %v4246 = vpop.permute.xlu0 %4245
    %4247 = vrot.lane.b32.xlu0 %v4221, 64
    %v4248 = vpop.permute.xlu0 %4247
    %4249 = vrot.lane.b32.xlu0 %v4222, 64
    %v4250 = vpop.permute.xlu0 %4249
    %v4255 = vsel %vm310, %v4228, %v4244
    %v4256 = vsel %vm310, %v4230, %v4246
    %v4257 = vsel %vm310, %v4232, %v4248
    %v4258 = vsel %vm310, %v4234, %v4250
    %v4259 = vld [vmem:[#allocation19] sm:$0xff]
    %v4260 = vld [vmem:[#allocation19 + $0x8] sm:$0xff]
    %v4261 = vld [vmem:[#allocation19 + $0x10] sm:$0xff]
    %v4262 = vld [vmem:[#allocation19 + $0x18] sm:$0xff]
    %v4263 = vld [vmem:[#allocation19 + $0x20] sm:$0xff]
    %v4264 = vld [vmem:[#allocation19 + $0x28] sm:$0xff]
    %v4265 = vld [vmem:[#allocation19 + $0x30] sm:$0xff]
    %v4266 = vld [vmem:[#allocation19 + $0x38] sm:$0xff]
    %v4267 = vld [vmem:[#allocation22] sm:$0x1]
    %v4269 = vlaneseq
    %v4270 = vshrl.u32 %v4269, 7
    %v4271 = vsub.s32 0, %v4270
    %v4272 = vrot.slane %v4267, %v4271
    %v4275 = vsel %vm2346, %v4255, 0
    %v4278 = vsel %vm2346, %v4256, 0
    %v4281 = vsel %vm2346, %v4257, 0
    %v4284 = vsel %vm2346, %v4258, 0
    %4286 = vmatprep.subr.mxu0 0.0
    %4287 = vmatpush1.msra.mxu0 0.0
    %4288 = vmatprep.subr.mxu0 0.0
    %4289 = vmatpush1.msra.mxu0 0.0
    %4290 = vmatprep.subr.mxu0 0.0
    %4291 = vmatpush1.msra.mxu0 0.0
    %4292 = vmatprep.subr.mxu0 0.0
    %4293 = vmatpush1.msra.mxu0 0.0
    %4294 = vmatprep.subr.mxu0 0.0
    %4295 = vmatpush1.msra.mxu0 0.0
    %4296 = vmatprep.subr.mxu0 0.0
    %4297 = vmatpush1.msra.mxu0 0.0
    %4298 = vmatprep.subr.mxu0 0.0
    %4299 = vmatpush1.msra.mxu0 0.0
    %4300 = vmatprep.subr.mxu0 0.0
    %4301 = vmatpush1.msra.mxu0 0.0
    %4302 = vmatprep.subr.mxu0 0.0
    %4303 = vmatpush1.msra.mxu0 %v4266
    %4304 = vmatprep.subr.mxu0 0.0
    %4305 = vmatpush1.msra.mxu0 %v4265
    %4306 = vmatprep.subr.mxu0 0.0
    %4307 = vmatpush1.msra.mxu0 %v4264
    %4308 = vmatprep.subr.mxu0 0.0
    %4309 = vmatpush1.msra.mxu0 %v4263
    %4310 = vmatprep.subr.mxu0 0.0
    %4311 = vmatpush1.msra.mxu0 %v4262
    %4312 = vmatprep.subr.mxu0 0.0
    %4313 = vmatpush1.msra.mxu0 %v4261
    %4314 = vmatprep.subr.mxu0 0.0
    %4315 = vmatpush1.msra.mxu0 %v4260
    %4316 = vmatprep.subr.mxu0 0.0
    %4317 = vmatpush1.msra.mxu0 %v4259
    %4318 = vmatprep.subr.mxu0 0.0
    %4319 = vmatpush2.msra.mxu0 0.0
    %4320 = vmatprep.subr.mxu0 0.0
    %4321 = vmatpush2.msra.mxu0 0.0
    %4322 = vmatprep.subr.mxu0 0.0
    %4323 = vmatpush2.msra.mxu0 0.0
    %4324 = vmatprep.subr.mxu0 0.0
    %4325 = vmatpush2.msra.mxu0 0.0
    %4326 = vmatprep.subr.mxu0 0.0
    %4327 = vmatpush2.msra.mxu0 0.0
    %4328 = vmatprep.subr.mxu0 0.0
    %4329 = vmatpush2.msra.mxu0 0.0
    %4330 = vmatprep.subr.mxu0 0.0
    %4331 = vmatpush2.msra.mxu0 0.0
    %4332 = vmatprep.subr.mxu0 0.0
    %4333 = vmatpush2.msra.mxu0 0.0
    %4334 = vmatprep.subr.mxu0 0.0
    %4335 = vmatpush2.msra.mxu0 0.0
    %4336 = vmatprep.subr.mxu0 0.0
    %4337 = vmatpush2.msra.mxu0 0.0
    %4338 = vmatprep.subr.mxu0 0.0
    %4339 = vmatpush2.msra.mxu0 0.0
    %4340 = vmatprep.subr.mxu0 0.0
    %4341 = vmatpush2.msra.mxu0 0.0
    %4342 = vmatprep.subr.mxu0 0.0
    %4343 = vmatpush2.msra.mxu0 0.0
    %4344 = vmatprep.subr.mxu0 0.0
    %4345 = vmatpush2.msra.mxu0 0.0
    %4346 = vmatprep.subr.mxu0 0.0
    %4347 = vmatpush2.msra.mxu0 0.0
    %4348 = vmatprep.subr.mxu0 0.0
    %4349 = vmatpush2.msra.mxu0 0.0
    %4350 = vmatprep.mubr.f32.mxu0 0.0
    %4351 = vmatmul.mubr.f32.gmra.mxu0 %v4275
    %v4352 = vpop.f32.mrf.mxu0
    %v4353 = vadd.f32 %v4272, %v4352
    %v4354 = vpop.f32.mrf.mxu0
    %4355 = vmatprep.mubr.f32.mxu0 0.0
    %4356 = vmatmul.mubr.f32.gmra.mxu0 %v4278
    %v4357 = vpop.f32.mrf.mxu0
    %v4358 = vadd.f32 %v4272, %v4357
    %v4359 = vpop.f32.mrf.mxu0
    %4360 = vmatprep.mubr.f32.mxu0 0.0
    %4361 = vmatmul.mubr.f32.gmra.mxu0 %v4281
    %v4362 = vpop.f32.mrf.mxu0
    %v4363 = vadd.f32 %v4272, %v4362
    %v4364 = vpop.f32.mrf.mxu0
    %4365 = vmatprep.mubr.f32.mxu0 0.0
    %4366 = vmatmul.mubr.f32.gmra.mxu0 %v4284
    %v4367 = vpop.f32.mrf.mxu0
    %v4368 = vadd.f32 %v4272, %v4367
    %v4369 = vpop.f32.mrf.mxu0
    %4370 = vdwg.mxu0
    %v4371 = vld [vmem:[#allocation21] sm:$0xff]
    %v4372 = vld [vmem:[#allocation21 + $0x8] sm:$0xff]
    %v4373 = vld [vmem:[#allocation21 + $0x10] sm:$0xff]
    %v4374 = vld [vmem:[#allocation21 + $0x18] sm:$0xff]
    %4375 = vmatprep.subr.mxu0 0.0
    %4376 = vmatpush1.msra.mxu0 0.0
    %4377 = vmatprep.subr.mxu0 0.0
    %4378 = vmatpush1.msra.mxu0 0.0
    %4379 = vmatprep.subr.mxu0 0.0
    %4380 = vmatpush1.msra.mxu0 0.0
    %4381 = vmatprep.subr.mxu0 0.0
    %4382 = vmatpush1.msra.mxu0 0.0
    %4383 = vmatprep.subr.mxu0 0.0
    %4384 = vmatpush1.msra.mxu0 0.0
    %4385 = vmatprep.subr.mxu0 0.0
    %4386 = vmatpush1.msra.mxu0 0.0
    %4387 = vmatprep.subr.mxu0 0.0
    %4388 = vmatpush1.msra.mxu0 0.0
    %4389 = vmatprep.subr.mxu0 0.0
    %4390 = vmatpush1.msra.mxu0 0.0
    %4391 = vmatprep.subr.mxu0 0.0
    %4392 = vmatpush1.msra.mxu0 0.0
    %4393 = vmatprep.subr.mxu0 0.0
    %4394 = vmatpush1.msra.mxu0 0.0
    %4395 = vmatprep.subr.mxu0 0.0
    %4396 = vmatpush1.msra.mxu0 0.0
    %4397 = vmatprep.subr.mxu0 0.0
    %4398 = vmatpush1.msra.mxu0 0.0
    %4399 = vmatprep.subr.mxu0 0.0
    %4400 = vmatpush1.msra.mxu0 %v4374
    %4401 = vmatprep.subr.mxu0 0.0
    %4402 = vmatpush1.msra.mxu0 %v4373
    %4403 = vmatprep.subr.mxu0 0.0
    %4404 = vmatpush1.msra.mxu0 %v4372
    %4405 = vmatprep.subr.mxu0 0.0
    %4406 = vmatpush1.msra.mxu0 %v4371
    %4407 = vmatprep.subr.mxu0 0.0
    %4408 = vmatpush2.msra.mxu0 0.0
    %4409 = vmatprep.subr.mxu0 0.0
    %4410 = vmatpush2.msra.mxu0 0.0
    %4411 = vmatprep.subr.mxu0 0.0
    %4412 = vmatpush2.msra.mxu0 0.0
    %4413 = vmatprep.subr.mxu0 0.0
    %4414 = vmatpush2.msra.mxu0 0.0
    %4415 = vmatprep.subr.mxu0 0.0
    %4416 = vmatpush2.msra.mxu0 0.0
    %4417 = vmatprep.subr.mxu0 0.0
    %4418 = vmatpush2.msra.mxu0 0.0
    %4419 = vmatprep.subr.mxu0 0.0
    %4420 = vmatpush2.msra.mxu0 0.0
    %4421 = vmatprep.subr.mxu0 0.0
    %4422 = vmatpush2.msra.mxu0 0.0
    %4423 = vmatprep.subr.mxu0 0.0
    %4424 = vmatpush2.msra.mxu0 0.0
    %4425 = vmatprep.subr.mxu0 0.0
    %4426 = vmatpush2.msra.mxu0 0.0
    %4427 = vmatprep.subr.mxu0 0.0
    %4428 = vmatpush2.msra.mxu0 0.0
    %4429 = vmatprep.subr.mxu0 0.0
    %4430 = vmatpush2.msra.mxu0 0.0
    %4431 = vmatprep.subr.mxu0 0.0
    %4432 = vmatpush2.msra.mxu0 0.0
    %4433 = vmatprep.subr.mxu0 0.0
    %4434 = vmatpush2.msra.mxu0 0.0
    %4435 = vmatprep.subr.mxu0 0.0
    %4436 = vmatpush2.msra.mxu0 0.0
    %4437 = vmatprep.subr.mxu0 0.0
    %4438 = vmatpush2.msra.mxu0 0.0
    %4439 = vmatprep.mubr.f32.mxu0 0.0
    %4440 = vmatmul.mubr.f32.gmra.mxu0 %v521
    %v4441 = vpop.f32.mrf.mxu0
    %v4442 = vadd.f32 0.0, %v4441
    %v4443 = vpop.f32.mrf.mxu0
    %4444 = vdwg.mxu0
    %v4445 = vadd.f32 %v4353, %v4442
    %v4446 = vxor.u32 %v4445, 2147483648
    %v4447 = vmul.f32 %v4446, 1.442695
    %v4448 = vpow.pop %v4447
    %v4449 = vadd.f32 %v4448, 1.0
    %v4450 = vrcp.pop %v4449
    %v4451 = vmul.f32 1.0, %v4450
    %v4452 = vtanh.pop %v4445
    %v4453 = vmul.f32 %v4451, 0.0
    %4455 = vrot.lane.b32.xlu0 %v4452, 64
    %v4456 = vpop.permute.xlu0 %4455
    %v4458 = vmul.f32 %v4451, %v4456
    %4460 = vrot.lane.b32.xlu0 %v4458, 32
    %v4461 = vpop.permute.xlu0 %4460
    %v4463 = vadd.f32 %v4453, %v4461
    %v4464 = vtanh.pop %v4463
    %4466 = vrot.lane.b32.xlu0 %v4464, 64
    %v4467 = vpop.permute.xlu0 %4466
    %v4469 = vmul.f32 %v4451, %v4467
    %4471 = vrot.lane.b32.xlu0 %v4469, 32
    %v4472 = vpop.permute.xlu0 %4471
    %v4473 = vsel %vm310, %v4472, 0
    %4475 = vmatprep.subr.mxu0 0.0
    %4476 = vmatpush1.msra.mxu0 0.0
    %4477 = vmatprep.subr.mxu0 0.0
    %4478 = vmatpush1.msra.mxu0 0.0
    %4479 = vmatprep.subr.mxu0 0.0
    %4480 = vmatpush1.msra.mxu0 0.0
    %4481 = vmatprep.subr.mxu0 0.0
    %4482 = vmatpush1.msra.mxu0 0.0
    %4483 = vmatprep.subr.mxu0 0.0
    %4484 = vmatpush1.msra.mxu0 0.0
    %4485 = vmatprep.subr.mxu0 0.0
    %4486 = vmatpush1.msra.mxu0 0.0
    %4487 = vmatprep.subr.mxu0 0.0
    %4488 = vmatpush1.msra.mxu0 0.0
    %4489 = vmatprep.subr.mxu0 0.0
    %4490 = vmatpush1.msra.mxu0 0.0
    %4491 = vmatprep.subr.mxu0 0.0
    %4492 = vmatpush1.msra.mxu0 0.0
    %4493 = vmatprep.subr.mxu0 0.0
    %4494 = vmatpush1.msra.mxu0 0.0
    %4495 = vmatprep.subr.mxu0 0.0
    %4496 = vmatpush1.msra.mxu0 0.0
    %4497 = vmatprep.subr.mxu0 0.0
    %4498 = vmatpush1.msra.mxu0 0.0
    %4499 = vmatprep.subr.mxu0 0.0
    %4500 = vmatpush1.msra.mxu0 %v4374
    %4501 = vmatprep.subr.mxu0 0.0
    %4502 = vmatpush1.msra.mxu0 %v4373
    %4503 = vmatprep.subr.mxu0 0.0
    %4504 = vmatpush1.msra.mxu0 %v4372
    %4505 = vmatprep.subr.mxu0 0.0
    %4506 = vmatpush1.msra.mxu0 %v4371
    %4507 = vmatprep.subr.mxu0 0.0
    %4508 = vmatpush2.msra.mxu0 0.0
    %4509 = vmatprep.subr.mxu0 0.0
    %4510 = vmatpush2.msra.mxu0 0.0
    %4511 = vmatprep.subr.mxu0 0.0
    %4512 = vmatpush2.msra.mxu0 0.0
    %4513 = vmatprep.subr.mxu0 0.0
    %4514 = vmatpush2.msra.mxu0 0.0
    %4515 = vmatprep.subr.mxu0 0.0
    %4516 = vmatpush2.msra.mxu0 0.0
    %4517 = vmatprep.subr.mxu0 0.0
    %4518 = vmatpush2.msra.mxu0 0.0
    %4519 = vmatprep.subr.mxu0 0.0
    %4520 = vmatpush2.msra.mxu0 0.0
    %4521 = vmatprep.subr.mxu0 0.0
    %4522 = vmatpush2.msra.mxu0 0.0
    %4523 = vmatprep.subr.mxu0 0.0
    %4524 = vmatpush2.msra.mxu0 0.0
    %4525 = vmatprep.subr.mxu0 0.0
    %4526 = vmatpush2.msra.mxu0 0.0
    %4527 = vmatprep.subr.mxu0 0.0
    %4528 = vmatpush2.msra.mxu0 0.0
    %4529 = vmatprep.subr.mxu0 0.0
    %4530 = vmatpush2.msra.mxu0 0.0
    %4531 = vmatprep.subr.mxu0 0.0
    %4532 = vmatpush2.msra.mxu0 0.0
    %4533 = vmatprep.subr.mxu0 0.0
    %4534 = vmatpush2.msra.mxu0 0.0
    %4535 = vmatprep.subr.mxu0 0.0
    %4536 = vmatpush2.msra.mxu0 0.0
    %4537 = vmatprep.subr.mxu0 0.0
    %4538 = vmatpush2.msra.mxu0 0.0
    %4539 = vmatprep.mubr.f32.mxu0 0.0
    %4540 = vmatmul.mubr.f32.gmra.mxu0 %v4473
    %v4541 = vpop.f32.mrf.mxu0
    %v4542 = vadd.f32 0.0, %v4541
    %v4543 = vpop.f32.mrf.mxu0
    %4544 = vdwg.mxu0
    %v4546 = vrot.slane %v4542, 4
    %v4548 = vadd.f32 %v4353, %v4546
    %v4549 = vxor.u32 %v4548, 2147483648
    %v4550 = vmul.f32 %v4549, 1.442695
    %v4551 = vpow.pop %v4550
    %v4552 = vadd.f32 %v4551, 1.0
    %v4553 = vrcp.pop %v4552
    %v4554 = vmul.f32 1.0, %v4553
    %v4555 = vtanh.pop %v4548
    %v4557 = vrot.slane %v4463, 4
    %v4559 = vmul.f32 %v4554, %v4557
    %4561 = vrot.lane.b32.xlu0 %v4555, 64
    %v4562 = vpop.permute.xlu0 %4561
    %v4564 = vmul.f32 %v4554, %v4562
    %4566 = vrot.lane.b32.xlu0 %v4564, 32
    %v4567 = vpop.permute.xlu0 %4566
    %v4569 = vadd.f32 %v4559, %v4567
    %v4570 = vtanh.pop %v4569
    %4572 = vrot.lane.b32.xlu0 %v4570, 64
    %v4573 = vpop.permute.xlu0 %4572
    %v4575 = vmul.f32 %v4554, %v4573
    %v4577 = vrot.slane %v4575, 4
    %4578 = vrot.lane.b32.xlu0 %v4577, 32
    %v4579 = vpop.permute.xlu0 %4578
    %v4580 = vsel %vm310, %v4579, 0
    %4582 = vmatprep.subr.mxu0 0.0
    %4583 = vmatpush1.msra.mxu0 0.0
    %4584 = vmatprep.subr.mxu0 0.0
    %4585 = vmatpush1.msra.mxu0 0.0
    %4586 = vmatprep.subr.mxu0 0.0
    %4587 = vmatpush1.msra.mxu0 0.0
    %4588 = vmatprep.subr.mxu0 0.0
    %4589 = vmatpush1.msra.mxu0 0.0
    %4590 = vmatprep.subr.mxu0 0.0
    %4591 = vmatpush1.msra.mxu0 0.0
    %4592 = vmatprep.subr.mxu0 0.0
    %4593 = vmatpush1.msra.mxu0 0.0
    %4594 = vmatprep.subr.mxu0 0.0
    %4595 = vmatpush1.msra.mxu0 0.0
    %4596 = vmatprep.subr.mxu0 0.0
    %4597 = vmatpush1.msra.mxu0 0.0
    %4598 = vmatprep.subr.mxu0 0.0
    %4599 = vmatpush1.msra.mxu0 0.0
    %4600 = vmatprep.subr.mxu0 0.0
    %4601 = vmatpush1.msra.mxu0 0.0
    %4602 = vmatprep.subr.mxu0 0.0
    %4603 = vmatpush1.msra.mxu0 0.0
    %4604 = vmatprep.subr.mxu0 0.0
    %4605 = vmatpush1.msra.mxu0 0.0
    %4606 = vmatprep.subr.mxu0 0.0
    %4607 = vmatpush1.msra.mxu0 %v4374
    %4608 = vmatprep.subr.mxu0 0.0
    %4609 = vmatpush1.msra.mxu0 %v4373
    %4610 = vmatprep.subr.mxu0 0.0
    %4611 = vmatpush1.msra.mxu0 %v4372
    %4612 = vmatprep.subr.mxu0 0.0
    %4613 = vmatpush1.msra.mxu0 %v4371
    %4614 = vmatprep.subr.mxu0 0.0
    %4615 = vmatpush2.msra.mxu0 0.0
    %4616 = vmatprep.subr.mxu0 0.0
    %4617 = vmatpush2.msra.mxu0 0.0
    %4618 = vmatprep.subr.mxu0 0.0
    %4619 = vmatpush2.msra.mxu0 0.0
    %4620 = vmatprep.subr.mxu0 0.0
    %4621 = vmatpush2.msra.mxu0 0.0
    %4622 = vmatprep.subr.mxu0 0.0
    %4623 = vmatpush2.msra.mxu0 0.0
    %4624 = vmatprep.subr.mxu0 0.0
    %4625 = vmatpush2.msra.mxu0 0.0
    %4626 = vmatprep.subr.mxu0 0.0
    %4627 = vmatpush2.msra.mxu0 0.0
    %4628 = vmatprep.subr.mxu0 0.0
    %4629 = vmatpush2.msra.mxu0 0.0
    %4630 = vmatprep.subr.mxu0 0.0
    %4631 = vmatpush2.msra.mxu0 0.0
    %4632 = vmatprep.subr.mxu0 0.0
    %4633 = vmatpush2.msra.mxu0 0.0
    %4634 = vmatprep.subr.mxu0 0.0
    %4635 = vmatpush2.msra.mxu0 0.0
    %4636 = vmatprep.subr.mxu0 0.0
    %4637 = vmatpush2.msra.mxu0 0.0
    %4638 = vmatprep.subr.mxu0 0.0
    %4639 = vmatpush2.msra.mxu0 0.0
    %4640 = vmatprep.subr.mxu0 0.0
    %4641 = vmatpush2.msra.mxu0 0.0
    %4642 = vmatprep.subr.mxu0 0.0
    %4643 = vmatpush2.msra.mxu0 0.0
    %4644 = vmatprep.subr.mxu0 0.0
    %4645 = vmatpush2.msra.mxu0 0.0
    %4646 = vmatprep.mubr.f32.mxu0 0.0
    %4647 = vmatmul.mubr.f32.gmra.mxu0 %v4580
    %v4648 = vpop.f32.mrf.mxu0
    %v4649 = vadd.f32 0.0, %v4648
    %v4650 = vpop.f32.mrf.mxu0
    %4651 = vdwg.mxu0
    %v4652 = vadd.f32 %v4358, %v4649
    %v4653 = vxor.u32 %v4652, 2147483648
    %v4654 = vmul.f32 %v4653, 1.442695
    %v4655 = vpow.pop %v4654
    %v4656 = vadd.f32 %v4655, 1.0
    %v4657 = vrcp.pop %v4656
    %v4658 = vmul.f32 1.0, %v4657
    %v4659 = vtanh.pop %v4652
    %v4661 = vrot.slane %v4569, 4
    %v4663 = vmul.f32 %v4658, %v4661
    %4665 = vrot.lane.b32.xlu0 %v4659, 64
    %v4666 = vpop.permute.xlu0 %4665
    %v4668 = vmul.f32 %v4658, %v4666
    %4670 = vrot.lane.b32.xlu0 %v4668, 32
    %v4671 = vpop.permute.xlu0 %4670
    %v4673 = vadd.f32 %v4663, %v4671
    %v4674 = vtanh.pop %v4673
    %4676 = vrot.lane.b32.xlu0 %v4674, 64
    %v4677 = vpop.permute.xlu0 %4676
    %v4679 = vmul.f32 %v4658, %v4677
    %4681 = vrot.lane.b32.xlu0 %v4679, 32
    %v4682 = vpop.permute.xlu0 %4681
    %v4683 = vsel %vm310, %v4682, 0
    %4685 = vmatprep.subr.mxu0 0.0
    %4686 = vmatpush1.msra.mxu0 0.0
    %4687 = vmatprep.subr.mxu0 0.0
    %4688 = vmatpush1.msra.mxu0 0.0
    %4689 = vmatprep.subr.mxu0 0.0
    %4690 = vmatpush1.msra.mxu0 0.0
    %4691 = vmatprep.subr.mxu0 0.0
    %4692 = vmatpush1.msra.mxu0 0.0
    %4693 = vmatprep.subr.mxu0 0.0
    %4694 = vmatpush1.msra.mxu0 0.0
    %4695 = vmatprep.subr.mxu0 0.0
    %4696 = vmatpush1.msra.mxu0 0.0
    %4697 = vmatprep.subr.mxu0 0.0
    %4698 = vmatpush1.msra.mxu0 0.0
    %4699 = vmatprep.subr.mxu0 0.0
    %4700 = vmatpush1.msra.mxu0 0.0
    %4701 = vmatprep.subr.mxu0 0.0
    %4702 = vmatpush1.msra.mxu0 0.0
    %4703 = vmatprep.subr.mxu0 0.0
    %4704 = vmatpush1.msra.mxu0 0.0
    %4705 = vmatprep.subr.mxu0 0.0
    %4706 = vmatpush1.msra.mxu0 0.0
    %4707 = vmatprep.subr.mxu0 0.0
    %4708 = vmatpush1.msra.mxu0 0.0
    %4709 = vmatprep.subr.mxu0 0.0
    %4710 = vmatpush1.msra.mxu0 %v4374
    %4711 = vmatprep.subr.mxu0 0.0
    %4712 = vmatpush1.msra.mxu0 %v4373
    %4713 = vmatprep.subr.mxu0 0.0
    %4714 = vmatpush1.msra.mxu0 %v4372
    %4715 = vmatprep.subr.mxu0 0.0
    %4716 = vmatpush1.msra.mxu0 %v4371
    %4717 = vmatprep.subr.mxu0 0.0
    %4718 = vmatpush2.msra.mxu0 0.0
    %4719 = vmatprep.subr.mxu0 0.0
    %4720 = vmatpush2.msra.mxu0 0.0
    %4721 = vmatprep.subr.mxu0 0.0
    %4722 = vmatpush2.msra.mxu0 0.0
    %4723 = vmatprep.subr.mxu0 0.0
    %4724 = vmatpush2.msra.mxu0 0.0
    %4725 = vmatprep.subr.mxu0 0.0
    %4726 = vmatpush2.msra.mxu0 0.0
    %4727 = vmatprep.subr.mxu0 0.0
    %4728 = vmatpush2.msra.mxu0 0.0
    %4729 = vmatprep.subr.mxu0 0.0
    %4730 = vmatpush2.msra.mxu0 0.0
    %4731 = vmatprep.subr.mxu0 0.0
    %4732 = vmatpush2.msra.mxu0 0.0
    %4733 = vmatprep.subr.mxu0 0.0
    %4734 = vmatpush2.msra.mxu0 0.0
    %4735 = vmatprep.subr.mxu0 0.0
    %4736 = vmatpush2.msra.mxu0 0.0
    %4737 = vmatprep.subr.mxu0 0.0
    %4738 = vmatpush2.msra.mxu0 0.0
    %4739 = vmatprep.subr.mxu0 0.0
    %4740 = vmatpush2.msra.mxu0 0.0
    %4741 = vmatprep.subr.mxu0 0.0
    %4742 = vmatpush2.msra.mxu0 0.0
    %4743 = vmatprep.subr.mxu0 0.0
    %4744 = vmatpush2.msra.mxu0 0.0
    %4745 = vmatprep.subr.mxu0 0.0
    %4746 = vmatpush2.msra.mxu0 0.0
    %4747 = vmatprep.subr.mxu0 0.0
    %4748 = vmatpush2.msra.mxu0 0.0
    %4749 = vmatprep.mubr.f32.mxu0 0.0
    %4750 = vmatmul.mubr.f32.gmra.mxu0 %v4683
    %v4751 = vpop.f32.mrf.mxu0
    %v4752 = vadd.f32 0.0, %v4751
    %v4753 = vpop.f32.mrf.mxu0
    %4754 = vdwg.mxu0
    %v4756 = vrot.slane %v4752, 4
    %v4758 = vadd.f32 %v4358, %v4756
    %v4759 = vxor.u32 %v4758, 2147483648
    %v4760 = vmul.f32 %v4759, 1.442695
    %v4761 = vpow.pop %v4760
    %v4762 = vadd.f32 %v4761, 1.0
    %v4763 = vrcp.pop %v4762
    %v4764 = vmul.f32 1.0, %v4763
    %v4765 = vtanh.pop %v4758
    %v4767 = vrot.slane %v4673, 4
    %v4769 = vmul.f32 %v4764, %v4767
    %4771 = vrot.lane.b32.xlu0 %v4765, 64
    %v4772 = vpop.permute.xlu0 %4771
    %v4774 = vmul.f32 %v4764, %v4772
    %4776 = vrot.lane.b32.xlu0 %v4774, 32
    %v4777 = vpop.permute.xlu0 %4776
    %v4779 = vadd.f32 %v4769, %v4777
    %v4780 = vtanh.pop %v4779
    %4782 = vrot.lane.b32.xlu0 %v4780, 64
    %v4783 = vpop.permute.xlu0 %4782
    %v4785 = vmul.f32 %v4764, %v4783
    %v4787 = vrot.slane %v4785, 4
    %4788 = vrot.lane.b32.xlu0 %v4787, 32
    %v4789 = vpop.permute.xlu0 %4788
    %v4790 = vsel %vm310, %v4789, 0
    %4792 = vmatprep.subr.mxu0 0.0
    %4793 = vmatpush1.msra.mxu0 0.0
    %4794 = vmatprep.subr.mxu0 0.0
    %4795 = vmatpush1.msra.mxu0 0.0
    %4796 = vmatprep.subr.mxu0 0.0
    %4797 = vmatpush1.msra.mxu0 0.0
    %4798 = vmatprep.subr.mxu0 0.0
    %4799 = vmatpush1.msra.mxu0 0.0
    %4800 = vmatprep.subr.mxu0 0.0
    %4801 = vmatpush1.msra.mxu0 0.0
    %4802 = vmatprep.subr.mxu0 0.0
    %4803 = vmatpush1.msra.mxu0 0.0
    %4804 = vmatprep.subr.mxu0 0.0
    %4805 = vmatpush1.msra.mxu0 0.0
    %4806 = vmatprep.subr.mxu0 0.0
    %4807 = vmatpush1.msra.mxu0 0.0
    %4808 = vmatprep.subr.mxu0 0.0
    %4809 = vmatpush1.msra.mxu0 0.0
    %4810 = vmatprep.subr.mxu0 0.0
    %4811 = vmatpush1.msra.mxu0 0.0
    %4812 = vmatprep.subr.mxu0 0.0
    %4813 = vmatpush1.msra.mxu0 0.0
    %4814 = vmatprep.subr.mxu0 0.0
    %4815 = vmatpush1.msra.mxu0 0.0
    %4816 = vmatprep.subr.mxu0 0.0
    %4817 = vmatpush1.msra.mxu0 %v4374
    %4818 = vmatprep.subr.mxu0 0.0
    %4819 = vmatpush1.msra.mxu0 %v4373
    %4820 = vmatprep.subr.mxu0 0.0
    %4821 = vmatpush1.msra.mxu0 %v4372
    %4822 = vmatprep.subr.mxu0 0.0
    %4823 = vmatpush1.msra.mxu0 %v4371
    %4824 = vmatprep.subr.mxu0 0.0
    %4825 = vmatpush2.msra.mxu0 0.0
    %4826 = vmatprep.subr.mxu0 0.0
    %4827 = vmatpush2.msra.mxu0 0.0
    %4828 = vmatprep.subr.mxu0 0.0
    %4829 = vmatpush2.msra.mxu0 0.0
    %4830 = vmatprep.subr.mxu0 0.0
    %4831 = vmatpush2.msra.mxu0 0.0
    %4832 = vmatprep.subr.mxu0 0.0
    %4833 = vmatpush2.msra.mxu0 0.0
    %4834 = vmatprep.subr.mxu0 0.0
    %4835 = vmatpush2.msra.mxu0 0.0
    %4836 = vmatprep.subr.mxu0 0.0
    %4837 = vmatpush2.msra.mxu0 0.0
    %4838 = vmatprep.subr.mxu0 0.0
    %4839 = vmatpush2.msra.mxu0 0.0
    %4840 = vmatprep.subr.mxu0 0.0
    %4841 = vmatpush2.msra.mxu0 0.0
    %4842 = vmatprep.subr.mxu0 0.0
    %4843 = vmatpush2.msra.mxu0 0.0
    %4844 = vmatprep.subr.mxu0 0.0
    %4845 = vmatpush2.msra.mxu0 0.0
    %4846 = vmatprep.subr.mxu0 0.0
    %4847 = vmatpush2.msra.mxu0 0.0
    %4848 = vmatprep.subr.mxu0 0.0
    %4849 = vmatpush2.msra.mxu0 0.0
    %4850 = vmatprep.subr.mxu0 0.0
    %4851 = vmatpush2.msra.mxu0 0.0
    %4852 = vmatprep.subr.mxu0 0.0
    %4853 = vmatpush2.msra.mxu0 0.0
    %4854 = vmatprep.subr.mxu0 0.0
    %4855 = vmatpush2.msra.mxu0 0.0
    %4856 = vmatprep.mubr.f32.mxu0 0.0
    %4857 = vmatmul.mubr.f32.gmra.mxu0 %v4790
    %v4858 = vpop.f32.mrf.mxu0
    %v4859 = vadd.f32 0.0, %v4858
    %v4860 = vpop.f32.mrf.mxu0
    %4861 = vdwg.mxu0
    %v4862 = vadd.f32 %v4363, %v4859
    %v4863 = vxor.u32 %v4862, 2147483648
    %v4864 = vmul.f32 %v4863, 1.442695
    %v4865 = vpow.pop %v4864
    %v4866 = vadd.f32 %v4865, 1.0
    %v4867 = vrcp.pop %v4866
    %v4868 = vmul.f32 1.0, %v4867
    %v4869 = vtanh.pop %v4862
    %v4871 = vrot.slane %v4779, 4
    %v4873 = vmul.f32 %v4868, %v4871
    %4875 = vrot.lane.b32.xlu0 %v4869, 64
    %v4876 = vpop.permute.xlu0 %4875
    %v4878 = vmul.f32 %v4868, %v4876
    %4880 = vrot.lane.b32.xlu0 %v4878, 32
    %v4881 = vpop.permute.xlu0 %4880
    %v4883 = vadd.f32 %v4873, %v4881
    %v4884 = vtanh.pop %v4883
    %4886 = vrot.lane.b32.xlu0 %v4884, 64
    %v4887 = vpop.permute.xlu0 %4886
    %v4889 = vmul.f32 %v4868, %v4887
    %4891 = vrot.lane.b32.xlu0 %v4889, 32
    %v4892 = vpop.permute.xlu0 %4891
    %v4893 = vsel %vm310, %v4892, 0
    %4895 = vmatprep.subr.mxu0 0.0
    %4896 = vmatpush1.msra.mxu0 0.0
    %4897 = vmatprep.subr.mxu0 0.0
    %4898 = vmatpush1.msra.mxu0 0.0
    %4899 = vmatprep.subr.mxu0 0.0
    %4900 = vmatpush1.msra.mxu0 0.0
    %4901 = vmatprep.subr.mxu0 0.0
    %4902 = vmatpush1.msra.mxu0 0.0
    %4903 = vmatprep.subr.mxu0 0.0
    %4904 = vmatpush1.msra.mxu0 0.0
    %4905 = vmatprep.subr.mxu0 0.0
    %4906 = vmatpush1.msra.mxu0 0.0
    %4907 = vmatprep.subr.mxu0 0.0
    %4908 = vmatpush1.msra.mxu0 0.0
    %4909 = vmatprep.subr.mxu0 0.0
    %4910 = vmatpush1.msra.mxu0 0.0
    %4911 = vmatprep.subr.mxu0 0.0
    %4912 = vmatpush1.msra.mxu0 0.0
    %4913 = vmatprep.subr.mxu0 0.0
    %4914 = vmatpush1.msra.mxu0 0.0
    %4915 = vmatprep.subr.mxu0 0.0
    %4916 = vmatpush1.msra.mxu0 0.0
    %4917 = vmatprep.subr.mxu0 0.0
    %4918 = vmatpush1.msra.mxu0 0.0
    %4919 = vmatprep.subr.mxu0 0.0
    %4920 = vmatpush1.msra.mxu0 %v4374
    %4921 = vmatprep.subr.mxu0 0.0
    %4922 = vmatpush1.msra.mxu0 %v4373
    %4923 = vmatprep.subr.mxu0 0.0
    %4924 = vmatpush1.msra.mxu0 %v4372
    %4925 = vmatprep.subr.mxu0 0.0
    %4926 = vmatpush1.msra.mxu0 %v4371
    %4927 = vmatprep.subr.mxu0 0.0
    %4928 = vmatpush2.msra.mxu0 0.0
    %4929 = vmatprep.subr.mxu0 0.0
    %4930 = vmatpush2.msra.mxu0 0.0
    %4931 = vmatprep.subr.mxu0 0.0
    %4932 = vmatpush2.msra.mxu0 0.0
    %4933 = vmatprep.subr.mxu0 0.0
    %4934 = vmatpush2.msra.mxu0 0.0
    %4935 = vmatprep.subr.mxu0 0.0
    %4936 = vmatpush2.msra.mxu0 0.0
    %4937 = vmatprep.subr.mxu0 0.0
    %4938 = vmatpush2.msra.mxu0 0.0
    %4939 = vmatprep.subr.mxu0 0.0
    %4940 = vmatpush2.msra.mxu0 0.0
    %4941 = vmatprep.subr.mxu0 0.0
    %4942 = vmatpush2.msra.mxu0 0.0
    %4943 = vmatprep.subr.mxu0 0.0
    %4944 = vmatpush2.msra.mxu0 0.0
    %4945 = vmatprep.subr.mxu0 0.0
    %4946 = vmatpush2.msra.mxu0 0.0
    %4947 = vmatprep.subr.mxu0 0.0
    %4948 = vmatpush2.msra.mxu0 0.0
    %4949 = vmatprep.subr.mxu0 0.0
    %4950 = vmatpush2.msra.mxu0 0.0
    %4951 = vmatprep.subr.mxu0 0.0
    %4952 = vmatpush2.msra.mxu0 0.0
    %4953 = vmatprep.subr.mxu0 0.0
    %4954 = vmatpush2.msra.mxu0 0.0
    %4955 = vmatprep.subr.mxu0 0.0
    %4956 = vmatpush2.msra.mxu0 0.0
    %4957 = vmatprep.subr.mxu0 0.0
    %4958 = vmatpush2.msra.mxu0 0.0
    %4959 = vmatprep.mubr.f32.mxu0 0.0
    %4960 = vmatmul.mubr.f32.gmra.mxu0 %v4893
    %v4961 = vpop.f32.mrf.mxu0
    %v4962 = vadd.f32 0.0, %v4961
    %v4963 = vpop.f32.mrf.mxu0
    %4964 = vdwg.mxu0
    %v4966 = vrot.slane %v4962, 4
    %v4968 = vadd.f32 %v4363, %v4966
    %v4969 = vxor.u32 %v4968, 2147483648
    %v4970 = vmul.f32 %v4969, 1.442695
    %v4971 = vpow.pop %v4970
    %v4972 = vadd.f32 %v4971, 1.0
    %v4973 = vrcp.pop %v4972
    %v4974 = vmul.f32 1.0, %v4973
    %v4975 = vtanh.pop %v4968
    %v4977 = vrot.slane %v4883, 4
    %v4979 = vmul.f32 %v4974, %v4977
    %4981 = vrot.lane.b32.xlu0 %v4975, 64
    %v4982 = vpop.permute.xlu0 %4981
    %v4984 = vmul.f32 %v4974, %v4982
    %4986 = vrot.lane.b32.xlu0 %v4984, 32
    %v4987 = vpop.permute.xlu0 %4986
    %v4989 = vadd.f32 %v4979, %v4987
    %v4990 = vtanh.pop %v4989
    %4992 = vrot.lane.b32.xlu0 %v4990, 64
    %v4993 = vpop.permute.xlu0 %4992
    %v4995 = vmul.f32 %v4974, %v4993
    %v4997 = vrot.slane %v4995, 4
    %4998 = vrot.lane.b32.xlu0 %v4997, 32
    %v4999 = vpop.permute.xlu0 %4998
    %v5000 = vsel %vm310, %v4999, 0
    %5002 = vmatprep.subr.mxu0 0.0
    %5003 = vmatpush1.msra.mxu0 0.0
    %5004 = vmatprep.subr.mxu0 0.0
    %5005 = vmatpush1.msra.mxu0 0.0
    %5006 = vmatprep.subr.mxu0 0.0
    %5007 = vmatpush1.msra.mxu0 0.0
    %5008 = vmatprep.subr.mxu0 0.0
    %5009 = vmatpush1.msra.mxu0 0.0
    %5010 = vmatprep.subr.mxu0 0.0
    %5011 = vmatpush1.msra.mxu0 0.0
    %5012 = vmatprep.subr.mxu0 0.0
    %5013 = vmatpush1.msra.mxu0 0.0
    %5014 = vmatprep.subr.mxu0 0.0
    %5015 = vmatpush1.msra.mxu0 0.0
    %5016 = vmatprep.subr.mxu0 0.0
    %5017 = vmatpush1.msra.mxu0 0.0
    %5018 = vmatprep.subr.mxu0 0.0
    %5019 = vmatpush1.msra.mxu0 0.0
    %5020 = vmatprep.subr.mxu0 0.0
    %5021 = vmatpush1.msra.mxu0 0.0
    %5022 = vmatprep.subr.mxu0 0.0
    %5023 = vmatpush1.msra.mxu0 0.0
    %5024 = vmatprep.subr.mxu0 0.0
    %5025 = vmatpush1.msra.mxu0 0.0
    %5026 = vmatprep.subr.mxu0 0.0
    %5027 = vmatpush1.msra.mxu0 %v4374
    %5028 = vmatprep.subr.mxu0 0.0
    %5029 = vmatpush1.msra.mxu0 %v4373
    %5030 = vmatprep.subr.mxu0 0.0
    %5031 = vmatpush1.msra.mxu0 %v4372
    %5032 = vmatprep.subr.mxu0 0.0
    %5033 = vmatpush1.msra.mxu0 %v4371
    %5034 = vmatprep.subr.mxu0 0.0
    %5035 = vmatpush2.msra.mxu0 0.0
    %5036 = vmatprep.subr.mxu0 0.0
    %5037 = vmatpush2.msra.mxu0 0.0
    %5038 = vmatprep.subr.mxu0 0.0
    %5039 = vmatpush2.msra.mxu0 0.0
    %5040 = vmatprep.subr.mxu0 0.0
    %5041 = vmatpush2.msra.mxu0 0.0
    %5042 = vmatprep.subr.mxu0 0.0
    %5043 = vmatpush2.msra.mxu0 0.0
    %5044 = vmatprep.subr.mxu0 0.0
    %5045 = vmatpush2.msra.mxu0 0.0
    %5046 = vmatprep.subr.mxu0 0.0
    %5047 = vmatpush2.msra.mxu0 0.0
    %5048 = vmatprep.subr.mxu0 0.0
    %5049 = vmatpush2.msra.mxu0 0.0
    %5050 = vmatprep.subr.mxu0 0.0
    %5051 = vmatpush2.msra.mxu0 0.0
    %5052 = vmatprep.subr.mxu0 0.0
    %5053 = vmatpush2.msra.mxu0 0.0
    %5054 = vmatprep.subr.mxu0 0.0
    %5055 = vmatpush2.msra.mxu0 0.0
    %5056 = vmatprep.subr.mxu0 0.0
    %5057 = vmatpush2.msra.mxu0 0.0
    %5058 = vmatprep.subr.mxu0 0.0
    %5059 = vmatpush2.msra.mxu0 0.0
    %5060 = vmatprep.subr.mxu0 0.0
    %5061 = vmatpush2.msra.mxu0 0.0
    %5062 = vmatprep.subr.mxu0 0.0
    %5063 = vmatpush2.msra.mxu0 0.0
    %5064 = vmatprep.subr.mxu0 0.0
    %5065 = vmatpush2.msra.mxu0 0.0
    %5066 = vmatprep.mubr.f32.mxu0 0.0
    %5067 = vmatmul.mubr.f32.gmra.mxu0 %v5000
    %v5068 = vpop.f32.mrf.mxu0
    %v5069 = vadd.f32 0.0, %v5068
    %v5070 = vpop.f32.mrf.mxu0
    %5071 = vdwg.mxu0
    %v5072 = vadd.f32 %v4368, %v5069
    %v5073 = vxor.u32 %v5072, 2147483648
    %v5074 = vmul.f32 %v5073, 1.442695
    %v5075 = vpow.pop %v5074
    %v5076 = vadd.f32 %v5075, 1.0
    %v5077 = vrcp.pop %v5076
    %v5078 = vmul.f32 1.0, %v5077
    %v5079 = vtanh.pop %v5072
    %v5081 = vrot.slane %v4989, 4
    %v5083 = vmul.f32 %v5078, %v5081
    %5085 = vrot.lane.b32.xlu0 %v5079, 64
    %v5086 = vpop.permute.xlu0 %5085
    %v5088 = vmul.f32 %v5078, %v5086
    %5090 = vrot.lane.b32.xlu0 %v5088, 32
    %v5091 = vpop.permute.xlu0 %5090
    %v5093 = vadd.f32 %v5083, %v5091
    %v5094 = vtanh.pop %v5093
    %5096 = vrot.lane.b32.xlu0 %v5094, 64
    %v5097 = vpop.permute.xlu0 %5096
    %v5099 = vmul.f32 %v5078, %v5097
    %5101 = vrot.lane.b32.xlu0 %v5099, 32
    %v5102 = vpop.permute.xlu0 %5101
    %v5103 = vsel %vm310, %v5102, 0
    %5105 = vmatprep.subr.mxu0 0.0
    %5106 = vmatpush1.msra.mxu0 0.0
    %5107 = vmatprep.subr.mxu0 0.0
    %5108 = vmatpush1.msra.mxu0 0.0
    %5109 = vmatprep.subr.mxu0 0.0
    %5110 = vmatpush1.msra.mxu0 0.0
    %5111 = vmatprep.subr.mxu0 0.0
    %5112 = vmatpush1.msra.mxu0 0.0
    %5113 = vmatprep.subr.mxu0 0.0
    %5114 = vmatpush1.msra.mxu0 0.0
    %5115 = vmatprep.subr.mxu0 0.0
    %5116 = vmatpush1.msra.mxu0 0.0
    %5117 = vmatprep.subr.mxu0 0.0
    %5118 = vmatpush1.msra.mxu0 0.0
    %5119 = vmatprep.subr.mxu0 0.0
    %5120 = vmatpush1.msra.mxu0 0.0
    %5121 = vmatprep.subr.mxu0 0.0
    %5122 = vmatpush1.msra.mxu0 0.0
    %5123 = vmatprep.subr.mxu0 0.0
    %5124 = vmatpush1.msra.mxu0 0.0
    %5125 = vmatprep.subr.mxu0 0.0
    %5126 = vmatpush1.msra.mxu0 0.0
    %5127 = vmatprep.subr.mxu0 0.0
    %5128 = vmatpush1.msra.mxu0 0.0
    %5129 = vmatprep.subr.mxu0 0.0
    %5130 = vmatpush1.msra.mxu0 %v4374
    %5131 = vmatprep.subr.mxu0 0.0
    %5132 = vmatpush1.msra.mxu0 %v4373
    %5133 = vmatprep.subr.mxu0 0.0
    %5134 = vmatpush1.msra.mxu0 %v4372
    %5135 = vmatprep.subr.mxu0 0.0
    %5136 = vmatpush1.msra.mxu0 %v4371
    %5137 = vmatprep.subr.mxu0 0.0
    %5138 = vmatpush2.msra.mxu0 0.0
    %5139 = vmatprep.subr.mxu0 0.0
    %5140 = vmatpush2.msra.mxu0 0.0
    %5141 = vmatprep.subr.mxu0 0.0
    %5142 = vmatpush2.msra.mxu0 0.0
    %5143 = vmatprep.subr.mxu0 0.0
    %5144 = vmatpush2.msra.mxu0 0.0
    %5145 = vmatprep.subr.mxu0 0.0
    %5146 = vmatpush2.msra.mxu0 0.0
    %5147 = vmatprep.subr.mxu0 0.0
    %5148 = vmatpush2.msra.mxu0 0.0
    %5149 = vmatprep.subr.mxu0 0.0
    %5150 = vmatpush2.msra.mxu0 0.0
    %5151 = vmatprep.subr.mxu0 0.0
    %5152 = vmatpush2.msra.mxu0 0.0
    %5153 = vmatprep.subr.mxu0 0.0
    %5154 = vmatpush2.msra.mxu0 0.0
    %5155 = vmatprep.subr.mxu0 0.0
    %5156 = vmatpush2.msra.mxu0 0.0
    %5157 = vmatprep.subr.mxu0 0.0
    %5158 = vmatpush2.msra.mxu0 0.0
    %5159 = vmatprep.subr.mxu0 0.0
    %5160 = vmatpush2.msra.mxu0 0.0
    %5161 = vmatprep.subr.mxu0 0.0
    %5162 = vmatpush2.msra.mxu0 0.0
    %5163 = vmatprep.subr.mxu0 0.0
    %5164 = vmatpush2.msra.mxu0 0.0
    %5165 = vmatprep.subr.mxu0 0.0
    %5166 = vmatpush2.msra.mxu0 0.0
    %5167 = vmatprep.subr.mxu0 0.0
    %5168 = vmatpush2.msra.mxu0 0.0
    %5169 = vmatprep.mubr.f32.mxu0 0.0
    %5170 = vmatmul.mubr.f32.gmra.mxu0 %v5103
    %v5171 = vpop.f32.mrf.mxu0
    %v5172 = vadd.f32 0.0, %v5171
    %v5173 = vpop.f32.mrf.mxu0
    %5174 = vdwg.mxu0
    %v5176 = vrot.slane %v5172, 4
    %v5178 = vadd.f32 %v4368, %v5176
    %v5179 = vxor.u32 %v5178, 2147483648
    %v5180 = vmul.f32 %v5179, 1.442695
    %v5181 = vpow.pop %v5180
    %v5182 = vadd.f32 %v5181, 1.0
    %v5183 = vrcp.pop %v5182
    %v5184 = vmul.f32 1.0, %v5183
    %v5185 = vtanh.pop %v5178
    %v5187 = vrot.slane %v5093, 4
    %v5189 = vmul.f32 %v5184, %v5187
    %5191 = vrot.lane.b32.xlu0 %v5185, 64
    %v5192 = vpop.permute.xlu0 %5191
    %v5194 = vmul.f32 %v5184, %v5192
    %5196 = vrot.lane.b32.xlu0 %v5194, 32
    %v5197 = vpop.permute.xlu0 %5196
    %v5199 = vadd.f32 %v5189, %v5197
    %v5200 = vtanh.pop %v5199
    %5202 = vrot.lane.b32.xlu0 %v5200, 64
    %v5203 = vpop.permute.xlu0 %5202
    %v5205 = vmul.f32 %v5184, %v5203
    %v5206 = vld [vmem:[%s17] sm:$0xff]
    %v5207 = vld [vmem:[%s17 + $0x8] sm:$0xff]
    %v5208 = vld [vmem:[%s17 + $0x10] sm:$0xff]
    %v5209 = vld [vmem:[%s17 + $0x18] sm:$0xff]
    %v5210 = vld [vmem:[%s17 + $0x20] sm:$0xff]
    %v5211 = vld [vmem:[%s17 + $0x28] sm:$0xff]
    %v5212 = vld [vmem:[%s17 + $0x30] sm:$0xff]
    %v5213 = vld [vmem:[%s17 + $0x38] sm:$0xff]
    %v5214 = vld [vmem:[%s19] sm:$0x1]
    %v5216 = vlaneseq
    %v5217 = vshrl.u32 %v5216, 7
    %v5218 = vsub.s32 0, %v5217
    %v5219 = vrot.slane %v5214, %v5218
    %5221 = vmatprep.subr.mxu0 0.0
    %5222 = vmatpush1.msra.mxu0 0.0
    %5223 = vmatprep.subr.mxu0 0.0
    %5224 = vmatpush1.msra.mxu0 0.0
    %5225 = vmatprep.subr.mxu0 0.0
    %5226 = vmatpush1.msra.mxu0 0.0
    %5227 = vmatprep.subr.mxu0 0.0
    %5228 = vmatpush1.msra.mxu0 0.0
    %5229 = vmatprep.subr.mxu0 0.0
    %5230 = vmatpush1.msra.mxu0 0.0
    %5231 = vmatprep.subr.mxu0 0.0
    %5232 = vmatpush1.msra.mxu0 0.0
    %5233 = vmatprep.subr.mxu0 0.0
    %5234 = vmatpush1.msra.mxu0 0.0
    %5235 = vmatprep.subr.mxu0 0.0
    %5236 = vmatpush1.msra.mxu0 0.0
    %5237 = vmatprep.subr.mxu0 0.0
    %5238 = vmatpush1.msra.mxu0 %v5213
    %5239 = vmatprep.subr.mxu0 0.0
    %5240 = vmatpush1.msra.mxu0 %v5212
    %5241 = vmatprep.subr.mxu0 0.0
    %5242 = vmatpush1.msra.mxu0 %v5211
    %5243 = vmatprep.subr.mxu0 0.0
    %5244 = vmatpush1.msra.mxu0 %v5210
    %5245 = vmatprep.subr.mxu0 0.0
    %5246 = vmatpush1.msra.mxu0 %v5209
    %5247 = vmatprep.subr.mxu0 0.0
    %5248 = vmatpush1.msra.mxu0 %v5208
    %5249 = vmatprep.subr.mxu0 0.0
    %5250 = vmatpush1.msra.mxu0 %v5207
    %5251 = vmatprep.subr.mxu0 0.0
    %5252 = vmatpush1.msra.mxu0 %v5206
    %5253 = vmatprep.subr.mxu0 0.0
    %5254 = vmatpush2.msra.mxu0 0.0
    %5255 = vmatprep.subr.mxu0 0.0
    %5256 = vmatpush2.msra.mxu0 0.0
    %5257 = vmatprep.subr.mxu0 0.0
    %5258 = vmatpush2.msra.mxu0 0.0
    %5259 = vmatprep.subr.mxu0 0.0
    %5260 = vmatpush2.msra.mxu0 0.0
    %5261 = vmatprep.subr.mxu0 0.0
    %5262 = vmatpush2.msra.mxu0 0.0
    %5263 = vmatprep.subr.mxu0 0.0
    %5264 = vmatpush2.msra.mxu0 0.0
    %5265 = vmatprep.subr.mxu0 0.0
    %5266 = vmatpush2.msra.mxu0 0.0
    %5267 = vmatprep.subr.mxu0 0.0
    %5268 = vmatpush2.msra.mxu0 0.0
    %5269 = vmatprep.subr.mxu0 0.0
    %5270 = vmatpush2.msra.mxu0 0.0
    %5271 = vmatprep.subr.mxu0 0.0
    %5272 = vmatpush2.msra.mxu0 0.0
    %5273 = vmatprep.subr.mxu0 0.0
    %5274 = vmatpush2.msra.mxu0 0.0
    %5275 = vmatprep.subr.mxu0 0.0
    %5276 = vmatpush2.msra.mxu0 0.0
    %5277 = vmatprep.subr.mxu0 0.0
    %5278 = vmatpush2.msra.mxu0 0.0
    %5279 = vmatprep.subr.mxu0 0.0
    %5280 = vmatpush2.msra.mxu0 0.0
    %5281 = vmatprep.subr.mxu0 0.0
    %5282 = vmatpush2.msra.mxu0 0.0
    %5283 = vmatprep.subr.mxu0 0.0
    %5284 = vmatpush2.msra.mxu0 0.0
    %5285 = vmatprep.mubr.f32.mxu0 0.0
    %5286 = vmatmul.mubr.f32.gmra.mxu0 %v4275
    %v5287 = vpop.f32.mrf.mxu0
    %v5288 = vadd.f32 %v5219, %v5287
    %v5289 = vpop.f32.mrf.mxu0
    %5290 = vmatprep.mubr.f32.mxu0 0.0
    %5291 = vmatmul.mubr.f32.gmra.mxu0 %v4278
    %v5292 = vpop.f32.mrf.mxu0
    %v5293 = vadd.f32 %v5219, %v5292
    %v5294 = vpop.f32.mrf.mxu0
    %5295 = vmatprep.mubr.f32.mxu0 0.0
    %5296 = vmatmul.mubr.f32.gmra.mxu0 %v4281
    %v5297 = vpop.f32.mrf.mxu0
    %v5298 = vadd.f32 %v5219, %v5297
    %v5299 = vpop.f32.mrf.mxu0
    %5300 = vmatprep.mubr.f32.mxu0 0.0
    %5301 = vmatmul.mubr.f32.gmra.mxu0 %v4284
    %v5302 = vpop.f32.mrf.mxu0
    %v5303 = vadd.f32 %v5219, %v5302
    %v5304 = vpop.f32.mrf.mxu0
    %5305 = vdwg.mxu0
    %v5306 = vld [vmem:[#allocation24] sm:$0xff]
    %v5307 = vld [vmem:[#allocation24 + $0x8] sm:$0xff]
    %v5308 = vld [vmem:[#allocation24 + $0x10] sm:$0xff]
    %v5309 = vld [vmem:[#allocation24 + $0x18] sm:$0xff]
    %5310 = vmatprep.subr.mxu0 0.0
    %5311 = vmatpush1.msra.mxu0 0.0
    %5312 = vmatprep.subr.mxu0 0.0
    %5313 = vmatpush1.msra.mxu0 0.0
    %5314 = vmatprep.subr.mxu0 0.0
    %5315 = vmatpush1.msra.mxu0 0.0
    %5316 = vmatprep.subr.mxu0 0.0
    %5317 = vmatpush1.msra.mxu0 0.0
    %5318 = vmatprep.subr.mxu0 0.0
    %5319 = vmatpush1.msra.mxu0 0.0
    %5320 = vmatprep.subr.mxu0 0.0
    %5321 = vmatpush1.msra.mxu0 0.0
    %5322 = vmatprep.subr.mxu0 0.0
    %5323 = vmatpush1.msra.mxu0 0.0
    %5324 = vmatprep.subr.mxu0 0.0
    %5325 = vmatpush1.msra.mxu0 0.0
    %5326 = vmatprep.subr.mxu0 0.0
    %5327 = vmatpush1.msra.mxu0 0.0
    %5328 = vmatprep.subr.mxu0 0.0
    %5329 = vmatpush1.msra.mxu0 0.0
    %5330 = vmatprep.subr.mxu0 0.0
    %5331 = vmatpush1.msra.mxu0 0.0
    %5332 = vmatprep.subr.mxu0 0.0
    %5333 = vmatpush1.msra.mxu0 0.0
    %5334 = vmatprep.subr.mxu0 0.0
    %5335 = vmatpush1.msra.mxu0 %v5309
    %5336 = vmatprep.subr.mxu0 0.0
    %5337 = vmatpush1.msra.mxu0 %v5308
    %5338 = vmatprep.subr.mxu0 0.0
    %5339 = vmatpush1.msra.mxu0 %v5307
    %5340 = vmatprep.subr.mxu0 0.0
    %5341 = vmatpush1.msra.mxu0 %v5306
    %5342 = vmatprep.subr.mxu0 0.0
    %5343 = vmatpush2.msra.mxu0 0.0
    %5344 = vmatprep.subr.mxu0 0.0
    %5345 = vmatpush2.msra.mxu0 0.0
    %5346 = vmatprep.subr.mxu0 0.0
    %5347 = vmatpush2.msra.mxu0 0.0
    %5348 = vmatprep.subr.mxu0 0.0
    %5349 = vmatpush2.msra.mxu0 0.0
    %5350 = vmatprep.subr.mxu0 0.0
    %5351 = vmatpush2.msra.mxu0 0.0
    %5352 = vmatprep.subr.mxu0 0.0
    %5353 = vmatpush2.msra.mxu0 0.0
    %5354 = vmatprep.subr.mxu0 0.0
    %5355 = vmatpush2.msra.mxu0 0.0
    %5356 = vmatprep.subr.mxu0 0.0
    %5357 = vmatpush2.msra.mxu0 0.0
    %5358 = vmatprep.subr.mxu0 0.0
    %5359 = vmatpush2.msra.mxu0 0.0
    %5360 = vmatprep.subr.mxu0 0.0
    %5361 = vmatpush2.msra.mxu0 0.0
    %5362 = vmatprep.subr.mxu0 0.0
    %5363 = vmatpush2.msra.mxu0 0.0
    %5364 = vmatprep.subr.mxu0 0.0
    %5365 = vmatpush2.msra.mxu0 0.0
    %5366 = vmatprep.subr.mxu0 0.0
    %5367 = vmatpush2.msra.mxu0 0.0
    %5368 = vmatprep.subr.mxu0 0.0
    %5369 = vmatpush2.msra.mxu0 0.0
    %5370 = vmatprep.subr.mxu0 0.0
    %5371 = vmatpush2.msra.mxu0 0.0
    %5372 = vmatprep.subr.mxu0 0.0
    %5373 = vmatpush2.msra.mxu0 0.0
    %5374 = vmatprep.mubr.f32.mxu0 0.0
    %5375 = vmatmul.mubr.f32.gmra.mxu0 %v521
    %v5376 = vpop.f32.mrf.mxu0
    %v5377 = vadd.f32 0.0, %v5376
    %v5378 = vpop.f32.mrf.mxu0
    %5379 = vdwg.mxu0
    %v5381 = vrot.slane %v5377, 4
    %v5383 = vadd.f32 %v5303, %v5381
    %v5384 = vxor.u32 %v5383, 2147483648
    %v5385 = vmul.f32 %v5384, 1.442695
    %v5386 = vpow.pop %v5385
    %v5387 = vadd.f32 %v5386, 1.0
    %v5388 = vrcp.pop %v5387
    %v5389 = vmul.f32 1.0, %v5388
    %v5390 = vtanh.pop %v5383
    %v5391 = vmul.f32 %v5389, 0.0
    %5393 = vrot.lane.b32.xlu0 %v5390, 64
    %v5394 = vpop.permute.xlu0 %5393
    %v5396 = vmul.f32 %v5389, %v5394
    %5398 = vrot.lane.b32.xlu0 %v5396, 32
    %v5399 = vpop.permute.xlu0 %5398
    %v5401 = vadd.f32 %v5391, %v5399
    %v5402 = vtanh.pop %v5401
    %5404 = vrot.lane.b32.xlu0 %v5402, 64
    %v5405 = vpop.permute.xlu0 %5404
    %v5407 = vmul.f32 %v5389, %v5405
    %v5409 = vrot.slane %v5407, 4
    %5410 = vrot.lane.b32.xlu0 %v5409, 32
    %v5411 = vpop.permute.xlu0 %5410
    %v5412 = vsel %vm310, %v5411, 0
    %5414 = vmatprep.subr.mxu0 0.0
    %5415 = vmatpush1.msra.mxu0 0.0
    %5416 = vmatprep.subr.mxu0 0.0
    %5417 = vmatpush1.msra.mxu0 0.0
    %5418 = vmatprep.subr.mxu0 0.0
    %5419 = vmatpush1.msra.mxu0 0.0
    %5420 = vmatprep.subr.mxu0 0.0
    %5421 = vmatpush1.msra.mxu0 0.0
    %5422 = vmatprep.subr.mxu0 0.0
    %5423 = vmatpush1.msra.mxu0 0.0
    %5424 = vmatprep.subr.mxu0 0.0
    %5425 = vmatpush1.msra.mxu0 0.0
    %5426 = vmatprep.subr.mxu0 0.0
    %5427 = vmatpush1.msra.mxu0 0.0
    %5428 = vmatprep.subr.mxu0 0.0
    %5429 = vmatpush1.msra.mxu0 0.0
    %5430 = vmatprep.subr.mxu0 0.0
    %5431 = vmatpush1.msra.mxu0 0.0
    %5432 = vmatprep.subr.mxu0 0.0
    %5433 = vmatpush1.msra.mxu0 0.0
    %5434 = vmatprep.subr.mxu0 0.0
    %5435 = vmatpush1.msra.mxu0 0.0
    %5436 = vmatprep.subr.mxu0 0.0
    %5437 = vmatpush1.msra.mxu0 0.0
    %5438 = vmatprep.subr.mxu0 0.0
    %5439 = vmatpush1.msra.mxu0 %v5309
    %5440 = vmatprep.subr.mxu0 0.0
    %5441 = vmatpush1.msra.mxu0 %v5308
    %5442 = vmatprep.subr.mxu0 0.0
    %5443 = vmatpush1.msra.mxu0 %v5307
    %5444 = vmatprep.subr.mxu0 0.0
    %5445 = vmatpush1.msra.mxu0 %v5306
    %5446 = vmatprep.subr.mxu0 0.0
    %5447 = vmatpush2.msra.mxu0 0.0
    %5448 = vmatprep.subr.mxu0 0.0
    %5449 = vmatpush2.msra.mxu0 0.0
    %5450 = vmatprep.subr.mxu0 0.0
    %5451 = vmatpush2.msra.mxu0 0.0
    %5452 = vmatprep.subr.mxu0 0.0
    %5453 = vmatpush2.msra.mxu0 0.0
    %5454 = vmatprep.subr.mxu0 0.0
    %5455 = vmatpush2.msra.mxu0 0.0
    %5456 = vmatprep.subr.mxu0 0.0
    %5457 = vmatpush2.msra.mxu0 0.0
    %5458 = vmatprep.subr.mxu0 0.0
    %5459 = vmatpush2.msra.mxu0 0.0
    %5460 = vmatprep.subr.mxu0 0.0
    %5461 = vmatpush2.msra.mxu0 0.0
    %5462 = vmatprep.subr.mxu0 0.0
    %5463 = vmatpush2.msra.mxu0 0.0
    %5464 = vmatprep.subr.mxu0 0.0
    %5465 = vmatpush2.msra.mxu0 0.0
    %5466 = vmatprep.subr.mxu0 0.0
    %5467 = vmatpush2.msra.mxu0 0.0
    %5468 = vmatprep.subr.mxu0 0.0
    %5469 = vmatpush2.msra.mxu0 0.0
    %5470 = vmatprep.subr.mxu0 0.0
    %5471 = vmatpush2.msra.mxu0 0.0
    %5472 = vmatprep.subr.mxu0 0.0
    %5473 = vmatpush2.msra.mxu0 0.0
    %5474 = vmatprep.subr.mxu0 0.0
    %5475 = vmatpush2.msra.mxu0 0.0
    %5476 = vmatprep.subr.mxu0 0.0
    %5477 = vmatpush2.msra.mxu0 0.0
    %5478 = vmatprep.mubr.f32.mxu0 0.0
    %5479 = vmatmul.mubr.f32.gmra.mxu0 %v5412
    %v5480 = vpop.f32.mrf.mxu0
    %v5481 = vadd.f32 0.0, %v5480
    %v5482 = vpop.f32.mrf.mxu0
    %5483 = vdwg.mxu0
    %v5484 = vadd.f32 %v5303, %v5481
    %v5485 = vxor.u32 %v5484, 2147483648
    %v5486 = vmul.f32 %v5485, 1.442695
    %v5487 = vpow.pop %v5486
    %v5488 = vadd.f32 %v5487, 1.0
    %v5489 = vrcp.pop %v5488
    %v5490 = vmul.f32 1.0, %v5489
    %v5491 = vtanh.pop %v5484
    %v5493 = vrot.slane %v5401, 4
    %v5495 = vmul.f32 %v5490, %v5493
    %5497 = vrot.lane.b32.xlu0 %v5491, 64
    %v5498 = vpop.permute.xlu0 %5497
    %v5500 = vmul.f32 %v5490, %v5498
    %5502 = vrot.lane.b32.xlu0 %v5500, 32
    %v5503 = vpop.permute.xlu0 %5502
    %v5505 = vadd.f32 %v5495, %v5503
    %v5506 = vtanh.pop %v5505
    %5508 = vrot.lane.b32.xlu0 %v5506, 64
    %v5509 = vpop.permute.xlu0 %5508
    %v5511 = vmul.f32 %v5490, %v5509
    %5513 = vrot.lane.b32.xlu0 %v5511, 32
    %v5514 = vpop.permute.xlu0 %5513
    %v5515 = vsel %vm310, %v5514, 0
    %5517 = vmatprep.subr.mxu0 0.0
    %5518 = vmatpush1.msra.mxu0 0.0
    %5519 = vmatprep.subr.mxu0 0.0
    %5520 = vmatpush1.msra.mxu0 0.0
    %5521 = vmatprep.subr.mxu0 0.0
    %5522 = vmatpush1.msra.mxu0 0.0
    %5523 = vmatprep.subr.mxu0 0.0
    %5524 = vmatpush1.msra.mxu0 0.0
    %5525 = vmatprep.subr.mxu0 0.0
    %5526 = vmatpush1.msra.mxu0 0.0
    %5527 = vmatprep.subr.mxu0 0.0
    %5528 = vmatpush1.msra.mxu0 0.0
    %5529 = vmatprep.subr.mxu0 0.0
    %5530 = vmatpush1.msra.mxu0 0.0
    %5531 = vmatprep.subr.mxu0 0.0
    %5532 = vmatpush1.msra.mxu0 0.0
    %5533 = vmatprep.subr.mxu0 0.0
    %5534 = vmatpush1.msra.mxu0 0.0
    %5535 = vmatprep.subr.mxu0 0.0
    %5536 = vmatpush1.msra.mxu0 0.0
    %5537 = vmatprep.subr.mxu0 0.0
    %5538 = vmatpush1.msra.mxu0 0.0
    %5539 = vmatprep.subr.mxu0 0.0
    %5540 = vmatpush1.msra.mxu0 0.0
    %5541 = vmatprep.subr.mxu0 0.0
    %5542 = vmatpush1.msra.mxu0 %v5309
    %5543 = vmatprep.subr.mxu0 0.0
    %5544 = vmatpush1.msra.mxu0 %v5308
    %5545 = vmatprep.subr.mxu0 0.0
    %5546 = vmatpush1.msra.mxu0 %v5307
    %5547 = vmatprep.subr.mxu0 0.0
    %5548 = vmatpush1.msra.mxu0 %v5306
    %5549 = vmatprep.subr.mxu0 0.0
    %5550 = vmatpush2.msra.mxu0 0.0
    %5551 = vmatprep.subr.mxu0 0.0
    %5552 = vmatpush2.msra.mxu0 0.0
    %5553 = vmatprep.subr.mxu0 0.0
    %5554 = vmatpush2.msra.mxu0 0.0
    %5555 = vmatprep.subr.mxu0 0.0
    %5556 = vmatpush2.msra.mxu0 0.0
    %5557 = vmatprep.subr.mxu0 0.0
    %5558 = vmatpush2.msra.mxu0 0.0
    %5559 = vmatprep.subr.mxu0 0.0
    %5560 = vmatpush2.msra.mxu0 0.0
    %5561 = vmatprep.subr.mxu0 0.0
    %5562 = vmatpush2.msra.mxu0 0.0
    %5563 = vmatprep.subr.mxu0 0.0
    %5564 = vmatpush2.msra.mxu0 0.0
    %5565 = vmatprep.subr.mxu0 0.0
    %5566 = vmatpush2.msra.mxu0 0.0
    %5567 = vmatprep.subr.mxu0 0.0
    %5568 = vmatpush2.msra.mxu0 0.0
    %5569 = vmatprep.subr.mxu0 0.0
    %5570 = vmatpush2.msra.mxu0 0.0
    %5571 = vmatprep.subr.mxu0 0.0
    %5572 = vmatpush2.msra.mxu0 0.0
    %5573 = vmatprep.subr.mxu0 0.0
    %5574 = vmatpush2.msra.mxu0 0.0
    %5575 = vmatprep.subr.mxu0 0.0
    %5576 = vmatpush2.msra.mxu0 0.0
    %5577 = vmatprep.subr.mxu0 0.0
    %5578 = vmatpush2.msra.mxu0 0.0
    %5579 = vmatprep.subr.mxu0 0.0
    %5580 = vmatpush2.msra.mxu0 0.0
    %5581 = vmatprep.mubr.f32.mxu0 0.0
    %5582 = vmatmul.mubr.f32.gmra.mxu0 %v5515
    %v5583 = vpop.f32.mrf.mxu0
    %v5584 = vadd.f32 0.0, %v5583
    %v5585 = vpop.f32.mrf.mxu0
    %5586 = vdwg.mxu0
    %v5588 = vrot.slane %v5584, 4
    %v5590 = vadd.f32 %v5298, %v5588
    %v5591 = vxor.u32 %v5590, 2147483648
    %v5592 = vmul.f32 %v5591, 1.442695
    %v5593 = vpow.pop %v5592
    %v5594 = vadd.f32 %v5593, 1.0
    %v5595 = vrcp.pop %v5594
    %v5596 = vmul.f32 1.0, %v5595
    %v5597 = vtanh.pop %v5590
    %v5599 = vrot.slane %v5505, 4
    %v5601 = vmul.f32 %v5596, %v5599
    %5603 = vrot.lane.b32.xlu0 %v5597, 64
    %v5604 = vpop.permute.xlu0 %5603
    %v5606 = vmul.f32 %v5596, %v5604
    %5608 = vrot.lane.b32.xlu0 %v5606, 32
    %v5609 = vpop.permute.xlu0 %5608
    %v5611 = vadd.f32 %v5601, %v5609
    %v5612 = vtanh.pop %v5611
    %5614 = vrot.lane.b32.xlu0 %v5612, 64
    %v5615 = vpop.permute.xlu0 %5614
    %v5617 = vmul.f32 %v5596, %v5615
    %v5619 = vrot.slane %v5617, 4
    %5620 = vrot.lane.b32.xlu0 %v5619, 32
    %v5621 = vpop.permute.xlu0 %5620
    %v5622 = vsel %vm310, %v5621, 0
    %5624 = vmatprep.subr.mxu0 0.0
    %5625 = vmatpush1.msra.mxu0 0.0
    %5626 = vmatprep.subr.mxu0 0.0
    %5627 = vmatpush1.msra.mxu0 0.0
    %5628 = vmatprep.subr.mxu0 0.0
    %5629 = vmatpush1.msra.mxu0 0.0
    %5630 = vmatprep.subr.mxu0 0.0
    %5631 = vmatpush1.msra.mxu0 0.0
    %5632 = vmatprep.subr.mxu0 0.0
    %5633 = vmatpush1.msra.mxu0 0.0
    %5634 = vmatprep.subr.mxu0 0.0
    %5635 = vmatpush1.msra.mxu0 0.0
    %5636 = vmatprep.subr.mxu0 0.0
    %5637 = vmatpush1.msra.mxu0 0.0
    %5638 = vmatprep.subr.mxu0 0.0
    %5639 = vmatpush1.msra.mxu0 0.0
    %5640 = vmatprep.subr.mxu0 0.0
    %5641 = vmatpush1.msra.mxu0 0.0
    %5642 = vmatprep.subr.mxu0 0.0
    %5643 = vmatpush1.msra.mxu0 0.0
    %5644 = vmatprep.subr.mxu0 0.0
    %5645 = vmatpush1.msra.mxu0 0.0
    %5646 = vmatprep.subr.mxu0 0.0
    %5647 = vmatpush1.msra.mxu0 0.0
    %5648 = vmatprep.subr.mxu0 0.0
    %5649 = vmatpush1.msra.mxu0 %v5309
    %5650 = vmatprep.subr.mxu0 0.0
    %5651 = vmatpush1.msra.mxu0 %v5308
    %5652 = vmatprep.subr.mxu0 0.0
    %5653 = vmatpush1.msra.mxu0 %v5307
    %5654 = vmatprep.subr.mxu0 0.0
    %5655 = vmatpush1.msra.mxu0 %v5306
    %5656 = vmatprep.subr.mxu0 0.0
    %5657 = vmatpush2.msra.mxu0 0.0
    %5658 = vmatprep.subr.mxu0 0.0
    %5659 = vmatpush2.msra.mxu0 0.0
    %5660 = vmatprep.subr.mxu0 0.0
    %5661 = vmatpush2.msra.mxu0 0.0
    %5662 = vmatprep.subr.mxu0 0.0
    %5663 = vmatpush2.msra.mxu0 0.0
    %5664 = vmatprep.subr.mxu0 0.0
    %5665 = vmatpush2.msra.mxu0 0.0
    %5666 = vmatprep.subr.mxu0 0.0
    %5667 = vmatpush2.msra.mxu0 0.0
    %5668 = vmatprep.subr.mxu0 0.0
    %5669 = vmatpush2.msra.mxu0 0.0
    %5670 = vmatprep.subr.mxu0 0.0
    %5671 = vmatpush2.msra.mxu0 0.0
    %5672 = vmatprep.subr.mxu0 0.0
    %5673 = vmatpush2.msra.mxu0 0.0
    %5674 = vmatprep.subr.mxu0 0.0
    %5675 = vmatpush2.msra.mxu0 0.0
    %5676 = vmatprep.subr.mxu0 0.0
    %5677 = vmatpush2.msra.mxu0 0.0
    %5678 = vmatprep.subr.mxu0 0.0
    %5679 = vmatpush2.msra.mxu0 0.0
    %5680 = vmatprep.subr.mxu0 0.0
    %5681 = vmatpush2.msra.mxu0 0.0
    %5682 = vmatprep.subr.mxu0 0.0
    %5683 = vmatpush2.msra.mxu0 0.0
    %5684 = vmatprep.subr.mxu0 0.0
    %5685 = vmatpush2.msra.mxu0 0.0
    %5686 = vmatprep.subr.mxu0 0.0
    %5687 = vmatpush2.msra.mxu0 0.0
    %5688 = vmatprep.mubr.f32.mxu0 0.0
    %5689 = vmatmul.mubr.f32.gmra.mxu0 %v5622
    %v5690 = vpop.f32.mrf.mxu0
    %v5691 = vadd.f32 0.0, %v5690
    %v5692 = vpop.f32.mrf.mxu0
    %5693 = vdwg.mxu0
    %v5694 = vadd.f32 %v5298, %v5691
    %v5695 = vxor.u32 %v5694, 2147483648
    %v5696 = vmul.f32 %v5695, 1.442695
    %v5697 = vpow.pop %v5696
    %v5698 = vadd.f32 %v5697, 1.0
    %v5699 = vrcp.pop %v5698
    %v5700 = vmul.f32 1.0, %v5699
    %v5701 = vtanh.pop %v5694
    %v5703 = vrot.slane %v5611, 4
    %v5705 = vmul.f32 %v5700, %v5703
    %5707 = vrot.lane.b32.xlu0 %v5701, 64
    %v5708 = vpop.permute.xlu0 %5707
    %v5710 = vmul.f32 %v5700, %v5708
    %5712 = vrot.lane.b32.xlu0 %v5710, 32
    %v5713 = vpop.permute.xlu0 %5712
    %v5715 = vadd.f32 %v5705, %v5713
    %v5716 = vtanh.pop %v5715
    %5718 = vrot.lane.b32.xlu0 %v5716, 64
    %v5719 = vpop.permute.xlu0 %5718
    %v5721 = vmul.f32 %v5700, %v5719
    %5723 = vrot.lane.b32.xlu0 %v5721, 32
    %v5724 = vpop.permute.xlu0 %5723
    %v5725 = vsel %vm310, %v5724, 0
    %5727 = vmatprep.subr.mxu0 0.0
    %5728 = vmatpush1.msra.mxu0 0.0
    %5729 = vmatprep.subr.mxu0 0.0
    %5730 = vmatpush1.msra.mxu0 0.0
    %5731 = vmatprep.subr.mxu0 0.0
    %5732 = vmatpush1.msra.mxu0 0.0
    %5733 = vmatprep.subr.mxu0 0.0
    %5734 = vmatpush1.msra.mxu0 0.0
    %5735 = vmatprep.subr.mxu0 0.0
    %5736 = vmatpush1.msra.mxu0 0.0
    %5737 = vmatprep.subr.mxu0 0.0
    %5738 = vmatpush1.msra.mxu0 0.0
    %5739 = vmatprep.subr.mxu0 0.0
    %5740 = vmatpush1.msra.mxu0 0.0
    %5741 = vmatprep.subr.mxu0 0.0
    %5742 = vmatpush1.msra.mxu0 0.0
    %5743 = vmatprep.subr.mxu0 0.0
    %5744 = vmatpush1.msra.mxu0 0.0
    %5745 = vmatprep.subr.mxu0 0.0
    %5746 = vmatpush1.msra.mxu0 0.0
    %5747 = vmatprep.subr.mxu0 0.0
    %5748 = vmatpush1.msra.mxu0 0.0
    %5749 = vmatprep.subr.mxu0 0.0
    %5750 = vmatpush1.msra.mxu0 0.0
    %5751 = vmatprep.subr.mxu0 0.0
    %5752 = vmatpush1.msra.mxu0 %v5309
    %5753 = vmatprep.subr.mxu0 0.0
    %5754 = vmatpush1.msra.mxu0 %v5308
    %5755 = vmatprep.subr.mxu0 0.0
    %5756 = vmatpush1.msra.mxu0 %v5307
    %5757 = vmatprep.subr.mxu0 0.0
    %5758 = vmatpush1.msra.mxu0 %v5306
    %5759 = vmatprep.subr.mxu0 0.0
    %5760 = vmatpush2.msra.mxu0 0.0
    %5761 = vmatprep.subr.mxu0 0.0
    %5762 = vmatpush2.msra.mxu0 0.0
    %5763 = vmatprep.subr.mxu0 0.0
    %5764 = vmatpush2.msra.mxu0 0.0
    %5765 = vmatprep.subr.mxu0 0.0
    %5766 = vmatpush2.msra.mxu0 0.0
    %5767 = vmatprep.subr.mxu0 0.0
    %5768 = vmatpush2.msra.mxu0 0.0
    %5769 = vmatprep.subr.mxu0 0.0
    %5770 = vmatpush2.msra.mxu0 0.0
    %5771 = vmatprep.subr.mxu0 0.0
    %5772 = vmatpush2.msra.mxu0 0.0
    %5773 = vmatprep.subr.mxu0 0.0
    %5774 = vmatpush2.msra.mxu0 0.0
    %5775 = vmatprep.subr.mxu0 0.0
    %5776 = vmatpush2.msra.mxu0 0.0
    %5777 = vmatprep.subr.mxu0 0.0
    %5778 = vmatpush2.msra.mxu0 0.0
    %5779 = vmatprep.subr.mxu0 0.0
    %5780 = vmatpush2.msra.mxu0 0.0
    %5781 = vmatprep.subr.mxu0 0.0
    %5782 = vmatpush2.msra.mxu0 0.0
    %5783 = vmatprep.subr.mxu0 0.0
    %5784 = vmatpush2.msra.mxu0 0.0
    %5785 = vmatprep.subr.mxu0 0.0
    %5786 = vmatpush2.msra.mxu0 0.0
    %5787 = vmatprep.subr.mxu0 0.0
    %5788 = vmatpush2.msra.mxu0 0.0
    %5789 = vmatprep.subr.mxu0 0.0
    %5790 = vmatpush2.msra.mxu0 0.0
    %5791 = vmatprep.mubr.f32.mxu0 0.0
    %5792 = vmatmul.mubr.f32.gmra.mxu0 %v5725
    %v5793 = vpop.f32.mrf.mxu0
    %v5794 = vadd.f32 0.0, %v5793
    %v5795 = vpop.f32.mrf.mxu0
    %5796 = vdwg.mxu0
    %v5798 = vrot.slane %v5794, 4
    %v5800 = vadd.f32 %v5293, %v5798
    %v5801 = vxor.u32 %v5800, 2147483648
    %v5802 = vmul.f32 %v5801, 1.442695
    %v5803 = vpow.pop %v5802
    %v5804 = vadd.f32 %v5803, 1.0
    %v5805 = vrcp.pop %v5804
    %v5806 = vmul.f32 1.0, %v5805
    %v5807 = vtanh.pop %v5800
    %v5809 = vrot.slane %v5715, 4
    %v5811 = vmul.f32 %v5806, %v5809
    %5813 = vrot.lane.b32.xlu0 %v5807, 64
    %v5814 = vpop.permute.xlu0 %5813
    %v5816 = vmul.f32 %v5806, %v5814
    %5818 = vrot.lane.b32.xlu0 %v5816, 32
    %v5819 = vpop.permute.xlu0 %5818
    %v5821 = vadd.f32 %v5811, %v5819
    %v5822 = vtanh.pop %v5821
    %5824 = vrot.lane.b32.xlu0 %v5822, 64
    %v5825 = vpop.permute.xlu0 %5824
    %v5827 = vmul.f32 %v5806, %v5825
    %v5829 = vrot.slane %v5827, 4
    %5830 = vrot.lane.b32.xlu0 %v5829, 32
    %v5831 = vpop.permute.xlu0 %5830
    %v5832 = vsel %vm310, %v5831, 0
    %5834 = vmatprep.subr.mxu0 0.0
    %5835 = vmatpush1.msra.mxu0 0.0
    %5836 = vmatprep.subr.mxu0 0.0
    %5837 = vmatpush1.msra.mxu0 0.0
    %5838 = vmatprep.subr.mxu0 0.0
    %5839 = vmatpush1.msra.mxu0 0.0
    %5840 = vmatprep.subr.mxu0 0.0
    %5841 = vmatpush1.msra.mxu0 0.0
    %5842 = vmatprep.subr.mxu0 0.0
    %5843 = vmatpush1.msra.mxu0 0.0
    %5844 = vmatprep.subr.mxu0 0.0
    %5845 = vmatpush1.msra.mxu0 0.0
    %5846 = vmatprep.subr.mxu0 0.0
    %5847 = vmatpush1.msra.mxu0 0.0
    %5848 = vmatprep.subr.mxu0 0.0
    %5849 = vmatpush1.msra.mxu0 0.0
    %5850 = vmatprep.subr.mxu0 0.0
    %5851 = vmatpush1.msra.mxu0 0.0
    %5852 = vmatprep.subr.mxu0 0.0
    %5853 = vmatpush1.msra.mxu0 0.0
    %5854 = vmatprep.subr.mxu0 0.0
    %5855 = vmatpush1.msra.mxu0 0.0
    %5856 = vmatprep.subr.mxu0 0.0
    %5857 = vmatpush1.msra.mxu0 0.0
    %5858 = vmatprep.subr.mxu0 0.0
    %5859 = vmatpush1.msra.mxu0 %v5309
    %5860 = vmatprep.subr.mxu0 0.0
    %5861 = vmatpush1.msra.mxu0 %v5308
    %5862 = vmatprep.subr.mxu0 0.0
    %5863 = vmatpush1.msra.mxu0 %v5307
    %5864 = vmatprep.subr.mxu0 0.0
    %5865 = vmatpush1.msra.mxu0 %v5306
    %5866 = vmatprep.subr.mxu0 0.0
    %5867 = vmatpush2.msra.mxu0 0.0
    %5868 = vmatprep.subr.mxu0 0.0
    %5869 = vmatpush2.msra.mxu0 0.0
    %5870 = vmatprep.subr.mxu0 0.0
    %5871 = vmatpush2.msra.mxu0 0.0
    %5872 = vmatprep.subr.mxu0 0.0
    %5873 = vmatpush2.msra.mxu0 0.0
    %5874 = vmatprep.subr.mxu0 0.0
    %5875 = vmatpush2.msra.mxu0 0.0
    %5876 = vmatprep.subr.mxu0 0.0
    %5877 = vmatpush2.msra.mxu0 0.0
    %5878 = vmatprep.subr.mxu0 0.0
    %5879 = vmatpush2.msra.mxu0 0.0
    %5880 = vmatprep.subr.mxu0 0.0
    %5881 = vmatpush2.msra.mxu0 0.0
    %5882 = vmatprep.subr.mxu0 0.0
    %5883 = vmatpush2.msra.mxu0 0.0
    %5884 = vmatprep.subr.mxu0 0.0
    %5885 = vmatpush2.msra.mxu0 0.0
    %5886 = vmatprep.subr.mxu0 0.0
    %5887 = vmatpush2.msra.mxu0 0.0
    %5888 = vmatprep.subr.mxu0 0.0
    %5889 = vmatpush2.msra.mxu0 0.0
    %5890 = vmatprep.subr.mxu0 0.0
    %5891 = vmatpush2.msra.mxu0 0.0
    %5892 = vmatprep.subr.mxu0 0.0
    %5893 = vmatpush2.msra.mxu0 0.0
    %5894 = vmatprep.subr.mxu0 0.0
    %5895 = vmatpush2.msra.mxu0 0.0
    %5896 = vmatprep.subr.mxu0 0.0
    %5897 = vmatpush2.msra.mxu0 0.0
    %5898 = vmatprep.mubr.f32.mxu0 0.0
    %5899 = vmatmul.mubr.f32.gmra.mxu0 %v5832
    %v5900 = vpop.f32.mrf.mxu0
    %v5901 = vadd.f32 0.0, %v5900
    %v5902 = vpop.f32.mrf.mxu0
    %5903 = vdwg.mxu0
    %v5904 = vadd.f32 %v5293, %v5901
    %v5905 = vxor.u32 %v5904, 2147483648
    %v5906 = vmul.f32 %v5905, 1.442695
    %v5907 = vpow.pop %v5906
    %v5908 = vadd.f32 %v5907, 1.0
    %v5909 = vrcp.pop %v5908
    %v5910 = vmul.f32 1.0, %v5909
    %v5911 = vtanh.pop %v5904
    %v5913 = vrot.slane %v5821, 4
    %v5915 = vmul.f32 %v5910, %v5913
    %5917 = vrot.lane.b32.xlu0 %v5911, 64
    %v5918 = vpop.permute.xlu0 %5917
    %v5920 = vmul.f32 %v5910, %v5918
    %5922 = vrot.lane.b32.xlu0 %v5920, 32
    %v5923 = vpop.permute.xlu0 %5922
    %v5925 = vadd.f32 %v5915, %v5923
    %v5926 = vtanh.pop %v5925
    %5928 = vrot.lane.b32.xlu0 %v5926, 64
    %v5929 = vpop.permute.xlu0 %5928
    %v5931 = vmul.f32 %v5910, %v5929
    %5933 = vrot.lane.b32.xlu0 %v5931, 32
    %v5934 = vpop.permute.xlu0 %5933
    %v5935 = vsel %vm310, %v5934, 0
    %5937 = vmatprep.subr.mxu0 0.0
    %5938 = vmatpush1.msra.mxu0 0.0
    %5939 = vmatprep.subr.mxu0 0.0
    %5940 = vmatpush1.msra.mxu0 0.0
    %5941 = vmatprep.subr.mxu0 0.0
    %5942 = vmatpush1.msra.mxu0 0.0
    %5943 = vmatprep.subr.mxu0 0.0
    %5944 = vmatpush1.msra.mxu0 0.0
    %5945 = vmatprep.subr.mxu0 0.0
    %5946 = vmatpush1.msra.mxu0 0.0
    %5947 = vmatprep.subr.mxu0 0.0
    %5948 = vmatpush1.msra.mxu0 0.0
    %5949 = vmatprep.subr.mxu0 0.0
    %5950 = vmatpush1.msra.mxu0 0.0
    %5951 = vmatprep.subr.mxu0 0.0
    %5952 = vmatpush1.msra.mxu0 0.0
    %5953 = vmatprep.subr.mxu0 0.0
    %5954 = vmatpush1.msra.mxu0 0.0
    %5955 = vmatprep.subr.mxu0 0.0
    %5956 = vmatpush1.msra.mxu0 0.0
    %5957 = vmatprep.subr.mxu0 0.0
    %5958 = vmatpush1.msra.mxu0 0.0
    %5959 = vmatprep.subr.mxu0 0.0
    %5960 = vmatpush1.msra.mxu0 0.0
    %5961 = vmatprep.subr.mxu0 0.0
    %5962 = vmatpush1.msra.mxu0 %v5309
    %5963 = vmatprep.subr.mxu0 0.0
    %5964 = vmatpush1.msra.mxu0 %v5308
    %5965 = vmatprep.subr.mxu0 0.0
    %5966 = vmatpush1.msra.mxu0 %v5307
    %5967 = vmatprep.subr.mxu0 0.0
    %5968 = vmatpush1.msra.mxu0 %v5306
    %5969 = vmatprep.subr.mxu0 0.0
    %5970 = vmatpush2.msra.mxu0 0.0
    %5971 = vmatprep.subr.mxu0 0.0
    %5972 = vmatpush2.msra.mxu0 0.0
    %5973 = vmatprep.subr.mxu0 0.0
    %5974 = vmatpush2.msra.mxu0 0.0
    %5975 = vmatprep.subr.mxu0 0.0
    %5976 = vmatpush2.msra.mxu0 0.0
    %5977 = vmatprep.subr.mxu0 0.0
    %5978 = vmatpush2.msra.mxu0 0.0
    %5979 = vmatprep.subr.mxu0 0.0
    %5980 = vmatpush2.msra.mxu0 0.0
    %5981 = vmatprep.subr.mxu0 0.0
    %5982 = vmatpush2.msra.mxu0 0.0
    %5983 = vmatprep.subr.mxu0 0.0
    %5984 = vmatpush2.msra.mxu0 0.0
    %5985 = vmatprep.subr.mxu0 0.0
    %5986 = vmatpush2.msra.mxu0 0.0
    %5987 = vmatprep.subr.mxu0 0.0
    %5988 = vmatpush2.msra.mxu0 0.0
    %5989 = vmatprep.subr.mxu0 0.0
    %5990 = vmatpush2.msra.mxu0 0.0
    %5991 = vmatprep.subr.mxu0 0.0
    %5992 = vmatpush2.msra.mxu0 0.0
    %5993 = vmatprep.subr.mxu0 0.0
    %5994 = vmatpush2.msra.mxu0 0.0
    %5995 = vmatprep.subr.mxu0 0.0
    %5996 = vmatpush2.msra.mxu0 0.0
    %5997 = vmatprep.subr.mxu0 0.0
    %5998 = vmatpush2.msra.mxu0 0.0
    %5999 = vmatprep.subr.mxu0 0.0
    %6000 = vmatpush2.msra.mxu0 0.0
    %6001 = vmatprep.mubr.f32.mxu0 0.0
    %6002 = vmatmul.mubr.f32.gmra.mxu0 %v5935
    %v6003 = vpop.f32.mrf.mxu0
    %v6004 = vadd.f32 0.0, %v6003
    %v6005 = vpop.f32.mrf.mxu0
    %6006 = vdwg.mxu0
    %v6008 = vrot.slane %v6004, 4
    %v6010 = vadd.f32 %v5288, %v6008
    %v6011 = vxor.u32 %v6010, 2147483648
    %v6012 = vmul.f32 %v6011, 1.442695
    %v6013 = vpow.pop %v6012
    %v6014 = vadd.f32 %v6013, 1.0
    %v6015 = vrcp.pop %v6014
    %v6016 = vmul.f32 1.0, %v6015
    %v6017 = vtanh.pop %v6010
    %v6019 = vrot.slane %v5925, 4
    %v6021 = vmul.f32 %v6016, %v6019
    %6023 = vrot.lane.b32.xlu0 %v6017, 64
    %v6024 = vpop.permute.xlu0 %6023
    %v6026 = vmul.f32 %v6016, %v6024
    %6028 = vrot.lane.b32.xlu0 %v6026, 32
    %v6029 = vpop.permute.xlu0 %6028
    %v6031 = vadd.f32 %v6021, %v6029
    %v6032 = vtanh.pop %v6031
    %6034 = vrot.lane.b32.xlu0 %v6032, 64
    %v6035 = vpop.permute.xlu0 %6034
    %v6037 = vmul.f32 %v6016, %v6035
    %v6039 = vrot.slane %v6037, 4
    %6040 = vrot.lane.b32.xlu0 %v6039, 32
    %v6041 = vpop.permute.xlu0 %6040
    %v6042 = vsel %vm310, %v6041, 0
    %6044 = vmatprep.subr.mxu0 0.0
    %6045 = vmatpush1.msra.mxu0 0.0
    %6046 = vmatprep.subr.mxu0 0.0
    %6047 = vmatpush1.msra.mxu0 0.0
    %6048 = vmatprep.subr.mxu0 0.0
    %6049 = vmatpush1.msra.mxu0 0.0
    %6050 = vmatprep.subr.mxu0 0.0
    %6051 = vmatpush1.msra.mxu0 0.0
    %6052 = vmatprep.subr.mxu0 0.0
    %6053 = vmatpush1.msra.mxu0 0.0
    %6054 = vmatprep.subr.mxu0 0.0
    %6055 = vmatpush1.msra.mxu0 0.0
    %6056 = vmatprep.subr.mxu0 0.0
    %6057 = vmatpush1.msra.mxu0 0.0
    %6058 = vmatprep.subr.mxu0 0.0
    %6059 = vmatpush1.msra.mxu0 0.0
    %6060 = vmatprep.subr.mxu0 0.0
    %6061 = vmatpush1.msra.mxu0 0.0
    %6062 = vmatprep.subr.mxu0 0.0
    %6063 = vmatpush1.msra.mxu0 0.0
    %6064 = vmatprep.subr.mxu0 0.0
    %6065 = vmatpush1.msra.mxu0 0.0
    %6066 = vmatprep.subr.mxu0 0.0
    %6067 = vmatpush1.msra.mxu0 0.0
    %6068 = vmatprep.subr.mxu0 0.0
    %6069 = vmatpush1.msra.mxu0 %v5309
    %6070 = vmatprep.subr.mxu0 0.0
    %6071 = vmatpush1.msra.mxu0 %v5308
    %6072 = vmatprep.subr.mxu0 0.0
    %6073 = vmatpush1.msra.mxu0 %v5307
    %6074 = vmatprep.subr.mxu0 0.0
    %6075 = vmatpush1.msra.mxu0 %v5306
    %6076 = vmatprep.subr.mxu0 0.0
    %6077 = vmatpush2.msra.mxu0 0.0
    %6078 = vmatprep.subr.mxu0 0.0
    %6079 = vmatpush2.msra.mxu0 0.0
    %6080 = vmatprep.subr.mxu0 0.0
    %6081 = vmatpush2.msra.mxu0 0.0
    %6082 = vmatprep.subr.mxu0 0.0
    %6083 = vmatpush2.msra.mxu0 0.0
    %6084 = vmatprep.subr.mxu0 0.0
    %6085 = vmatpush2.msra.mxu0 0.0
    %6086 = vmatprep.subr.mxu0 0.0
    %6087 = vmatpush2.msra.mxu0 0.0
    %6088 = vmatprep.subr.mxu0 0.0
    %6089 = vmatpush2.msra.mxu0 0.0
    %6090 = vmatprep.subr.mxu0 0.0
    %6091 = vmatpush2.msra.mxu0 0.0
    %6092 = vmatprep.subr.mxu0 0.0
    %6093 = vmatpush2.msra.mxu0 0.0
    %6094 = vmatprep.subr.mxu0 0.0
    %6095 = vmatpush2.msra.mxu0 0.0
    %6096 = vmatprep.subr.mxu0 0.0
    %6097 = vmatpush2.msra.mxu0 0.0
    %6098 = vmatprep.subr.mxu0 0.0
    %6099 = vmatpush2.msra.mxu0 0.0
    %6100 = vmatprep.subr.mxu0 0.0
    %6101 = vmatpush2.msra.mxu0 0.0
    %6102 = vmatprep.subr.mxu0 0.0
    %6103 = vmatpush2.msra.mxu0 0.0
    %6104 = vmatprep.subr.mxu0 0.0
    %6105 = vmatpush2.msra.mxu0 0.0
    %6106 = vmatprep.subr.mxu0 0.0
    %6107 = vmatpush2.msra.mxu0 0.0
    %6108 = vmatprep.mubr.f32.mxu0 0.0
    %6109 = vmatmul.mubr.f32.gmra.mxu0 %v6042
    %v6110 = vpop.f32.mrf.mxu0
    %v6111 = vadd.f32 0.0, %v6110
    %v6112 = vpop.f32.mrf.mxu0
    %6113 = vdwg.mxu0
    %v6114 = vadd.f32 %v5288, %v6111
    %v6115 = vxor.u32 %v6114, 2147483648
    %v6116 = vmul.f32 %v6115, 1.442695
    %v6117 = vpow.pop %v6116
    %v6118 = vadd.f32 %v6117, 1.0
    %v6119 = vrcp.pop %v6118
    %v6120 = vmul.f32 1.0, %v6119
    %v6121 = vtanh.pop %v6114
    %v6123 = vrot.slane %v6031, 4
    %v6125 = vmul.f32 %v6120, %v6123
    %6127 = vrot.lane.b32.xlu0 %v6121, 64
    %v6128 = vpop.permute.xlu0 %6127
    %v6130 = vmul.f32 %v6120, %v6128
    %6132 = vrot.lane.b32.xlu0 %v6130, 32
    %v6133 = vpop.permute.xlu0 %6132
    %v6135 = vadd.f32 %v6125, %v6133
    %v6136 = vtanh.pop %v6135
    %6138 = vrot.lane.b32.xlu0 %v6136, 64
    %v6139 = vpop.permute.xlu0 %6138
    %v6141 = vmul.f32 %v6120, %v6139
    %6143 = vrot.lane.b32.xlu0 %v5205, 32
    %v6144 = vpop.permute.xlu0 %6143
    %v6147 = vrot.slane %v6141, 4
    %6148 = vrot.lane.b32.xlu0 %v6147, 64
    %v6149 = vpop.permute.xlu0 %6148
    %v6151 = vsel %vm310, %v6144, %v6149
    %v6152 = vld [vmem:[%s20] sm:$0xff]
    %v6153 = vld [vmem:[%s20 + $0x8] sm:$0xff]
    %v6154 = vld [vmem:[%s20 + $0x10] sm:$0xff]
    %v6155 = vld [vmem:[%s20 + $0x18] sm:$0xff]
    %v6156 = vld [vmem:[%s20 + $0x20] sm:$0xff]
    %v6157 = vld [vmem:[%s20 + $0x28] sm:$0xff]
    %v6158 = vld [vmem:[%s20 + $0x30] sm:$0xff]
    %v6159 = vld [vmem:[%s20 + $0x38] sm:$0xff]
    %v6160 = vld [vmem:[#allocation25] sm:$0x1]
    %v6162 = vlaneseq
    %v6163 = vshrl.u32 %v6162, 7
    %v6164 = vsub.s32 0, %v6163
    %v6165 = vrot.slane %v6160, %v6164
    %v6168 = vrot.slane %v6151, 4
    %v6169 = vsel %vm2346, %v6168, 0
    %6171 = vmatprep.subr.mxu0 0.0
    %6172 = vmatpush1.msra.mxu0 0.0
    %6173 = vmatprep.subr.mxu0 0.0
    %6174 = vmatpush1.msra.mxu0 0.0
    %6175 = vmatprep.subr.mxu0 0.0
    %6176 = vmatpush1.msra.mxu0 0.0
    %6177 = vmatprep.subr.mxu0 0.0
    %6178 = vmatpush1.msra.mxu0 0.0
    %6179 = vmatprep.subr.mxu0 0.0
    %6180 = vmatpush1.msra.mxu0 0.0
    %6181 = vmatprep.subr.mxu0 0.0
    %6182 = vmatpush1.msra.mxu0 0.0
    %6183 = vmatprep.subr.mxu0 0.0
    %6184 = vmatpush1.msra.mxu0 0.0
    %6185 = vmatprep.subr.mxu0 0.0
    %6186 = vmatpush1.msra.mxu0 0.0
    %6187 = vmatprep.subr.mxu0 0.0
    %6188 = vmatpush1.msra.mxu0 %v6159
    %6189 = vmatprep.subr.mxu0 0.0
    %6190 = vmatpush1.msra.mxu0 %v6158
    %6191 = vmatprep.subr.mxu0 0.0
    %6192 = vmatpush1.msra.mxu0 %v6157
    %6193 = vmatprep.subr.mxu0 0.0
    %6194 = vmatpush1.msra.mxu0 %v6156
    %6195 = vmatprep.subr.mxu0 0.0
    %6196 = vmatpush1.msra.mxu0 %v6155
    %6197 = vmatprep.subr.mxu0 0.0
    %6198 = vmatpush1.msra.mxu0 %v6154
    %6199 = vmatprep.subr.mxu0 0.0
    %6200 = vmatpush1.msra.mxu0 %v6153
    %6201 = vmatprep.subr.mxu0 0.0
    %6202 = vmatpush1.msra.mxu0 %v6152
    %6203 = vmatprep.subr.mxu0 0.0
    %6204 = vmatpush2.msra.mxu0 0.0
    %6205 = vmatprep.subr.mxu0 0.0
    %6206 = vmatpush2.msra.mxu0 0.0
    %6207 = vmatprep.subr.mxu0 0.0
    %6208 = vmatpush2.msra.mxu0 0.0
    %6209 = vmatprep.subr.mxu0 0.0
    %6210 = vmatpush2.msra.mxu0 0.0
    %6211 = vmatprep.subr.mxu0 0.0
    %6212 = vmatpush2.msra.mxu0 0.0
    %6213 = vmatprep.subr.mxu0 0.0
    %6214 = vmatpush2.msra.mxu0 0.0
    %6215 = vmatprep.subr.mxu0 0.0
    %6216 = vmatpush2.msra.mxu0 0.0
    %6217 = vmatprep.subr.mxu0 0.0
    %6218 = vmatpush2.msra.mxu0 0.0
    %6219 = vmatprep.subr.mxu0 0.0
    %6220 = vmatpush2.msra.mxu0 0.0
    %6221 = vmatprep.subr.mxu0 0.0
    %6222 = vmatpush2.msra.mxu0 0.0
    %6223 = vmatprep.subr.mxu0 0.0
    %6224 = vmatpush2.msra.mxu0 0.0
    %6225 = vmatprep.subr.mxu0 0.0
    %6226 = vmatpush2.msra.mxu0 0.0
    %6227 = vmatprep.subr.mxu0 0.0
    %6228 = vmatpush2.msra.mxu0 0.0
    %6229 = vmatprep.subr.mxu0 0.0
    %6230 = vmatpush2.msra.mxu0 0.0
    %6231 = vmatprep.subr.mxu0 0.0
    %6232 = vmatpush2.msra.mxu0 0.0
    %6233 = vmatprep.subr.mxu0 0.0
    %6234 = vmatpush2.msra.mxu0 0.0
    %6235 = vmatprep.mubr.f32.mxu0 0.0
    %6236 = vmatmul.mubr.f32.gmra.mxu0 %v6169
    %v6237 = vpop.f32.mrf.mxu0
    %v6238 = vadd.f32 %v6165, %v6237
    %v6239 = vpop.f32.mrf.mxu0
    %6240 = vdwg.mxu0
    %v6242 = vrot.slane %v6238, 2
    %v6244 = vsub.f32 %v6238, %v6242
    %v6245 = vmul.f32 %v6244, %v6244
    %vm6246 = vcmask 254976
    %v6247 = vsel %vm6246, %v6245, 0.0
    %6248 = vadd.xlane.f32.xlu0 %v6247
    %v6249 = vpop.xlane.xlu0 %6248
    %v6250 = vrsqrt.pop %v6249
    %v6251 = vmul.f32 %v6249, %v6250
    %vm6252 = vcmp.eq.f32.partialorder %v6249, inf
    %v6253 = vsel %vm6252, %v6249, %v6251
    %vm6254 = vcmp.eq.f32.partialorder %v6249, 0.0
    %v6255 = vand.u32 %v6249, 2147483648
    %v6256 = vsel %vm6254, %v6255, %v6253
    %v6257 = vmul.f32 %v6238, %v6238
    %v6258 = vsel %vm6246, %v6257, 0.0
    %6259 = vadd.xlane.f32.xlu0 %v6258
    %v6260 = vpop.xlane.xlu0 %6259
    %v6261 = vrsqrt.pop %v6260
    %v6262 = vmul.f32 %v6260, %v6261
    %vm6263 = vcmp.eq.f32.partialorder %v6260, inf
    %v6264 = vsel %vm6263, %v6260, %v6262
    %vm6265 = vcmp.eq.f32.partialorder %v6260, 0.0
    %v6266 = vand.u32 %v6260, 2147483648
    %v6267 = vsel %vm6265, %v6266, %v6264
    %vm6268 = vcmask 257026
    %v6269 = vsel %vm6268, %v6257, 0.0
    %6270 = vadd.xlane.f32.xlu0 %v6269
    %v6271 = vpop.xlane.xlu0 %6270
    %v6272 = vrsqrt.pop %v6271
    %v6273 = vmul.f32 %v6271, %v6272
    %vm6274 = vcmp.eq.f32.partialorder %v6271, inf
    %v6275 = vsel %vm6274, %v6271, %v6273
    %vm6276 = vcmp.eq.f32.partialorder %v6271, 0.0
    %v6277 = vand.u32 %v6271, 2147483648
    %v6278 = vsel %vm6276, %v6277, %v6275
    %v6280 = vrot.slane %v6278, 2
    %v6282 = vadd.f32 %v6267, %v6280
    %v6283 = vrcp.pop %v6282
    %v6284 = vmul.f32 %v6256, %v6283
    %vm6285 = vcmask 1024
    %6286 = vst.msk [vmem:[%s22] sm:$0x3] %vm6285, %v6284
    // Predicated region
    $region154: #{siamese_forward.1} parent=1 // pred_check
      _
    $region155: #{siamese_forward.1} parent=1 // pred_check_branch
      %6288 = sbr.rel (0) target = $region157
    $region156: #{siamese_forward.1} parent=1 // pred_region
      _
    $region157: #{siamese_forward.1} parent=1 // pred_fallthru
      _
    // Predicated region
    $region158: #{siamese_forward.1} parent=1 // pred_check
      _
    $region159: #{siamese_forward.1} parent=1 // pred_check_branch
      %6290 = sbr.rel (0) target = $region161
    $region160: #{siamese_forward.1} parent=1 // pred_region
      _
    $region161: #{siamese_forward.1} parent=1 // pred_fallthru
      _
    %6291 = vsyncpa [#allocation3], 1
    %6292 = vsyncpa [#allocation5], 1
    %6293 = vsyncpa [#allocation8], 1
    %6294 = vsyncpa [#allocation11], 1
    %6295 = vsyncpa [#allocation14], 1
    %6296 = vsyncpa [#allocation17], 1
    %6297 = vsyncpa [#allocation20], 1
    %6298 = vsyncpa [#allocation23], 1
    %6299 = vsyncpa [#allocation26], 1

</llo_original>
